<compile_context>
chip_gen: v6e
topology: v6e:2x2x1
jax: 0.10.0
libtpu: 0.0.40
codegen_flags: <defaults>
</compile_context>

<pallas_src>
import functools
import math

import jax
import jax.numpy as jnp
from jax import lax
from jax.experimental import pallas as pl
from jax.experimental.pallas import tpu as pltpu

K_WAVE = 10.0                      # k = torch.tensor(10)
TWO_PI = 2.0 * math.pi
INV_2PI = 1.0 / TWO_PI

# Numerical-Recipes bessj0 small-argument numerator coefficients, pre-scaled
# by 1/(2*pi) so the kernel never needs the final "/ (2*pi)" multiply.
_J0S_P0 = 57568490574.0 * INV_2PI
_J0S_P1 = -13362590354.0 * INV_2PI
_J0S_P2 = 651619640.7 * INV_2PI
_J0S_P3 = -11214424.18 * INV_2PI
_J0S_P4 = 77392.33017 * INV_2PI
_J0S_P5 = -184.9052456 * INV_2PI
# Asymptotic-branch amplitude with 1/(2*pi) folded in: sqrt(2/pi) / (2*pi).
_J0L_AMP = math.sqrt(0.636619772) * INV_2PI


def _round_up(x, m):
    return ((x + m - 1) // m) * m


def pikf_kernel(p_ref, s_ref, o_ref, *, tn: int):
    # p_ref: (N_pad, 2)  all (k-scaled) collocation points, resident in VMEM
    # s_ref: (2, TS)     transposed (k-scaled) source-node tile
    # o_ref: (TN, TS)    output tile = J0(k*r) / (2*pi)
    i = pl.program_id(0)
    row0 = pl.multiple_of(i * tn, tn)
    px = p_ref[pl.ds(row0, tn), 0:1]          # (TN, 1)
    py = p_ref[pl.ds(row0, tn), 1:2]          # (TN, 1)
    sx = s_ref[0:1, :]                        # (1, TS)
    sy = s_ref[1:2, :]                        # (1, TS)

    dx = px - sx                              # (TN, TS), already k-scaled
    dy = py - sy
    y = dx * dx + dy * dy                     # (k*r)^2
    x = jnp.sqrt(y)                           # k*r >= 0 by construction (no abs)

    # --- |x| < 8: rational approximation in y = x^2 (1/(2*pi) folded into p1)
    p1 = _J0S_P0 + y * (_J0S_P1 + y * (_J0S_P2
         + y * (_J0S_P3 + y * (_J0S_P4 + y * _J0S_P5))))
    p2 = 57568490411.0 + y * (1029532985.0 + y * (9494680.718
         + y * (59272.64853 + y * (267.8532712 + y))))
    small = p1 * pl.reciprocal(p2, approx=False)

    # --- |x| >= 8: asymptotic expansion (1/(2*pi) folded into the amplitude)
    # Clamp the dead lanes to 8 so the unselected branch never overflows; for
    # selected lanes (x >= 8) this is a no-op.
    x_safe = jnp.maximum(x, 8.0)
    rsq = lax.rsqrt(x_safe)                   # 1/sqrt(k*r)   (1 EUP op)
    inv = rsq * rsq                           # 1/(k*r) without another EUP op
    z = 8.0 * inv
    y2 = z * z
    xx = x_safe - 0.785398164
    a1 = 1.0 + y2 * (-0.1098628627e-2 + y2 * (0.2734510407e-4
         + y2 * (-0.2073370639e-5 + y2 * 0.2093887211e-6)))
    a2 = -0.1562499995e-1 + y2 * (0.1430488765e-3 + y2 * (-0.6911147651e-5
         + y2 * (0.7621095161e-6 - y2 * 0.934935152e-7)))
    large = (_J0L_AMP * rsq) * (jnp.cos(xx) * a1 - z * jnp.sin(xx) * a2)

    o_ref[...] = jnp.where(x < 8.0, small, large)


def pikf_forward(p, source_nodes, *, tn=256, ts=512):
    """p: (N, 2), source_nodes: (NS, 2) -> (N, NS) = J0(k*|p - s|) / (2*pi)."""
    p = jnp.asarray(p, jnp.float32)
    s = jnp.asarray(source_nodes, jnp.float32)
    N = p.shape[0]
    NS = s.shape[0]

    # Tile sizes: multiples of (8, 128); clamp to (padded) problem size.
    tn_eff = min(tn, _round_up(N, 8))
    ts_eff = min(ts, _round_up(NS, 128))
    N_pad = _round_up(N, tn_eff)
    NS_pad = _round_up(NS, ts_eff)

    # Pre-scale by k (O(N+NS) work) and pad to tile multiples (e.g. 1500->1536).
    p_s = jnp.pad(p * K_WAVE, ((0, N_pad - N), (0, 0)))
    s_t = jnp.pad((s * K_WAVE).T, ((0, 0), (0, NS_pad - NS)))   # (2, NS_pad)

    kernel = functools.partial(pikf_kernel, tn=tn_eff)
    out = pl.pallas_call(
        kernel,
        out_shape=jax.ShapeDtypeStruct((N_pad, NS_pad), jnp.float32),
        grid_spec=pltpu.PrefetchScalarGridSpec(
            num_scalar_prefetch=0,
            grid=(N_pad // tn_eff, NS_pad // ts_eff),
            in_specs=[
                # Whole (k-scaled) point set stays resident in VMEM.
                pl.BlockSpec((N_pad, 2), lambda i, j: (0, 0)),
                # Lane-dense source-node tile.
                pl.BlockSpec((2, ts_eff), lambda i, j: (0, j)),
            ],
            out_specs=pl.BlockSpec((tn_eff, ts_eff), lambda i, j: (i, j)),
        ),
        compiler_params=pltpu.CompilerParams(
            dimension_semantics=("parallel", "parallel")),
    )(p_s, s_t)
    return out[:N, :NS]


# ----------------------------------------------------------------------------
# Pure-JAX reference (mirrors the torch forward; plain NR bessj0, no fusions).
# ----------------------------------------------------------------------------
def _bessel_j0_ref(x):
    ax = jnp.abs(x)
    y = x * x
    p1 = 57568490574.0 + y * (-13362590354.0 + y * (651619640.7
         + y * (-11214424.18 + y * (77392.33017 + y * (-184.9052456)))))
    p2 = 57568490411.0 + y * (1029532985.0 + y * (9494680.718
         + y * (59272.64853 + y * (267.8532712 + y * 1.0))))
    small = p1 / p2

    ax_safe = jnp.maximum(ax, 8.0)
    z = 8.0 / ax_safe
    y2 = z * z
    xx = ax_safe - 0.785398164
    a1 = 1.0 + y2 * (-0.1098628627e-2 + y2 * (0.2734510407e-4
         + y2 * (-0.2073370639e-5 + y2 * 0.2093887211e-6)))
    a2 = -0.1562499995e-1 + y2 * (0.1430488765e-3 + y2 * (-0.6911147651e-5
         + y2 * (0.7621095161e-6 - y2 * 0.934935152e-7)))
    large = jnp.sqrt(0.636619772 / ax_safe) * (jnp.cos(xx) * a1
                                               - z * jnp.sin(xx) * a2)
    return jnp.where(ax < 8.0, small, large)


def pikf_reference(p, source_nodes):
    a = p[:, None, :] - source_nodes[None, :, :]               # (N, NS, 2)
    r = jnp.sqrt(a[..., 0] ** 2 + a[..., 1] ** 2)              # (N, NS)
    return _bessel_j0_ref(K_WAVE * r) / TWO_PI


if __name__ == "__main__":
    key = jax.random.PRNGKey(0)
    k_src, k_pts = jax.random.split(key)

    NS = 1500   # number of source nodes (matches the module constant)
    N = 64      # small number of collocation / input points for the demo

    # Deterministic "QuadrangleCollocator" stand-in: uniform points in the
    # square [-2.5, 2.5]^2.
    # TODO(synk): the original module builds source_nodes with a boundary
    # collocator; random points in the same square are used here instead.
    source_nodes = jax.random.uniform(
        k_src, (NS, 2), minval=-2.5, maxval=2.5, dtype=jnp.float32)
    p = jax.random.uniform(
        k_pts, (N, 2), minval=-2.5, maxval=2.5, dtype=jnp.float32)

    # Guard the J0 approximation against known values (catches the Y0 mix-up).
    j0_vals = _bessel_j0_ref(jnp.array([0.0, 1.0, 5.0, 10.0], jnp.float32))
    j0_true = jnp.array([1.0, 0.76519769, -0.17759677, -0.24593576],
                        jnp.float32)
    assert jnp.allclose(j0_vals, j0_true, atol=1e-5), "J0 approximation broken"

    out = jax.block_until_ready(pikf_forward(p, source_nodes))
    ref = pikf_reference(p, source_nodes)

    assert out.shape == (N, NS)
    assert jnp.allclose(out, ref, rtol=1e-5, atol=1e-5), "mismatch vs reference"

    print("KERNEL_OK")
</pallas_src>

<mosaic_0001>
module attributes {stable_mosaic.version = 11 : i64} {
  func.func @pikf_kernel(%arg0: i32, %arg1: i32, %arg2: memref<64x2xf32, #tpu.memory_space<vmem>>, %arg3: memref<2x512xf32, #tpu.memory_space<vmem>>, %arg4: memref<64x512xf32, #tpu.memory_space<vmem>>) attributes {dimension_semantics = [#tpu.dimension_semantics<parallel>, #tpu.dimension_semantics<parallel>], iteration_bounds = array<i64: 1, 3>, scalar_prefetch = 0 : i64, scratch_operands = 0 : i64, tpu.core_type = #tpu.core_type<tc>, window_params = [{pipeline_mode = #tpu.pipeline_mode<synchronous>, transform_indices = @transform_0, window_bounds = array<i64: 64, 2>}, {transform_indices = @transform_1, window_bounds = array<i64: 2, 512>}, {transform_indices = @transform_2, window_bounds = array<i64: 64, 512>}]} {
    %c64_i32 = arith.constant 64 : i32
    %0 = arith.muli %arg0, %c64_i32 : i32
    %1 = tpu.assume_multiple %0, 64 : i32
    %2 = arith.index_cast %1 : i32 to index
    %c0 = arith.constant 0 : index
    %3 = vector.load %arg2[%2, %c0] : memref<64x2xf32, #tpu.memory_space<vmem>>, vector<64x1xf32>
    %4 = arith.index_cast %1 : i32 to index
    %c1 = arith.constant 1 : index
    %5 = vector.load %arg2[%4, %c1] : memref<64x2xf32, #tpu.memory_space<vmem>>, vector<64x1xf32>
    %c0_0 = arith.constant 0 : index
    %c0_1 = arith.constant 0 : index
    %6 = vector.load %arg3[%c0_0, %c0_1] : memref<2x512xf32, #tpu.memory_space<vmem>>, vector<1x512xf32>
    %c1_2 = arith.constant 1 : index
    %c0_3 = arith.constant 0 : index
    %7 = vector.load %arg3[%c1_2, %c0_3] : memref<2x512xf32, #tpu.memory_space<vmem>>, vector<1x512xf32>
    %8 = vector.broadcast %3 : vector<64x1xf32> to vector<64x512xf32>
    %9 = vector.broadcast %6 : vector<1x512xf32> to vector<64x512xf32>
    %10 = arith.subf %8, %9 : vector<64x512xf32>
    %11 = vector.broadcast %5 : vector<64x1xf32> to vector<64x512xf32>
    %12 = vector.broadcast %7 : vector<1x512xf32> to vector<64x512xf32>
    %13 = arith.subf %11, %12 : vector<64x512xf32>
    %14 = arith.mulf %10, %10 : vector<64x512xf32>
    %15 = arith.mulf %13, %13 : vector<64x512xf32>
    %16 = arith.addf %14, %15 : vector<64x512xf32>
    %17 = math.sqrt %16 : vector<64x512xf32>
    %cst = arith.constant -29.4285831 : f32
    %18 = vector.broadcast %cst : f32 to vector<64x512xf32>
    %19 = arith.mulf %16, %18 : vector<64x512xf32>
    %cst_4 = arith.constant 12317.3721 : f32
    %20 = vector.broadcast %cst_4 : f32 to vector<64x512xf32>
    %21 = arith.addf %20, %19 : vector<64x512xf32>
    %22 = arith.mulf %16, %21 : vector<64x512xf32>
    %cst_5 = arith.constant 0xC9D9DFF8 : f32
    %23 = vector.broadcast %cst_5 : f32 to vector<64x512xf32>
    %24 = arith.addf %23, %22 : vector<64x512xf32>
    %25 = arith.mulf %16, %24 : vector<64x512xf32>
    %cst_6 = arith.constant 0x4CC5CEE9 : f32
    %26 = vector.broadcast %cst_6 : f32 to vector<64x512xf32>
    %27 = arith.addf %26, %25 : vector<64x512xf32>
    %28 = arith.mulf %16, %27 : vector<64x512xf32>
    %cst_7 = arith.constant -2.1267223E+9 : f32
    %29 = vector.broadcast %cst_7 : f32 to vector<64x512xf32>
    %30 = arith.addf %29, %28 : vector<64x512xf32>
    %31 = arith.mulf %16, %30 : vector<64x512xf32>
    %cst_8 = arith.constant 9.16230963E+9 : f32
    %32 = vector.broadcast %cst_8 : f32 to vector<64x512xf32>
    %33 = arith.addf %32, %31 : vector<64x512xf32>
    %cst_9 = arith.constant 267.853271 : f32
    %34 = vector.broadcast %cst_9 : f32 to vector<64x512xf32>
    %35 = arith.addf %34, %16 : vector<64x512xf32>
    %36 = arith.mulf %16, %35 : vector<64x512xf32>
    %cst_10 = arith.constant 59272.6484 : f32
    %37 = vector.broadcast %cst_10 : f32 to vector<64x512xf32>
    %38 = arith.addf %37, %36 : vector<64x512xf32>
    %39 = arith.mulf %16, %38 : vector<64x512xf32>
    %cst_11 = arith.constant 0x4B10E099 : f32
    %40 = vector.broadcast %cst_11 : f32 to vector<64x512xf32>
    %41 = arith.addf %40, %39 : vector<64x512xf32>
    %42 = arith.mulf %16, %41 : vector<64x512xf32>
    %cst_12 = arith.constant 1.02953299E+9 : f32
    %43 = vector.broadcast %cst_12 : f32 to vector<64x512xf32>
    %44 = arith.addf %43, %42 : vector<64x512xf32>
    %45 = arith.mulf %16, %44 : vector<64x512xf32>
    %cst_13 = arith.constant 5.75684895E+10 : f32
    %46 = vector.broadcast %cst_13 : f32 to vector<64x512xf32>
    %47 = arith.addf %46, %45 : vector<64x512xf32>
    %48 = tpu.reciprocal %47 : vector<64x512xf32> -> vector<64x512xf32>
    %49 = arith.mulf %33, %48 : vector<64x512xf32>
    %cst_14 = arith.constant 8.000000e+00 : f32
    %50 = vector.broadcast %cst_14 : f32 to vector<64x512xf32>
    %51 = arith.maximumf %17, %50 : vector<64x512xf32>
    %52 = math.rsqrt %51 : vector<64x512xf32>
    %53 = arith.mulf %52, %52 : vector<64x512xf32>
    %cst_15 = arith.constant 8.000000e+00 : f32
    %54 = vector.broadcast %cst_15 : f32 to vector<64x512xf32>
    %55 = arith.mulf %54, %53 : vector<64x512xf32>
    %56 = arith.mulf %55, %55 : vector<64x512xf32>
    %cst_16 = arith.constant 0.785398185 : f32
    %57 = vector.broadcast %cst_16 : f32 to vector<64x512xf32>
    %58 = arith.subf %51, %57 : vector<64x512xf32>
    %cst_17 = arith.constant 2.09388716E-7 : f32
    %59 = vector.broadcast %cst_17 : f32 to vector<64x512xf32>
    %60 = arith.mulf %56, %59 : vector<64x512xf32>
    %cst_18 = arith.constant -2.07337075E-6 : f32
    %61 = vector.broadcast %cst_18 : f32 to vector<64x512xf32>
    %62 = arith.addf %61, %60 : vector<64x512xf32>
    %63 = arith.mulf %56, %62 : vector<64x512xf32>
    %cst_19 = arith.constant 2.73451042E-5 : f32
    %64 = vector.broadcast %cst_19 : f32 to vector<64x512xf32>
    %65 = arith.addf %64, %63 : vector<64x512xf32>
    %66 = arith.mulf %56, %65 : vector<64x512xf32>
    %cst_20 = arith.constant -0.00109862862 : f32
    %67 = vector.broadcast %cst_20 : f32 to vector<64x512xf32>
    %68 = arith.addf %67, %66 : vector<64x512xf32>
    %69 = arith.mulf %56, %68 : vector<64x512xf32>
    %cst_21 = arith.constant 1.000000e+00 : f32
    %70 = vector.broadcast %cst_21 : f32 to vector<64x512xf32>
    %71 = arith.addf %70, %69 : vector<64x512xf32>
    %cst_22 = arith.constant 9.34935187E-8 : f32
    %72 = vector.broadcast %cst_22 : f32 to vector<64x512xf32>
    %73 = arith.mulf %56, %72 : vector<64x512xf32>
    %cst_23 = arith.constant 7.62109493E-7 : f32
    %74 = vector.broadcast %cst_23 : f32 to vector<64x512xf32>
    %75 = arith.subf %74, %73 : vector<64x512xf32>
    %76 = arith.mulf %56, %75 : vector<64x512xf32>
    %cst_24 = arith.constant -6.91114747E-6 : f32
    %77 = vector.broadcast %cst_24 : f32 to vector<64x512xf32>
    %78 = arith.addf %77, %76 : vector<64x512xf32>
    %79 = arith.mulf %56, %78 : vector<64x512xf32>
    %cst_25 = arith.constant 1.43048877E-4 : f32
    %80 = vector.broadcast %cst_25 : f32 to vector<64x512xf32>
    %81 = arith.addf %80, %79 : vector<64x512xf32>
    %82 = arith.mulf %56, %81 : vector<64x512xf32>
    %cst_26 = arith.constant -1.562500e-02 : f32
    %83 = vector.broadcast %cst_26 : f32 to vector<64x512xf32>
    %84 = arith.addf %83, %82 : vector<64x512xf32>
    %cst_27 = arith.constant 0.126987278 : f32
    %85 = vector.broadcast %cst_27 : f32 to vector<64x512xf32>
    %86 = arith.mulf %85, %52 : vector<64x512xf32>
    %87 = math.cos %58 : vector<64x512xf32>
    %88 = arith.mulf %87, %71 : vector<64x512xf32>
    %89 = math.sin %58 : vector<64x512xf32>
    %90 = arith.mulf %55, %89 : vector<64x512xf32>
    %91 = arith.mulf %90, %84 : vector<64x512xf32>
    %92 = arith.subf %88, %91 : vector<64x512xf32>
    %93 = arith.mulf %86, %92 : vector<64x512xf32>
    %cst_28 = arith.constant 8.000000e+00 : f32
    %94 = vector.broadcast %cst_28 : f32 to vector<64x512xf32>
    %95 = arith.cmpf olt, %17, %94 : vector<64x512xf32>
    %96 = arith.select %95, %49, %93 : vector<64x512xi1>, vector<64x512xf32>
    %c0_29 = arith.constant 0 : index
    %c0_30 = arith.constant 0 : index
    %97 = vector.load %arg4[%c0_29, %c0_30] : memref<64x512xf32, #tpu.memory_space<vmem>>, vector<64x512xf32>
    tpu.vector_store %arg4[%c0_29, %c0_30], %96 {strides = array<i32>} : memref<64x512xf32, #tpu.memory_space<vmem>>, vector<64x512xf32>,
    return
  }
  func.func @transform_0(%arg0: i32, %arg1: i32) -> (i32, i32) {
    %c0_i32 = arith.constant 0 : i32
    %c0_i32_0 = arith.constant 0 : i32
    %c0_i32_1 = arith.constant 0 : i32
    return %c0_i32, %c0_i32_0 : i32, i32
  }
  func.func @transform_1(%arg0: i32, %arg1: i32) -> (i32, i32) {
    %c0_i32 = arith.constant 0 : i32
    %c0_i32_0 = arith.constant 0 : i32
    return %c0_i32, %arg1 : i32, i32
  }
  func.func @transform_2(%arg0: i32, %arg1: i32) -> (i32, i32) {
    %c0_i32 = arith.constant 0 : i32
    return %arg0, %arg1 : i32, i32
  }
}

</mosaic_0001>

<llo_original>
// kernel: tpu_custom_call.1
$region0: #{tpu_custom_call.1}
  #allocation0 [shape = 'u32[]', space=smem, size = 0x4, offset = 0x4, fixed_abs, tag = 'smem constant byte address 0x4 - core index']
  #allocation1 [shape = 'u32[144,128]{1,0:T(1,128)}', space=vmem, size = 0x12000, scoped, tag = 'internal scratch']
  %s0 = inlined_call_operand.vmem [shape: f32[64,2], index: 0, kind: input, shape index: {}]
  %s1 = inlined_call_operand.vmem [shape: f32[2,1536], index: 1, kind: input, shape index: {}]
  %s2 = inlined_call_operand.hbm [shape: f32[64,1536], index: 2, kind: output, shape index: {}]
  %s3 = sld [smem:[#allocation0]]
  $region41: #{tpu_custom_call.1} parent=0
    _
  %s5 = ssub.s32 1, %s3
  %s6 = scalar_select 0, %s5, %s3
  $region1: #{tpu_custom_call.1} parent=0
    #allocation2 [shape = 'u8[262144]{0}', space=vmem, size = 0x40000, scoped, tag = 'output window, operand 0']
    #allocation3 [shape = 's32[2]{0}', space=sflag, size = 0x8, scoped, tag = 'scoped memory for tpu_custom_call.1']
    %7 = vsyncpa [#allocation3], 0
    %s8 = scalar_lea.sflag [#allocation3], 1
    %9 = vsyncpa %s8, 0
    loop: start=0, step=1, limit=5
    $region2: #{tpu_custom_call.1} parent=1 // loop_pre_header
      _
    $region3: #{tpu_custom_call.1} parent=1 // loop_header
      %s11 = sphi 0, %s15
      %p12 = scmp.ge.s32.totalorder %s11, 5
      %s18 = sphi 0, %s30
      %s19 = sphi 0, %s26
      %s20 = sphi 0, %s18
      %s21 = sphi 0, %s19
      %s22 = sphi 0, %s20
      %s23 = sphi 0, %s21
      %s31 = sphi 0, %s31
      %s33 = sphi 0, %s31
      %s34 = sphi 0, %s33
      %s48 = sphi 0, %s34
      %s54 = sphi 0, %s56
      %s57 = sphi 0, %s54
      %s58 = sphi 0, %s57
      %s74 = sphi 0, %s58
      %s82 = sphi 0, %s84
      %s85 = sphi 0, %s82
      %s86 = sphi 0, %s85
      %s102 = sphi 0, %s86
    $region4: #{tpu_custom_call.1} parent=1 // loop_header_branch
      %14 = sbr.rel (%p12) target = $region8
    $region5: #{tpu_custom_call.1} parent=1 // loop_body
      %s16 = ssub.s32 %s11, 1
      %s17 = ssub.s32 %s11, 2
      %s24 = sadd.s32 1, %s19
      %p25 = scmp.ge.s32.totalorder %s24, 3
      %s26 = scalar_select %p25, 0, %s24
      %s27 = sadd.s32 1, %s18
      %s28 = scalar_select %p25, %s27, %s18
      %p29 = scmp.ge.s32.totalorder %s28, 1
      %s30 = scalar_select %p29, 0, %s28
      %s32 = sadd.s32 %s31, 1
      %p35 = scmp.eq.s32.totalorder %s11, 2
      %p36 = scmp.ne.s32.totalorder %s31, %s33
      %p37 = scmp.eq.s32.totalorder %s11, 0
      %p38 = por %p36, %p37
      %p39 = scmp.ne.s32.totalorder %s31, %s33
      %p40 = scmp.eq.s32.totalorder %s16, 2
      %p41 = por %p39, %p40
      %p42 = scmp.ne.s32.totalorder %s33, %s34
      %p43 = scmp.eq.s32.totalorder %s16, 0
      %p44 = por %p42, %p43
      %p45 = scmp.ne.s32.totalorder %s33, %s34
      %p46 = scmp.eq.s32.totalorder %s17, 2
      %p47 = por %p45, %p46
      %p49 = scmp.ne.s32.totalorder %s34, %s48
      %p50 = scmp.eq.s32.totalorder %s17, 0
      %p51 = por %p49, %p50
      %s52 = ssub.s32 %s19, %s26
      %p53 = scmp.eq.s32.totalorder %s52, 0
      %s55 = sadd.s32 %s54, 1
      %s56 = scalar_select %p53, %s54, %s55
      %p59 = pneg %p53
      %p60 = scmp.eq.s32.totalorder %s11, 2
      %p61 = por %p59, %p60
      %p62 = scmp.ne.s32.totalorder %s54, %s57
      %p63 = scmp.eq.s32.totalorder %s11, 0
      %p64 = por %p62, %p63
      %p65 = scmp.ne.s32.totalorder %s54, %s57
      %p66 = scmp.eq.s32.totalorder %s16, 2
      %p67 = por %p65, %p66
      %p68 = scmp.ne.s32.totalorder %s57, %s58
      %p69 = scmp.eq.s32.totalorder %s16, 0
      %p70 = por %p68, %p69
      %p71 = scmp.ne.s32.totalorder %s57, %s58
      %p72 = scmp.eq.s32.totalorder %s17, 2
      %p73 = por %p71, %p72
      %p75 = scmp.ne.s32.totalorder %s58, %s74
      %p76 = scmp.eq.s32.totalorder %s17, 0
      %p77 = por %p75, %p76
      %s78 = ssub.s32 %s18, %s30
      %s79 = ssub.s32 %s19, %s26
      %s80 = sor.u32 %s78, %s79
      %p81 = scmp.eq.s32.totalorder %s80, 0
      %s83 = sadd.s32 %s82, 1
      %s84 = scalar_select %p81, %s82, %s83
      %p87 = pneg %p81
      %p88 = scmp.eq.s32.totalorder %s11, 2
      %p89 = por %p87, %p88
      %p90 = scmp.ne.s32.totalorder %s82, %s85
      %p91 = scmp.eq.s32.totalorder %s11, 0
      %p92 = por %p90, %p91
      %p93 = scmp.ne.s32.totalorder %s82, %s85
      %p94 = scmp.eq.s32.totalorder %s16, 2
      %p95 = por %p93, %p94
      %p96 = scmp.ne.s32.totalorder %s85, %s86
      %p97 = scmp.eq.s32.totalorder %s16, 0
      %p98 = por %p96, %p97
      %p99 = scmp.ne.s32.totalorder %s85, %s86
      %p100 = scmp.eq.s32.totalorder %s17, 2
      %p101 = por %p99, %p100
      %p103 = scmp.ne.s32.totalorder %s86, %s102
      %p104 = scmp.eq.s32.totalorder %s17, 0
      %p105 = por %p103, %p104
      %p106 = scmp.le.s32.totalorder 1, %s11
      %p107 = scmp.lt.s32.totalorder %s11, 4
      %p108 = pnand %p106, %p107
      %p109 = pneg %p108
      // Predicated region
      $region9: #{tpu_custom_call.1} parent=5 // pred_check
        _
      $region10: #{tpu_custom_call.1} parent=5 // pred_check_branch
        %111 = sbr.rel (%p108) target = $region12
      $region11: #{tpu_custom_call.1} parent=5 // pred_region
        %s112 = ssub.s32 %s11, 1
        // Predicated region
        $region13: #{tpu_custom_call.1} parent=11 // pred_check
          %p113 = pneg %p44
        $region14: #{tpu_custom_call.1} parent=11 // pred_check_branch
          %115 = sbr.rel (%p113) target = $region16
        $region15: #{tpu_custom_call.1} parent=11 // pred_region
          _
        $region16: #{tpu_custom_call.1} parent=11 // pred_fallthru
          _
      $region12: #{tpu_custom_call.1} parent=5 // pred_fallthru
        _
      %p116 = scmp.lt.s32.totalorder %s11, 3
      // Predicated region
      $region17: #{tpu_custom_call.1} parent=5 // pred_check
        %p117 = pneg %p116
      $region18: #{tpu_custom_call.1} parent=5 // pred_check_branch
        %119 = sbr.rel (%p117) target = $region20
      $region19: #{tpu_custom_call.1} parent=5 // pred_region
        // Predicated region
        $region21: #{tpu_custom_call.1} parent=19 // pred_check
          %p120 = pneg %p64
        $region22: #{tpu_custom_call.1} parent=19 // pred_check_branch
          %122 = sbr.rel (%p120) target = $region24
        $region23: #{tpu_custom_call.1} parent=19 // pred_region
          %s123 = smul.u32 4, %s19
          %p124 = scmp.lt.s32.totalorder %s123, 11
          %s125 = scalar_select %p124, %s123, 11
          %s126 = smul.addr %s125, 2
          %s127 = scalar_lea.vmem %s1, %s126
          %s128 = smul.u32 4, %s19
        $region24: #{tpu_custom_call.1} parent=19 // pred_fallthru
          _
      $region20: #{tpu_custom_call.1} parent=5 // pred_fallthru
        _
      %p129 = scmp.le.s32.totalorder 1, %s11
      %p130 = scmp.lt.s32.totalorder %s11, 4
      %p131 = pnand %p129, %p130
      %p132 = pneg %p131
      // Predicated region
      $region25: #{tpu_custom_call.1} parent=5 // pred_check
        _
      $region26: #{tpu_custom_call.1} parent=5 // pred_check_branch
        %134 = sbr.rel (%p131) target = $region28
      $region27: #{tpu_custom_call.1} parent=5 // pred_region
        %s135 = ssub.s32 %s11, 1
        %p136 = pneg %p44
        %p137 = pneg %p41
        %s138 = smul.u32 4, %s21
        %p139 = scmp.lt.s32.totalorder %s138, 11
        %s140 = scalar_select %p139, %s138, 11
        %s141 = smul.addr %s140, 2
        %s142 = scalar_lea.vmem %s1, %s141
        %p143 = pneg %p70
        %p144 = pneg %p67
        %p145 = pneg %p98
        %p146 = pneg %p95
        %s147 = sand.u32 %s85, 1
        %s148 = scalar_lea.sflag [#allocation3], %s147
        %s149 = sand.u32 %s85, 1
        %s150 = smul.addr %s149, 256
        %s151 = scalar_lea.vmem [#allocation2], %s150
        %s152 = smul.u32 4, %s21
        %p153 = scmp.lt.s32.totalorder %s152, 11
        %s154 = scalar_select %p153, %s152, 11
        %s155 = smul.addr %s154, 2
        %s156 = scalar_lea.vmem %s1, %s155
        %s157 = smul.u32 4, %s21
        %s158 = smul.u32 8, %s20
        %s159 = smul.u32 4, %s21
        %s160 = smul.u32 %s20, 64
        %s161 = scalar_lea.vmem %s0, %s160
        %v162 = vld [vmem:[%s161] sm:$0xff]
        %v163 = vld [vmem:[%s161 + $0x8] sm:$0xff]
        %v164 = vld [vmem:[%s161 + $0x10] sm:$0xff]
        %v165 = vld [vmem:[%s161 + $0x18] sm:$0xff]
        %v166 = vld [vmem:[%s161 + $0x20] sm:$0xff]
        %v167 = vld [vmem:[%s161 + $0x28] sm:$0xff]
        %v168 = vld [vmem:[%s161 + $0x30] sm:$0xff]
        %v169 = vld [vmem:[%s161 + $0x38] sm:$0xff]
        %v170 = vld [vmem:[%s156] ss:$2 sm:$0xf]
        %s171 = scalar_lea.vmem %s156, 1
        %v172 = vld [vmem:[%s171] ss:$2 sm:$0xf]
        %174 = vset.pattern.permute.xlu0 0
        %175 = vperm.xlu0 %174, %v162
        %v176 = vpop.permute.xlu0 %175
        %179 = vset.pattern.permute.xlu0 0
        %180 = vperm.xlu0 %179, %v163
        %v181 = vpop.permute.xlu0 %180
        %184 = vset.pattern.permute.xlu0 0
        %185 = vperm.xlu0 %184, %v164
        %v186 = vpop.permute.xlu0 %185
        %189 = vset.pattern.permute.xlu0 0
        %190 = vperm.xlu0 %189, %v165
        %v191 = vpop.permute.xlu0 %190
        %194 = vset.pattern.permute.xlu0 0
        %195 = vperm.xlu0 %194, %v166
        %v196 = vpop.permute.xlu0 %195
        %199 = vset.pattern.permute.xlu0 0
        %200 = vperm.xlu0 %199, %v167
        %v201 = vpop.permute.xlu0 %200
        %204 = vset.pattern.permute.xlu0 0
        %205 = vperm.xlu0 %204, %v168
        %v206 = vpop.permute.xlu0 %205
        %209 = vset.pattern.permute.xlu0 0
        %210 = vperm.xlu0 %209, %v169
        %v211 = vpop.permute.xlu0 %210
        %v214 = vlaneseq
        %v215 = vshrl.u32 %v214, 7
        %v216 = vsub.s32 0, %v215
        %v217 = vrot.slane %v170, %v216
        %v218 = vlaneseq
        %v219 = vshrl.u32 %v218, 7
        %v220 = vsub.s32 1, %v219
        %v221 = vrot.slane %v170, %v220
        %v222 = vlaneseq
        %v223 = vshrl.u32 %v222, 7
        %v224 = vsub.s32 2, %v223
        %v225 = vrot.slane %v170, %v224
        %v226 = vlaneseq
        %v227 = vshrl.u32 %v226, 7
        %v228 = vsub.s32 3, %v227
        %v229 = vrot.slane %v170, %v228
        %v234 = vsub.f32 %v176, %v217
        %v235 = vsub.f32 %v176, %v221
        %v236 = vsub.f32 %v176, %v225
        %v237 = vsub.f32 %v176, %v229
        %v238 = vsub.f32 %v181, %v217
        %v239 = vsub.f32 %v181, %v221
        %v240 = vsub.f32 %v181, %v225
        %v241 = vsub.f32 %v181, %v229
        %v242 = vsub.f32 %v186, %v217
        %v243 = vsub.f32 %v186, %v221
        %v244 = vsub.f32 %v186, %v225
        %v245 = vsub.f32 %v186, %v229
        %v246 = vsub.f32 %v191, %v217
        %v247 = vsub.f32 %v191, %v221
        %v248 = vsub.f32 %v191, %v225
        %v249 = vsub.f32 %v191, %v229
        %v250 = vsub.f32 %v196, %v217
        %v251 = vsub.f32 %v196, %v221
        %v252 = vsub.f32 %v196, %v225
        %v253 = vsub.f32 %v196, %v229
        %v254 = vsub.f32 %v201, %v217
        %v255 = vsub.f32 %v201, %v221
        %v256 = vsub.f32 %v201, %v225
        %v257 = vsub.f32 %v201, %v229
        %v258 = vsub.f32 %v206, %v217
        %v259 = vsub.f32 %v206, %v221
        %v260 = vsub.f32 %v206, %v225
        %v261 = vsub.f32 %v206, %v229
        %v262 = vsub.f32 %v211, %v217
        %v263 = vsub.f32 %v211, %v221
        %v264 = vsub.f32 %v211, %v225
        %v265 = vsub.f32 %v211, %v229
        %266 = vset.pattern.permute.xlu0 1
        %267 = vperm.xlu0 %266, %v162
        %v268 = vpop.permute.xlu0 %267
        %270 = vset.pattern.permute.xlu0 1
        %271 = vperm.xlu0 %270, %v163
        %v272 = vpop.permute.xlu0 %271
        %274 = vset.pattern.permute.xlu0 1
        %275 = vperm.xlu0 %274, %v164
        %v276 = vpop.permute.xlu0 %275
        %278 = vset.pattern.permute.xlu0 1
        %279 = vperm.xlu0 %278, %v165
        %v280 = vpop.permute.xlu0 %279
        %282 = vset.pattern.permute.xlu0 1
        %283 = vperm.xlu0 %282, %v166
        %v284 = vpop.permute.xlu0 %283
        %286 = vset.pattern.permute.xlu0 1
        %287 = vperm.xlu0 %286, %v167
        %v288 = vpop.permute.xlu0 %287
        %290 = vset.pattern.permute.xlu0 1
        %291 = vperm.xlu0 %290, %v168
        %v292 = vpop.permute.xlu0 %291
        %294 = vset.pattern.permute.xlu0 1
        %295 = vperm.xlu0 %294, %v169
        %v296 = vpop.permute.xlu0 %295
        %v299 = vlaneseq
        %v300 = vshrl.u32 %v299, 7
        %v301 = vsub.s32 0, %v300
        %v302 = vrot.slane %v172, %v301
        %v303 = vlaneseq
        %v304 = vshrl.u32 %v303, 7
        %v305 = vsub.s32 1, %v304
        %v306 = vrot.slane %v172, %v305
        %v307 = vlaneseq
        %v308 = vshrl.u32 %v307, 7
        %v309 = vsub.s32 2, %v308
        %v310 = vrot.slane %v172, %v309
        %v311 = vlaneseq
        %v312 = vshrl.u32 %v311, 7
        %v313 = vsub.s32 3, %v312
        %v314 = vrot.slane %v172, %v313
        %v319 = vsub.f32 %v268, %v302
        %v320 = vsub.f32 %v268, %v306
        %v321 = vsub.f32 %v268, %v310
        %v322 = vsub.f32 %v268, %v314
        %v323 = vsub.f32 %v272, %v302
        %v324 = vsub.f32 %v272, %v306
        %v325 = vsub.f32 %v272, %v310
        %v326 = vsub.f32 %v272, %v314
        %v327 = vsub.f32 %v276, %v302
        %v328 = vsub.f32 %v276, %v306
        %v329 = vsub.f32 %v276, %v310
        %v330 = vsub.f32 %v276, %v314
        %v331 = vsub.f32 %v280, %v302
        %v332 = vsub.f32 %v280, %v306
        %v333 = vsub.f32 %v280, %v310
        %v334 = vsub.f32 %v280, %v314
        %v335 = vsub.f32 %v284, %v302
        %v336 = vsub.f32 %v284, %v306
        %v337 = vsub.f32 %v284, %v310
        %v338 = vsub.f32 %v284, %v314
        %v339 = vsub.f32 %v288, %v302
        %v340 = vsub.f32 %v288, %v306
        %v341 = vsub.f32 %v288, %v310
        %v342 = vsub.f32 %v288, %v314
        %v343 = vsub.f32 %v292, %v302
        %v344 = vsub.f32 %v292, %v306
        %v345 = vsub.f32 %v292, %v310
        %v346 = vsub.f32 %v292, %v314
        %v347 = vsub.f32 %v296, %v302
        %v348 = vsub.f32 %v296, %v306
        %v349 = vsub.f32 %v296, %v310
        %v350 = vsub.f32 %v296, %v314
        %v351 = vmul.f32 %v234, %v234
        %v352 = vmul.f32 %v235, %v235
        %v353 = vmul.f32 %v236, %v236
        %v354 = vmul.f32 %v237, %v237
        %v355 = vmul.f32 %v238, %v238
        %v356 = vmul.f32 %v239, %v239
        %v357 = vmul.f32 %v240, %v240
        %v358 = vmul.f32 %v241, %v241
        %v359 = vmul.f32 %v242, %v242
        %v360 = vmul.f32 %v243, %v243
        %v361 = vmul.f32 %v244, %v244
        %v362 = vmul.f32 %v245, %v245
        %v363 = vmul.f32 %v246, %v246
        %v364 = vmul.f32 %v247, %v247
        %v365 = vmul.f32 %v248, %v248
        %v366 = vmul.f32 %v249, %v249
        %v367 = vmul.f32 %v250, %v250
        %v368 = vmul.f32 %v251, %v251
        %v369 = vmul.f32 %v252, %v252
        %v370 = vmul.f32 %v253, %v253
        %v371 = vmul.f32 %v254, %v254
        %v372 = vmul.f32 %v255, %v255
        %v373 = vmul.f32 %v256, %v256
        %v374 = vmul.f32 %v257, %v257
        %v375 = vmul.f32 %v258, %v258
        %v376 = vmul.f32 %v259, %v259
        %v377 = vmul.f32 %v260, %v260
        %v378 = vmul.f32 %v261, %v261
        %v379 = vmul.f32 %v262, %v262
        %v380 = vmul.f32 %v263, %v263
        %v381 = vmul.f32 %v264, %v264
        %v382 = vmul.f32 %v265, %v265
        %v383 = vmul.f32 %v319, %v319
        %v384 = vmul.f32 %v320, %v320
        %v385 = vmul.f32 %v321, %v321
        %v386 = vmul.f32 %v322, %v322
        %v387 = vmul.f32 %v323, %v323
        %v388 = vmul.f32 %v324, %v324
        %v389 = vmul.f32 %v325, %v325
        %v390 = vmul.f32 %v326, %v326
        %v391 = vmul.f32 %v327, %v327
        %v392 = vmul.f32 %v328, %v328
        %v393 = vmul.f32 %v329, %v329
        %v394 = vmul.f32 %v330, %v330
        %v395 = vmul.f32 %v331, %v331
        %v396 = vmul.f32 %v332, %v332
        %v397 = vmul.f32 %v333, %v333
        %v398 = vmul.f32 %v334, %v334
        %v399 = vmul.f32 %v335, %v335
        %v400 = vmul.f32 %v336, %v336
        %v401 = vmul.f32 %v337, %v337
        %v402 = vmul.f32 %v338, %v338
        %v403 = vmul.f32 %v339, %v339
        %v404 = vmul.f32 %v340, %v340
        %v405 = vmul.f32 %v341, %v341
        %v406 = vmul.f32 %v342, %v342
        %v407 = vmul.f32 %v343, %v343
        %v408 = vmul.f32 %v344, %v344
        %v409 = vmul.f32 %v345, %v345
        %v410 = vmul.f32 %v346, %v346
        %v411 = vmul.f32 %v347, %v347
        %v412 = vmul.f32 %v348, %v348
        %v413 = vmul.f32 %v349, %v349
        %v414 = vmul.f32 %v350, %v350
        %v415 = vadd.f32 %v351, %v383
        %v416 = vadd.f32 %v352, %v384
        %v417 = vadd.f32 %v353, %v385
        %v418 = vadd.f32 %v354, %v386
        %v419 = vadd.f32 %v355, %v387
        %v420 = vadd.f32 %v356, %v388
        %v421 = vadd.f32 %v357, %v389
        %v422 = vadd.f32 %v358, %v390
        %v423 = vadd.f32 %v359, %v391
        %v424 = vadd.f32 %v360, %v392
        %v425 = vadd.f32 %v361, %v393
        %v426 = vadd.f32 %v362, %v394
        %v427 = vadd.f32 %v363, %v395
        %v428 = vadd.f32 %v364, %v396
        %v429 = vadd.f32 %v365, %v397
        %v430 = vadd.f32 %v366, %v398
        %v431 = vadd.f32 %v367, %v399
        %v432 = vadd.f32 %v368, %v400
        %v433 = vadd.f32 %v369, %v401
        %v434 = vadd.f32 %v370, %v402
        %v435 = vadd.f32 %v371, %v403
        %v436 = vadd.f32 %v372, %v404
        %v437 = vadd.f32 %v373, %v405
        %v438 = vadd.f32 %v374, %v406
        %v439 = vadd.f32 %v375, %v407
        %v440 = vadd.f32 %v376, %v408
        %v441 = vadd.f32 %v377, %v409
        %v442 = vadd.f32 %v378, %v410
        %v443 = vadd.f32 %v379, %v411
        %v444 = vadd.f32 %v380, %v412
        %v445 = vadd.f32 %v381, %v413
        %v446 = vadd.f32 %v382, %v414
        %v447 = vrsqrt.pop %v415
        %v448 = vmul.f32 %v415, %v447
        %vm449 = vcmp.eq.f32.partialorder %v415, inf
        %v450 = vsel %vm449, %v415, %v448
        %vm451 = vcmp.eq.f32.partialorder %v415, 0.0
        %v452 = vand.u32 %v415, 2147483648
        %v453 = vsel %vm451, %v452, %v450
        %v454 = vrsqrt.pop %v416
        %v455 = vmul.f32 %v416, %v454
        %vm456 = vcmp.eq.f32.partialorder %v416, inf
        %v457 = vsel %vm456, %v416, %v455
        %vm458 = vcmp.eq.f32.partialorder %v416, 0.0
        %v459 = vand.u32 %v416, 2147483648
        %v460 = vsel %vm458, %v459, %v457
        %v461 = vrsqrt.pop %v417
        %v462 = vmul.f32 %v417, %v461
        %vm463 = vcmp.eq.f32.partialorder %v417, inf
        %v464 = vsel %vm463, %v417, %v462
        %vm465 = vcmp.eq.f32.partialorder %v417, 0.0
        %v466 = vand.u32 %v417, 2147483648
        %v467 = vsel %vm465, %v466, %v464
        %v468 = vrsqrt.pop %v418
        %v469 = vmul.f32 %v418, %v468
        %vm470 = vcmp.eq.f32.partialorder %v418, inf
        %v471 = vsel %vm470, %v418, %v469
        %vm472 = vcmp.eq.f32.partialorder %v418, 0.0
        %v473 = vand.u32 %v418, 2147483648
        %v474 = vsel %vm472, %v473, %v471
        %v475 = vrsqrt.pop %v419
        %v476 = vmul.f32 %v419, %v475
        %vm477 = vcmp.eq.f32.partialorder %v419, inf
        %v478 = vsel %vm477, %v419, %v476
        %vm479 = vcmp.eq.f32.partialorder %v419, 0.0
        %v480 = vand.u32 %v419, 2147483648
        %v481 = vsel %vm479, %v480, %v478
        %v482 = vrsqrt.pop %v420
        %v483 = vmul.f32 %v420, %v482
        %vm484 = vcmp.eq.f32.partialorder %v420, inf
        %v485 = vsel %vm484, %v420, %v483
        %vm486 = vcmp.eq.f32.partialorder %v420, 0.0
        %v487 = vand.u32 %v420, 2147483648
        %v488 = vsel %vm486, %v487, %v485
        %v489 = vrsqrt.pop %v421
        %v490 = vmul.f32 %v421, %v489
        %vm491 = vcmp.eq.f32.partialorder %v421, inf
        %v492 = vsel %vm491, %v421, %v490
        %vm493 = vcmp.eq.f32.partialorder %v421, 0.0
        %v494 = vand.u32 %v421, 2147483648
        %v495 = vsel %vm493, %v494, %v492
        %v496 = vrsqrt.pop %v422
        %v497 = vmul.f32 %v422, %v496
        %vm498 = vcmp.eq.f32.partialorder %v422, inf
        %v499 = vsel %vm498, %v422, %v497
        %vm500 = vcmp.eq.f32.partialorder %v422, 0.0
        %v501 = vand.u32 %v422, 2147483648
        %v502 = vsel %vm500, %v501, %v499
        %v503 = vrsqrt.pop %v423
        %v504 = vmul.f32 %v423, %v503
        %vm505 = vcmp.eq.f32.partialorder %v423, inf
        %v506 = vsel %vm505, %v423, %v504
        %vm507 = vcmp.eq.f32.partialorder %v423, 0.0
        %v508 = vand.u32 %v423, 2147483648
        %v509 = vsel %vm507, %v508, %v506
        %v510 = vrsqrt.pop %v424
        %v511 = vmul.f32 %v424, %v510
        %vm512 = vcmp.eq.f32.partialorder %v424, inf
        %v513 = vsel %vm512, %v424, %v511
        %vm514 = vcmp.eq.f32.partialorder %v424, 0.0
        %v515 = vand.u32 %v424, 2147483648
        %v516 = vsel %vm514, %v515, %v513
        %v517 = vrsqrt.pop %v425
        %v518 = vmul.f32 %v425, %v517
        %vm519 = vcmp.eq.f32.partialorder %v425, inf
        %v520 = vsel %vm519, %v425, %v518
        %vm521 = vcmp.eq.f32.partialorder %v425, 0.0
        %v522 = vand.u32 %v425, 2147483648
        %v523 = vsel %vm521, %v522, %v520
        %v524 = vrsqrt.pop %v426
        %v525 = vmul.f32 %v426, %v524
        %vm526 = vcmp.eq.f32.partialorder %v426, inf
        %v527 = vsel %vm526, %v426, %v525
        %vm528 = vcmp.eq.f32.partialorder %v426, 0.0
        %v529 = vand.u32 %v426, 2147483648
        %v530 = vsel %vm528, %v529, %v527
        %v531 = vrsqrt.pop %v427
        %v532 = vmul.f32 %v427, %v531
        %vm533 = vcmp.eq.f32.partialorder %v427, inf
        %v534 = vsel %vm533, %v427, %v532
        %vm535 = vcmp.eq.f32.partialorder %v427, 0.0
        %v536 = vand.u32 %v427, 2147483648
        %v537 = vsel %vm535, %v536, %v534
        %v538 = vrsqrt.pop %v428
        %v539 = vmul.f32 %v428, %v538
        %vm540 = vcmp.eq.f32.partialorder %v428, inf
        %v541 = vsel %vm540, %v428, %v539
        %vm542 = vcmp.eq.f32.partialorder %v428, 0.0
        %v543 = vand.u32 %v428, 2147483648
        %v544 = vsel %vm542, %v543, %v541
        %v545 = vrsqrt.pop %v429
        %v546 = vmul.f32 %v429, %v545
        %vm547 = vcmp.eq.f32.partialorder %v429, inf
        %v548 = vsel %vm547, %v429, %v546
        %vm549 = vcmp.eq.f32.partialorder %v429, 0.0
        %v550 = vand.u32 %v429, 2147483648
        %v551 = vsel %vm549, %v550, %v548
        %v552 = vrsqrt.pop %v430
        %v553 = vmul.f32 %v430, %v552
        %vm554 = vcmp.eq.f32.partialorder %v430, inf
        %v555 = vsel %vm554, %v430, %v553
        %vm556 = vcmp.eq.f32.partialorder %v430, 0.0
        %v557 = vand.u32 %v430, 2147483648
        %v558 = vsel %vm556, %v557, %v555
        %v559 = vrsqrt.pop %v431
        %v560 = vmul.f32 %v431, %v559
        %vm561 = vcmp.eq.f32.partialorder %v431, inf
        %v562 = vsel %vm561, %v431, %v560
        %vm563 = vcmp.eq.f32.partialorder %v431, 0.0
        %v564 = vand.u32 %v431, 2147483648
        %v565 = vsel %vm563, %v564, %v562
        %v566 = vrsqrt.pop %v432
        %v567 = vmul.f32 %v432, %v566
        %vm568 = vcmp.eq.f32.partialorder %v432, inf
        %v569 = vsel %vm568, %v432, %v567
        %vm570 = vcmp.eq.f32.partialorder %v432, 0.0
        %v571 = vand.u32 %v432, 2147483648
        %v572 = vsel %vm570, %v571, %v569
        %v573 = vrsqrt.pop %v433
        %v574 = vmul.f32 %v433, %v573
        %vm575 = vcmp.eq.f32.partialorder %v433, inf
        %v576 = vsel %vm575, %v433, %v574
        %vm577 = vcmp.eq.f32.partialorder %v433, 0.0
        %v578 = vand.u32 %v433, 2147483648
        %v579 = vsel %vm577, %v578, %v576
        %v580 = vrsqrt.pop %v434
        %v581 = vmul.f32 %v434, %v580
        %vm582 = vcmp.eq.f32.partialorder %v434, inf
        %v583 = vsel %vm582, %v434, %v581
        %vm584 = vcmp.eq.f32.partialorder %v434, 0.0
        %v585 = vand.u32 %v434, 2147483648
        %v586 = vsel %vm584, %v585, %v583
        %v587 = vrsqrt.pop %v435
        %v588 = vmul.f32 %v435, %v587
        %vm589 = vcmp.eq.f32.partialorder %v435, inf
        %v590 = vsel %vm589, %v435, %v588
        %vm591 = vcmp.eq.f32.partialorder %v435, 0.0
        %v592 = vand.u32 %v435, 2147483648
        %v593 = vsel %vm591, %v592, %v590
        %v594 = vrsqrt.pop %v436
        %v595 = vmul.f32 %v436, %v594
        %vm596 = vcmp.eq.f32.partialorder %v436, inf
        %v597 = vsel %vm596, %v436, %v595
        %vm598 = vcmp.eq.f32.partialorder %v436, 0.0
        %v599 = vand.u32 %v436, 2147483648
        %v600 = vsel %vm598, %v599, %v597
        %v601 = vrsqrt.pop %v437
        %v602 = vmul.f32 %v437, %v601
        %vm603 = vcmp.eq.f32.partialorder %v437, inf
        %v604 = vsel %vm603, %v437, %v602
        %vm605 = vcmp.eq.f32.partialorder %v437, 0.0
        %v606 = vand.u32 %v437, 2147483648
        %v607 = vsel %vm605, %v606, %v604
        %v608 = vrsqrt.pop %v438
        %v609 = vmul.f32 %v438, %v608
        %vm610 = vcmp.eq.f32.partialorder %v438, inf
        %v611 = vsel %vm610, %v438, %v609
        %vm612 = vcmp.eq.f32.partialorder %v438, 0.0
        %v613 = vand.u32 %v438, 2147483648
        %v614 = vsel %vm612, %v613, %v611
        %v615 = vrsqrt.pop %v439
        %v616 = vmul.f32 %v439, %v615
        %vm617 = vcmp.eq.f32.partialorder %v439, inf
        %v618 = vsel %vm617, %v439, %v616
        %vm619 = vcmp.eq.f32.partialorder %v439, 0.0
        %v620 = vand.u32 %v439, 2147483648
        %v621 = vsel %vm619, %v620, %v618
        %v622 = vrsqrt.pop %v440
        %v623 = vmul.f32 %v440, %v622
        %vm624 = vcmp.eq.f32.partialorder %v440, inf
        %v625 = vsel %vm624, %v440, %v623
        %vm626 = vcmp.eq.f32.partialorder %v440, 0.0
        %v627 = vand.u32 %v440, 2147483648
        %v628 = vsel %vm626, %v627, %v625
        %v629 = vrsqrt.pop %v441
        %v630 = vmul.f32 %v441, %v629
        %vm631 = vcmp.eq.f32.partialorder %v441, inf
        %v632 = vsel %vm631, %v441, %v630
        %vm633 = vcmp.eq.f32.partialorder %v441, 0.0
        %v634 = vand.u32 %v441, 2147483648
        %v635 = vsel %vm633, %v634, %v632
        %v636 = vrsqrt.pop %v442
        %v637 = vmul.f32 %v442, %v636
        %vm638 = vcmp.eq.f32.partialorder %v442, inf
        %v639 = vsel %vm638, %v442, %v637
        %vm640 = vcmp.eq.f32.partialorder %v442, 0.0
        %v641 = vand.u32 %v442, 2147483648
        %v642 = vsel %vm640, %v641, %v639
        %v643 = vrsqrt.pop %v443
        %v644 = vmul.f32 %v443, %v643
        %vm645 = vcmp.eq.f32.partialorder %v443, inf
        %v646 = vsel %vm645, %v443, %v644
        %vm647 = vcmp.eq.f32.partialorder %v443, 0.0
        %v648 = vand.u32 %v443, 2147483648
        %v649 = vsel %vm647, %v648, %v646
        %v650 = vrsqrt.pop %v444
        %v651 = vmul.f32 %v444, %v650
        %vm652 = vcmp.eq.f32.partialorder %v444, inf
        %v653 = vsel %vm652, %v444, %v651
        %vm654 = vcmp.eq.f32.partialorder %v444, 0.0
        %v655 = vand.u32 %v444, 2147483648
        %v656 = vsel %vm654, %v655, %v653
        %v657 = vrsqrt.pop %v445
        %v658 = vmul.f32 %v445, %v657
        %vm659 = vcmp.eq.f32.partialorder %v445, inf
        %v660 = vsel %vm659, %v445, %v658
        %vm661 = vcmp.eq.f32.partialorder %v445, 0.0
        %v662 = vand.u32 %v445, 2147483648
        %v663 = vsel %vm661, %v662, %v660
        %v664 = vrsqrt.pop %v446
        %v665 = vmul.f32 %v446, %v664
        %vm666 = vcmp.eq.f32.partialorder %v446, inf
        %v667 = vsel %vm666, %v446, %v665
        %vm668 = vcmp.eq.f32.partialorder %v446, 0.0
        %v669 = vand.u32 %v446, 2147483648
        %v670 = vsel %vm668, %v669, %v667
        %v671 = vmul.f32 %v415, -29.428583
        %v672 = vmul.f32 %v416, -29.428583
        %v673 = vmul.f32 %v417, -29.428583
        %v674 = vmul.f32 %v418, -29.428583
        %v675 = vmul.f32 %v419, -29.428583
        %v676 = vmul.f32 %v420, -29.428583
        %v677 = vmul.f32 %v421, -29.428583
        %v678 = vmul.f32 %v422, -29.428583
        %v679 = vmul.f32 %v423, -29.428583
        %v680 = vmul.f32 %v424, -29.428583
        %v681 = vmul.f32 %v425, -29.428583
        %v682 = vmul.f32 %v426, -29.428583
        %v683 = vmul.f32 %v427, -29.428583
        %v684 = vmul.f32 %v428, -29.428583
        %v685 = vmul.f32 %v429, -29.428583
        %v686 = vmul.f32 %v430, -29.428583
        %v687 = vmul.f32 %v431, -29.428583
        %v688 = vmul.f32 %v432, -29.428583
        %v689 = vmul.f32 %v433, -29.428583
        %v690 = vmul.f32 %v434, -29.428583
        %v691 = vmul.f32 %v435, -29.428583
        %v692 = vmul.f32 %v436, -29.428583
        %v693 = vmul.f32 %v437, -29.428583
        %v694 = vmul.f32 %v438, -29.428583
        %v695 = vmul.f32 %v439, -29.428583
        %v696 = vmul.f32 %v440, -29.428583
        %v697 = vmul.f32 %v441, -29.428583
        %v698 = vmul.f32 %v442, -29.428583
        %v699 = vmul.f32 %v443, -29.428583
        %v700 = vmul.f32 %v444, -29.428583
        %v701 = vmul.f32 %v445, -29.428583
        %v702 = vmul.f32 %v446, -29.428583
        %v703 = vadd.f32 %v671, 12317.372
        %v704 = vadd.f32 %v672, 12317.372
        %v705 = vadd.f32 %v673, 12317.372
        %v706 = vadd.f32 %v674, 12317.372
        %v707 = vadd.f32 %v675, 12317.372
        %v708 = vadd.f32 %v676, 12317.372
        %v709 = vadd.f32 %v677, 12317.372
        %v710 = vadd.f32 %v678, 12317.372
        %v711 = vadd.f32 %v679, 12317.372
        %v712 = vadd.f32 %v680, 12317.372
        %v713 = vadd.f32 %v681, 12317.372
        %v714 = vadd.f32 %v682, 12317.372
        %v715 = vadd.f32 %v683, 12317.372
        %v716 = vadd.f32 %v684, 12317.372
        %v717 = vadd.f32 %v685, 12317.372
        %v718 = vadd.f32 %v686, 12317.372
        %v719 = vadd.f32 %v687, 12317.372
        %v720 = vadd.f32 %v688, 12317.372
        %v721 = vadd.f32 %v689, 12317.372
        %v722 = vadd.f32 %v690, 12317.372
        %v723 = vadd.f32 %v691, 12317.372
        %v724 = vadd.f32 %v692, 12317.372
        %v725 = vadd.f32 %v693, 12317.372
        %v726 = vadd.f32 %v694, 12317.372
        %v727 = vadd.f32 %v695, 12317.372
        %v728 = vadd.f32 %v696, 12317.372
        %v729 = vadd.f32 %v697, 12317.372
        %v730 = vadd.f32 %v698, 12317.372
        %v731 = vadd.f32 %v699, 12317.372
        %v732 = vadd.f32 %v700, 12317.372
        %v733 = vadd.f32 %v701, 12317.372
        %v734 = vadd.f32 %v702, 12317.372
        %v735 = vmul.f32 %v415, %v703
        %v736 = vmul.f32 %v416, %v704
        %v737 = vmul.f32 %v417, %v705
        %v738 = vmul.f32 %v418, %v706
        %v739 = vmul.f32 %v419, %v707
        %v740 = vmul.f32 %v420, %v708
        %v741 = vmul.f32 %v421, %v709
        %v742 = vmul.f32 %v422, %v710
        %v743 = vmul.f32 %v423, %v711
        %v744 = vmul.f32 %v424, %v712
        %v745 = vmul.f32 %v425, %v713
        %v746 = vmul.f32 %v426, %v714
        %v747 = vmul.f32 %v427, %v715
        %v748 = vmul.f32 %v428, %v716
        %v749 = vmul.f32 %v429, %v717
        %v750 = vmul.f32 %v430, %v718
        %v751 = vmul.f32 %v431, %v719
        %v752 = vmul.f32 %v432, %v720
        %v753 = vmul.f32 %v433, %v721
        %v754 = vmul.f32 %v434, %v722
        %v755 = vmul.f32 %v435, %v723
        %v756 = vmul.f32 %v436, %v724
        %v757 = vmul.f32 %v437, %v725
        %v758 = vmul.f32 %v438, %v726
        %v759 = vmul.f32 %v439, %v727
        %v760 = vmul.f32 %v440, %v728
        %v761 = vmul.f32 %v441, %v729
        %v762 = vmul.f32 %v442, %v730
        %v763 = vmul.f32 %v443, %v731
        %v764 = vmul.f32 %v444, %v732
        %v765 = vmul.f32 %v445, %v733
        %v766 = vmul.f32 %v446, %v734
        %v767 = vadd.f32 %v735, -1784831.0
        %v768 = vadd.f32 %v736, -1784831.0
        %v769 = vadd.f32 %v737, -1784831.0
        %v770 = vadd.f32 %v738, -1784831.0
        %v771 = vadd.f32 %v739, -1784831.0
        %v772 = vadd.f32 %v740, -1784831.0
        %v773 = vadd.f32 %v741, -1784831.0
        %v774 = vadd.f32 %v742, -1784831.0
        %v775 = vadd.f32 %v743, -1784831.0
        %v776 = vadd.f32 %v744, -1784831.0
        %v777 = vadd.f32 %v745, -1784831.0
        %v778 = vadd.f32 %v746, -1784831.0
        %v779 = vadd.f32 %v747, -1784831.0
        %v780 = vadd.f32 %v748, -1784831.0
        %v781 = vadd.f32 %v749, -1784831.0
        %v782 = vadd.f32 %v750, -1784831.0
        %v783 = vadd.f32 %v751, -1784831.0
        %v784 = vadd.f32 %v752, -1784831.0
        %v785 = vadd.f32 %v753, -1784831.0
        %v786 = vadd.f32 %v754, -1784831.0
        %v787 = vadd.f32 %v755, -1784831.0
        %v788 = vadd.f32 %v756, -1784831.0
        %v789 = vadd.f32 %v757, -1784831.0
        %v790 = vadd.f32 %v758, -1784831.0
        %v791 = vadd.f32 %v759, -1784831.0
        %v792 = vadd.f32 %v760, -1784831.0
        %v793 = vadd.f32 %v761, -1784831.0
        %v794 = vadd.f32 %v762, -1784831.0
        %v795 = vadd.f32 %v763, -1784831.0
        %v796 = vadd.f32 %v764, -1784831.0
        %v797 = vadd.f32 %v765, -1784831.0
        %v798 = vadd.f32 %v766, -1784831.0
        %v799 = vmul.f32 %v415, %v767
        %v800 = vmul.f32 %v416, %v768
        %v801 = vmul.f32 %v417, %v769
        %v802 = vmul.f32 %v418, %v770
        %v803 = vmul.f32 %v419, %v771
        %v804 = vmul.f32 %v420, %v772
        %v805 = vmul.f32 %v421, %v773
        %v806 = vmul.f32 %v422, %v774
        %v807 = vmul.f32 %v423, %v775
        %v808 = vmul.f32 %v424, %v776
        %v809 = vmul.f32 %v425, %v777
        %v810 = vmul.f32 %v426, %v778
        %v811 = vmul.f32 %v427, %v779
        %v812 = vmul.f32 %v428, %v780
        %v813 = vmul.f32 %v429, %v781
        %v814 = vmul.f32 %v430, %v782
        %v815 = vmul.f32 %v431, %v783
        %v816 = vmul.f32 %v432, %v784
        %v817 = vmul.f32 %v433, %v785
        %v818 = vmul.f32 %v434, %v786
        %v819 = vmul.f32 %v435, %v787
        %v820 = vmul.f32 %v436, %v788
        %v821 = vmul.f32 %v437, %v789
        %v822 = vmul.f32 %v438, %v790
        %v823 = vmul.f32 %v439, %v791
        %v824 = vmul.f32 %v440, %v792
        %v825 = vmul.f32 %v441, %v793
        %v826 = vmul.f32 %v442, %v794
        %v827 = vmul.f32 %v443, %v795
        %v828 = vmul.f32 %v444, %v796
        %v829 = vmul.f32 %v445, %v797
        %v830 = vmul.f32 %v446, %v798
        %v831 = vadd.f32 %v799, 1.0370849e+08
        %v832 = vadd.f32 %v800, 1.0370849e+08
        %v833 = vadd.f32 %v801, 1.0370849e+08
        %v834 = vadd.f32 %v802, 1.0370849e+08
        %v835 = vadd.f32 %v803, 1.0370849e+08
        %v836 = vadd.f32 %v804, 1.0370849e+08
        %v837 = vadd.f32 %v805, 1.0370849e+08
        %v838 = vadd.f32 %v806, 1.0370849e+08
        %v839 = vadd.f32 %v807, 1.0370849e+08
        %v840 = vadd.f32 %v808, 1.0370849e+08
        %v841 = vadd.f32 %v809, 1.0370849e+08
        %v842 = vadd.f32 %v810, 1.0370849e+08
        %v843 = vadd.f32 %v811, 1.0370849e+08
        %v844 = vadd.f32 %v812, 1.0370849e+08
        %v845 = vadd.f32 %v813, 1.0370849e+08
        %v846 = vadd.f32 %v814, 1.0370849e+08
        %v847 = vadd.f32 %v815, 1.0370849e+08
        %v848 = vadd.f32 %v816, 1.0370849e+08
        %v849 = vadd.f32 %v817, 1.0370849e+08
        %v850 = vadd.f32 %v818, 1.0370849e+08
        %v851 = vadd.f32 %v819, 1.0370849e+08
        %v852 = vadd.f32 %v820, 1.0370849e+08
        %v853 = vadd.f32 %v821, 1.0370849e+08
        %v854 = vadd.f32 %v822, 1.0370849e+08
        %v855 = vadd.f32 %v823, 1.0370849e+08
        %v856 = vadd.f32 %v824, 1.0370849e+08
        %v857 = vadd.f32 %v825, 1.0370849e+08
        %v858 = vadd.f32 %v826, 1.0370849e+08
        %v859 = vadd.f32 %v827, 1.0370849e+08
        %v860 = vadd.f32 %v828, 1.0370849e+08
        %v861 = vadd.f32 %v829, 1.0370849e+08
        %v862 = vadd.f32 %v830, 1.0370849e+08
        %v863 = vmul.f32 %v415, %v831
        %v864 = vmul.f32 %v416, %v832
        %v865 = vmul.f32 %v417, %v833
        %v866 = vmul.f32 %v418, %v834
        %v867 = vmul.f32 %v419, %v835
        %v868 = vmul.f32 %v420, %v836
        %v869 = vmul.f32 %v421, %v837
        %v870 = vmul.f32 %v422, %v838
        %v871 = vmul.f32 %v423, %v839
        %v872 = vmul.f32 %v424, %v840
        %v873 = vmul.f32 %v425, %v841
        %v874 = vmul.f32 %v426, %v842
        %v875 = vmul.f32 %v427, %v843
        %v876 = vmul.f32 %v428, %v844
        %v877 = vmul.f32 %v429, %v845
        %v878 = vmul.f32 %v430, %v846
        %v879 = vmul.f32 %v431, %v847
        %v880 = vmul.f32 %v432, %v848
        %v881 = vmul.f32 %v433, %v849
        %v882 = vmul.f32 %v434, %v850
        %v883 = vmul.f32 %v435, %v851
        %v884 = vmul.f32 %v436, %v852
        %v885 = vmul.f32 %v437, %v853
        %v886 = vmul.f32 %v438, %v854
        %v887 = vmul.f32 %v439, %v855
        %v888 = vmul.f32 %v440, %v856
        %v889 = vmul.f32 %v441, %v857
        %v890 = vmul.f32 %v442, %v858
        %v891 = vmul.f32 %v443, %v859
        %v892 = vmul.f32 %v444, %v860
        %v893 = vmul.f32 %v445, %v861
        %v894 = vmul.f32 %v446, %v862
        %v895 = vadd.f32 %v863, -2.1267223e+09
        %v896 = vadd.f32 %v864, -2.1267223e+09
        %v897 = vadd.f32 %v865, -2.1267223e+09
        %v898 = vadd.f32 %v866, -2.1267223e+09
        %v899 = vadd.f32 %v867, -2.1267223e+09
        %v900 = vadd.f32 %v868, -2.1267223e+09
        %v901 = vadd.f32 %v869, -2.1267223e+09
        %v902 = vadd.f32 %v870, -2.1267223e+09
        %v903 = vadd.f32 %v871, -2.1267223e+09
        %v904 = vadd.f32 %v872, -2.1267223e+09
        %v905 = vadd.f32 %v873, -2.1267223e+09
        %v906 = vadd.f32 %v874, -2.1267223e+09
        %v907 = vadd.f32 %v875, -2.1267223e+09
        %v908 = vadd.f32 %v876, -2.1267223e+09
        %v909 = vadd.f32 %v877, -2.1267223e+09
        %v910 = vadd.f32 %v878, -2.1267223e+09
        %v911 = vadd.f32 %v879, -2.1267223e+09
        %v912 = vadd.f32 %v880, -2.1267223e+09
        %v913 = vadd.f32 %v881, -2.1267223e+09
        %v914 = vadd.f32 %v882, -2.1267223e+09
        %v915 = vadd.f32 %v883, -2.1267223e+09
        %v916 = vadd.f32 %v884, -2.1267223e+09
        %v917 = vadd.f32 %v885, -2.1267223e+09
        %v918 = vadd.f32 %v886, -2.1267223e+09
        %v919 = vadd.f32 %v887, -2.1267223e+09
        %v920 = vadd.f32 %v888, -2.1267223e+09
        %v921 = vadd.f32 %v889, -2.1267223e+09
        %v922 = vadd.f32 %v890, -2.1267223e+09
        %v923 = vadd.f32 %v891, -2.1267223e+09
        %v924 = vadd.f32 %v892, -2.1267223e+09
        %v925 = vadd.f32 %v893, -2.1267223e+09
        %v926 = vadd.f32 %v894, -2.1267223e+09
        %v927 = vmul.f32 %v415, %v895
        %v928 = vmul.f32 %v416, %v896
        %v929 = vmul.f32 %v417, %v897
        %v930 = vmul.f32 %v418, %v898
        %v931 = vmul.f32 %v419, %v899
        %v932 = vmul.f32 %v420, %v900
        %v933 = vmul.f32 %v421, %v901
        %v934 = vmul.f32 %v422, %v902
        %v935 = vmul.f32 %v423, %v903
        %v936 = vmul.f32 %v424, %v904
        %v937 = vmul.f32 %v425, %v905
        %v938 = vmul.f32 %v426, %v906
        %v939 = vmul.f32 %v427, %v907
        %v940 = vmul.f32 %v428, %v908
        %v941 = vmul.f32 %v429, %v909
        %v942 = vmul.f32 %v430, %v910
        %v943 = vmul.f32 %v431, %v911
        %v944 = vmul.f32 %v432, %v912
        %v945 = vmul.f32 %v433, %v913
        %v946 = vmul.f32 %v434, %v914
        %v947 = vmul.f32 %v435, %v915
        %v948 = vmul.f32 %v436, %v916
        %v949 = vmul.f32 %v437, %v917
        %v950 = vmul.f32 %v438, %v918
        %v951 = vmul.f32 %v439, %v919
        %v952 = vmul.f32 %v440, %v920
        %v953 = vmul.f32 %v441, %v921
        %v954 = vmul.f32 %v442, %v922
        %v955 = vmul.f32 %v443, %v923
        %v956 = vmul.f32 %v444, %v924
        %v957 = vmul.f32 %v445, %v925
        %v958 = vmul.f32 %v446, %v926
        %v959 = vadd.f32 %v927, 9.16231e+09
        %v960 = vadd.f32 %v928, 9.16231e+09
        %v961 = vadd.f32 %v929, 9.16231e+09
        %v962 = vadd.f32 %v930, 9.16231e+09
        %v963 = vadd.f32 %v931, 9.16231e+09
        %v964 = vadd.f32 %v932, 9.16231e+09
        %v965 = vadd.f32 %v933, 9.16231e+09
        %v966 = vadd.f32 %v934, 9.16231e+09
        %v967 = vadd.f32 %v935, 9.16231e+09
        %v968 = vadd.f32 %v936, 9.16231e+09
        %v969 = vadd.f32 %v937, 9.16231e+09
        %v970 = vadd.f32 %v938, 9.16231e+09
        %v971 = vadd.f32 %v939, 9.16231e+09
        %v972 = vadd.f32 %v940, 9.16231e+09
        %v973 = vadd.f32 %v941, 9.16231e+09
        %v974 = vadd.f32 %v942, 9.16231e+09
        %v975 = vadd.f32 %v943, 9.16231e+09
        %v976 = vadd.f32 %v944, 9.16231e+09
        %v977 = vadd.f32 %v945, 9.16231e+09
        %v978 = vadd.f32 %v946, 9.16231e+09
        %v979 = vadd.f32 %v947, 9.16231e+09
        %v980 = vadd.f32 %v948, 9.16231e+09
        %v981 = vadd.f32 %v949, 9.16231e+09
        %v982 = vadd.f32 %v950, 9.16231e+09
        %v983 = vadd.f32 %v951, 9.16231e+09
        %v984 = vadd.f32 %v952, 9.16231e+09
        %v985 = vadd.f32 %v953, 9.16231e+09
        %v986 = vadd.f32 %v954, 9.16231e+09
        %v987 = vadd.f32 %v955, 9.16231e+09
        %v988 = vadd.f32 %v956, 9.16231e+09
        %v989 = vadd.f32 %v957, 9.16231e+09
        %v990 = vadd.f32 %v958, 9.16231e+09
        %v991 = vadd.f32 %v415, 267.85327
        %v992 = vadd.f32 %v416, 267.85327
        %v993 = vadd.f32 %v417, 267.85327
        %v994 = vadd.f32 %v418, 267.85327
        %v995 = vadd.f32 %v419, 267.85327
        %v996 = vadd.f32 %v420, 267.85327
        %v997 = vadd.f32 %v421, 267.85327
        %v998 = vadd.f32 %v422, 267.85327
        %v999 = vadd.f32 %v423, 267.85327
        %v1000 = vadd.f32 %v424, 267.85327
        %v1001 = vadd.f32 %v425, 267.85327
        %v1002 = vadd.f32 %v426, 267.85327
        %v1003 = vadd.f32 %v427, 267.85327
        %v1004 = vadd.f32 %v428, 267.85327
        %v1005 = vadd.f32 %v429, 267.85327
        %v1006 = vadd.f32 %v430, 267.85327
        %v1007 = vadd.f32 %v431, 267.85327
        %v1008 = vadd.f32 %v432, 267.85327
        %v1009 = vadd.f32 %v433, 267.85327
        %v1010 = vadd.f32 %v434, 267.85327
        %v1011 = vadd.f32 %v435, 267.85327
        %v1012 = vadd.f32 %v436, 267.85327
        %v1013 = vadd.f32 %v437, 267.85327
        %v1014 = vadd.f32 %v438, 267.85327
        %v1015 = vadd.f32 %v439, 267.85327
        %v1016 = vadd.f32 %v440, 267.85327
        %v1017 = vadd.f32 %v441, 267.85327
        %v1018 = vadd.f32 %v442, 267.85327
        %v1019 = vadd.f32 %v443, 267.85327
        %v1020 = vadd.f32 %v444, 267.85327
        %v1021 = vadd.f32 %v445, 267.85327
        %v1022 = vadd.f32 %v446, 267.85327
        %v1023 = vmul.f32 %v415, %v991
        %v1024 = vmul.f32 %v416, %v992
        %v1025 = vmul.f32 %v417, %v993
        %v1026 = vmul.f32 %v418, %v994
        %v1027 = vmul.f32 %v419, %v995
        %v1028 = vmul.f32 %v420, %v996
        %v1029 = vmul.f32 %v421, %v997
        %v1030 = vmul.f32 %v422, %v998
        %v1031 = vmul.f32 %v423, %v999
        %v1032 = vmul.f32 %v424, %v1000
        %v1033 = vmul.f32 %v425, %v1001
        %v1034 = vmul.f32 %v426, %v1002
        %v1035 = vmul.f32 %v427, %v1003
        %v1036 = vmul.f32 %v428, %v1004
        %v1037 = vmul.f32 %v429, %v1005
        %v1038 = vmul.f32 %v430, %v1006
        %v1039 = vmul.f32 %v431, %v1007
        %v1040 = vmul.f32 %v432, %v1008
        %v1041 = vmul.f32 %v433, %v1009
        %v1042 = vmul.f32 %v434, %v1010
        %v1043 = vmul.f32 %v435, %v1011
        %v1044 = vmul.f32 %v436, %v1012
        %v1045 = vmul.f32 %v437, %v1013
        %v1046 = vmul.f32 %v438, %v1014
        %v1047 = vmul.f32 %v439, %v1015
        %v1048 = vmul.f32 %v440, %v1016
        %v1049 = vmul.f32 %v441, %v1017
        %v1050 = vmul.f32 %v442, %v1018
        %v1051 = vmul.f32 %v443, %v1019
        %v1052 = vmul.f32 %v444, %v1020
        %v1053 = vmul.f32 %v445, %v1021
        %v1054 = vmul.f32 %v446, %v1022
        %v1055 = vadd.f32 %v1023, 59272.65
        %v1056 = vadd.f32 %v1024, 59272.65
        %v1057 = vadd.f32 %v1025, 59272.65
        %v1058 = vadd.f32 %v1026, 59272.65
        %v1059 = vadd.f32 %v1027, 59272.65
        %v1060 = vadd.f32 %v1028, 59272.65
        %v1061 = vadd.f32 %v1029, 59272.65
        %v1062 = vadd.f32 %v1030, 59272.65
        %v1063 = vadd.f32 %v1031, 59272.65
        %v1064 = vadd.f32 %v1032, 59272.65
        %v1065 = vadd.f32 %v1033, 59272.65
        %v1066 = vadd.f32 %v1034, 59272.65
        %v1067 = vadd.f32 %v1035, 59272.65
        %v1068 = vadd.f32 %v1036, 59272.65
        %v1069 = vadd.f32 %v1037, 59272.65
        %v1070 = vadd.f32 %v1038, 59272.65
        %v1071 = vadd.f32 %v1039, 59272.65
        %v1072 = vadd.f32 %v1040, 59272.65
        %v1073 = vadd.f32 %v1041, 59272.65
        %v1074 = vadd.f32 %v1042, 59272.65
        %v1075 = vadd.f32 %v1043, 59272.65
        %v1076 = vadd.f32 %v1044, 59272.65
        %v1077 = vadd.f32 %v1045, 59272.65
        %v1078 = vadd.f32 %v1046, 59272.65
        %v1079 = vadd.f32 %v1047, 59272.65
        %v1080 = vadd.f32 %v1048, 59272.65
        %v1081 = vadd.f32 %v1049, 59272.65
        %v1082 = vadd.f32 %v1050, 59272.65
        %v1083 = vadd.f32 %v1051, 59272.65
        %v1084 = vadd.f32 %v1052, 59272.65
        %v1085 = vadd.f32 %v1053, 59272.65
        %v1086 = vadd.f32 %v1054, 59272.65
        %v1087 = vmul.f32 %v415, %v1055
        %v1088 = vmul.f32 %v416, %v1056
        %v1089 = vmul.f32 %v417, %v1057
        %v1090 = vmul.f32 %v418, %v1058
        %v1091 = vmul.f32 %v419, %v1059
        %v1092 = vmul.f32 %v420, %v1060
        %v1093 = vmul.f32 %v421, %v1061
        %v1094 = vmul.f32 %v422, %v1062
        %v1095 = vmul.f32 %v423, %v1063
        %v1096 = vmul.f32 %v424, %v1064
        %v1097 = vmul.f32 %v425, %v1065
        %v1098 = vmul.f32 %v426, %v1066
        %v1099 = vmul.f32 %v427, %v1067
        %v1100 = vmul.f32 %v428, %v1068
        %v1101 = vmul.f32 %v429, %v1069
        %v1102 = vmul.f32 %v430, %v1070
        %v1103 = vmul.f32 %v431, %v1071
        %v1104 = vmul.f32 %v432, %v1072
        %v1105 = vmul.f32 %v433, %v1073
        %v1106 = vmul.f32 %v434, %v1074
        %v1107 = vmul.f32 %v435, %v1075
        %v1108 = vmul.f32 %v436, %v1076
        %v1109 = vmul.f32 %v437, %v1077
        %v1110 = vmul.f32 %v438, %v1078
        %v1111 = vmul.f32 %v439, %v1079
        %v1112 = vmul.f32 %v440, %v1080
        %v1113 = vmul.f32 %v441, %v1081
        %v1114 = vmul.f32 %v442, %v1082
        %v1115 = vmul.f32 %v443, %v1083
        %v1116 = vmul.f32 %v444, %v1084
        %v1117 = vmul.f32 %v445, %v1085
        %v1118 = vmul.f32 %v446, %v1086
        %v1119 = vadd.f32 %v1087, 9494681.0
        %v1120 = vadd.f32 %v1088, 9494681.0
        %v1121 = vadd.f32 %v1089, 9494681.0
        %v1122 = vadd.f32 %v1090, 9494681.0
        %v1123 = vadd.f32 %v1091, 9494681.0
        %v1124 = vadd.f32 %v1092, 9494681.0
        %v1125 = vadd.f32 %v1093, 9494681.0
        %v1126 = vadd.f32 %v1094, 9494681.0
        %v1127 = vadd.f32 %v1095, 9494681.0
        %v1128 = vadd.f32 %v1096, 9494681.0
        %v1129 = vadd.f32 %v1097, 9494681.0
        %v1130 = vadd.f32 %v1098, 9494681.0
        %v1131 = vadd.f32 %v1099, 9494681.0
        %v1132 = vadd.f32 %v1100, 9494681.0
        %v1133 = vadd.f32 %v1101, 9494681.0
        %v1134 = vadd.f32 %v1102, 9494681.0
        %v1135 = vadd.f32 %v1103, 9494681.0
        %v1136 = vadd.f32 %v1104, 9494681.0
        %v1137 = vadd.f32 %v1105, 9494681.0
        %v1138 = vadd.f32 %v1106, 9494681.0
        %v1139 = vadd.f32 %v1107, 9494681.0
        %v1140 = vadd.f32 %v1108, 9494681.0
        %v1141 = vadd.f32 %v1109, 9494681.0
        %v1142 = vadd.f32 %v1110, 9494681.0
        %v1143 = vadd.f32 %v1111, 9494681.0
        %v1144 = vadd.f32 %v1112, 9494681.0
        %v1145 = vadd.f32 %v1113, 9494681.0
        %v1146 = vadd.f32 %v1114, 9494681.0
        %v1147 = vadd.f32 %v1115, 9494681.0
        %v1148 = vadd.f32 %v1116, 9494681.0
        %v1149 = vadd.f32 %v1117, 9494681.0
        %v1150 = vadd.f32 %v1118, 9494681.0
        %v1151 = vmul.f32 %v415, %v1119
        %v1152 = vmul.f32 %v416, %v1120
        %v1153 = vmul.f32 %v417, %v1121
        %v1154 = vmul.f32 %v418, %v1122
        %v1155 = vmul.f32 %v419, %v1123
        %v1156 = vmul.f32 %v420, %v1124
        %v1157 = vmul.f32 %v421, %v1125
        %v1158 = vmul.f32 %v422, %v1126
        %v1159 = vmul.f32 %v423, %v1127
        %v1160 = vmul.f32 %v424, %v1128
        %v1161 = vmul.f32 %v425, %v1129
        %v1162 = vmul.f32 %v426, %v1130
        %v1163 = vmul.f32 %v427, %v1131
        %v1164 = vmul.f32 %v428, %v1132
        %v1165 = vmul.f32 %v429, %v1133
        %v1166 = vmul.f32 %v430, %v1134
        %v1167 = vmul.f32 %v431, %v1135
        %v1168 = vmul.f32 %v432, %v1136
        %v1169 = vmul.f32 %v433, %v1137
        %v1170 = vmul.f32 %v434, %v1138
        %v1171 = vmul.f32 %v435, %v1139
        %v1172 = vmul.f32 %v436, %v1140
        %v1173 = vmul.f32 %v437, %v1141
        %v1174 = vmul.f32 %v438, %v1142
        %v1175 = vmul.f32 %v439, %v1143
        %v1176 = vmul.f32 %v440, %v1144
        %v1177 = vmul.f32 %v441, %v1145
        %v1178 = vmul.f32 %v442, %v1146
        %v1179 = vmul.f32 %v443, %v1147
        %v1180 = vmul.f32 %v444, %v1148
        %v1181 = vmul.f32 %v445, %v1149
        %v1182 = vmul.f32 %v446, %v1150
        %v1183 = vadd.f32 %v1151, 1.029533e+09
        %v1184 = vadd.f32 %v1152, 1.029533e+09
        %v1185 = vadd.f32 %v1153, 1.029533e+09
        %v1186 = vadd.f32 %v1154, 1.029533e+09
        %v1187 = vadd.f32 %v1155, 1.029533e+09
        %v1188 = vadd.f32 %v1156, 1.029533e+09
        %v1189 = vadd.f32 %v1157, 1.029533e+09
        %v1190 = vadd.f32 %v1158, 1.029533e+09
        %v1191 = vadd.f32 %v1159, 1.029533e+09
        %v1192 = vadd.f32 %v1160, 1.029533e+09
        %v1193 = vadd.f32 %v1161, 1.029533e+09
        %v1194 = vadd.f32 %v1162, 1.029533e+09
        %v1195 = vadd.f32 %v1163, 1.029533e+09
        %v1196 = vadd.f32 %v1164, 1.029533e+09
        %v1197 = vadd.f32 %v1165, 1.029533e+09
        %v1198 = vadd.f32 %v1166, 1.029533e+09
        %v1199 = vadd.f32 %v1167, 1.029533e+09
        %v1200 = vadd.f32 %v1168, 1.029533e+09
        %v1201 = vadd.f32 %v1169, 1.029533e+09
        %v1202 = vadd.f32 %v1170, 1.029533e+09
        %v1203 = vadd.f32 %v1171, 1.029533e+09
        %v1204 = vadd.f32 %v1172, 1.029533e+09
        %v1205 = vadd.f32 %v1173, 1.029533e+09
        %v1206 = vadd.f32 %v1174, 1.029533e+09
        %v1207 = vadd.f32 %v1175, 1.029533e+09
        %v1208 = vadd.f32 %v1176, 1.029533e+09
        %v1209 = vadd.f32 %v1177, 1.029533e+09
        %v1210 = vadd.f32 %v1178, 1.029533e+09
        %v1211 = vadd.f32 %v1179, 1.029533e+09
        %v1212 = vadd.f32 %v1180, 1.029533e+09
        %v1213 = vadd.f32 %v1181, 1.029533e+09
        %v1214 = vadd.f32 %v1182, 1.029533e+09
        %v1215 = vmul.f32 %v415, %v1183
        %v1216 = vmul.f32 %v416, %v1184
        %v1217 = vmul.f32 %v417, %v1185
        %v1218 = vmul.f32 %v418, %v1186
        %v1219 = vmul.f32 %v419, %v1187
        %v1220 = vmul.f32 %v420, %v1188
        %v1221 = vmul.f32 %v421, %v1189
        %v1222 = vmul.f32 %v422, %v1190
        %v1223 = vmul.f32 %v423, %v1191
        %v1224 = vmul.f32 %v424, %v1192
        %v1225 = vmul.f32 %v425, %v1193
        %v1226 = vmul.f32 %v426, %v1194
        %v1227 = vmul.f32 %v427, %v1195
        %v1228 = vmul.f32 %v428, %v1196
        %v1229 = vmul.f32 %v429, %v1197
        %v1230 = vmul.f32 %v430, %v1198
        %v1231 = vmul.f32 %v431, %v1199
        %v1232 = vmul.f32 %v432, %v1200
        %v1233 = vmul.f32 %v433, %v1201
        %v1234 = vmul.f32 %v434, %v1202
        %v1235 = vmul.f32 %v435, %v1203
        %v1236 = vmul.f32 %v436, %v1204
        %v1237 = vmul.f32 %v437, %v1205
        %v1238 = vmul.f32 %v438, %v1206
        %v1239 = vmul.f32 %v439, %v1207
        %v1240 = vmul.f32 %v440, %v1208
        %v1241 = vmul.f32 %v441, %v1209
        %v1242 = vmul.f32 %v442, %v1210
        %v1243 = vmul.f32 %v443, %v1211
        %v1244 = vmul.f32 %v444, %v1212
        %v1245 = vmul.f32 %v445, %v1213
        %v1246 = vmul.f32 %v446, %v1214
        %v1247 = vadd.f32 %v1215, 5.756849e+10
        %v1248 = vadd.f32 %v1216, 5.756849e+10
        %v1249 = vadd.f32 %v1217, 5.756849e+10
        %v1250 = vadd.f32 %v1218, 5.756849e+10
        %v1251 = vadd.f32 %v1219, 5.756849e+10
        %v1252 = vadd.f32 %v1220, 5.756849e+10
        %v1253 = vadd.f32 %v1221, 5.756849e+10
        %v1254 = vadd.f32 %v1222, 5.756849e+10
        %v1255 = vadd.f32 %v1223, 5.756849e+10
        %v1256 = vadd.f32 %v1224, 5.756849e+10
        %v1257 = vadd.f32 %v1225, 5.756849e+10
        %v1258 = vadd.f32 %v1226, 5.756849e+10
        %v1259 = vadd.f32 %v1227, 5.756849e+10
        %v1260 = vadd.f32 %v1228, 5.756849e+10
        %v1261 = vadd.f32 %v1229, 5.756849e+10
        %v1262 = vadd.f32 %v1230, 5.756849e+10
        %v1263 = vadd.f32 %v1231, 5.756849e+10
        %v1264 = vadd.f32 %v1232, 5.756849e+10
        %v1265 = vadd.f32 %v1233, 5.756849e+10
        %v1266 = vadd.f32 %v1234, 5.756849e+10
        %v1267 = vadd.f32 %v1235, 5.756849e+10
        %v1268 = vadd.f32 %v1236, 5.756849e+10
        %v1269 = vadd.f32 %v1237, 5.756849e+10
        %v1270 = vadd.f32 %v1238, 5.756849e+10
        %v1271 = vadd.f32 %v1239, 5.756849e+10
        %v1272 = vadd.f32 %v1240, 5.756849e+10
        %v1273 = vadd.f32 %v1241, 5.756849e+10
        %v1274 = vadd.f32 %v1242, 5.756849e+10
        %v1275 = vadd.f32 %v1243, 5.756849e+10
        %v1276 = vadd.f32 %v1244, 5.756849e+10
        %v1277 = vadd.f32 %v1245, 5.756849e+10
        %v1278 = vadd.f32 %v1246, 5.756849e+10
        %v1279 = vrcp.pop %v1247
        %v1280 = vrcp.pop %v1248
        %v1281 = vrcp.pop %v1249
        %v1282 = vrcp.pop %v1250
        %v1283 = vrcp.pop %v1251
        %v1284 = vrcp.pop %v1252
        %v1285 = vrcp.pop %v1253
        %v1286 = vrcp.pop %v1254
        %v1287 = vrcp.pop %v1255
        %v1288 = vrcp.pop %v1256
        %v1289 = vrcp.pop %v1257
        %v1290 = vrcp.pop %v1258
        %v1291 = vrcp.pop %v1259
        %v1292 = vrcp.pop %v1260
        %v1293 = vrcp.pop %v1261
        %v1294 = vrcp.pop %v1262
        %v1295 = vrcp.pop %v1263
        %v1296 = vrcp.pop %v1264
        %v1297 = vrcp.pop %v1265
        %v1298 = vrcp.pop %v1266
        %v1299 = vrcp.pop %v1267
        %v1300 = vrcp.pop %v1268
        %v1301 = vrcp.pop %v1269
        %v1302 = vrcp.pop %v1270
        %v1303 = vrcp.pop %v1271
        %v1304 = vrcp.pop %v1272
        %v1305 = vrcp.pop %v1273
        %v1306 = vrcp.pop %v1274
        %v1307 = vrcp.pop %v1275
        %v1308 = vrcp.pop %v1276
        %v1309 = vrcp.pop %v1277
        %v1310 = vrcp.pop %v1278
        %v1311 = vmul.f32 %v959, %v1279
        %v1312 = vmul.f32 %v960, %v1280
        %v1313 = vmul.f32 %v961, %v1281
        %v1314 = vmul.f32 %v962, %v1282
        %v1315 = vmul.f32 %v963, %v1283
        %v1316 = vmul.f32 %v964, %v1284
        %v1317 = vmul.f32 %v965, %v1285
        %v1318 = vmul.f32 %v966, %v1286
        %v1319 = vmul.f32 %v967, %v1287
        %v1320 = vmul.f32 %v968, %v1288
        %v1321 = vmul.f32 %v969, %v1289
        %v1322 = vmul.f32 %v970, %v1290
        %v1323 = vmul.f32 %v971, %v1291
        %v1324 = vmul.f32 %v972, %v1292
        %v1325 = vmul.f32 %v973, %v1293
        %v1326 = vmul.f32 %v974, %v1294
        %v1327 = vmul.f32 %v975, %v1295
        %v1328 = vmul.f32 %v976, %v1296
        %v1329 = vmul.f32 %v977, %v1297
        %v1330 = vmul.f32 %v978, %v1298
        %v1331 = vmul.f32 %v979, %v1299
        %v1332 = vmul.f32 %v980, %v1300
        %v1333 = vmul.f32 %v981, %v1301
        %v1334 = vmul.f32 %v982, %v1302
        %v1335 = vmul.f32 %v983, %v1303
        %v1336 = vmul.f32 %v984, %v1304
        %v1337 = vmul.f32 %v985, %v1305
        %v1338 = vmul.f32 %v986, %v1306
        %v1339 = vmul.f32 %v987, %v1307
        %v1340 = vmul.f32 %v988, %v1308
        %v1341 = vmul.f32 %v989, %v1309
        %v1342 = vmul.f32 %v990, %v1310
        %v1343 = vmax.f32 %v453, 8.0
        %v1344 = vmax.f32 %v460, 8.0
        %v1345 = vmax.f32 %v467, 8.0
        %v1346 = vmax.f32 %v474, 8.0
        %v1347 = vmax.f32 %v481, 8.0
        %v1348 = vmax.f32 %v488, 8.0
        %v1349 = vmax.f32 %v495, 8.0
        %v1350 = vmax.f32 %v502, 8.0
        %v1351 = vmax.f32 %v509, 8.0
        %v1352 = vmax.f32 %v516, 8.0
        %v1353 = vmax.f32 %v523, 8.0
        %v1354 = vmax.f32 %v530, 8.0
        %v1355 = vmax.f32 %v537, 8.0
        %v1356 = vmax.f32 %v544, 8.0
        %v1357 = vmax.f32 %v551, 8.0
        %v1358 = vmax.f32 %v558, 8.0
        %v1359 = vmax.f32 %v565, 8.0
        %v1360 = vmax.f32 %v572, 8.0
        %v1361 = vmax.f32 %v579, 8.0
        %v1362 = vmax.f32 %v586, 8.0
        %v1363 = vmax.f32 %v593, 8.0
        %v1364 = vmax.f32 %v600, 8.0
        %v1365 = vmax.f32 %v607, 8.0
        %v1366 = vmax.f32 %v614, 8.0
        %v1367 = vmax.f32 %v621, 8.0
        %v1368 = vmax.f32 %v628, 8.0
        %v1369 = vmax.f32 %v635, 8.0
        %v1370 = vmax.f32 %v642, 8.0
        %v1371 = vmax.f32 %v649, 8.0
        %v1372 = vmax.f32 %v656, 8.0
        %v1373 = vmax.f32 %v663, 8.0
        %v1374 = vmax.f32 %v670, 8.0
        %v1375 = vrsqrt.pop %v1343
        %v1376 = vrsqrt.pop %v1344
        %v1377 = vrsqrt.pop %v1345
        %v1378 = vrsqrt.pop %v1346
        %v1379 = vrsqrt.pop %v1347
        %v1380 = vrsqrt.pop %v1348
        %v1381 = vrsqrt.pop %v1349
        %v1382 = vrsqrt.pop %v1350
        %v1383 = vrsqrt.pop %v1351
        %v1384 = vrsqrt.pop %v1352
        %v1385 = vrsqrt.pop %v1353
        %v1386 = vrsqrt.pop %v1354
        %v1387 = vrsqrt.pop %v1355
        %v1388 = vrsqrt.pop %v1356
        %v1389 = vrsqrt.pop %v1357
        %v1390 = vrsqrt.pop %v1358
        %v1391 = vrsqrt.pop %v1359
        %v1392 = vrsqrt.pop %v1360
        %v1393 = vrsqrt.pop %v1361
        %v1394 = vrsqrt.pop %v1362
        %v1395 = vrsqrt.pop %v1363
        %v1396 = vrsqrt.pop %v1364
        %v1397 = vrsqrt.pop %v1365
        %v1398 = vrsqrt.pop %v1366
        %v1399 = vrsqrt.pop %v1367
        %v1400 = vrsqrt.pop %v1368
        %v1401 = vrsqrt.pop %v1369
        %v1402 = vrsqrt.pop %v1370
        %v1403 = vrsqrt.pop %v1371
        %v1404 = vrsqrt.pop %v1372
        %v1405 = vrsqrt.pop %v1373
        %v1406 = vrsqrt.pop %v1374
        %v1407 = vmul.f32 %v1375, %v1375
        %v1408 = vmul.f32 %v1376, %v1376
        %v1409 = vmul.f32 %v1377, %v1377
        %v1410 = vmul.f32 %v1378, %v1378
        %v1411 = vmul.f32 %v1379, %v1379
        %v1412 = vmul.f32 %v1380, %v1380
        %v1413 = vmul.f32 %v1381, %v1381
        %v1414 = vmul.f32 %v1382, %v1382
        %v1415 = vmul.f32 %v1383, %v1383
        %v1416 = vmul.f32 %v1384, %v1384
        %v1417 = vmul.f32 %v1385, %v1385
        %v1418 = vmul.f32 %v1386, %v1386
        %v1419 = vmul.f32 %v1387, %v1387
        %v1420 = vmul.f32 %v1388, %v1388
        %v1421 = vmul.f32 %v1389, %v1389
        %v1422 = vmul.f32 %v1390, %v1390
        %v1423 = vmul.f32 %v1391, %v1391
        %v1424 = vmul.f32 %v1392, %v1392
        %v1425 = vmul.f32 %v1393, %v1393
        %v1426 = vmul.f32 %v1394, %v1394
        %v1427 = vmul.f32 %v1395, %v1395
        %v1428 = vmul.f32 %v1396, %v1396
        %v1429 = vmul.f32 %v1397, %v1397
        %v1430 = vmul.f32 %v1398, %v1398
        %v1431 = vmul.f32 %v1399, %v1399
        %v1432 = vmul.f32 %v1400, %v1400
        %v1433 = vmul.f32 %v1401, %v1401
        %v1434 = vmul.f32 %v1402, %v1402
        %v1435 = vmul.f32 %v1403, %v1403
        %v1436 = vmul.f32 %v1404, %v1404
        %v1437 = vmul.f32 %v1405, %v1405
        %v1438 = vmul.f32 %v1406, %v1406
        %v1439 = vmul.f32 %v1407, 8.0
        %v1440 = vmul.f32 %v1408, 8.0
        %v1441 = vmul.f32 %v1409, 8.0
        %v1442 = vmul.f32 %v1410, 8.0
        %v1443 = vmul.f32 %v1411, 8.0
        %v1444 = vmul.f32 %v1412, 8.0
        %v1445 = vmul.f32 %v1413, 8.0
        %v1446 = vmul.f32 %v1414, 8.0
        %v1447 = vmul.f32 %v1415, 8.0
        %v1448 = vmul.f32 %v1416, 8.0
        %v1449 = vmul.f32 %v1417, 8.0
        %v1450 = vmul.f32 %v1418, 8.0
        %v1451 = vmul.f32 %v1419, 8.0
        %v1452 = vmul.f32 %v1420, 8.0
        %v1453 = vmul.f32 %v1421, 8.0
        %v1454 = vmul.f32 %v1422, 8.0
        %v1455 = vmul.f32 %v1423, 8.0
        %v1456 = vmul.f32 %v1424, 8.0
        %v1457 = vmul.f32 %v1425, 8.0
        %v1458 = vmul.f32 %v1426, 8.0
        %v1459 = vmul.f32 %v1427, 8.0
        %v1460 = vmul.f32 %v1428, 8.0
        %v1461 = vmul.f32 %v1429, 8.0
        %v1462 = vmul.f32 %v1430, 8.0
        %v1463 = vmul.f32 %v1431, 8.0
        %v1464 = vmul.f32 %v1432, 8.0
        %v1465 = vmul.f32 %v1433, 8.0
        %v1466 = vmul.f32 %v1434, 8.0
        %v1467 = vmul.f32 %v1435, 8.0
        %v1468 = vmul.f32 %v1436, 8.0
        %v1469 = vmul.f32 %v1437, 8.0
        %v1470 = vmul.f32 %v1438, 8.0
        %v1471 = vmul.f32 %v1439, %v1439
        %v1472 = vmul.f32 %v1440, %v1440
        %v1473 = vmul.f32 %v1441, %v1441
        %v1474 = vmul.f32 %v1442, %v1442
        %v1475 = vmul.f32 %v1443, %v1443
        %v1476 = vmul.f32 %v1444, %v1444
        %v1477 = vmul.f32 %v1445, %v1445
        %v1478 = vmul.f32 %v1446, %v1446
        %v1479 = vmul.f32 %v1447, %v1447
        %v1480 = vmul.f32 %v1448, %v1448
        %v1481 = vmul.f32 %v1449, %v1449
        %v1482 = vmul.f32 %v1450, %v1450
        %v1483 = vmul.f32 %v1451, %v1451
        %v1484 = vmul.f32 %v1452, %v1452
        %v1485 = vmul.f32 %v1453, %v1453
        %v1486 = vmul.f32 %v1454, %v1454
        %v1487 = vmul.f32 %v1455, %v1455
        %v1488 = vmul.f32 %v1456, %v1456
        %v1489 = vmul.f32 %v1457, %v1457
        %v1490 = vmul.f32 %v1458, %v1458
        %v1491 = vmul.f32 %v1459, %v1459
        %v1492 = vmul.f32 %v1460, %v1460
        %v1493 = vmul.f32 %v1461, %v1461
        %v1494 = vmul.f32 %v1462, %v1462
        %v1495 = vmul.f32 %v1463, %v1463
        %v1496 = vmul.f32 %v1464, %v1464
        %v1497 = vmul.f32 %v1465, %v1465
        %v1498 = vmul.f32 %v1466, %v1466
        %v1499 = vmul.f32 %v1467, %v1467
        %v1500 = vmul.f32 %v1468, %v1468
        %v1501 = vmul.f32 %v1469, %v1469
        %v1502 = vmul.f32 %v1470, %v1470
        %v1503 = vsub.f32 %v1343, 0.7853982
        %v1504 = vsub.f32 %v1344, 0.7853982
        %v1505 = vsub.f32 %v1345, 0.7853982
        %v1506 = vsub.f32 %v1346, 0.7853982
        %v1507 = vsub.f32 %v1347, 0.7853982
        %v1508 = vsub.f32 %v1348, 0.7853982
        %v1509 = vsub.f32 %v1349, 0.7853982
        %v1510 = vsub.f32 %v1350, 0.7853982
        %v1511 = vsub.f32 %v1351, 0.7853982
        %v1512 = vsub.f32 %v1352, 0.7853982
        %v1513 = vsub.f32 %v1353, 0.7853982
        %v1514 = vsub.f32 %v1354, 0.7853982
        %v1515 = vsub.f32 %v1355, 0.7853982
        %v1516 = vsub.f32 %v1356, 0.7853982
        %v1517 = vsub.f32 %v1357, 0.7853982
        %v1518 = vsub.f32 %v1358, 0.7853982
        %v1519 = vsub.f32 %v1359, 0.7853982
        %v1520 = vsub.f32 %v1360, 0.7853982
        %v1521 = vsub.f32 %v1361, 0.7853982
        %v1522 = vsub.f32 %v1362, 0.7853982
        %v1523 = vsub.f32 %v1363, 0.7853982
        %v1524 = vsub.f32 %v1364, 0.7853982
        %v1525 = vsub.f32 %v1365, 0.7853982
        %v1526 = vsub.f32 %v1366, 0.7853982
        %v1527 = vsub.f32 %v1367, 0.7853982
        %v1528 = vsub.f32 %v1368, 0.7853982
        %v1529 = vsub.f32 %v1369, 0.7853982
        %v1530 = vsub.f32 %v1370, 0.7853982
        %v1531 = vsub.f32 %v1371, 0.7853982
        %v1532 = vsub.f32 %v1372, 0.7853982
        %v1533 = vsub.f32 %v1373, 0.7853982
        %v1534 = vsub.f32 %v1374, 0.7853982
        %v1535 = vmul.f32 %v1471, 2.0938872e-07
        %v1536 = vmul.f32 %v1472, 2.0938872e-07
        %v1537 = vmul.f32 %v1473, 2.0938872e-07
        %v1538 = vmul.f32 %v1474, 2.0938872e-07
        %v1539 = vmul.f32 %v1475, 2.0938872e-07
        %v1540 = vmul.f32 %v1476, 2.0938872e-07
        %v1541 = vmul.f32 %v1477, 2.0938872e-07
        %v1542 = vmul.f32 %v1478, 2.0938872e-07
        %v1543 = vmul.f32 %v1479, 2.0938872e-07
        %v1544 = vmul.f32 %v1480, 2.0938872e-07
        %v1545 = vmul.f32 %v1481, 2.0938872e-07
        %v1546 = vmul.f32 %v1482, 2.0938872e-07
        %v1547 = vmul.f32 %v1483, 2.0938872e-07
        %v1548 = vmul.f32 %v1484, 2.0938872e-07
        %v1549 = vmul.f32 %v1485, 2.0938872e-07
        %v1550 = vmul.f32 %v1486, 2.0938872e-07
        %v1551 = vmul.f32 %v1487, 2.0938872e-07
        %v1552 = vmul.f32 %v1488, 2.0938872e-07
        %v1553 = vmul.f32 %v1489, 2.0938872e-07
        %v1554 = vmul.f32 %v1490, 2.0938872e-07
        %v1555 = vmul.f32 %v1491, 2.0938872e-07
        %v1556 = vmul.f32 %v1492, 2.0938872e-07
        %v1557 = vmul.f32 %v1493, 2.0938872e-07
        %v1558 = vmul.f32 %v1494, 2.0938872e-07
        %v1559 = vmul.f32 %v1495, 2.0938872e-07
        %v1560 = vmul.f32 %v1496, 2.0938872e-07
        %v1561 = vmul.f32 %v1497, 2.0938872e-07
        %v1562 = vmul.f32 %v1498, 2.0938872e-07
        %v1563 = vmul.f32 %v1499, 2.0938872e-07
        %v1564 = vmul.f32 %v1500, 2.0938872e-07
        %v1565 = vmul.f32 %v1501, 2.0938872e-07
        %v1566 = vmul.f32 %v1502, 2.0938872e-07
        %v1567 = vadd.f32 %v1535, -2.0733708e-06
        %v1568 = vadd.f32 %v1536, -2.0733708e-06
        %v1569 = vadd.f32 %v1537, -2.0733708e-06
        %v1570 = vadd.f32 %v1538, -2.0733708e-06
        %v1571 = vadd.f32 %v1539, -2.0733708e-06
        %v1572 = vadd.f32 %v1540, -2.0733708e-06
        %v1573 = vadd.f32 %v1541, -2.0733708e-06
        %v1574 = vadd.f32 %v1542, -2.0733708e-06
        %v1575 = vadd.f32 %v1543, -2.0733708e-06
        %v1576 = vadd.f32 %v1544, -2.0733708e-06
        %v1577 = vadd.f32 %v1545, -2.0733708e-06
        %v1578 = vadd.f32 %v1546, -2.0733708e-06
        %v1579 = vadd.f32 %v1547, -2.0733708e-06
        %v1580 = vadd.f32 %v1548, -2.0733708e-06
        %v1581 = vadd.f32 %v1549, -2.0733708e-06
        %v1582 = vadd.f32 %v1550, -2.0733708e-06
        %v1583 = vadd.f32 %v1551, -2.0733708e-06
        %v1584 = vadd.f32 %v1552, -2.0733708e-06
        %v1585 = vadd.f32 %v1553, -2.0733708e-06
        %v1586 = vadd.f32 %v1554, -2.0733708e-06
        %v1587 = vadd.f32 %v1555, -2.0733708e-06
        %v1588 = vadd.f32 %v1556, -2.0733708e-06
        %v1589 = vadd.f32 %v1557, -2.0733708e-06
        %v1590 = vadd.f32 %v1558, -2.0733708e-06
        %v1591 = vadd.f32 %v1559, -2.0733708e-06
        %v1592 = vadd.f32 %v1560, -2.0733708e-06
        %v1593 = vadd.f32 %v1561, -2.0733708e-06
        %v1594 = vadd.f32 %v1562, -2.0733708e-06
        %v1595 = vadd.f32 %v1563, -2.0733708e-06
        %v1596 = vadd.f32 %v1564, -2.0733708e-06
        %v1597 = vadd.f32 %v1565, -2.0733708e-06
        %v1598 = vadd.f32 %v1566, -2.0733708e-06
        %v1599 = vmul.f32 %v1471, %v1567
        %v1600 = vmul.f32 %v1472, %v1568
        %v1601 = vmul.f32 %v1473, %v1569
        %v1602 = vmul.f32 %v1474, %v1570
        %v1603 = vmul.f32 %v1475, %v1571
        %v1604 = vmul.f32 %v1476, %v1572
        %v1605 = vmul.f32 %v1477, %v1573
        %v1606 = vmul.f32 %v1478, %v1574
        %v1607 = vmul.f32 %v1479, %v1575
        %v1608 = vmul.f32 %v1480, %v1576
        %v1609 = vmul.f32 %v1481, %v1577
        %v1610 = vmul.f32 %v1482, %v1578
        %v1611 = vmul.f32 %v1483, %v1579
        %v1612 = vmul.f32 %v1484, %v1580
        %v1613 = vmul.f32 %v1485, %v1581
        %v1614 = vmul.f32 %v1486, %v1582
        %v1615 = vmul.f32 %v1487, %v1583
        %v1616 = vmul.f32 %v1488, %v1584
        %v1617 = vmul.f32 %v1489, %v1585
        %v1618 = vmul.f32 %v1490, %v1586
        %v1619 = vmul.f32 %v1491, %v1587
        %v1620 = vmul.f32 %v1492, %v1588
        %v1621 = vmul.f32 %v1493, %v1589
        %v1622 = vmul.f32 %v1494, %v1590
        %v1623 = vmul.f32 %v1495, %v1591
        %v1624 = vmul.f32 %v1496, %v1592
        %v1625 = vmul.f32 %v1497, %v1593
        %v1626 = vmul.f32 %v1498, %v1594
        %v1627 = vmul.f32 %v1499, %v1595
        %v1628 = vmul.f32 %v1500, %v1596
        %v1629 = vmul.f32 %v1501, %v1597
        %v1630 = vmul.f32 %v1502, %v1598
        %v1631 = vadd.f32 %v1599, 2.7345104e-05
        %v1632 = vadd.f32 %v1600, 2.7345104e-05
        %v1633 = vadd.f32 %v1601, 2.7345104e-05
        %v1634 = vadd.f32 %v1602, 2.7345104e-05
        %v1635 = vadd.f32 %v1603, 2.7345104e-05
        %v1636 = vadd.f32 %v1604, 2.7345104e-05
        %v1637 = vadd.f32 %v1605, 2.7345104e-05
        %v1638 = vadd.f32 %v1606, 2.7345104e-05
        %v1639 = vadd.f32 %v1607, 2.7345104e-05
        %v1640 = vadd.f32 %v1608, 2.7345104e-05
        %v1641 = vadd.f32 %v1609, 2.7345104e-05
        %v1642 = vadd.f32 %v1610, 2.7345104e-05
        %v1643 = vadd.f32 %v1611, 2.7345104e-05
        %v1644 = vadd.f32 %v1612, 2.7345104e-05
        %v1645 = vadd.f32 %v1613, 2.7345104e-05
        %v1646 = vadd.f32 %v1614, 2.7345104e-05
        %v1647 = vadd.f32 %v1615, 2.7345104e-05
        %v1648 = vadd.f32 %v1616, 2.7345104e-05
        %v1649 = vadd.f32 %v1617, 2.7345104e-05
        %v1650 = vadd.f32 %v1618, 2.7345104e-05
        %v1651 = vadd.f32 %v1619, 2.7345104e-05
        %v1652 = vadd.f32 %v1620, 2.7345104e-05
        %v1653 = vadd.f32 %v1621, 2.7345104e-05
        %v1654 = vadd.f32 %v1622, 2.7345104e-05
        %v1655 = vadd.f32 %v1623, 2.7345104e-05
        %v1656 = vadd.f32 %v1624, 2.7345104e-05
        %v1657 = vadd.f32 %v1625, 2.7345104e-05
        %v1658 = vadd.f32 %v1626, 2.7345104e-05
        %v1659 = vadd.f32 %v1627, 2.7345104e-05
        %v1660 = vadd.f32 %v1628, 2.7345104e-05
        %v1661 = vadd.f32 %v1629, 2.7345104e-05
        %v1662 = vadd.f32 %v1630, 2.7345104e-05
        %v1663 = vmul.f32 %v1471, %v1631
        %v1664 = vmul.f32 %v1472, %v1632
        %v1665 = vmul.f32 %v1473, %v1633
        %v1666 = vmul.f32 %v1474, %v1634
        %v1667 = vmul.f32 %v1475, %v1635
        %v1668 = vmul.f32 %v1476, %v1636
        %v1669 = vmul.f32 %v1477, %v1637
        %v1670 = vmul.f32 %v1478, %v1638
        %v1671 = vmul.f32 %v1479, %v1639
        %v1672 = vmul.f32 %v1480, %v1640
        %v1673 = vmul.f32 %v1481, %v1641
        %v1674 = vmul.f32 %v1482, %v1642
        %v1675 = vmul.f32 %v1483, %v1643
        %v1676 = vmul.f32 %v1484, %v1644
        %v1677 = vmul.f32 %v1485, %v1645
        %v1678 = vmul.f32 %v1486, %v1646
        %v1679 = vmul.f32 %v1487, %v1647
        %v1680 = vmul.f32 %v1488, %v1648
        %v1681 = vmul.f32 %v1489, %v1649
        %v1682 = vmul.f32 %v1490, %v1650
        %v1683 = vmul.f32 %v1491, %v1651
        %v1684 = vmul.f32 %v1492, %v1652
        %v1685 = vmul.f32 %v1493, %v1653
        %v1686 = vmul.f32 %v1494, %v1654
        %v1687 = vmul.f32 %v1495, %v1655
        %v1688 = vmul.f32 %v1496, %v1656
        %v1689 = vmul.f32 %v1497, %v1657
        %v1690 = vmul.f32 %v1498, %v1658
        %v1691 = vmul.f32 %v1499, %v1659
        %v1692 = vmul.f32 %v1500, %v1660
        %v1693 = vmul.f32 %v1501, %v1661
        %v1694 = vmul.f32 %v1502, %v1662
        %v1695 = vadd.f32 %v1663, -0.0010986286
        %v1696 = vadd.f32 %v1664, -0.0010986286
        %v1697 = vadd.f32 %v1665, -0.0010986286
        %v1698 = vadd.f32 %v1666, -0.0010986286
        %v1699 = vadd.f32 %v1667, -0.0010986286
        %v1700 = vadd.f32 %v1668, -0.0010986286
        %v1701 = vadd.f32 %v1669, -0.0010986286
        %v1702 = vadd.f32 %v1670, -0.0010986286
        %v1703 = vadd.f32 %v1671, -0.0010986286
        %v1704 = vadd.f32 %v1672, -0.0010986286
        %v1705 = vadd.f32 %v1673, -0.0010986286
        %v1706 = vadd.f32 %v1674, -0.0010986286
        %v1707 = vadd.f32 %v1675, -0.0010986286
        %v1708 = vadd.f32 %v1676, -0.0010986286
        %v1709 = vadd.f32 %v1677, -0.0010986286
        %v1710 = vadd.f32 %v1678, -0.0010986286
        %v1711 = vadd.f32 %v1679, -0.0010986286
        %v1712 = vadd.f32 %v1680, -0.0010986286
        %v1713 = vadd.f32 %v1681, -0.0010986286
        %v1714 = vadd.f32 %v1682, -0.0010986286
        %v1715 = vadd.f32 %v1683, -0.0010986286
        %v1716 = vadd.f32 %v1684, -0.0010986286
        %v1717 = vadd.f32 %v1685, -0.0010986286
        %v1718 = vadd.f32 %v1686, -0.0010986286
        %v1719 = vadd.f32 %v1687, -0.0010986286
        %v1720 = vadd.f32 %v1688, -0.0010986286
        %v1721 = vadd.f32 %v1689, -0.0010986286
        %v1722 = vadd.f32 %v1690, -0.0010986286
        %v1723 = vadd.f32 %v1691, -0.0010986286
        %v1724 = vadd.f32 %v1692, -0.0010986286
        %v1725 = vadd.f32 %v1693, -0.0010986286
        %v1726 = vadd.f32 %v1694, -0.0010986286
        %v1727 = vmul.f32 %v1471, %v1695
        %v1728 = vmul.f32 %v1472, %v1696
        %v1729 = vmul.f32 %v1473, %v1697
        %v1730 = vmul.f32 %v1474, %v1698
        %v1731 = vmul.f32 %v1475, %v1699
        %v1732 = vmul.f32 %v1476, %v1700
        %v1733 = vmul.f32 %v1477, %v1701
        %v1734 = vmul.f32 %v1478, %v1702
        %v1735 = vmul.f32 %v1479, %v1703
        %v1736 = vmul.f32 %v1480, %v1704
        %v1737 = vmul.f32 %v1481, %v1705
        %v1738 = vmul.f32 %v1482, %v1706
        %v1739 = vmul.f32 %v1483, %v1707
        %v1740 = vmul.f32 %v1484, %v1708
        %v1741 = vmul.f32 %v1485, %v1709
        %v1742 = vmul.f32 %v1486, %v1710
        %v1743 = vmul.f32 %v1487, %v1711
        %v1744 = vmul.f32 %v1488, %v1712
        %v1745 = vmul.f32 %v1489, %v1713
        %v1746 = vmul.f32 %v1490, %v1714
        %v1747 = vmul.f32 %v1491, %v1715
        %v1748 = vmul.f32 %v1492, %v1716
        %v1749 = vmul.f32 %v1493, %v1717
        %v1750 = vmul.f32 %v1494, %v1718
        %v1751 = vmul.f32 %v1495, %v1719
        %v1752 = vmul.f32 %v1496, %v1720
        %v1753 = vmul.f32 %v1497, %v1721
        %v1754 = vmul.f32 %v1498, %v1722
        %v1755 = vmul.f32 %v1499, %v1723
        %v1756 = vmul.f32 %v1500, %v1724
        %v1757 = vmul.f32 %v1501, %v1725
        %v1758 = vmul.f32 %v1502, %v1726
        %v1759 = vadd.f32 %v1727, 1.0
        %v1760 = vadd.f32 %v1728, 1.0
        %v1761 = vadd.f32 %v1729, 1.0
        %v1762 = vadd.f32 %v1730, 1.0
        %v1763 = vadd.f32 %v1731, 1.0
        %v1764 = vadd.f32 %v1732, 1.0
        %v1765 = vadd.f32 %v1733, 1.0
        %v1766 = vadd.f32 %v1734, 1.0
        %v1767 = vadd.f32 %v1735, 1.0
        %v1768 = vadd.f32 %v1736, 1.0
        %v1769 = vadd.f32 %v1737, 1.0
        %v1770 = vadd.f32 %v1738, 1.0
        %v1771 = vadd.f32 %v1739, 1.0
        %v1772 = vadd.f32 %v1740, 1.0
        %v1773 = vadd.f32 %v1741, 1.0
        %v1774 = vadd.f32 %v1742, 1.0
        %v1775 = vadd.f32 %v1743, 1.0
        %v1776 = vadd.f32 %v1744, 1.0
        %v1777 = vadd.f32 %v1745, 1.0
        %v1778 = vadd.f32 %v1746, 1.0
        %v1779 = vadd.f32 %v1747, 1.0
        %v1780 = vadd.f32 %v1748, 1.0
        %v1781 = vadd.f32 %v1749, 1.0
        %v1782 = vadd.f32 %v1750, 1.0
        %v1783 = vadd.f32 %v1751, 1.0
        %v1784 = vadd.f32 %v1752, 1.0
        %v1785 = vadd.f32 %v1753, 1.0
        %v1786 = vadd.f32 %v1754, 1.0
        %v1787 = vadd.f32 %v1755, 1.0
        %v1788 = vadd.f32 %v1756, 1.0
        %v1789 = vadd.f32 %v1757, 1.0
        %v1790 = vadd.f32 %v1758, 1.0
        %v1791 = vmul.f32 %v1471, 9.349352e-08
        %v1792 = vmul.f32 %v1472, 9.349352e-08
        %v1793 = vmul.f32 %v1473, 9.349352e-08
        %v1794 = vmul.f32 %v1474, 9.349352e-08
        %v1795 = vmul.f32 %v1475, 9.349352e-08
        %v1796 = vmul.f32 %v1476, 9.349352e-08
        %v1797 = vmul.f32 %v1477, 9.349352e-08
        %v1798 = vmul.f32 %v1478, 9.349352e-08
        %v1799 = vmul.f32 %v1479, 9.349352e-08
        %v1800 = vmul.f32 %v1480, 9.349352e-08
        %v1801 = vmul.f32 %v1481, 9.349352e-08
        %v1802 = vmul.f32 %v1482, 9.349352e-08
        %v1803 = vmul.f32 %v1483, 9.349352e-08
        %v1804 = vmul.f32 %v1484, 9.349352e-08
        %v1805 = vmul.f32 %v1485, 9.349352e-08
        %v1806 = vmul.f32 %v1486, 9.349352e-08
        %v1807 = vmul.f32 %v1487, 9.349352e-08
        %v1808 = vmul.f32 %v1488, 9.349352e-08
        %v1809 = vmul.f32 %v1489, 9.349352e-08
        %v1810 = vmul.f32 %v1490, 9.349352e-08
        %v1811 = vmul.f32 %v1491, 9.349352e-08
        %v1812 = vmul.f32 %v1492, 9.349352e-08
        %v1813 = vmul.f32 %v1493, 9.349352e-08
        %v1814 = vmul.f32 %v1494, 9.349352e-08
        %v1815 = vmul.f32 %v1495, 9.349352e-08
        %v1816 = vmul.f32 %v1496, 9.349352e-08
        %v1817 = vmul.f32 %v1497, 9.349352e-08
        %v1818 = vmul.f32 %v1498, 9.349352e-08
        %v1819 = vmul.f32 %v1499, 9.349352e-08
        %v1820 = vmul.f32 %v1500, 9.349352e-08
        %v1821 = vmul.f32 %v1501, 9.349352e-08
        %v1822 = vmul.f32 %v1502, 9.349352e-08
        %v1823 = vsub.f32 7.621095e-07, %v1791
        %v1824 = vsub.f32 7.621095e-07, %v1792
        %v1825 = vsub.f32 7.621095e-07, %v1793
        %v1826 = vsub.f32 7.621095e-07, %v1794
        %v1827 = vsub.f32 7.621095e-07, %v1795
        %v1828 = vsub.f32 7.621095e-07, %v1796
        %v1829 = vsub.f32 7.621095e-07, %v1797
        %v1830 = vsub.f32 7.621095e-07, %v1798
        %v1831 = vsub.f32 7.621095e-07, %v1799
        %v1832 = vsub.f32 7.621095e-07, %v1800
        %v1833 = vsub.f32 7.621095e-07, %v1801
        %v1834 = vsub.f32 7.621095e-07, %v1802
        %v1835 = vsub.f32 7.621095e-07, %v1803
        %v1836 = vsub.f32 7.621095e-07, %v1804
        %v1837 = vsub.f32 7.621095e-07, %v1805
        %v1838 = vsub.f32 7.621095e-07, %v1806
        %v1839 = vsub.f32 7.621095e-07, %v1807
        %v1840 = vsub.f32 7.621095e-07, %v1808
        %v1841 = vsub.f32 7.621095e-07, %v1809
        %v1842 = vsub.f32 7.621095e-07, %v1810
        %v1843 = vsub.f32 7.621095e-07, %v1811
        %v1844 = vsub.f32 7.621095e-07, %v1812
        %v1845 = vsub.f32 7.621095e-07, %v1813
        %v1846 = vsub.f32 7.621095e-07, %v1814
        %v1847 = vsub.f32 7.621095e-07, %v1815
        %v1848 = vsub.f32 7.621095e-07, %v1816
        %v1849 = vsub.f32 7.621095e-07, %v1817
        %v1850 = vsub.f32 7.621095e-07, %v1818
        %v1851 = vsub.f32 7.621095e-07, %v1819
        %v1852 = vsub.f32 7.621095e-07, %v1820
        %v1853 = vsub.f32 7.621095e-07, %v1821
        %v1854 = vsub.f32 7.621095e-07, %v1822
        %v1855 = vmul.f32 %v1471, %v1823
        %v1856 = vmul.f32 %v1472, %v1824
        %v1857 = vmul.f32 %v1473, %v1825
        %v1858 = vmul.f32 %v1474, %v1826
        %v1859 = vmul.f32 %v1475, %v1827
        %v1860 = vmul.f32 %v1476, %v1828
        %v1861 = vmul.f32 %v1477, %v1829
        %v1862 = vmul.f32 %v1478, %v1830
        %v1863 = vmul.f32 %v1479, %v1831
        %v1864 = vmul.f32 %v1480, %v1832
        %v1865 = vmul.f32 %v1481, %v1833
        %v1866 = vmul.f32 %v1482, %v1834
        %v1867 = vmul.f32 %v1483, %v1835
        %v1868 = vmul.f32 %v1484, %v1836
        %v1869 = vmul.f32 %v1485, %v1837
        %v1870 = vmul.f32 %v1486, %v1838
        %v1871 = vmul.f32 %v1487, %v1839
        %v1872 = vmul.f32 %v1488, %v1840
        %v1873 = vmul.f32 %v1489, %v1841
        %v1874 = vmul.f32 %v1490, %v1842
        %v1875 = vmul.f32 %v1491, %v1843
        %v1876 = vmul.f32 %v1492, %v1844
        %v1877 = vmul.f32 %v1493, %v1845
        %v1878 = vmul.f32 %v1494, %v1846
        %v1879 = vmul.f32 %v1495, %v1847
        %v1880 = vmul.f32 %v1496, %v1848
        %v1881 = vmul.f32 %v1497, %v1849
        %v1882 = vmul.f32 %v1498, %v1850
        %v1883 = vmul.f32 %v1499, %v1851
        %v1884 = vmul.f32 %v1500, %v1852
        %v1885 = vmul.f32 %v1501, %v1853
        %v1886 = vmul.f32 %v1502, %v1854
        %v1887 = vadd.f32 %v1855, -6.9111475e-06
        %v1888 = vadd.f32 %v1856, -6.9111475e-06
        %v1889 = vadd.f32 %v1857, -6.9111475e-06
        %v1890 = vadd.f32 %v1858, -6.9111475e-06
        %v1891 = vadd.f32 %v1859, -6.9111475e-06
        %v1892 = vadd.f32 %v1860, -6.9111475e-06
        %v1893 = vadd.f32 %v1861, -6.9111475e-06
        %v1894 = vadd.f32 %v1862, -6.9111475e-06
        %v1895 = vadd.f32 %v1863, -6.9111475e-06
        %v1896 = vadd.f32 %v1864, -6.9111475e-06
        %v1897 = vadd.f32 %v1865, -6.9111475e-06
        %v1898 = vadd.f32 %v1866, -6.9111475e-06
        %v1899 = vadd.f32 %v1867, -6.9111475e-06
        %v1900 = vadd.f32 %v1868, -6.9111475e-06
        %v1901 = vadd.f32 %v1869, -6.9111475e-06
        %v1902 = vadd.f32 %v1870, -6.9111475e-06
        %v1903 = vadd.f32 %v1871, -6.9111475e-06
        %v1904 = vadd.f32 %v1872, -6.9111475e-06
        %v1905 = vadd.f32 %v1873, -6.9111475e-06
        %v1906 = vadd.f32 %v1874, -6.9111475e-06
        %v1907 = vadd.f32 %v1875, -6.9111475e-06
        %v1908 = vadd.f32 %v1876, -6.9111475e-06
        %v1909 = vadd.f32 %v1877, -6.9111475e-06
        %v1910 = vadd.f32 %v1878, -6.9111475e-06
        %v1911 = vadd.f32 %v1879, -6.9111475e-06
        %v1912 = vadd.f32 %v1880, -6.9111475e-06
        %v1913 = vadd.f32 %v1881, -6.9111475e-06
        %v1914 = vadd.f32 %v1882, -6.9111475e-06
        %v1915 = vadd.f32 %v1883, -6.9111475e-06
        %v1916 = vadd.f32 %v1884, -6.9111475e-06
        %v1917 = vadd.f32 %v1885, -6.9111475e-06
        %v1918 = vadd.f32 %v1886, -6.9111475e-06
        %v1919 = vmul.f32 %v1471, %v1887
        %v1920 = vmul.f32 %v1472, %v1888
        %v1921 = vmul.f32 %v1473, %v1889
        %v1922 = vmul.f32 %v1474, %v1890
        %v1923 = vmul.f32 %v1475, %v1891
        %v1924 = vmul.f32 %v1476, %v1892
        %v1925 = vmul.f32 %v1477, %v1893
        %v1926 = vmul.f32 %v1478, %v1894
        %v1927 = vmul.f32 %v1479, %v1895
        %v1928 = vmul.f32 %v1480, %v1896
        %v1929 = vmul.f32 %v1481, %v1897
        %v1930 = vmul.f32 %v1482, %v1898
        %v1931 = vmul.f32 %v1483, %v1899
        %v1932 = vmul.f32 %v1484, %v1900
        %v1933 = vmul.f32 %v1485, %v1901
        %v1934 = vmul.f32 %v1486, %v1902
        %v1935 = vmul.f32 %v1487, %v1903
        %v1936 = vmul.f32 %v1488, %v1904
        %v1937 = vmul.f32 %v1489, %v1905
        %v1938 = vmul.f32 %v1490, %v1906
        %v1939 = vmul.f32 %v1491, %v1907
        %v1940 = vmul.f32 %v1492, %v1908
        %v1941 = vmul.f32 %v1493, %v1909
        %v1942 = vmul.f32 %v1494, %v1910
        %v1943 = vmul.f32 %v1495, %v1911
        %v1944 = vmul.f32 %v1496, %v1912
        %v1945 = vmul.f32 %v1497, %v1913
        %v1946 = vmul.f32 %v1498, %v1914
        %v1947 = vmul.f32 %v1499, %v1915
        %v1948 = vmul.f32 %v1500, %v1916
        %v1949 = vmul.f32 %v1501, %v1917
        %v1950 = vmul.f32 %v1502, %v1918
        %v1951 = vadd.f32 %v1919, 0.00014304888
        %v1952 = vadd.f32 %v1920, 0.00014304888
        %v1953 = vadd.f32 %v1921, 0.00014304888
        %v1954 = vadd.f32 %v1922, 0.00014304888
        %v1955 = vadd.f32 %v1923, 0.00014304888
        %v1956 = vadd.f32 %v1924, 0.00014304888
        %v1957 = vadd.f32 %v1925, 0.00014304888
        %v1958 = vadd.f32 %v1926, 0.00014304888
        %v1959 = vadd.f32 %v1927, 0.00014304888
        %v1960 = vadd.f32 %v1928, 0.00014304888
        %v1961 = vadd.f32 %v1929, 0.00014304888
        %v1962 = vadd.f32 %v1930, 0.00014304888
        %v1963 = vadd.f32 %v1931, 0.00014304888
        %v1964 = vadd.f32 %v1932, 0.00014304888
        %v1965 = vadd.f32 %v1933, 0.00014304888
        %v1966 = vadd.f32 %v1934, 0.00014304888
        %v1967 = vadd.f32 %v1935, 0.00014304888
        %v1968 = vadd.f32 %v1936, 0.00014304888
        %v1969 = vadd.f32 %v1937, 0.00014304888
        %v1970 = vadd.f32 %v1938, 0.00014304888
        %v1971 = vadd.f32 %v1939, 0.00014304888
        %v1972 = vadd.f32 %v1940, 0.00014304888
        %v1973 = vadd.f32 %v1941, 0.00014304888
        %v1974 = vadd.f32 %v1942, 0.00014304888
        %v1975 = vadd.f32 %v1943, 0.00014304888
        %v1976 = vadd.f32 %v1944, 0.00014304888
        %v1977 = vadd.f32 %v1945, 0.00014304888
        %v1978 = vadd.f32 %v1946, 0.00014304888
        %v1979 = vadd.f32 %v1947, 0.00014304888
        %v1980 = vadd.f32 %v1948, 0.00014304888
        %v1981 = vadd.f32 %v1949, 0.00014304888
        %v1982 = vadd.f32 %v1950, 0.00014304888
        %v1983 = vmul.f32 %v1471, %v1951
        %v1984 = vmul.f32 %v1472, %v1952
        %v1985 = vmul.f32 %v1473, %v1953
        %v1986 = vmul.f32 %v1474, %v1954
        %v1987 = vmul.f32 %v1475, %v1955
        %v1988 = vmul.f32 %v1476, %v1956
        %v1989 = vmul.f32 %v1477, %v1957
        %v1990 = vmul.f32 %v1478, %v1958
        %v1991 = vmul.f32 %v1479, %v1959
        %v1992 = vmul.f32 %v1480, %v1960
        %v1993 = vmul.f32 %v1481, %v1961
        %v1994 = vmul.f32 %v1482, %v1962
        %v1995 = vmul.f32 %v1483, %v1963
        %v1996 = vmul.f32 %v1484, %v1964
        %v1997 = vmul.f32 %v1485, %v1965
        %v1998 = vmul.f32 %v1486, %v1966
        %v1999 = vmul.f32 %v1487, %v1967
        %v2000 = vmul.f32 %v1488, %v1968
        %v2001 = vmul.f32 %v1489, %v1969
        %v2002 = vmul.f32 %v1490, %v1970
        %v2003 = vmul.f32 %v1491, %v1971
        %v2004 = vmul.f32 %v1492, %v1972
        %v2005 = vmul.f32 %v1493, %v1973
        %v2006 = vmul.f32 %v1494, %v1974
        %v2007 = vmul.f32 %v1495, %v1975
        %v2008 = vmul.f32 %v1496, %v1976
        %v2009 = vmul.f32 %v1497, %v1977
        %v2010 = vmul.f32 %v1498, %v1978
        %v2011 = vmul.f32 %v1499, %v1979
        %v2012 = vmul.f32 %v1500, %v1980
        %v2013 = vmul.f32 %v1501, %v1981
        %v2014 = vmul.f32 %v1502, %v1982
        %v2015 = vadd.f32 %v1983, -0.015625
        %v2016 = vadd.f32 %v1984, -0.015625
        %v2017 = vadd.f32 %v1985, -0.015625
        %v2018 = vadd.f32 %v1986, -0.015625
        %v2019 = vadd.f32 %v1987, -0.015625
        %v2020 = vadd.f32 %v1988, -0.015625
        %v2021 = vadd.f32 %v1989, -0.015625
        %v2022 = vadd.f32 %v1990, -0.015625
        %v2023 = vadd.f32 %v1991, -0.015625
        %v2024 = vadd.f32 %v1992, -0.015625
        %v2025 = vadd.f32 %v1993, -0.015625
        %v2026 = vadd.f32 %v1994, -0.015625
        %v2027 = vadd.f32 %v1995, -0.015625
        %v2028 = vadd.f32 %v1996, -0.015625
        %v2029 = vadd.f32 %v1997, -0.015625
        %v2030 = vadd.f32 %v1998, -0.015625
        %v2031 = vadd.f32 %v1999, -0.015625
        %v2032 = vadd.f32 %v2000, -0.015625
        %v2033 = vadd.f32 %v2001, -0.015625
        %v2034 = vadd.f32 %v2002, -0.015625
        %v2035 = vadd.f32 %v2003, -0.015625
        %v2036 = vadd.f32 %v2004, -0.015625
        %v2037 = vadd.f32 %v2005, -0.015625
        %v2038 = vadd.f32 %v2006, -0.015625
        %v2039 = vadd.f32 %v2007, -0.015625
        %v2040 = vadd.f32 %v2008, -0.015625
        %v2041 = vadd.f32 %v2009, -0.015625
        %v2042 = vadd.f32 %v2010, -0.015625
        %v2043 = vadd.f32 %v2011, -0.015625
        %v2044 = vadd.f32 %v2012, -0.015625
        %v2045 = vadd.f32 %v2013, -0.015625
        %v2046 = vadd.f32 %v2014, -0.015625
        %v2047 = vmul.f32 %v1375, 0.12698728
        %v2048 = vmul.f32 %v1376, 0.12698728
        %v2049 = vmul.f32 %v1377, 0.12698728
        %v2050 = vmul.f32 %v1378, 0.12698728
        %v2051 = vmul.f32 %v1379, 0.12698728
        %v2052 = vmul.f32 %v1380, 0.12698728
        %v2053 = vmul.f32 %v1381, 0.12698728
        %v2054 = vmul.f32 %v1382, 0.12698728
        %v2055 = vmul.f32 %v1383, 0.12698728
        %v2056 = vmul.f32 %v1384, 0.12698728
        %v2057 = vmul.f32 %v1385, 0.12698728
        %v2058 = vmul.f32 %v1386, 0.12698728
        %v2059 = vmul.f32 %v1387, 0.12698728
        %v2060 = vmul.f32 %v1388, 0.12698728
        %v2061 = vmul.f32 %v1389, 0.12698728
        %v2062 = vmul.f32 %v1390, 0.12698728
        %v2063 = vmul.f32 %v1391, 0.12698728
        %v2064 = vmul.f32 %v1392, 0.12698728
        %v2065 = vmul.f32 %v1393, 0.12698728
        %v2066 = vmul.f32 %v1394, 0.12698728
        %v2067 = vmul.f32 %v1395, 0.12698728
        %v2068 = vmul.f32 %v1396, 0.12698728
        %v2069 = vmul.f32 %v1397, 0.12698728
        %v2070 = vmul.f32 %v1398, 0.12698728
        %v2071 = vmul.f32 %v1399, 0.12698728
        %v2072 = vmul.f32 %v1400, 0.12698728
        %v2073 = vmul.f32 %v1401, 0.12698728
        %v2074 = vmul.f32 %v1402, 0.12698728
        %v2075 = vmul.f32 %v1403, 0.12698728
        %v2076 = vmul.f32 %v1404, 0.12698728
        %v2077 = vmul.f32 %v1405, 0.12698728
        %v2078 = vmul.f32 %v1406, 0.12698728
        %v2079 = vand.u32 2147483647, %v1503
        %vm2080 = vcmp.le.f32.partialorder %v2079, 0.7853982
        %vm2081 = vcmp.lt.s32.totalorder %v1503, 0
        %v2082 = vand.u32 %v1503, 2139095040
        %v2083 = vshrl.u32 %v2082, 23
        %v2084 = vsub.s32 %v2083, 127
        %v2085 = vand.u32 2147483647, %v1503
        %v2086 = vand.u32 %v2085, 8388607
        %v2087 = vor.u32 %v2086, 8388608
        %v2088 = vsub.s32 0, %v2087
        %v2089 = vadd.s32 %v2084, 1
        %vm2090 = vcmp.gt.s32.totalorder %v2089, 0
        %v2091 = vsel %vm2090, %v2089, 0
        %v2092 = vshrl.u32 %v2091, 5
        %v2093 = vand.u32 %v2091, 31
        %v2094 = vsub.s32 32, %v2093
        %v2095 = vshrl.u32 683565275, %v2094
        %v2096 = vshll.u32 683565275, %v2093
        %v2097 = vshrl.u32 2475754826, %v2094
        %v2098 = vor.u32 %v2096, %v2097
        %v2099 = vshll.u32 2475754826, %v2093
        %v2100 = vshrl.u32 2131351028, %v2094
        %v2101 = vor.u32 %v2099, %v2100
        %v2102 = vshll.u32 2131351028, %v2093
        %v2103 = vshrl.u32 2102212464, %v2094
        %v2104 = vor.u32 %v2102, %v2103
        %v2105 = vshll.u32 2102212464, %v2093
        %v2106 = vshrl.u32 920167782, %v2094
        %v2107 = vor.u32 %v2105, %v2106
        %v2108 = vshll.u32 920167782, %v2093
        %v2109 = vshrl.u32 1326507024, %v2094
        %v2110 = vor.u32 %v2108, %v2109
        %vm2111 = vcmp.lt.s32.totalorder %v2092, 1
        %vm2112 = vcmp.lt.s32.totalorder %v2092, 2
        %vm2113 = vcmp.lt.s32.totalorder %v2092, 3
        %vm2114 = vcmp.lt.s32.totalorder %v2092, 4
        %v2115 = vsel %vm2111, %v2095, %v2098
        %v2116 = vsel %vm2114, %v2104, 2102212464
        %v2117 = vsel %vm2113, %v2101, %v2116
        %v2118 = vsel %vm2112, %v2115, %v2117
        %v2119 = vsel %vm2111, %v2098, %v2101
        %v2120 = vsel %vm2114, %v2107, 920167782
        %v2121 = vsel %vm2113, %v2104, %v2120
        %v2122 = vsel %vm2112, %v2119, %v2121
        %v2123 = vsel %vm2111, %v2101, %v2104
        %v2124 = vsel %vm2114, %v2110, 1326507024
        %v2125 = vsel %vm2113, %v2107, %v2124
        %v2126 = vsel %vm2112, %v2123, %v2125
        %v2127 = vshll.u32 %v2087, 8
        %v2128 = vmul.u32.u64.compose %v2127, %v2126
        %v2129 = vextract.low.u32 %v2128
        %v2130 = vextract.high.u32 %v2128
        %v2131 = vmul.u32.u64.compose %v2127, %v2122
        %v2132 = vextract.low.u32 %v2131
        %v2133 = vextract.high.u32 %v2131
        %v2134 = vmul.u32 %v2127, %v2118
        %v2135 = vadd.s32 %v2130, %v2132
        %vm2136 = vc.u32 %v2130, %v2132
        %v2137 = vadd.s32 %v2133, 1
        %v2138 = vsel %vm2136, %v2137, %v2133
        %v2139 = vadd.s32 %v2134, %v2138
        %v2140 = vadd.s32 %v2139, 536870912
        %v2141 = vshrl.u32 %v2140, 30
        %v2142 = vshll.u32 %v2141, 30
        %v2143 = vsub.s32 %v2139, %v2142
        %vm2144 = vcmp.lt.s32.totalorder %v2143, 0
        %v2145 = vsub.s32 0, %v2143
        %v2146 = vsel %vm2144, %v2145, %v2143
        %v2147 = vclz %v2146
        %v2148 = vsub.s32 %v2147, 2
        %vm2149 = vcmp.gt.s32.totalorder 0, %v2148
        %v2150 = vsel %vm2149, 0, %v2148
        %v2151 = vsub.s32 32, %v2150
        %v2152 = vshll.u32 %v2143, %v2150
        %v2153 = vshrl.u32 %v2135, %v2151
        %v2154 = vor.u32 %v2152, %v2153
        %v2155 = vsub.s32 4294967266, %v2150
        %v2156 = vadd.s32 %v2155, 127
        %v2157 = vshll.u32 %v2156, 23
        %v2158 = vor.u32 4788187, %v2157
        %v2159 = vand.u32 2147483647, %v2158
        %v2161 = vcvt.s32.f32 %v2154
        %v2162 = vmul.f32 %v2161, %v2159
        %v2163 = vxor.u32 %v2162, 2147483648
        %v2164 = vsel %vm2081, %v2163, %v2162
        %v2165 = vsub.s32 4, %v2141
        %v2166 = vsel %vm2081, %v2165, %v2141
        %v2167 = vsel %vm2080, %v1503, %v2164
        %v2168 = vsel %vm2080, 0, %v2166
        %v2169 = vcosq.f32.pop %v2167
        %v2170 = vsinq.f32.pop %v2167
        %vm2171 = vweird.f32 %v1503
        %v2172 = vand.u32 %v2168, 3
        %vm2173 = vcmp.lt.s32.totalorder %v2172, 2
        %vm2174 = vcmp.eq.s32.totalorder %v2172, 0
        %v2175 = vxor.u32 %v2170, 2147483648
        %v2176 = vsel %vm2174, %v2169, %v2175
        %vm2177 = vcmp.eq.s32.totalorder %v2172, 2
        %v2178 = vxor.u32 %v2169, 2147483648
        %v2179 = vsel %vm2177, %v2178, %v2170
        %v2180 = vsel %vm2173, %v2176, %v2179
        %v2181 = vsel %vm2171, nan, %v2180
        %v2182 = vand.u32 2147483647, %v1504
        %vm2183 = vcmp.le.f32.partialorder %v2182, 0.7853982
        %vm2184 = vcmp.lt.s32.totalorder %v1504, 0
        %v2185 = vand.u32 %v1504, 2139095040
        %v2186 = vshrl.u32 %v2185, 23
        %v2187 = vsub.s32 %v2186, 127
        %v2188 = vand.u32 2147483647, %v1504
        %v2189 = vand.u32 %v2188, 8388607
        %v2190 = vor.u32 %v2189, 8388608
        %v2191 = vsub.s32 0, %v2190
        %v2192 = vadd.s32 %v2187, 1
        %vm2193 = vcmp.gt.s32.totalorder %v2192, 0
        %v2194 = vsel %vm2193, %v2192, 0
        %v2195 = vshrl.u32 %v2194, 5
        %v2196 = vand.u32 %v2194, 31
        %v2197 = vsub.s32 32, %v2196
        %v2198 = vshrl.u32 683565275, %v2197
        %v2199 = vshll.u32 683565275, %v2196
        %v2200 = vshrl.u32 2475754826, %v2197
        %v2201 = vor.u32 %v2199, %v2200
        %v2202 = vshll.u32 2475754826, %v2196
        %v2203 = vshrl.u32 2131351028, %v2197
        %v2204 = vor.u32 %v2202, %v2203
        %v2205 = vshll.u32 2131351028, %v2196
        %v2206 = vshrl.u32 2102212464, %v2197
        %v2207 = vor.u32 %v2205, %v2206
        %v2208 = vshll.u32 2102212464, %v2196
        %v2209 = vshrl.u32 920167782, %v2197
        %v2210 = vor.u32 %v2208, %v2209
        %v2211 = vshll.u32 920167782, %v2196
        %v2212 = vshrl.u32 1326507024, %v2197
        %v2213 = vor.u32 %v2211, %v2212
        %vm2214 = vcmp.lt.s32.totalorder %v2195, 1
        %vm2215 = vcmp.lt.s32.totalorder %v2195, 2
        %vm2216 = vcmp.lt.s32.totalorder %v2195, 3
        %vm2217 = vcmp.lt.s32.totalorder %v2195, 4
        %v2218 = vsel %vm2214, %v2198, %v2201
        %v2219 = vsel %vm2217, %v2207, 2102212464
        %v2220 = vsel %vm2216, %v2204, %v2219
        %v2221 = vsel %vm2215, %v2218, %v2220
        %v2222 = vsel %vm2214, %v2201, %v2204
        %v2223 = vsel %vm2217, %v2210, 920167782
        %v2224 = vsel %vm2216, %v2207, %v2223
        %v2225 = vsel %vm2215, %v2222, %v2224
        %v2226 = vsel %vm2214, %v2204, %v2207
        %v2227 = vsel %vm2217, %v2213, 1326507024
        %v2228 = vsel %vm2216, %v2210, %v2227
        %v2229 = vsel %vm2215, %v2226, %v2228
        %v2230 = vshll.u32 %v2190, 8
        %v2231 = vmul.u32.u64.compose %v2230, %v2229
        %v2232 = vextract.low.u32 %v2231
        %v2233 = vextract.high.u32 %v2231
        %v2234 = vmul.u32.u64.compose %v2230, %v2225
        %v2235 = vextract.low.u32 %v2234
        %v2236 = vextract.high.u32 %v2234
        %v2237 = vmul.u32 %v2230, %v2221
        %v2238 = vadd.s32 %v2233, %v2235
        %vm2239 = vc.u32 %v2233, %v2235
        %v2240 = vadd.s32 %v2236, 1
        %v2241 = vsel %vm2239, %v2240, %v2236
        %v2242 = vadd.s32 %v2237, %v2241
        %v2243 = vadd.s32 %v2242, 536870912
        %v2244 = vshrl.u32 %v2243, 30
        %v2245 = vshll.u32 %v2244, 30
        %v2246 = vsub.s32 %v2242, %v2245
        %vm2247 = vcmp.lt.s32.totalorder %v2246, 0
        %v2248 = vsub.s32 0, %v2246
        %v2249 = vsel %vm2247, %v2248, %v2246
        %v2250 = vclz %v2249
        %v2251 = vsub.s32 %v2250, 2
        %vm2252 = vcmp.gt.s32.totalorder 0, %v2251
        %v2253 = vsel %vm2252, 0, %v2251
        %v2254 = vsub.s32 32, %v2253
        %v2255 = vshll.u32 %v2246, %v2253
        %v2256 = vshrl.u32 %v2238, %v2254
        %v2257 = vor.u32 %v2255, %v2256
        %v2258 = vsub.s32 4294967266, %v2253
        %v2259 = vadd.s32 %v2258, 127
        %v2260 = vshll.u32 %v2259, 23
        %v2261 = vor.u32 4788187, %v2260
        %v2262 = vand.u32 2147483647, %v2261
        %v2264 = vcvt.s32.f32 %v2257
        %v2265 = vmul.f32 %v2264, %v2262
        %v2266 = vxor.u32 %v2265, 2147483648
        %v2267 = vsel %vm2184, %v2266, %v2265
        %v2268 = vsub.s32 4, %v2244
        %v2269 = vsel %vm2184, %v2268, %v2244
        %v2270 = vsel %vm2183, %v1504, %v2267
        %v2271 = vsel %vm2183, 0, %v2269
        %v2272 = vcosq.f32.pop %v2270
        %v2273 = vsinq.f32.pop %v2270
        %vm2274 = vweird.f32 %v1504
        %v2275 = vand.u32 %v2271, 3
        %vm2276 = vcmp.lt.s32.totalorder %v2275, 2
        %vm2277 = vcmp.eq.s32.totalorder %v2275, 0
        %v2278 = vxor.u32 %v2273, 2147483648
        %v2279 = vsel %vm2277, %v2272, %v2278
        %vm2280 = vcmp.eq.s32.totalorder %v2275, 2
        %v2281 = vxor.u32 %v2272, 2147483648
        %v2282 = vsel %vm2280, %v2281, %v2273
        %v2283 = vsel %vm2276, %v2279, %v2282
        %v2284 = vsel %vm2274, nan, %v2283
        %v2285 = vand.u32 2147483647, %v1505
        %vm2286 = vcmp.le.f32.partialorder %v2285, 0.7853982
        %vm2287 = vcmp.lt.s32.totalorder %v1505, 0
        %v2288 = vand.u32 %v1505, 2139095040
        %v2289 = vshrl.u32 %v2288, 23
        %v2290 = vsub.s32 %v2289, 127
        %v2291 = vand.u32 2147483647, %v1505
        %v2292 = vand.u32 %v2291, 8388607
        %v2293 = vor.u32 %v2292, 8388608
        %v2294 = vsub.s32 0, %v2293
        %v2295 = vadd.s32 %v2290, 1
        %vm2296 = vcmp.gt.s32.totalorder %v2295, 0
        %v2297 = vsel %vm2296, %v2295, 0
        %v2298 = vshrl.u32 %v2297, 5
        %v2299 = vand.u32 %v2297, 31
        %v2300 = vsub.s32 32, %v2299
        %v2301 = vshrl.u32 683565275, %v2300
        %v2302 = vshll.u32 683565275, %v2299
        %v2303 = vshrl.u32 2475754826, %v2300
        %v2304 = vor.u32 %v2302, %v2303
        %v2305 = vshll.u32 2475754826, %v2299
        %v2306 = vshrl.u32 2131351028, %v2300
        %v2307 = vor.u32 %v2305, %v2306
        %v2308 = vshll.u32 2131351028, %v2299
        %v2309 = vshrl.u32 2102212464, %v2300
        %v2310 = vor.u32 %v2308, %v2309
        %v2311 = vshll.u32 2102212464, %v2299
        %v2312 = vshrl.u32 920167782, %v2300
        %v2313 = vor.u32 %v2311, %v2312
        %v2314 = vshll.u32 920167782, %v2299
        %v2315 = vshrl.u32 1326507024, %v2300
        %v2316 = vor.u32 %v2314, %v2315
        %vm2317 = vcmp.lt.s32.totalorder %v2298, 1
        %vm2318 = vcmp.lt.s32.totalorder %v2298, 2
        %vm2319 = vcmp.lt.s32.totalorder %v2298, 3
        %vm2320 = vcmp.lt.s32.totalorder %v2298, 4
        %v2321 = vsel %vm2317, %v2301, %v2304
        %v2322 = vsel %vm2320, %v2310, 2102212464
        %v2323 = vsel %vm2319, %v2307, %v2322
        %v2324 = vsel %vm2318, %v2321, %v2323
        %v2325 = vsel %vm2317, %v2304, %v2307
        %v2326 = vsel %vm2320, %v2313, 920167782
        %v2327 = vsel %vm2319, %v2310, %v2326
        %v2328 = vsel %vm2318, %v2325, %v2327
        %v2329 = vsel %vm2317, %v2307, %v2310
        %v2330 = vsel %vm2320, %v2316, 1326507024
        %v2331 = vsel %vm2319, %v2313, %v2330
        %v2332 = vsel %vm2318, %v2329, %v2331
        %v2333 = vshll.u32 %v2293, 8
        %v2334 = vmul.u32.u64.compose %v2333, %v2332
        %v2335 = vextract.low.u32 %v2334
        %v2336 = vextract.high.u32 %v2334
        %v2337 = vmul.u32.u64.compose %v2333, %v2328
        %v2338 = vextract.low.u32 %v2337
        %v2339 = vextract.high.u32 %v2337
        %v2340 = vmul.u32 %v2333, %v2324
        %v2341 = vadd.s32 %v2336, %v2338
        %vm2342 = vc.u32 %v2336, %v2338
        %v2343 = vadd.s32 %v2339, 1
        %v2344 = vsel %vm2342, %v2343, %v2339
        %v2345 = vadd.s32 %v2340, %v2344
        %v2346 = vadd.s32 %v2345, 536870912
        %v2347 = vshrl.u32 %v2346, 30
        %v2348 = vshll.u32 %v2347, 30
        %v2349 = vsub.s32 %v2345, %v2348
        %vm2350 = vcmp.lt.s32.totalorder %v2349, 0
        %v2351 = vsub.s32 0, %v2349
        %v2352 = vsel %vm2350, %v2351, %v2349
        %v2353 = vclz %v2352
        %v2354 = vsub.s32 %v2353, 2
        %vm2355 = vcmp.gt.s32.totalorder 0, %v2354
        %v2356 = vsel %vm2355, 0, %v2354
        %v2357 = vsub.s32 32, %v2356
        %v2358 = vshll.u32 %v2349, %v2356
        %v2359 = vshrl.u32 %v2341, %v2357
        %v2360 = vor.u32 %v2358, %v2359
        %v2361 = vsub.s32 4294967266, %v2356
        %v2362 = vadd.s32 %v2361, 127
        %v2363 = vshll.u32 %v2362, 23
        %v2364 = vor.u32 4788187, %v2363
        %v2365 = vand.u32 2147483647, %v2364
        %v2367 = vcvt.s32.f32 %v2360
        %v2368 = vmul.f32 %v2367, %v2365
        %v2369 = vxor.u32 %v2368, 2147483648
        %v2370 = vsel %vm2287, %v2369, %v2368
        %v2371 = vsub.s32 4, %v2347
        %v2372 = vsel %vm2287, %v2371, %v2347
        %v2373 = vsel %vm2286, %v1505, %v2370
        %v2374 = vsel %vm2286, 0, %v2372
        %v2375 = vcosq.f32.pop %v2373
        %v2376 = vsinq.f32.pop %v2373
        %vm2377 = vweird.f32 %v1505
        %v2378 = vand.u32 %v2374, 3
        %vm2379 = vcmp.lt.s32.totalorder %v2378, 2
        %vm2380 = vcmp.eq.s32.totalorder %v2378, 0
        %v2381 = vxor.u32 %v2376, 2147483648
        %v2382 = vsel %vm2380, %v2375, %v2381
        %vm2383 = vcmp.eq.s32.totalorder %v2378, 2
        %v2384 = vxor.u32 %v2375, 2147483648
        %v2385 = vsel %vm2383, %v2384, %v2376
        %v2386 = vsel %vm2379, %v2382, %v2385
        %v2387 = vsel %vm2377, nan, %v2386
        %v2388 = vand.u32 2147483647, %v1506
        %vm2389 = vcmp.le.f32.partialorder %v2388, 0.7853982
        %vm2390 = vcmp.lt.s32.totalorder %v1506, 0
        %v2391 = vand.u32 %v1506, 2139095040
        %v2392 = vshrl.u32 %v2391, 23
        %v2393 = vsub.s32 %v2392, 127
        %v2394 = vand.u32 2147483647, %v1506
        %v2395 = vand.u32 %v2394, 8388607
        %v2396 = vor.u32 %v2395, 8388608
        %v2397 = vsub.s32 0, %v2396
        %v2398 = vadd.s32 %v2393, 1
        %vm2399 = vcmp.gt.s32.totalorder %v2398, 0
        %v2400 = vsel %vm2399, %v2398, 0
        %v2401 = vshrl.u32 %v2400, 5
        %v2402 = vand.u32 %v2400, 31
        %v2403 = vsub.s32 32, %v2402
        %v2404 = vshrl.u32 683565275, %v2403
        %v2405 = vshll.u32 683565275, %v2402
        %v2406 = vshrl.u32 2475754826, %v2403
        %v2407 = vor.u32 %v2405, %v2406
        %v2408 = vshll.u32 2475754826, %v2402
        %v2409 = vshrl.u32 2131351028, %v2403
        %v2410 = vor.u32 %v2408, %v2409
        %v2411 = vshll.u32 2131351028, %v2402
        %v2412 = vshrl.u32 2102212464, %v2403
        %v2413 = vor.u32 %v2411, %v2412
        %v2414 = vshll.u32 2102212464, %v2402
        %v2415 = vshrl.u32 920167782, %v2403
        %v2416 = vor.u32 %v2414, %v2415
        %v2417 = vshll.u32 920167782, %v2402
        %v2418 = vshrl.u32 1326507024, %v2403
        %v2419 = vor.u32 %v2417, %v2418
        %vm2420 = vcmp.lt.s32.totalorder %v2401, 1
        %vm2421 = vcmp.lt.s32.totalorder %v2401, 2
        %vm2422 = vcmp.lt.s32.totalorder %v2401, 3
        %vm2423 = vcmp.lt.s32.totalorder %v2401, 4
        %v2424 = vsel %vm2420, %v2404, %v2407
        %v2425 = vsel %vm2423, %v2413, 2102212464
        %v2426 = vsel %vm2422, %v2410, %v2425
        %v2427 = vsel %vm2421, %v2424, %v2426
        %v2428 = vsel %vm2420, %v2407, %v2410
        %v2429 = vsel %vm2423, %v2416, 920167782
        %v2430 = vsel %vm2422, %v2413, %v2429
        %v2431 = vsel %vm2421, %v2428, %v2430
        %v2432 = vsel %vm2420, %v2410, %v2413
        %v2433 = vsel %vm2423, %v2419, 1326507024
        %v2434 = vsel %vm2422, %v2416, %v2433
        %v2435 = vsel %vm2421, %v2432, %v2434
        %v2436 = vshll.u32 %v2396, 8
        %v2437 = vmul.u32.u64.compose %v2436, %v2435
        %v2438 = vextract.low.u32 %v2437
        %v2439 = vextract.high.u32 %v2437
        %v2440 = vmul.u32.u64.compose %v2436, %v2431
        %v2441 = vextract.low.u32 %v2440
        %v2442 = vextract.high.u32 %v2440
        %v2443 = vmul.u32 %v2436, %v2427
        %v2444 = vadd.s32 %v2439, %v2441
        %vm2445 = vc.u32 %v2439, %v2441
        %v2446 = vadd.s32 %v2442, 1
        %v2447 = vsel %vm2445, %v2446, %v2442
        %v2448 = vadd.s32 %v2443, %v2447
        %v2449 = vadd.s32 %v2448, 536870912
        %v2450 = vshrl.u32 %v2449, 30
        %v2451 = vshll.u32 %v2450, 30
        %v2452 = vsub.s32 %v2448, %v2451
        %vm2453 = vcmp.lt.s32.totalorder %v2452, 0
        %v2454 = vsub.s32 0, %v2452
        %v2455 = vsel %vm2453, %v2454, %v2452
        %v2456 = vclz %v2455
        %v2457 = vsub.s32 %v2456, 2
        %vm2458 = vcmp.gt.s32.totalorder 0, %v2457
        %v2459 = vsel %vm2458, 0, %v2457
        %v2460 = vsub.s32 32, %v2459
        %v2461 = vshll.u32 %v2452, %v2459
        %v2462 = vshrl.u32 %v2444, %v2460
        %v2463 = vor.u32 %v2461, %v2462
        %v2464 = vsub.s32 4294967266, %v2459
        %v2465 = vadd.s32 %v2464, 127
        %v2466 = vshll.u32 %v2465, 23
        %v2467 = vor.u32 4788187, %v2466
        %v2468 = vand.u32 2147483647, %v2467
        %v2470 = vcvt.s32.f32 %v2463
        %v2471 = vmul.f32 %v2470, %v2468
        %v2472 = vxor.u32 %v2471, 2147483648
        %v2473 = vsel %vm2390, %v2472, %v2471
        %v2474 = vsub.s32 4, %v2450
        %v2475 = vsel %vm2390, %v2474, %v2450
        %v2476 = vsel %vm2389, %v1506, %v2473
        %v2477 = vsel %vm2389, 0, %v2475
        %v2478 = vcosq.f32.pop %v2476
        %v2479 = vsinq.f32.pop %v2476
        %vm2480 = vweird.f32 %v1506
        %v2481 = vand.u32 %v2477, 3
        %vm2482 = vcmp.lt.s32.totalorder %v2481, 2
        %vm2483 = vcmp.eq.s32.totalorder %v2481, 0
        %v2484 = vxor.u32 %v2479, 2147483648
        %v2485 = vsel %vm2483, %v2478, %v2484
        %vm2486 = vcmp.eq.s32.totalorder %v2481, 2
        %v2487 = vxor.u32 %v2478, 2147483648
        %v2488 = vsel %vm2486, %v2487, %v2479
        %v2489 = vsel %vm2482, %v2485, %v2488
        %v2490 = vsel %vm2480, nan, %v2489
        %v2491 = vand.u32 2147483647, %v1507
        %vm2492 = vcmp.le.f32.partialorder %v2491, 0.7853982
        %vm2493 = vcmp.lt.s32.totalorder %v1507, 0
        %v2494 = vand.u32 %v1507, 2139095040
        %v2495 = vshrl.u32 %v2494, 23
        %v2496 = vsub.s32 %v2495, 127
        %v2497 = vand.u32 2147483647, %v1507
        %v2498 = vand.u32 %v2497, 8388607
        %v2499 = vor.u32 %v2498, 8388608
        %v2500 = vsub.s32 0, %v2499
        %v2501 = vadd.s32 %v2496, 1
        %vm2502 = vcmp.gt.s32.totalorder %v2501, 0
        %v2503 = vsel %vm2502, %v2501, 0
        %v2504 = vshrl.u32 %v2503, 5
        %v2505 = vand.u32 %v2503, 31
        %v2506 = vsub.s32 32, %v2505
        %v2507 = vshrl.u32 683565275, %v2506
        %v2508 = vshll.u32 683565275, %v2505
        %v2509 = vshrl.u32 2475754826, %v2506
        %v2510 = vor.u32 %v2508, %v2509
        %v2511 = vshll.u32 2475754826, %v2505
        %v2512 = vshrl.u32 2131351028, %v2506
        %v2513 = vor.u32 %v2511, %v2512
        %v2514 = vshll.u32 2131351028, %v2505
        %v2515 = vshrl.u32 2102212464, %v2506
        %v2516 = vor.u32 %v2514, %v2515
        %v2517 = vshll.u32 2102212464, %v2505
        %v2518 = vshrl.u32 920167782, %v2506
        %v2519 = vor.u32 %v2517, %v2518
        %v2520 = vshll.u32 920167782, %v2505
        %v2521 = vshrl.u32 1326507024, %v2506
        %v2522 = vor.u32 %v2520, %v2521
        %vm2523 = vcmp.lt.s32.totalorder %v2504, 1
        %vm2524 = vcmp.lt.s32.totalorder %v2504, 2
        %vm2525 = vcmp.lt.s32.totalorder %v2504, 3
        %vm2526 = vcmp.lt.s32.totalorder %v2504, 4
        %v2527 = vsel %vm2523, %v2507, %v2510
        %v2528 = vsel %vm2526, %v2516, 2102212464
        %v2529 = vsel %vm2525, %v2513, %v2528
        %v2530 = vsel %vm2524, %v2527, %v2529
        %v2531 = vsel %vm2523, %v2510, %v2513
        %v2532 = vsel %vm2526, %v2519, 920167782
        %v2533 = vsel %vm2525, %v2516, %v2532
        %v2534 = vsel %vm2524, %v2531, %v2533
        %v2535 = vsel %vm2523, %v2513, %v2516
        %v2536 = vsel %vm2526, %v2522, 1326507024
        %v2537 = vsel %vm2525, %v2519, %v2536
        %v2538 = vsel %vm2524, %v2535, %v2537
        %v2539 = vshll.u32 %v2499, 8
        %v2540 = vmul.u32.u64.compose %v2539, %v2538
        %v2541 = vextract.low.u32 %v2540
        %v2542 = vextract.high.u32 %v2540
        %v2543 = vmul.u32.u64.compose %v2539, %v2534
        %v2544 = vextract.low.u32 %v2543
        %v2545 = vextract.high.u32 %v2543
        %v2546 = vmul.u32 %v2539, %v2530
        %v2547 = vadd.s32 %v2542, %v2544
        %vm2548 = vc.u32 %v2542, %v2544
        %v2549 = vadd.s32 %v2545, 1
        %v2550 = vsel %vm2548, %v2549, %v2545
        %v2551 = vadd.s32 %v2546, %v2550
        %v2552 = vadd.s32 %v2551, 536870912
        %v2553 = vshrl.u32 %v2552, 30
        %v2554 = vshll.u32 %v2553, 30
        %v2555 = vsub.s32 %v2551, %v2554
        %vm2556 = vcmp.lt.s32.totalorder %v2555, 0
        %v2557 = vsub.s32 0, %v2555
        %v2558 = vsel %vm2556, %v2557, %v2555
        %v2559 = vclz %v2558
        %v2560 = vsub.s32 %v2559, 2
        %vm2561 = vcmp.gt.s32.totalorder 0, %v2560
        %v2562 = vsel %vm2561, 0, %v2560
        %v2563 = vsub.s32 32, %v2562
        %v2564 = vshll.u32 %v2555, %v2562
        %v2565 = vshrl.u32 %v2547, %v2563
        %v2566 = vor.u32 %v2564, %v2565
        %v2567 = vsub.s32 4294967266, %v2562
        %v2568 = vadd.s32 %v2567, 127
        %v2569 = vshll.u32 %v2568, 23
        %v2570 = vor.u32 4788187, %v2569
        %v2571 = vand.u32 2147483647, %v2570
        %v2573 = vcvt.s32.f32 %v2566
        %v2574 = vmul.f32 %v2573, %v2571
        %v2575 = vxor.u32 %v2574, 2147483648
        %v2576 = vsel %vm2493, %v2575, %v2574
        %v2577 = vsub.s32 4, %v2553
        %v2578 = vsel %vm2493, %v2577, %v2553
        %v2579 = vsel %vm2492, %v1507, %v2576
        %v2580 = vsel %vm2492, 0, %v2578
        %v2581 = vcosq.f32.pop %v2579
        %v2582 = vsinq.f32.pop %v2579
        %vm2583 = vweird.f32 %v1507
        %v2584 = vand.u32 %v2580, 3
        %vm2585 = vcmp.lt.s32.totalorder %v2584, 2
        %vm2586 = vcmp.eq.s32.totalorder %v2584, 0
        %v2587 = vxor.u32 %v2582, 2147483648
        %v2588 = vsel %vm2586, %v2581, %v2587
        %vm2589 = vcmp.eq.s32.totalorder %v2584, 2
        %v2590 = vxor.u32 %v2581, 2147483648
        %v2591 = vsel %vm2589, %v2590, %v2582
        %v2592 = vsel %vm2585, %v2588, %v2591
        %v2593 = vsel %vm2583, nan, %v2592
        %v2594 = vand.u32 2147483647, %v1508
        %vm2595 = vcmp.le.f32.partialorder %v2594, 0.7853982
        %vm2596 = vcmp.lt.s32.totalorder %v1508, 0
        %v2597 = vand.u32 %v1508, 2139095040
        %v2598 = vshrl.u32 %v2597, 23
        %v2599 = vsub.s32 %v2598, 127
        %v2600 = vand.u32 2147483647, %v1508
        %v2601 = vand.u32 %v2600, 8388607
        %v2602 = vor.u32 %v2601, 8388608
        %v2603 = vsub.s32 0, %v2602
        %v2604 = vadd.s32 %v2599, 1
        %vm2605 = vcmp.gt.s32.totalorder %v2604, 0
        %v2606 = vsel %vm2605, %v2604, 0
        %v2607 = vshrl.u32 %v2606, 5
        %v2608 = vand.u32 %v2606, 31
        %v2609 = vsub.s32 32, %v2608
        %v2610 = vshrl.u32 683565275, %v2609
        %v2611 = vshll.u32 683565275, %v2608
        %v2612 = vshrl.u32 2475754826, %v2609
        %v2613 = vor.u32 %v2611, %v2612
        %v2614 = vshll.u32 2475754826, %v2608
        %v2615 = vshrl.u32 2131351028, %v2609
        %v2616 = vor.u32 %v2614, %v2615
        %v2617 = vshll.u32 2131351028, %v2608
        %v2618 = vshrl.u32 2102212464, %v2609
        %v2619 = vor.u32 %v2617, %v2618
        %v2620 = vshll.u32 2102212464, %v2608
        %v2621 = vshrl.u32 920167782, %v2609
        %v2622 = vor.u32 %v2620, %v2621
        %v2623 = vshll.u32 920167782, %v2608
        %v2624 = vshrl.u32 1326507024, %v2609
        %v2625 = vor.u32 %v2623, %v2624
        %vm2626 = vcmp.lt.s32.totalorder %v2607, 1
        %vm2627 = vcmp.lt.s32.totalorder %v2607, 2
        %vm2628 = vcmp.lt.s32.totalorder %v2607, 3
        %vm2629 = vcmp.lt.s32.totalorder %v2607, 4
        %v2630 = vsel %vm2626, %v2610, %v2613
        %v2631 = vsel %vm2629, %v2619, 2102212464
        %v2632 = vsel %vm2628, %v2616, %v2631
        %v2633 = vsel %vm2627, %v2630, %v2632
        %v2634 = vsel %vm2626, %v2613, %v2616
        %v2635 = vsel %vm2629, %v2622, 920167782
        %v2636 = vsel %vm2628, %v2619, %v2635
        %v2637 = vsel %vm2627, %v2634, %v2636
        %v2638 = vsel %vm2626, %v2616, %v2619
        %v2639 = vsel %vm2629, %v2625, 1326507024
        %v2640 = vsel %vm2628, %v2622, %v2639
        %v2641 = vsel %vm2627, %v2638, %v2640
        %v2642 = vshll.u32 %v2602, 8
        %v2643 = vmul.u32.u64.compose %v2642, %v2641
        %v2644 = vextract.low.u32 %v2643
        %v2645 = vextract.high.u32 %v2643
        %v2646 = vmul.u32.u64.compose %v2642, %v2637
        %v2647 = vextract.low.u32 %v2646
        %v2648 = vextract.high.u32 %v2646
        %v2649 = vmul.u32 %v2642, %v2633
        %v2650 = vadd.s32 %v2645, %v2647
        %vm2651 = vc.u32 %v2645, %v2647
        %v2652 = vadd.s32 %v2648, 1
        %v2653 = vsel %vm2651, %v2652, %v2648
        %v2654 = vadd.s32 %v2649, %v2653
        %v2655 = vadd.s32 %v2654, 536870912
        %v2656 = vshrl.u32 %v2655, 30
        %v2657 = vshll.u32 %v2656, 30
        %v2658 = vsub.s32 %v2654, %v2657
        %vm2659 = vcmp.lt.s32.totalorder %v2658, 0
        %v2660 = vsub.s32 0, %v2658
        %v2661 = vsel %vm2659, %v2660, %v2658
        %v2662 = vclz %v2661
        %v2663 = vsub.s32 %v2662, 2
        %vm2664 = vcmp.gt.s32.totalorder 0, %v2663
        %v2665 = vsel %vm2664, 0, %v2663
        %v2666 = vsub.s32 32, %v2665
        %v2667 = vshll.u32 %v2658, %v2665
        %v2668 = vshrl.u32 %v2650, %v2666
        %v2669 = vor.u32 %v2667, %v2668
        %v2670 = vsub.s32 4294967266, %v2665
        %v2671 = vadd.s32 %v2670, 127
        %v2672 = vshll.u32 %v2671, 23
        %v2673 = vor.u32 4788187, %v2672
        %v2674 = vand.u32 2147483647, %v2673
        %v2676 = vcvt.s32.f32 %v2669
        %v2677 = vmul.f32 %v2676, %v2674
        %v2678 = vxor.u32 %v2677, 2147483648
        %v2679 = vsel %vm2596, %v2678, %v2677
        %v2680 = vsub.s32 4, %v2656
        %v2681 = vsel %vm2596, %v2680, %v2656
        %v2682 = vsel %vm2595, %v1508, %v2679
        %v2683 = vsel %vm2595, 0, %v2681
        %v2684 = vcosq.f32.pop %v2682
        %v2685 = vsinq.f32.pop %v2682
        %vm2686 = vweird.f32 %v1508
        %v2687 = vand.u32 %v2683, 3
        %vm2688 = vcmp.lt.s32.totalorder %v2687, 2
        %vm2689 = vcmp.eq.s32.totalorder %v2687, 0
        %v2690 = vxor.u32 %v2685, 2147483648
        %v2691 = vsel %vm2689, %v2684, %v2690
        %vm2692 = vcmp.eq.s32.totalorder %v2687, 2
        %v2693 = vxor.u32 %v2684, 2147483648
        %v2694 = vsel %vm2692, %v2693, %v2685
        %v2695 = vsel %vm2688, %v2691, %v2694
        %v2696 = vsel %vm2686, nan, %v2695
        %v2697 = vand.u32 2147483647, %v1509
        %vm2698 = vcmp.le.f32.partialorder %v2697, 0.7853982
        %vm2699 = vcmp.lt.s32.totalorder %v1509, 0
        %v2700 = vand.u32 %v1509, 2139095040
        %v2701 = vshrl.u32 %v2700, 23
        %v2702 = vsub.s32 %v2701, 127
        %v2703 = vand.u32 2147483647, %v1509
        %v2704 = vand.u32 %v2703, 8388607
        %v2705 = vor.u32 %v2704, 8388608
        %v2706 = vsub.s32 0, %v2705
        %v2707 = vadd.s32 %v2702, 1
        %vm2708 = vcmp.gt.s32.totalorder %v2707, 0
        %v2709 = vsel %vm2708, %v2707, 0
        %v2710 = vshrl.u32 %v2709, 5
        %v2711 = vand.u32 %v2709, 31
        %v2712 = vsub.s32 32, %v2711
        %v2713 = vshrl.u32 683565275, %v2712
        %v2714 = vshll.u32 683565275, %v2711
        %v2715 = vshrl.u32 2475754826, %v2712
        %v2716 = vor.u32 %v2714, %v2715
        %v2717 = vshll.u32 2475754826, %v2711
        %v2718 = vshrl.u32 2131351028, %v2712
        %v2719 = vor.u32 %v2717, %v2718
        %v2720 = vshll.u32 2131351028, %v2711
        %v2721 = vshrl.u32 2102212464, %v2712
        %v2722 = vor.u32 %v2720, %v2721
        %v2723 = vshll.u32 2102212464, %v2711
        %v2724 = vshrl.u32 920167782, %v2712
        %v2725 = vor.u32 %v2723, %v2724
        %v2726 = vshll.u32 920167782, %v2711
        %v2727 = vshrl.u32 1326507024, %v2712
        %v2728 = vor.u32 %v2726, %v2727
        %vm2729 = vcmp.lt.s32.totalorder %v2710, 1
        %vm2730 = vcmp.lt.s32.totalorder %v2710, 2
        %vm2731 = vcmp.lt.s32.totalorder %v2710, 3
        %vm2732 = vcmp.lt.s32.totalorder %v2710, 4
        %v2733 = vsel %vm2729, %v2713, %v2716
        %v2734 = vsel %vm2732, %v2722, 2102212464
        %v2735 = vsel %vm2731, %v2719, %v2734
        %v2736 = vsel %vm2730, %v2733, %v2735
        %v2737 = vsel %vm2729, %v2716, %v2719
        %v2738 = vsel %vm2732, %v2725, 920167782
        %v2739 = vsel %vm2731, %v2722, %v2738
        %v2740 = vsel %vm2730, %v2737, %v2739
        %v2741 = vsel %vm2729, %v2719, %v2722
        %v2742 = vsel %vm2732, %v2728, 1326507024
        %v2743 = vsel %vm2731, %v2725, %v2742
        %v2744 = vsel %vm2730, %v2741, %v2743
        %v2745 = vshll.u32 %v2705, 8
        %v2746 = vmul.u32.u64.compose %v2745, %v2744
        %v2747 = vextract.low.u32 %v2746
        %v2748 = vextract.high.u32 %v2746
        %v2749 = vmul.u32.u64.compose %v2745, %v2740
        %v2750 = vextract.low.u32 %v2749
        %v2751 = vextract.high.u32 %v2749
        %v2752 = vmul.u32 %v2745, %v2736
        %v2753 = vadd.s32 %v2748, %v2750
        %vm2754 = vc.u32 %v2748, %v2750
        %v2755 = vadd.s32 %v2751, 1
        %v2756 = vsel %vm2754, %v2755, %v2751
        %v2757 = vadd.s32 %v2752, %v2756
        %v2758 = vadd.s32 %v2757, 536870912
        %v2759 = vshrl.u32 %v2758, 30
        %v2760 = vshll.u32 %v2759, 30
        %v2761 = vsub.s32 %v2757, %v2760
        %vm2762 = vcmp.lt.s32.totalorder %v2761, 0
        %v2763 = vsub.s32 0, %v2761
        %v2764 = vsel %vm2762, %v2763, %v2761
        %v2765 = vclz %v2764
        %v2766 = vsub.s32 %v2765, 2
        %vm2767 = vcmp.gt.s32.totalorder 0, %v2766
        %v2768 = vsel %vm2767, 0, %v2766
        %v2769 = vsub.s32 32, %v2768
        %v2770 = vshll.u32 %v2761, %v2768
        %v2771 = vshrl.u32 %v2753, %v2769
        %v2772 = vor.u32 %v2770, %v2771
        %v2773 = vsub.s32 4294967266, %v2768
        %v2774 = vadd.s32 %v2773, 127
        %v2775 = vshll.u32 %v2774, 23
        %v2776 = vor.u32 4788187, %v2775
        %v2777 = vand.u32 2147483647, %v2776
        %v2779 = vcvt.s32.f32 %v2772
        %v2780 = vmul.f32 %v2779, %v2777
        %v2781 = vxor.u32 %v2780, 2147483648
        %v2782 = vsel %vm2699, %v2781, %v2780
        %v2783 = vsub.s32 4, %v2759
        %v2784 = vsel %vm2699, %v2783, %v2759
        %v2785 = vsel %vm2698, %v1509, %v2782
        %v2786 = vsel %vm2698, 0, %v2784
        %v2787 = vcosq.f32.pop %v2785
        %v2788 = vsinq.f32.pop %v2785
        %vm2789 = vweird.f32 %v1509
        %v2790 = vand.u32 %v2786, 3
        %vm2791 = vcmp.lt.s32.totalorder %v2790, 2
        %vm2792 = vcmp.eq.s32.totalorder %v2790, 0
        %v2793 = vxor.u32 %v2788, 2147483648
        %v2794 = vsel %vm2792, %v2787, %v2793
        %vm2795 = vcmp.eq.s32.totalorder %v2790, 2
        %v2796 = vxor.u32 %v2787, 2147483648
        %v2797 = vsel %vm2795, %v2796, %v2788
        %v2798 = vsel %vm2791, %v2794, %v2797
        %v2799 = vsel %vm2789, nan, %v2798
        %v2800 = vand.u32 2147483647, %v1510
        %vm2801 = vcmp.le.f32.partialorder %v2800, 0.7853982
        %vm2802 = vcmp.lt.s32.totalorder %v1510, 0
        %v2803 = vand.u32 %v1510, 2139095040
        %v2804 = vshrl.u32 %v2803, 23
        %v2805 = vsub.s32 %v2804, 127
        %v2806 = vand.u32 2147483647, %v1510
        %v2807 = vand.u32 %v2806, 8388607
        %v2808 = vor.u32 %v2807, 8388608
        %v2809 = vsub.s32 0, %v2808
        %v2810 = vadd.s32 %v2805, 1
        %vm2811 = vcmp.gt.s32.totalorder %v2810, 0
        %v2812 = vsel %vm2811, %v2810, 0
        %v2813 = vshrl.u32 %v2812, 5
        %v2814 = vand.u32 %v2812, 31
        %v2815 = vsub.s32 32, %v2814
        %v2816 = vshrl.u32 683565275, %v2815
        %v2817 = vshll.u32 683565275, %v2814
        %v2818 = vshrl.u32 2475754826, %v2815
        %v2819 = vor.u32 %v2817, %v2818
        %v2820 = vshll.u32 2475754826, %v2814
        %v2821 = vshrl.u32 2131351028, %v2815
        %v2822 = vor.u32 %v2820, %v2821
        %v2823 = vshll.u32 2131351028, %v2814
        %v2824 = vshrl.u32 2102212464, %v2815
        %v2825 = vor.u32 %v2823, %v2824
        %v2826 = vshll.u32 2102212464, %v2814
        %v2827 = vshrl.u32 920167782, %v2815
        %v2828 = vor.u32 %v2826, %v2827
        %v2829 = vshll.u32 920167782, %v2814
        %v2830 = vshrl.u32 1326507024, %v2815
        %v2831 = vor.u32 %v2829, %v2830
        %vm2832 = vcmp.lt.s32.totalorder %v2813, 1
        %vm2833 = vcmp.lt.s32.totalorder %v2813, 2
        %vm2834 = vcmp.lt.s32.totalorder %v2813, 3
        %vm2835 = vcmp.lt.s32.totalorder %v2813, 4
        %v2836 = vsel %vm2832, %v2816, %v2819
        %v2837 = vsel %vm2835, %v2825, 2102212464
        %v2838 = vsel %vm2834, %v2822, %v2837
        %v2839 = vsel %vm2833, %v2836, %v2838
        %v2840 = vsel %vm2832, %v2819, %v2822
        %v2841 = vsel %vm2835, %v2828, 920167782
        %v2842 = vsel %vm2834, %v2825, %v2841
        %v2843 = vsel %vm2833, %v2840, %v2842
        %v2844 = vsel %vm2832, %v2822, %v2825
        %v2845 = vsel %vm2835, %v2831, 1326507024
        %v2846 = vsel %vm2834, %v2828, %v2845
        %v2847 = vsel %vm2833, %v2844, %v2846
        %v2848 = vshll.u32 %v2808, 8
        %v2849 = vmul.u32.u64.compose %v2848, %v2847
        %v2850 = vextract.low.u32 %v2849
        %v2851 = vextract.high.u32 %v2849
        %v2852 = vmul.u32.u64.compose %v2848, %v2843
        %v2853 = vextract.low.u32 %v2852
        %v2854 = vextract.high.u32 %v2852
        %v2855 = vmul.u32 %v2848, %v2839
        %v2856 = vadd.s32 %v2851, %v2853
        %vm2857 = vc.u32 %v2851, %v2853
        %v2858 = vadd.s32 %v2854, 1
        %v2859 = vsel %vm2857, %v2858, %v2854
        %v2860 = vadd.s32 %v2855, %v2859
        %v2861 = vadd.s32 %v2860, 536870912
        %v2862 = vshrl.u32 %v2861, 30
        %v2863 = vshll.u32 %v2862, 30
        %v2864 = vsub.s32 %v2860, %v2863
        %vm2865 = vcmp.lt.s32.totalorder %v2864, 0
        %v2866 = vsub.s32 0, %v2864
        %v2867 = vsel %vm2865, %v2866, %v2864
        %v2868 = vclz %v2867
        %v2869 = vsub.s32 %v2868, 2
        %vm2870 = vcmp.gt.s32.totalorder 0, %v2869
        %v2871 = vsel %vm2870, 0, %v2869
        %v2872 = vsub.s32 32, %v2871
        %v2873 = vshll.u32 %v2864, %v2871
        %v2874 = vshrl.u32 %v2856, %v2872
        %v2875 = vor.u32 %v2873, %v2874
        %v2876 = vsub.s32 4294967266, %v2871
        %v2877 = vadd.s32 %v2876, 127
        %v2878 = vshll.u32 %v2877, 23
        %v2879 = vor.u32 4788187, %v2878
        %v2880 = vand.u32 2147483647, %v2879
        %v2882 = vcvt.s32.f32 %v2875
        %v2883 = vmul.f32 %v2882, %v2880
        %v2884 = vxor.u32 %v2883, 2147483648
        %v2885 = vsel %vm2802, %v2884, %v2883
        %v2886 = vsub.s32 4, %v2862
        %v2887 = vsel %vm2802, %v2886, %v2862
        %v2888 = vsel %vm2801, %v1510, %v2885
        %v2889 = vsel %vm2801, 0, %v2887
        %v2890 = vcosq.f32.pop %v2888
        %v2891 = vsinq.f32.pop %v2888
        %vm2892 = vweird.f32 %v1510
        %v2893 = vand.u32 %v2889, 3
        %vm2894 = vcmp.lt.s32.totalorder %v2893, 2
        %vm2895 = vcmp.eq.s32.totalorder %v2893, 0
        %v2896 = vxor.u32 %v2891, 2147483648
        %v2897 = vsel %vm2895, %v2890, %v2896
        %vm2898 = vcmp.eq.s32.totalorder %v2893, 2
        %v2899 = vxor.u32 %v2890, 2147483648
        %v2900 = vsel %vm2898, %v2899, %v2891
        %v2901 = vsel %vm2894, %v2897, %v2900
        %v2902 = vsel %vm2892, nan, %v2901
        %v2903 = vand.u32 2147483647, %v1511
        %vm2904 = vcmp.le.f32.partialorder %v2903, 0.7853982
        %vm2905 = vcmp.lt.s32.totalorder %v1511, 0
        %v2906 = vand.u32 %v1511, 2139095040
        %v2907 = vshrl.u32 %v2906, 23
        %v2908 = vsub.s32 %v2907, 127
        %v2909 = vand.u32 2147483647, %v1511
        %v2910 = vand.u32 %v2909, 8388607
        %v2911 = vor.u32 %v2910, 8388608
        %v2912 = vsub.s32 0, %v2911
        %v2913 = vadd.s32 %v2908, 1
        %vm2914 = vcmp.gt.s32.totalorder %v2913, 0
        %v2915 = vsel %vm2914, %v2913, 0
        %v2916 = vshrl.u32 %v2915, 5
        %v2917 = vand.u32 %v2915, 31
        %v2918 = vsub.s32 32, %v2917
        %v2919 = vshrl.u32 683565275, %v2918
        %v2920 = vshll.u32 683565275, %v2917
        %v2921 = vshrl.u32 2475754826, %v2918
        %v2922 = vor.u32 %v2920, %v2921
        %v2923 = vshll.u32 2475754826, %v2917
        %v2924 = vshrl.u32 2131351028, %v2918
        %v2925 = vor.u32 %v2923, %v2924
        %v2926 = vshll.u32 2131351028, %v2917
        %v2927 = vshrl.u32 2102212464, %v2918
        %v2928 = vor.u32 %v2926, %v2927
        %v2929 = vshll.u32 2102212464, %v2917
        %v2930 = vshrl.u32 920167782, %v2918
        %v2931 = vor.u32 %v2929, %v2930
        %v2932 = vshll.u32 920167782, %v2917
        %v2933 = vshrl.u32 1326507024, %v2918
        %v2934 = vor.u32 %v2932, %v2933
        %vm2935 = vcmp.lt.s32.totalorder %v2916, 1
        %vm2936 = vcmp.lt.s32.totalorder %v2916, 2
        %vm2937 = vcmp.lt.s32.totalorder %v2916, 3
        %vm2938 = vcmp.lt.s32.totalorder %v2916, 4
        %v2939 = vsel %vm2935, %v2919, %v2922
        %v2940 = vsel %vm2938, %v2928, 2102212464
        %v2941 = vsel %vm2937, %v2925, %v2940
        %v2942 = vsel %vm2936, %v2939, %v2941
        %v2943 = vsel %vm2935, %v2922, %v2925
        %v2944 = vsel %vm2938, %v2931, 920167782
        %v2945 = vsel %vm2937, %v2928, %v2944
        %v2946 = vsel %vm2936, %v2943, %v2945
        %v2947 = vsel %vm2935, %v2925, %v2928
        %v2948 = vsel %vm2938, %v2934, 1326507024
        %v2949 = vsel %vm2937, %v2931, %v2948
        %v2950 = vsel %vm2936, %v2947, %v2949
        %v2951 = vshll.u32 %v2911, 8
        %v2952 = vmul.u32.u64.compose %v2951, %v2950
        %v2953 = vextract.low.u32 %v2952
        %v2954 = vextract.high.u32 %v2952
        %v2955 = vmul.u32.u64.compose %v2951, %v2946
        %v2956 = vextract.low.u32 %v2955
        %v2957 = vextract.high.u32 %v2955
        %v2958 = vmul.u32 %v2951, %v2942
        %v2959 = vadd.s32 %v2954, %v2956
        %vm2960 = vc.u32 %v2954, %v2956
        %v2961 = vadd.s32 %v2957, 1
        %v2962 = vsel %vm2960, %v2961, %v2957
        %v2963 = vadd.s32 %v2958, %v2962
        %v2964 = vadd.s32 %v2963, 536870912
        %v2965 = vshrl.u32 %v2964, 30
        %v2966 = vshll.u32 %v2965, 30
        %v2967 = vsub.s32 %v2963, %v2966
        %vm2968 = vcmp.lt.s32.totalorder %v2967, 0
        %v2969 = vsub.s32 0, %v2967
        %v2970 = vsel %vm2968, %v2969, %v2967
        %v2971 = vclz %v2970
        %v2972 = vsub.s32 %v2971, 2
        %vm2973 = vcmp.gt.s32.totalorder 0, %v2972
        %v2974 = vsel %vm2973, 0, %v2972
        %v2975 = vsub.s32 32, %v2974
        %v2976 = vshll.u32 %v2967, %v2974
        %v2977 = vshrl.u32 %v2959, %v2975
        %v2978 = vor.u32 %v2976, %v2977
        %v2979 = vsub.s32 4294967266, %v2974
        %v2980 = vadd.s32 %v2979, 127
        %v2981 = vshll.u32 %v2980, 23
        %v2982 = vor.u32 4788187, %v2981
        %v2983 = vand.u32 2147483647, %v2982
        %v2985 = vcvt.s32.f32 %v2978
        %v2986 = vmul.f32 %v2985, %v2983
        %v2987 = vxor.u32 %v2986, 2147483648
        %v2988 = vsel %vm2905, %v2987, %v2986
        %v2989 = vsub.s32 4, %v2965
        %v2990 = vsel %vm2905, %v2989, %v2965
        %v2991 = vsel %vm2904, %v1511, %v2988
        %v2992 = vsel %vm2904, 0, %v2990
        %v2993 = vcosq.f32.pop %v2991
        %v2994 = vsinq.f32.pop %v2991
        %vm2995 = vweird.f32 %v1511
        %v2996 = vand.u32 %v2992, 3
        %vm2997 = vcmp.lt.s32.totalorder %v2996, 2
        %vm2998 = vcmp.eq.s32.totalorder %v2996, 0
        %v2999 = vxor.u32 %v2994, 2147483648
        %v3000 = vsel %vm2998, %v2993, %v2999
        %vm3001 = vcmp.eq.s32.totalorder %v2996, 2
        %v3002 = vxor.u32 %v2993, 2147483648
        %v3003 = vsel %vm3001, %v3002, %v2994
        %v3004 = vsel %vm2997, %v3000, %v3003
        %v3005 = vsel %vm2995, nan, %v3004
        %v3006 = vand.u32 2147483647, %v1512
        %vm3007 = vcmp.le.f32.partialorder %v3006, 0.7853982
        %vm3008 = vcmp.lt.s32.totalorder %v1512, 0
        %v3009 = vand.u32 %v1512, 2139095040
        %v3010 = vshrl.u32 %v3009, 23
        %v3011 = vsub.s32 %v3010, 127
        %v3012 = vand.u32 2147483647, %v1512
        %v3013 = vand.u32 %v3012, 8388607
        %v3014 = vor.u32 %v3013, 8388608
        %v3015 = vsub.s32 0, %v3014
        %v3016 = vadd.s32 %v3011, 1
        %vm3017 = vcmp.gt.s32.totalorder %v3016, 0
        %v3018 = vsel %vm3017, %v3016, 0
        %v3019 = vshrl.u32 %v3018, 5
        %v3020 = vand.u32 %v3018, 31
        %v3021 = vsub.s32 32, %v3020
        %v3022 = vshrl.u32 683565275, %v3021
        %v3023 = vshll.u32 683565275, %v3020
        %v3024 = vshrl.u32 2475754826, %v3021
        %v3025 = vor.u32 %v3023, %v3024
        %v3026 = vshll.u32 2475754826, %v3020
        %v3027 = vshrl.u32 2131351028, %v3021
        %v3028 = vor.u32 %v3026, %v3027
        %v3029 = vshll.u32 2131351028, %v3020
        %v3030 = vshrl.u32 2102212464, %v3021
        %v3031 = vor.u32 %v3029, %v3030
        %v3032 = vshll.u32 2102212464, %v3020
        %v3033 = vshrl.u32 920167782, %v3021
        %v3034 = vor.u32 %v3032, %v3033
        %v3035 = vshll.u32 920167782, %v3020
        %v3036 = vshrl.u32 1326507024, %v3021
        %v3037 = vor.u32 %v3035, %v3036
        %vm3038 = vcmp.lt.s32.totalorder %v3019, 1
        %vm3039 = vcmp.lt.s32.totalorder %v3019, 2
        %vm3040 = vcmp.lt.s32.totalorder %v3019, 3
        %vm3041 = vcmp.lt.s32.totalorder %v3019, 4
        %v3042 = vsel %vm3038, %v3022, %v3025
        %v3043 = vsel %vm3041, %v3031, 2102212464
        %v3044 = vsel %vm3040, %v3028, %v3043
        %v3045 = vsel %vm3039, %v3042, %v3044
        %v3046 = vsel %vm3038, %v3025, %v3028
        %v3047 = vsel %vm3041, %v3034, 920167782
        %v3048 = vsel %vm3040, %v3031, %v3047
        %v3049 = vsel %vm3039, %v3046, %v3048
        %v3050 = vsel %vm3038, %v3028, %v3031
        %v3051 = vsel %vm3041, %v3037, 1326507024
        %v3052 = vsel %vm3040, %v3034, %v3051
        %v3053 = vsel %vm3039, %v3050, %v3052
        %v3054 = vshll.u32 %v3014, 8
        %v3055 = vmul.u32.u64.compose %v3054, %v3053
        %v3056 = vextract.low.u32 %v3055
        %v3057 = vextract.high.u32 %v3055
        %v3058 = vmul.u32.u64.compose %v3054, %v3049
        %v3059 = vextract.low.u32 %v3058
        %v3060 = vextract.high.u32 %v3058
        %v3061 = vmul.u32 %v3054, %v3045
        %v3062 = vadd.s32 %v3057, %v3059
        %vm3063 = vc.u32 %v3057, %v3059
        %v3064 = vadd.s32 %v3060, 1
        %v3065 = vsel %vm3063, %v3064, %v3060
        %v3066 = vadd.s32 %v3061, %v3065
        %v3067 = vadd.s32 %v3066, 536870912
        %v3068 = vshrl.u32 %v3067, 30
        %v3069 = vshll.u32 %v3068, 30
        %v3070 = vsub.s32 %v3066, %v3069
        %vm3071 = vcmp.lt.s32.totalorder %v3070, 0
        %v3072 = vsub.s32 0, %v3070
        %v3073 = vsel %vm3071, %v3072, %v3070
        %v3074 = vclz %v3073
        %v3075 = vsub.s32 %v3074, 2
        %vm3076 = vcmp.gt.s32.totalorder 0, %v3075
        %v3077 = vsel %vm3076, 0, %v3075
        %v3078 = vsub.s32 32, %v3077
        %v3079 = vshll.u32 %v3070, %v3077
        %v3080 = vshrl.u32 %v3062, %v3078
        %v3081 = vor.u32 %v3079, %v3080
        %v3082 = vsub.s32 4294967266, %v3077
        %v3083 = vadd.s32 %v3082, 127
        %v3084 = vshll.u32 %v3083, 23
        %v3085 = vor.u32 4788187, %v3084
        %v3086 = vand.u32 2147483647, %v3085
        %v3088 = vcvt.s32.f32 %v3081
        %v3089 = vmul.f32 %v3088, %v3086
        %v3090 = vxor.u32 %v3089, 2147483648
        %v3091 = vsel %vm3008, %v3090, %v3089
        %v3092 = vsub.s32 4, %v3068
        %v3093 = vsel %vm3008, %v3092, %v3068
        %v3094 = vsel %vm3007, %v1512, %v3091
        %v3095 = vsel %vm3007, 0, %v3093
        %v3096 = vcosq.f32.pop %v3094
        %v3097 = vsinq.f32.pop %v3094
        %vm3098 = vweird.f32 %v1512
        %v3099 = vand.u32 %v3095, 3
        %vm3100 = vcmp.lt.s32.totalorder %v3099, 2
        %vm3101 = vcmp.eq.s32.totalorder %v3099, 0
        %v3102 = vxor.u32 %v3097, 2147483648
        %v3103 = vsel %vm3101, %v3096, %v3102
        %vm3104 = vcmp.eq.s32.totalorder %v3099, 2
        %v3105 = vxor.u32 %v3096, 2147483648
        %v3106 = vsel %vm3104, %v3105, %v3097
        %v3107 = vsel %vm3100, %v3103, %v3106
        %v3108 = vsel %vm3098, nan, %v3107
        %v3109 = vand.u32 2147483647, %v1513
        %vm3110 = vcmp.le.f32.partialorder %v3109, 0.7853982
        %vm3111 = vcmp.lt.s32.totalorder %v1513, 0
        %v3112 = vand.u32 %v1513, 2139095040
        %v3113 = vshrl.u32 %v3112, 23
        %v3114 = vsub.s32 %v3113, 127
        %v3115 = vand.u32 2147483647, %v1513
        %v3116 = vand.u32 %v3115, 8388607
        %v3117 = vor.u32 %v3116, 8388608
        %v3118 = vsub.s32 0, %v3117
        %v3119 = vadd.s32 %v3114, 1
        %vm3120 = vcmp.gt.s32.totalorder %v3119, 0
        %v3121 = vsel %vm3120, %v3119, 0
        %v3122 = vshrl.u32 %v3121, 5
        %v3123 = vand.u32 %v3121, 31
        %v3124 = vsub.s32 32, %v3123
        %v3125 = vshrl.u32 683565275, %v3124
        %v3126 = vshll.u32 683565275, %v3123
        %v3127 = vshrl.u32 2475754826, %v3124
        %v3128 = vor.u32 %v3126, %v3127
        %v3129 = vshll.u32 2475754826, %v3123
        %v3130 = vshrl.u32 2131351028, %v3124
        %v3131 = vor.u32 %v3129, %v3130
        %v3132 = vshll.u32 2131351028, %v3123
        %v3133 = vshrl.u32 2102212464, %v3124
        %v3134 = vor.u32 %v3132, %v3133
        %v3135 = vshll.u32 2102212464, %v3123
        %v3136 = vshrl.u32 920167782, %v3124
        %v3137 = vor.u32 %v3135, %v3136
        %v3138 = vshll.u32 920167782, %v3123
        %v3139 = vshrl.u32 1326507024, %v3124
        %v3140 = vor.u32 %v3138, %v3139
        %vm3141 = vcmp.lt.s32.totalorder %v3122, 1
        %vm3142 = vcmp.lt.s32.totalorder %v3122, 2
        %vm3143 = vcmp.lt.s32.totalorder %v3122, 3
        %vm3144 = vcmp.lt.s32.totalorder %v3122, 4
        %v3145 = vsel %vm3141, %v3125, %v3128
        %v3146 = vsel %vm3144, %v3134, 2102212464
        %v3147 = vsel %vm3143, %v3131, %v3146
        %v3148 = vsel %vm3142, %v3145, %v3147
        %v3149 = vsel %vm3141, %v3128, %v3131
        %v3150 = vsel %vm3144, %v3137, 920167782
        %v3151 = vsel %vm3143, %v3134, %v3150
        %v3152 = vsel %vm3142, %v3149, %v3151
        %v3153 = vsel %vm3141, %v3131, %v3134
        %v3154 = vsel %vm3144, %v3140, 1326507024
        %v3155 = vsel %vm3143, %v3137, %v3154
        %v3156 = vsel %vm3142, %v3153, %v3155
        %v3157 = vshll.u32 %v3117, 8
        %v3158 = vmul.u32.u64.compose %v3157, %v3156
        %v3159 = vextract.low.u32 %v3158
        %v3160 = vextract.high.u32 %v3158
        %v3161 = vmul.u32.u64.compose %v3157, %v3152
        %v3162 = vextract.low.u32 %v3161
        %v3163 = vextract.high.u32 %v3161
        %v3164 = vmul.u32 %v3157, %v3148
        %v3165 = vadd.s32 %v3160, %v3162
        %vm3166 = vc.u32 %v3160, %v3162
        %v3167 = vadd.s32 %v3163, 1
        %v3168 = vsel %vm3166, %v3167, %v3163
        %v3169 = vadd.s32 %v3164, %v3168
        %v3170 = vadd.s32 %v3169, 536870912
        %v3171 = vshrl.u32 %v3170, 30
        %v3172 = vshll.u32 %v3171, 30
        %v3173 = vsub.s32 %v3169, %v3172
        %vm3174 = vcmp.lt.s32.totalorder %v3173, 0
        %v3175 = vsub.s32 0, %v3173
        %v3176 = vsel %vm3174, %v3175, %v3173
        %v3177 = vclz %v3176
        %v3178 = vsub.s32 %v3177, 2
        %vm3179 = vcmp.gt.s32.totalorder 0, %v3178
        %v3180 = vsel %vm3179, 0, %v3178
        %v3181 = vsub.s32 32, %v3180
        %v3182 = vshll.u32 %v3173, %v3180
        %v3183 = vshrl.u32 %v3165, %v3181
        %v3184 = vor.u32 %v3182, %v3183
        %v3185 = vsub.s32 4294967266, %v3180
        %v3186 = vadd.s32 %v3185, 127
        %v3187 = vshll.u32 %v3186, 23
        %v3188 = vor.u32 4788187, %v3187
        %v3189 = vand.u32 2147483647, %v3188
        %v3191 = vcvt.s32.f32 %v3184
        %v3192 = vmul.f32 %v3191, %v3189
        %v3193 = vxor.u32 %v3192, 2147483648
        %v3194 = vsel %vm3111, %v3193, %v3192
        %v3195 = vsub.s32 4, %v3171
        %v3196 = vsel %vm3111, %v3195, %v3171
        %v3197 = vsel %vm3110, %v1513, %v3194
        %v3198 = vsel %vm3110, 0, %v3196
        %v3199 = vcosq.f32.pop %v3197
        %v3200 = vsinq.f32.pop %v3197
        %vm3201 = vweird.f32 %v1513
        %v3202 = vand.u32 %v3198, 3
        %vm3203 = vcmp.lt.s32.totalorder %v3202, 2
        %vm3204 = vcmp.eq.s32.totalorder %v3202, 0
        %v3205 = vxor.u32 %v3200, 2147483648
        %v3206 = vsel %vm3204, %v3199, %v3205
        %vm3207 = vcmp.eq.s32.totalorder %v3202, 2
        %v3208 = vxor.u32 %v3199, 2147483648
        %v3209 = vsel %vm3207, %v3208, %v3200
        %v3210 = vsel %vm3203, %v3206, %v3209
        %v3211 = vsel %vm3201, nan, %v3210
        %v3212 = vand.u32 2147483647, %v1514
        %vm3213 = vcmp.le.f32.partialorder %v3212, 0.7853982
        %vm3214 = vcmp.lt.s32.totalorder %v1514, 0
        %v3215 = vand.u32 %v1514, 2139095040
        %v3216 = vshrl.u32 %v3215, 23
        %v3217 = vsub.s32 %v3216, 127
        %v3218 = vand.u32 2147483647, %v1514
        %v3219 = vand.u32 %v3218, 8388607
        %v3220 = vor.u32 %v3219, 8388608
        %v3221 = vsub.s32 0, %v3220
        %v3222 = vadd.s32 %v3217, 1
        %vm3223 = vcmp.gt.s32.totalorder %v3222, 0
        %v3224 = vsel %vm3223, %v3222, 0
        %v3225 = vshrl.u32 %v3224, 5
        %v3226 = vand.u32 %v3224, 31
        %v3227 = vsub.s32 32, %v3226
        %v3228 = vshrl.u32 683565275, %v3227
        %v3229 = vshll.u32 683565275, %v3226
        %v3230 = vshrl.u32 2475754826, %v3227
        %v3231 = vor.u32 %v3229, %v3230
        %v3232 = vshll.u32 2475754826, %v3226
        %v3233 = vshrl.u32 2131351028, %v3227
        %v3234 = vor.u32 %v3232, %v3233
        %v3235 = vshll.u32 2131351028, %v3226
        %v3236 = vshrl.u32 2102212464, %v3227
        %v3237 = vor.u32 %v3235, %v3236
        %v3238 = vshll.u32 2102212464, %v3226
        %v3239 = vshrl.u32 920167782, %v3227
        %v3240 = vor.u32 %v3238, %v3239
        %v3241 = vshll.u32 920167782, %v3226
        %v3242 = vshrl.u32 1326507024, %v3227
        %v3243 = vor.u32 %v3241, %v3242
        %vm3244 = vcmp.lt.s32.totalorder %v3225, 1
        %vm3245 = vcmp.lt.s32.totalorder %v3225, 2
        %vm3246 = vcmp.lt.s32.totalorder %v3225, 3
        %vm3247 = vcmp.lt.s32.totalorder %v3225, 4
        %v3248 = vsel %vm3244, %v3228, %v3231
        %v3249 = vsel %vm3247, %v3237, 2102212464
        %v3250 = vsel %vm3246, %v3234, %v3249
        %v3251 = vsel %vm3245, %v3248, %v3250
        %v3252 = vsel %vm3244, %v3231, %v3234
        %v3253 = vsel %vm3247, %v3240, 920167782
        %v3254 = vsel %vm3246, %v3237, %v3253
        %v3255 = vsel %vm3245, %v3252, %v3254
        %v3256 = vsel %vm3244, %v3234, %v3237
        %v3257 = vsel %vm3247, %v3243, 1326507024
        %v3258 = vsel %vm3246, %v3240, %v3257
        %v3259 = vsel %vm3245, %v3256, %v3258
        %v3260 = vshll.u32 %v3220, 8
        %v3261 = vmul.u32.u64.compose %v3260, %v3259
        %v3262 = vextract.low.u32 %v3261
        %v3263 = vextract.high.u32 %v3261
        %v3264 = vmul.u32.u64.compose %v3260, %v3255
        %v3265 = vextract.low.u32 %v3264
        %v3266 = vextract.high.u32 %v3264
        %v3267 = vmul.u32 %v3260, %v3251
        %v3268 = vadd.s32 %v3263, %v3265
        %vm3269 = vc.u32 %v3263, %v3265
        %v3270 = vadd.s32 %v3266, 1
        %v3271 = vsel %vm3269, %v3270, %v3266
        %v3272 = vadd.s32 %v3267, %v3271
        %v3273 = vadd.s32 %v3272, 536870912
        %v3274 = vshrl.u32 %v3273, 30
        %v3275 = vshll.u32 %v3274, 30
        %v3276 = vsub.s32 %v3272, %v3275
        %vm3277 = vcmp.lt.s32.totalorder %v3276, 0
        %v3278 = vsub.s32 0, %v3276
        %v3279 = vsel %vm3277, %v3278, %v3276
        %v3280 = vclz %v3279
        %v3281 = vsub.s32 %v3280, 2
        %vm3282 = vcmp.gt.s32.totalorder 0, %v3281
        %v3283 = vsel %vm3282, 0, %v3281
        %v3284 = vsub.s32 32, %v3283
        %v3285 = vshll.u32 %v3276, %v3283
        %v3286 = vshrl.u32 %v3268, %v3284
        %v3287 = vor.u32 %v3285, %v3286
        %v3288 = vsub.s32 4294967266, %v3283
        %v3289 = vadd.s32 %v3288, 127
        %v3290 = vshll.u32 %v3289, 23
        %v3291 = vor.u32 4788187, %v3290
        %v3292 = vand.u32 2147483647, %v3291
        %v3294 = vcvt.s32.f32 %v3287
        %v3295 = vmul.f32 %v3294, %v3292
        %v3296 = vxor.u32 %v3295, 2147483648
        %v3297 = vsel %vm3214, %v3296, %v3295
        %v3298 = vsub.s32 4, %v3274
        %v3299 = vsel %vm3214, %v3298, %v3274
        %v3300 = vsel %vm3213, %v1514, %v3297
        %v3301 = vsel %vm3213, 0, %v3299
        %v3302 = vcosq.f32.pop %v3300
        %v3303 = vsinq.f32.pop %v3300
        %vm3304 = vweird.f32 %v1514
        %v3305 = vand.u32 %v3301, 3
        %vm3306 = vcmp.lt.s32.totalorder %v3305, 2
        %vm3307 = vcmp.eq.s32.totalorder %v3305, 0
        %v3308 = vxor.u32 %v3303, 2147483648
        %v3309 = vsel %vm3307, %v3302, %v3308
        %vm3310 = vcmp.eq.s32.totalorder %v3305, 2
        %v3311 = vxor.u32 %v3302, 2147483648
        %v3312 = vsel %vm3310, %v3311, %v3303
        %v3313 = vsel %vm3306, %v3309, %v3312
        %v3314 = vsel %vm3304, nan, %v3313
        %v3315 = vand.u32 2147483647, %v1515
        %vm3316 = vcmp.le.f32.partialorder %v3315, 0.7853982
        %vm3317 = vcmp.lt.s32.totalorder %v1515, 0
        %v3318 = vand.u32 %v1515, 2139095040
        %v3319 = vshrl.u32 %v3318, 23
        %v3320 = vsub.s32 %v3319, 127
        %v3321 = vand.u32 2147483647, %v1515
        %v3322 = vand.u32 %v3321, 8388607
        %v3323 = vor.u32 %v3322, 8388608
        %v3324 = vsub.s32 0, %v3323
        %v3325 = vadd.s32 %v3320, 1
        %vm3326 = vcmp.gt.s32.totalorder %v3325, 0
        %v3327 = vsel %vm3326, %v3325, 0
        %v3328 = vshrl.u32 %v3327, 5
        %v3329 = vand.u32 %v3327, 31
        %v3330 = vsub.s32 32, %v3329
        %v3331 = vshrl.u32 683565275, %v3330
        %v3332 = vshll.u32 683565275, %v3329
        %v3333 = vshrl.u32 2475754826, %v3330
        %v3334 = vor.u32 %v3332, %v3333
        %v3335 = vshll.u32 2475754826, %v3329
        %v3336 = vshrl.u32 2131351028, %v3330
        %v3337 = vor.u32 %v3335, %v3336
        %v3338 = vshll.u32 2131351028, %v3329
        %v3339 = vshrl.u32 2102212464, %v3330
        %v3340 = vor.u32 %v3338, %v3339
        %v3341 = vshll.u32 2102212464, %v3329
        %v3342 = vshrl.u32 920167782, %v3330
        %v3343 = vor.u32 %v3341, %v3342
        %v3344 = vshll.u32 920167782, %v3329
        %v3345 = vshrl.u32 1326507024, %v3330
        %v3346 = vor.u32 %v3344, %v3345
        %vm3347 = vcmp.lt.s32.totalorder %v3328, 1
        %vm3348 = vcmp.lt.s32.totalorder %v3328, 2
        %vm3349 = vcmp.lt.s32.totalorder %v3328, 3
        %vm3350 = vcmp.lt.s32.totalorder %v3328, 4
        %v3351 = vsel %vm3347, %v3331, %v3334
        %v3352 = vsel %vm3350, %v3340, 2102212464
        %v3353 = vsel %vm3349, %v3337, %v3352
        %v3354 = vsel %vm3348, %v3351, %v3353
        %v3355 = vsel %vm3347, %v3334, %v3337
        %v3356 = vsel %vm3350, %v3343, 920167782
        %v3357 = vsel %vm3349, %v3340, %v3356
        %v3358 = vsel %vm3348, %v3355, %v3357
        %v3359 = vsel %vm3347, %v3337, %v3340
        %v3360 = vsel %vm3350, %v3346, 1326507024
        %v3361 = vsel %vm3349, %v3343, %v3360
        %v3362 = vsel %vm3348, %v3359, %v3361
        %v3363 = vshll.u32 %v3323, 8
        %v3364 = vmul.u32.u64.compose %v3363, %v3362
        %v3365 = vextract.low.u32 %v3364
        %v3366 = vextract.high.u32 %v3364
        %v3367 = vmul.u32.u64.compose %v3363, %v3358
        %v3368 = vextract.low.u32 %v3367
        %v3369 = vextract.high.u32 %v3367
        %v3370 = vmul.u32 %v3363, %v3354
        %v3371 = vadd.s32 %v3366, %v3368
        %vm3372 = vc.u32 %v3366, %v3368
        %v3373 = vadd.s32 %v3369, 1
        %v3374 = vsel %vm3372, %v3373, %v3369
        %v3375 = vadd.s32 %v3370, %v3374
        %v3376 = vadd.s32 %v3375, 536870912
        %v3377 = vshrl.u32 %v3376, 30
        %v3378 = vshll.u32 %v3377, 30
        %v3379 = vsub.s32 %v3375, %v3378
        %vm3380 = vcmp.lt.s32.totalorder %v3379, 0
        %v3381 = vsub.s32 0, %v3379
        %v3382 = vsel %vm3380, %v3381, %v3379
        %v3383 = vclz %v3382
        %v3384 = vsub.s32 %v3383, 2
        %vm3385 = vcmp.gt.s32.totalorder 0, %v3384
        %v3386 = vsel %vm3385, 0, %v3384
        %v3387 = vsub.s32 32, %v3386
        %v3388 = vshll.u32 %v3379, %v3386
        %v3389 = vshrl.u32 %v3371, %v3387
        %v3390 = vor.u32 %v3388, %v3389
        %v3391 = vsub.s32 4294967266, %v3386
        %v3392 = vadd.s32 %v3391, 127
        %v3393 = vshll.u32 %v3392, 23
        %v3394 = vor.u32 4788187, %v3393
        %v3395 = vand.u32 2147483647, %v3394
        %v3397 = vcvt.s32.f32 %v3390
        %v3398 = vmul.f32 %v3397, %v3395
        %v3399 = vxor.u32 %v3398, 2147483648
        %v3400 = vsel %vm3317, %v3399, %v3398
        %v3401 = vsub.s32 4, %v3377
        %v3402 = vsel %vm3317, %v3401, %v3377
        %v3403 = vsel %vm3316, %v1515, %v3400
        %v3404 = vsel %vm3316, 0, %v3402
        %v3405 = vcosq.f32.pop %v3403
        %v3406 = vsinq.f32.pop %v3403
        %vm3407 = vweird.f32 %v1515
        %v3408 = vand.u32 %v3404, 3
        %vm3409 = vcmp.lt.s32.totalorder %v3408, 2
        %vm3410 = vcmp.eq.s32.totalorder %v3408, 0
        %v3411 = vxor.u32 %v3406, 2147483648
        %v3412 = vsel %vm3410, %v3405, %v3411
        %vm3413 = vcmp.eq.s32.totalorder %v3408, 2
        %v3414 = vxor.u32 %v3405, 2147483648
        %v3415 = vsel %vm3413, %v3414, %v3406
        %v3416 = vsel %vm3409, %v3412, %v3415
        %v3417 = vsel %vm3407, nan, %v3416
        %v3418 = vand.u32 2147483647, %v1516
        %vm3419 = vcmp.le.f32.partialorder %v3418, 0.7853982
        %vm3420 = vcmp.lt.s32.totalorder %v1516, 0
        %v3421 = vand.u32 %v1516, 2139095040
        %v3422 = vshrl.u32 %v3421, 23
        %v3423 = vsub.s32 %v3422, 127
        %v3424 = vand.u32 2147483647, %v1516
        %v3425 = vand.u32 %v3424, 8388607
        %v3426 = vor.u32 %v3425, 8388608
        %v3427 = vsub.s32 0, %v3426
        %v3428 = vadd.s32 %v3423, 1
        %vm3429 = vcmp.gt.s32.totalorder %v3428, 0
        %v3430 = vsel %vm3429, %v3428, 0
        %v3431 = vshrl.u32 %v3430, 5
        %v3432 = vand.u32 %v3430, 31
        %v3433 = vsub.s32 32, %v3432
        %v3434 = vshrl.u32 683565275, %v3433
        %v3435 = vshll.u32 683565275, %v3432
        %v3436 = vshrl.u32 2475754826, %v3433
        %v3437 = vor.u32 %v3435, %v3436
        %v3438 = vshll.u32 2475754826, %v3432
        %v3439 = vshrl.u32 2131351028, %v3433
        %v3440 = vor.u32 %v3438, %v3439
        %v3441 = vshll.u32 2131351028, %v3432
        %v3442 = vshrl.u32 2102212464, %v3433
        %v3443 = vor.u32 %v3441, %v3442
        %v3444 = vshll.u32 2102212464, %v3432
        %v3445 = vshrl.u32 920167782, %v3433
        %v3446 = vor.u32 %v3444, %v3445
        %v3447 = vshll.u32 920167782, %v3432
        %v3448 = vshrl.u32 1326507024, %v3433
        %v3449 = vor.u32 %v3447, %v3448
        %vm3450 = vcmp.lt.s32.totalorder %v3431, 1
        %vm3451 = vcmp.lt.s32.totalorder %v3431, 2
        %vm3452 = vcmp.lt.s32.totalorder %v3431, 3
        %vm3453 = vcmp.lt.s32.totalorder %v3431, 4
        %v3454 = vsel %vm3450, %v3434, %v3437
        %v3455 = vsel %vm3453, %v3443, 2102212464
        %v3456 = vsel %vm3452, %v3440, %v3455
        %v3457 = vsel %vm3451, %v3454, %v3456
        %v3458 = vsel %vm3450, %v3437, %v3440
        %v3459 = vsel %vm3453, %v3446, 920167782
        %v3460 = vsel %vm3452, %v3443, %v3459
        %v3461 = vsel %vm3451, %v3458, %v3460
        %v3462 = vsel %vm3450, %v3440, %v3443
        %v3463 = vsel %vm3453, %v3449, 1326507024
        %v3464 = vsel %vm3452, %v3446, %v3463
        %v3465 = vsel %vm3451, %v3462, %v3464
        %v3466 = vshll.u32 %v3426, 8
        %v3467 = vmul.u32.u64.compose %v3466, %v3465
        %v3468 = vextract.low.u32 %v3467
        %v3469 = vextract.high.u32 %v3467
        %v3470 = vmul.u32.u64.compose %v3466, %v3461
        %v3471 = vextract.low.u32 %v3470
        %v3472 = vextract.high.u32 %v3470
        %v3473 = vmul.u32 %v3466, %v3457
        %v3474 = vadd.s32 %v3469, %v3471
        %vm3475 = vc.u32 %v3469, %v3471
        %v3476 = vadd.s32 %v3472, 1
        %v3477 = vsel %vm3475, %v3476, %v3472
        %v3478 = vadd.s32 %v3473, %v3477
        %v3479 = vadd.s32 %v3478, 536870912
        %v3480 = vshrl.u32 %v3479, 30
        %v3481 = vshll.u32 %v3480, 30
        %v3482 = vsub.s32 %v3478, %v3481
        %vm3483 = vcmp.lt.s32.totalorder %v3482, 0
        %v3484 = vsub.s32 0, %v3482
        %v3485 = vsel %vm3483, %v3484, %v3482
        %v3486 = vclz %v3485
        %v3487 = vsub.s32 %v3486, 2
        %vm3488 = vcmp.gt.s32.totalorder 0, %v3487
        %v3489 = vsel %vm3488, 0, %v3487
        %v3490 = vsub.s32 32, %v3489
        %v3491 = vshll.u32 %v3482, %v3489
        %v3492 = vshrl.u32 %v3474, %v3490
        %v3493 = vor.u32 %v3491, %v3492
        %v3494 = vsub.s32 4294967266, %v3489
        %v3495 = vadd.s32 %v3494, 127
        %v3496 = vshll.u32 %v3495, 23
        %v3497 = vor.u32 4788187, %v3496
        %v3498 = vand.u32 2147483647, %v3497
        %v3500 = vcvt.s32.f32 %v3493
        %v3501 = vmul.f32 %v3500, %v3498
        %v3502 = vxor.u32 %v3501, 2147483648
        %v3503 = vsel %vm3420, %v3502, %v3501
        %v3504 = vsub.s32 4, %v3480
        %v3505 = vsel %vm3420, %v3504, %v3480
        %v3506 = vsel %vm3419, %v1516, %v3503
        %v3507 = vsel %vm3419, 0, %v3505
        %v3508 = vcosq.f32.pop %v3506
        %v3509 = vsinq.f32.pop %v3506
        %vm3510 = vweird.f32 %v1516
        %v3511 = vand.u32 %v3507, 3
        %vm3512 = vcmp.lt.s32.totalorder %v3511, 2
        %vm3513 = vcmp.eq.s32.totalorder %v3511, 0
        %v3514 = vxor.u32 %v3509, 2147483648
        %v3515 = vsel %vm3513, %v3508, %v3514
        %vm3516 = vcmp.eq.s32.totalorder %v3511, 2
        %v3517 = vxor.u32 %v3508, 2147483648
        %v3518 = vsel %vm3516, %v3517, %v3509
        %v3519 = vsel %vm3512, %v3515, %v3518
        %v3520 = vsel %vm3510, nan, %v3519
        %v3521 = vand.u32 2147483647, %v1517
        %vm3522 = vcmp.le.f32.partialorder %v3521, 0.7853982
        %vm3523 = vcmp.lt.s32.totalorder %v1517, 0
        %v3524 = vand.u32 %v1517, 2139095040
        %v3525 = vshrl.u32 %v3524, 23
        %v3526 = vsub.s32 %v3525, 127
        %v3527 = vand.u32 2147483647, %v1517
        %v3528 = vand.u32 %v3527, 8388607
        %v3529 = vor.u32 %v3528, 8388608
        %v3530 = vsub.s32 0, %v3529
        %v3531 = vadd.s32 %v3526, 1
        %vm3532 = vcmp.gt.s32.totalorder %v3531, 0
        %v3533 = vsel %vm3532, %v3531, 0
        %v3534 = vshrl.u32 %v3533, 5
        %v3535 = vand.u32 %v3533, 31
        %v3536 = vsub.s32 32, %v3535
        %v3537 = vshrl.u32 683565275, %v3536
        %v3538 = vshll.u32 683565275, %v3535
        %v3539 = vshrl.u32 2475754826, %v3536
        %v3540 = vor.u32 %v3538, %v3539
        %v3541 = vshll.u32 2475754826, %v3535
        %v3542 = vshrl.u32 2131351028, %v3536
        %v3543 = vor.u32 %v3541, %v3542
        %v3544 = vshll.u32 2131351028, %v3535
        %v3545 = vshrl.u32 2102212464, %v3536
        %v3546 = vor.u32 %v3544, %v3545
        %v3547 = vshll.u32 2102212464, %v3535
        %v3548 = vshrl.u32 920167782, %v3536
        %v3549 = vor.u32 %v3547, %v3548
        %v3550 = vshll.u32 920167782, %v3535
        %v3551 = vshrl.u32 1326507024, %v3536
        %v3552 = vor.u32 %v3550, %v3551
        %vm3553 = vcmp.lt.s32.totalorder %v3534, 1
        %vm3554 = vcmp.lt.s32.totalorder %v3534, 2
        %vm3555 = vcmp.lt.s32.totalorder %v3534, 3
        %vm3556 = vcmp.lt.s32.totalorder %v3534, 4
        %v3557 = vsel %vm3553, %v3537, %v3540
        %v3558 = vsel %vm3556, %v3546, 2102212464
        %v3559 = vsel %vm3555, %v3543, %v3558
        %v3560 = vsel %vm3554, %v3557, %v3559
        %v3561 = vsel %vm3553, %v3540, %v3543
        %v3562 = vsel %vm3556, %v3549, 920167782
        %v3563 = vsel %vm3555, %v3546, %v3562
        %v3564 = vsel %vm3554, %v3561, %v3563
        %v3565 = vsel %vm3553, %v3543, %v3546
        %v3566 = vsel %vm3556, %v3552, 1326507024
        %v3567 = vsel %vm3555, %v3549, %v3566
        %v3568 = vsel %vm3554, %v3565, %v3567
        %v3569 = vshll.u32 %v3529, 8
        %v3570 = vmul.u32.u64.compose %v3569, %v3568
        %v3571 = vextract.low.u32 %v3570
        %v3572 = vextract.high.u32 %v3570
        %v3573 = vmul.u32.u64.compose %v3569, %v3564
        %v3574 = vextract.low.u32 %v3573
        %v3575 = vextract.high.u32 %v3573
        %v3576 = vmul.u32 %v3569, %v3560
        %v3577 = vadd.s32 %v3572, %v3574
        %vm3578 = vc.u32 %v3572, %v3574
        %v3579 = vadd.s32 %v3575, 1
        %v3580 = vsel %vm3578, %v3579, %v3575
        %v3581 = vadd.s32 %v3576, %v3580
        %v3582 = vadd.s32 %v3581, 536870912
        %v3583 = vshrl.u32 %v3582, 30
        %v3584 = vshll.u32 %v3583, 30
        %v3585 = vsub.s32 %v3581, %v3584
        %vm3586 = vcmp.lt.s32.totalorder %v3585, 0
        %v3587 = vsub.s32 0, %v3585
        %v3588 = vsel %vm3586, %v3587, %v3585
        %v3589 = vclz %v3588
        %v3590 = vsub.s32 %v3589, 2
        %vm3591 = vcmp.gt.s32.totalorder 0, %v3590
        %v3592 = vsel %vm3591, 0, %v3590
        %v3593 = vsub.s32 32, %v3592
        %v3594 = vshll.u32 %v3585, %v3592
        %v3595 = vshrl.u32 %v3577, %v3593
        %v3596 = vor.u32 %v3594, %v3595
        %v3597 = vsub.s32 4294967266, %v3592
        %v3598 = vadd.s32 %v3597, 127
        %v3599 = vshll.u32 %v3598, 23
        %v3600 = vor.u32 4788187, %v3599
        %v3601 = vand.u32 2147483647, %v3600
        %v3603 = vcvt.s32.f32 %v3596
        %v3604 = vmul.f32 %v3603, %v3601
        %v3605 = vxor.u32 %v3604, 2147483648
        %v3606 = vsel %vm3523, %v3605, %v3604
        %v3607 = vsub.s32 4, %v3583
        %v3608 = vsel %vm3523, %v3607, %v3583
        %v3609 = vsel %vm3522, %v1517, %v3606
        %v3610 = vsel %vm3522, 0, %v3608
        %v3611 = vcosq.f32.pop %v3609
        %v3612 = vsinq.f32.pop %v3609
        %vm3613 = vweird.f32 %v1517
        %v3614 = vand.u32 %v3610, 3
        %vm3615 = vcmp.lt.s32.totalorder %v3614, 2
        %vm3616 = vcmp.eq.s32.totalorder %v3614, 0
        %v3617 = vxor.u32 %v3612, 2147483648
        %v3618 = vsel %vm3616, %v3611, %v3617
        %vm3619 = vcmp.eq.s32.totalorder %v3614, 2
        %v3620 = vxor.u32 %v3611, 2147483648
        %v3621 = vsel %vm3619, %v3620, %v3612
        %v3622 = vsel %vm3615, %v3618, %v3621
        %v3623 = vsel %vm3613, nan, %v3622
        %v3624 = vand.u32 2147483647, %v1518
        %vm3625 = vcmp.le.f32.partialorder %v3624, 0.7853982
        %vm3626 = vcmp.lt.s32.totalorder %v1518, 0
        %v3627 = vand.u32 %v1518, 2139095040
        %v3628 = vshrl.u32 %v3627, 23
        %v3629 = vsub.s32 %v3628, 127
        %v3630 = vand.u32 2147483647, %v1518
        %v3631 = vand.u32 %v3630, 8388607
        %v3632 = vor.u32 %v3631, 8388608
        %v3633 = vsub.s32 0, %v3632
        %v3634 = vadd.s32 %v3629, 1
        %vm3635 = vcmp.gt.s32.totalorder %v3634, 0
        %v3636 = vsel %vm3635, %v3634, 0
        %v3637 = vshrl.u32 %v3636, 5
        %v3638 = vand.u32 %v3636, 31
        %v3639 = vsub.s32 32, %v3638
        %v3640 = vshrl.u32 683565275, %v3639
        %v3641 = vshll.u32 683565275, %v3638
        %v3642 = vshrl.u32 2475754826, %v3639
        %v3643 = vor.u32 %v3641, %v3642
        %v3644 = vshll.u32 2475754826, %v3638
        %v3645 = vshrl.u32 2131351028, %v3639
        %v3646 = vor.u32 %v3644, %v3645
        %v3647 = vshll.u32 2131351028, %v3638
        %v3648 = vshrl.u32 2102212464, %v3639
        %v3649 = vor.u32 %v3647, %v3648
        %v3650 = vshll.u32 2102212464, %v3638
        %v3651 = vshrl.u32 920167782, %v3639
        %v3652 = vor.u32 %v3650, %v3651
        %v3653 = vshll.u32 920167782, %v3638
        %v3654 = vshrl.u32 1326507024, %v3639
        %v3655 = vor.u32 %v3653, %v3654
        %vm3656 = vcmp.lt.s32.totalorder %v3637, 1
        %vm3657 = vcmp.lt.s32.totalorder %v3637, 2
        %vm3658 = vcmp.lt.s32.totalorder %v3637, 3
        %vm3659 = vcmp.lt.s32.totalorder %v3637, 4
        %v3660 = vsel %vm3656, %v3640, %v3643
        %v3661 = vsel %vm3659, %v3649, 2102212464
        %v3662 = vsel %vm3658, %v3646, %v3661
        %v3663 = vsel %vm3657, %v3660, %v3662
        %v3664 = vsel %vm3656, %v3643, %v3646
        %v3665 = vsel %vm3659, %v3652, 920167782
        %v3666 = vsel %vm3658, %v3649, %v3665
        %v3667 = vsel %vm3657, %v3664, %v3666
        %v3668 = vsel %vm3656, %v3646, %v3649
        %v3669 = vsel %vm3659, %v3655, 1326507024
        %v3670 = vsel %vm3658, %v3652, %v3669
        %v3671 = vsel %vm3657, %v3668, %v3670
        %v3672 = vshll.u32 %v3632, 8
        %v3673 = vmul.u32.u64.compose %v3672, %v3671
        %v3674 = vextract.low.u32 %v3673
        %v3675 = vextract.high.u32 %v3673
        %v3676 = vmul.u32.u64.compose %v3672, %v3667
        %v3677 = vextract.low.u32 %v3676
        %v3678 = vextract.high.u32 %v3676
        %v3679 = vmul.u32 %v3672, %v3663
        %v3680 = vadd.s32 %v3675, %v3677
        %vm3681 = vc.u32 %v3675, %v3677
        %v3682 = vadd.s32 %v3678, 1
        %v3683 = vsel %vm3681, %v3682, %v3678
        %v3684 = vadd.s32 %v3679, %v3683
        %v3685 = vadd.s32 %v3684, 536870912
        %v3686 = vshrl.u32 %v3685, 30
        %v3687 = vshll.u32 %v3686, 30
        %v3688 = vsub.s32 %v3684, %v3687
        %vm3689 = vcmp.lt.s32.totalorder %v3688, 0
        %v3690 = vsub.s32 0, %v3688
        %v3691 = vsel %vm3689, %v3690, %v3688
        %v3692 = vclz %v3691
        %v3693 = vsub.s32 %v3692, 2
        %vm3694 = vcmp.gt.s32.totalorder 0, %v3693
        %v3695 = vsel %vm3694, 0, %v3693
        %v3696 = vsub.s32 32, %v3695
        %v3697 = vshll.u32 %v3688, %v3695
        %v3698 = vshrl.u32 %v3680, %v3696
        %v3699 = vor.u32 %v3697, %v3698
        %v3700 = vsub.s32 4294967266, %v3695
        %v3701 = vadd.s32 %v3700, 127
        %v3702 = vshll.u32 %v3701, 23
        %v3703 = vor.u32 4788187, %v3702
        %v3704 = vand.u32 2147483647, %v3703
        %v3706 = vcvt.s32.f32 %v3699
        %v3707 = vmul.f32 %v3706, %v3704
        %v3708 = vxor.u32 %v3707, 2147483648
        %v3709 = vsel %vm3626, %v3708, %v3707
        %v3710 = vsub.s32 4, %v3686
        %v3711 = vsel %vm3626, %v3710, %v3686
        %v3712 = vsel %vm3625, %v1518, %v3709
        %v3713 = vsel %vm3625, 0, %v3711
        %v3714 = vcosq.f32.pop %v3712
        %v3715 = vsinq.f32.pop %v3712
        %vm3716 = vweird.f32 %v1518
        %v3717 = vand.u32 %v3713, 3
        %vm3718 = vcmp.lt.s32.totalorder %v3717, 2
        %vm3719 = vcmp.eq.s32.totalorder %v3717, 0
        %v3720 = vxor.u32 %v3715, 2147483648
        %v3721 = vsel %vm3719, %v3714, %v3720
        %vm3722 = vcmp.eq.s32.totalorder %v3717, 2
        %v3723 = vxor.u32 %v3714, 2147483648
        %v3724 = vsel %vm3722, %v3723, %v3715
        %v3725 = vsel %vm3718, %v3721, %v3724
        %v3726 = vsel %vm3716, nan, %v3725
        %v3727 = vand.u32 2147483647, %v1519
        %vm3728 = vcmp.le.f32.partialorder %v3727, 0.7853982
        %vm3729 = vcmp.lt.s32.totalorder %v1519, 0
        %v3730 = vand.u32 %v1519, 2139095040
        %v3731 = vshrl.u32 %v3730, 23
        %v3732 = vsub.s32 %v3731, 127
        %v3733 = vand.u32 2147483647, %v1519
        %v3734 = vand.u32 %v3733, 8388607
        %v3735 = vor.u32 %v3734, 8388608
        %v3736 = vsub.s32 0, %v3735
        %v3737 = vadd.s32 %v3732, 1
        %vm3738 = vcmp.gt.s32.totalorder %v3737, 0
        %v3739 = vsel %vm3738, %v3737, 0
        %v3740 = vshrl.u32 %v3739, 5
        %v3741 = vand.u32 %v3739, 31
        %v3742 = vsub.s32 32, %v3741
        %v3743 = vshrl.u32 683565275, %v3742
        %v3744 = vshll.u32 683565275, %v3741
        %v3745 = vshrl.u32 2475754826, %v3742
        %v3746 = vor.u32 %v3744, %v3745
        %v3747 = vshll.u32 2475754826, %v3741
        %v3748 = vshrl.u32 2131351028, %v3742
        %v3749 = vor.u32 %v3747, %v3748
        %v3750 = vshll.u32 2131351028, %v3741
        %v3751 = vshrl.u32 2102212464, %v3742
        %v3752 = vor.u32 %v3750, %v3751
        %v3753 = vshll.u32 2102212464, %v3741
        %v3754 = vshrl.u32 920167782, %v3742
        %v3755 = vor.u32 %v3753, %v3754
        %v3756 = vshll.u32 920167782, %v3741
        %v3757 = vshrl.u32 1326507024, %v3742
        %v3758 = vor.u32 %v3756, %v3757
        %vm3759 = vcmp.lt.s32.totalorder %v3740, 1
        %vm3760 = vcmp.lt.s32.totalorder %v3740, 2
        %vm3761 = vcmp.lt.s32.totalorder %v3740, 3
        %vm3762 = vcmp.lt.s32.totalorder %v3740, 4
        %v3763 = vsel %vm3759, %v3743, %v3746
        %v3764 = vsel %vm3762, %v3752, 2102212464
        %v3765 = vsel %vm3761, %v3749, %v3764
        %v3766 = vsel %vm3760, %v3763, %v3765
        %v3767 = vsel %vm3759, %v3746, %v3749
        %v3768 = vsel %vm3762, %v3755, 920167782
        %v3769 = vsel %vm3761, %v3752, %v3768
        %v3770 = vsel %vm3760, %v3767, %v3769
        %v3771 = vsel %vm3759, %v3749, %v3752
        %v3772 = vsel %vm3762, %v3758, 1326507024
        %v3773 = vsel %vm3761, %v3755, %v3772
        %v3774 = vsel %vm3760, %v3771, %v3773
        %v3775 = vshll.u32 %v3735, 8
        %v3776 = vmul.u32.u64.compose %v3775, %v3774
        %v3777 = vextract.low.u32 %v3776
        %v3778 = vextract.high.u32 %v3776
        %v3779 = vmul.u32.u64.compose %v3775, %v3770
        %v3780 = vextract.low.u32 %v3779
        %v3781 = vextract.high.u32 %v3779
        %v3782 = vmul.u32 %v3775, %v3766
        %v3783 = vadd.s32 %v3778, %v3780
        %vm3784 = vc.u32 %v3778, %v3780
        %v3785 = vadd.s32 %v3781, 1
        %v3786 = vsel %vm3784, %v3785, %v3781
        %v3787 = vadd.s32 %v3782, %v3786
        %v3788 = vadd.s32 %v3787, 536870912
        %v3789 = vshrl.u32 %v3788, 30
        %v3790 = vshll.u32 %v3789, 30
        %v3791 = vsub.s32 %v3787, %v3790
        %vm3792 = vcmp.lt.s32.totalorder %v3791, 0
        %v3793 = vsub.s32 0, %v3791
        %v3794 = vsel %vm3792, %v3793, %v3791
        %v3795 = vclz %v3794
        %v3796 = vsub.s32 %v3795, 2
        %vm3797 = vcmp.gt.s32.totalorder 0, %v3796
        %v3798 = vsel %vm3797, 0, %v3796
        %v3799 = vsub.s32 32, %v3798
        %v3800 = vshll.u32 %v3791, %v3798
        %v3801 = vshrl.u32 %v3783, %v3799
        %v3802 = vor.u32 %v3800, %v3801
        %v3803 = vsub.s32 4294967266, %v3798
        %v3804 = vadd.s32 %v3803, 127
        %v3805 = vshll.u32 %v3804, 23
        %v3806 = vor.u32 4788187, %v3805
        %v3807 = vand.u32 2147483647, %v3806
        %v3809 = vcvt.s32.f32 %v3802
        %v3810 = vmul.f32 %v3809, %v3807
        %v3811 = vxor.u32 %v3810, 2147483648
        %v3812 = vsel %vm3729, %v3811, %v3810
        %v3813 = vsub.s32 4, %v3789
        %v3814 = vsel %vm3729, %v3813, %v3789
        %v3815 = vsel %vm3728, %v1519, %v3812
        %v3816 = vsel %vm3728, 0, %v3814
        %v3817 = vcosq.f32.pop %v3815
        %v3818 = vsinq.f32.pop %v3815
        %vm3819 = vweird.f32 %v1519
        %v3820 = vand.u32 %v3816, 3
        %vm3821 = vcmp.lt.s32.totalorder %v3820, 2
        %vm3822 = vcmp.eq.s32.totalorder %v3820, 0
        %v3823 = vxor.u32 %v3818, 2147483648
        %v3824 = vsel %vm3822, %v3817, %v3823
        %vm3825 = vcmp.eq.s32.totalorder %v3820, 2
        %v3826 = vxor.u32 %v3817, 2147483648
        %v3827 = vsel %vm3825, %v3826, %v3818
        %v3828 = vsel %vm3821, %v3824, %v3827
        %v3829 = vsel %vm3819, nan, %v3828
        %v3830 = vand.u32 2147483647, %v1520
        %vm3831 = vcmp.le.f32.partialorder %v3830, 0.7853982
        %vm3832 = vcmp.lt.s32.totalorder %v1520, 0
        %v3833 = vand.u32 %v1520, 2139095040
        %v3834 = vshrl.u32 %v3833, 23
        %v3835 = vsub.s32 %v3834, 127
        %v3836 = vand.u32 2147483647, %v1520
        %v3837 = vand.u32 %v3836, 8388607
        %v3838 = vor.u32 %v3837, 8388608
        %v3839 = vsub.s32 0, %v3838
        %v3840 = vadd.s32 %v3835, 1
        %vm3841 = vcmp.gt.s32.totalorder %v3840, 0
        %v3842 = vsel %vm3841, %v3840, 0
        %v3843 = vshrl.u32 %v3842, 5
        %v3844 = vand.u32 %v3842, 31
        %v3845 = vsub.s32 32, %v3844
        %v3846 = vshrl.u32 683565275, %v3845
        %v3847 = vshll.u32 683565275, %v3844
        %v3848 = vshrl.u32 2475754826, %v3845
        %v3849 = vor.u32 %v3847, %v3848
        %v3850 = vshll.u32 2475754826, %v3844
        %v3851 = vshrl.u32 2131351028, %v3845
        %v3852 = vor.u32 %v3850, %v3851
        %v3853 = vshll.u32 2131351028, %v3844
        %v3854 = vshrl.u32 2102212464, %v3845
        %v3855 = vor.u32 %v3853, %v3854
        %v3856 = vshll.u32 2102212464, %v3844
        %v3857 = vshrl.u32 920167782, %v3845
        %v3858 = vor.u32 %v3856, %v3857
        %v3859 = vshll.u32 920167782, %v3844
        %v3860 = vshrl.u32 1326507024, %v3845
        %v3861 = vor.u32 %v3859, %v3860
        %vm3862 = vcmp.lt.s32.totalorder %v3843, 1
        %vm3863 = vcmp.lt.s32.totalorder %v3843, 2
        %vm3864 = vcmp.lt.s32.totalorder %v3843, 3
        %vm3865 = vcmp.lt.s32.totalorder %v3843, 4
        %v3866 = vsel %vm3862, %v3846, %v3849
        %v3867 = vsel %vm3865, %v3855, 2102212464
        %v3868 = vsel %vm3864, %v3852, %v3867
        %v3869 = vsel %vm3863, %v3866, %v3868
        %v3870 = vsel %vm3862, %v3849, %v3852
        %v3871 = vsel %vm3865, %v3858, 920167782
        %v3872 = vsel %vm3864, %v3855, %v3871
        %v3873 = vsel %vm3863, %v3870, %v3872
        %v3874 = vsel %vm3862, %v3852, %v3855
        %v3875 = vsel %vm3865, %v3861, 1326507024
        %v3876 = vsel %vm3864, %v3858, %v3875
        %v3877 = vsel %vm3863, %v3874, %v3876
        %v3878 = vshll.u32 %v3838, 8
        %v3879 = vmul.u32.u64.compose %v3878, %v3877
        %v3880 = vextract.low.u32 %v3879
        %v3881 = vextract.high.u32 %v3879
        %v3882 = vmul.u32.u64.compose %v3878, %v3873
        %v3883 = vextract.low.u32 %v3882
        %v3884 = vextract.high.u32 %v3882
        %v3885 = vmul.u32 %v3878, %v3869
        %v3886 = vadd.s32 %v3881, %v3883
        %vm3887 = vc.u32 %v3881, %v3883
        %v3888 = vadd.s32 %v3884, 1
        %v3889 = vsel %vm3887, %v3888, %v3884
        %v3890 = vadd.s32 %v3885, %v3889
        %v3891 = vadd.s32 %v3890, 536870912
        %v3892 = vshrl.u32 %v3891, 30
        %v3893 = vshll.u32 %v3892, 30
        %v3894 = vsub.s32 %v3890, %v3893
        %vm3895 = vcmp.lt.s32.totalorder %v3894, 0
        %v3896 = vsub.s32 0, %v3894
        %v3897 = vsel %vm3895, %v3896, %v3894
        %v3898 = vclz %v3897
        %v3899 = vsub.s32 %v3898, 2
        %vm3900 = vcmp.gt.s32.totalorder 0, %v3899
        %v3901 = vsel %vm3900, 0, %v3899
        %v3902 = vsub.s32 32, %v3901
        %v3903 = vshll.u32 %v3894, %v3901
        %v3904 = vshrl.u32 %v3886, %v3902
        %v3905 = vor.u32 %v3903, %v3904
        %v3906 = vsub.s32 4294967266, %v3901
        %v3907 = vadd.s32 %v3906, 127
        %v3908 = vshll.u32 %v3907, 23
        %v3909 = vor.u32 4788187, %v3908
        %v3910 = vand.u32 2147483647, %v3909
        %v3912 = vcvt.s32.f32 %v3905
        %v3913 = vmul.f32 %v3912, %v3910
        %v3914 = vxor.u32 %v3913, 2147483648
        %v3915 = vsel %vm3832, %v3914, %v3913
        %v3916 = vsub.s32 4, %v3892
        %v3917 = vsel %vm3832, %v3916, %v3892
        %v3918 = vsel %vm3831, %v1520, %v3915
        %v3919 = vsel %vm3831, 0, %v3917
        %v3920 = vcosq.f32.pop %v3918
        %v3921 = vsinq.f32.pop %v3918
        %vm3922 = vweird.f32 %v1520
        %v3923 = vand.u32 %v3919, 3
        %vm3924 = vcmp.lt.s32.totalorder %v3923, 2
        %vm3925 = vcmp.eq.s32.totalorder %v3923, 0
        %v3926 = vxor.u32 %v3921, 2147483648
        %v3927 = vsel %vm3925, %v3920, %v3926
        %vm3928 = vcmp.eq.s32.totalorder %v3923, 2
        %v3929 = vxor.u32 %v3920, 2147483648
        %v3930 = vsel %vm3928, %v3929, %v3921
        %v3931 = vsel %vm3924, %v3927, %v3930
        %v3932 = vsel %vm3922, nan, %v3931
        %v3933 = vand.u32 2147483647, %v1521
        %vm3934 = vcmp.le.f32.partialorder %v3933, 0.7853982
        %vm3935 = vcmp.lt.s32.totalorder %v1521, 0
        %v3936 = vand.u32 %v1521, 2139095040
        %v3937 = vshrl.u32 %v3936, 23
        %v3938 = vsub.s32 %v3937, 127
        %v3939 = vand.u32 2147483647, %v1521
        %v3940 = vand.u32 %v3939, 8388607
        %v3941 = vor.u32 %v3940, 8388608
        %v3942 = vsub.s32 0, %v3941
        %v3943 = vadd.s32 %v3938, 1
        %vm3944 = vcmp.gt.s32.totalorder %v3943, 0
        %v3945 = vsel %vm3944, %v3943, 0
        %v3946 = vshrl.u32 %v3945, 5
        %v3947 = vand.u32 %v3945, 31
        %v3948 = vsub.s32 32, %v3947
        %v3949 = vshrl.u32 683565275, %v3948
        %v3950 = vshll.u32 683565275, %v3947
        %v3951 = vshrl.u32 2475754826, %v3948
        %v3952 = vor.u32 %v3950, %v3951
        %v3953 = vshll.u32 2475754826, %v3947
        %v3954 = vshrl.u32 2131351028, %v3948
        %v3955 = vor.u32 %v3953, %v3954
        %v3956 = vshll.u32 2131351028, %v3947
        %v3957 = vshrl.u32 2102212464, %v3948
        %v3958 = vor.u32 %v3956, %v3957
        %v3959 = vshll.u32 2102212464, %v3947
        %v3960 = vshrl.u32 920167782, %v3948
        %v3961 = vor.u32 %v3959, %v3960
        %v3962 = vshll.u32 920167782, %v3947
        %v3963 = vshrl.u32 1326507024, %v3948
        %v3964 = vor.u32 %v3962, %v3963
        %vm3965 = vcmp.lt.s32.totalorder %v3946, 1
        %vm3966 = vcmp.lt.s32.totalorder %v3946, 2
        %vm3967 = vcmp.lt.s32.totalorder %v3946, 3
        %vm3968 = vcmp.lt.s32.totalorder %v3946, 4
        %v3969 = vsel %vm3965, %v3949, %v3952
        %v3970 = vsel %vm3968, %v3958, 2102212464
        %v3971 = vsel %vm3967, %v3955, %v3970
        %v3972 = vsel %vm3966, %v3969, %v3971
        %v3973 = vsel %vm3965, %v3952, %v3955
        %v3974 = vsel %vm3968, %v3961, 920167782
        %v3975 = vsel %vm3967, %v3958, %v3974
        %v3976 = vsel %vm3966, %v3973, %v3975
        %v3977 = vsel %vm3965, %v3955, %v3958
        %v3978 = vsel %vm3968, %v3964, 1326507024
        %v3979 = vsel %vm3967, %v3961, %v3978
        %v3980 = vsel %vm3966, %v3977, %v3979
        %v3981 = vshll.u32 %v3941, 8
        %v3982 = vmul.u32.u64.compose %v3981, %v3980
        %v3983 = vextract.low.u32 %v3982
        %v3984 = vextract.high.u32 %v3982
        %v3985 = vmul.u32.u64.compose %v3981, %v3976
        %v3986 = vextract.low.u32 %v3985
        %v3987 = vextract.high.u32 %v3985
        %v3988 = vmul.u32 %v3981, %v3972
        %v3989 = vadd.s32 %v3984, %v3986
        %vm3990 = vc.u32 %v3984, %v3986
        %v3991 = vadd.s32 %v3987, 1
        %v3992 = vsel %vm3990, %v3991, %v3987
        %v3993 = vadd.s32 %v3988, %v3992
        %v3994 = vadd.s32 %v3993, 536870912
        %v3995 = vshrl.u32 %v3994, 30
        %v3996 = vshll.u32 %v3995, 30
        %v3997 = vsub.s32 %v3993, %v3996
        %vm3998 = vcmp.lt.s32.totalorder %v3997, 0
        %v3999 = vsub.s32 0, %v3997
        %v4000 = vsel %vm3998, %v3999, %v3997
        %v4001 = vclz %v4000
        %v4002 = vsub.s32 %v4001, 2
        %vm4003 = vcmp.gt.s32.totalorder 0, %v4002
        %v4004 = vsel %vm4003, 0, %v4002
        %v4005 = vsub.s32 32, %v4004
        %v4006 = vshll.u32 %v3997, %v4004
        %v4007 = vshrl.u32 %v3989, %v4005
        %v4008 = vor.u32 %v4006, %v4007
        %v4009 = vsub.s32 4294967266, %v4004
        %v4010 = vadd.s32 %v4009, 127
        %v4011 = vshll.u32 %v4010, 23
        %v4012 = vor.u32 4788187, %v4011
        %v4013 = vand.u32 2147483647, %v4012
        %v4015 = vcvt.s32.f32 %v4008
        %v4016 = vmul.f32 %v4015, %v4013
        %v4017 = vxor.u32 %v4016, 2147483648
        %v4018 = vsel %vm3935, %v4017, %v4016
        %v4019 = vsub.s32 4, %v3995
        %v4020 = vsel %vm3935, %v4019, %v3995
        %v4021 = vsel %vm3934, %v1521, %v4018
        %v4022 = vsel %vm3934, 0, %v4020
        %v4023 = vcosq.f32.pop %v4021
        %v4024 = vsinq.f32.pop %v4021
        %vm4025 = vweird.f32 %v1521
        %v4026 = vand.u32 %v4022, 3
        %vm4027 = vcmp.lt.s32.totalorder %v4026, 2
        %vm4028 = vcmp.eq.s32.totalorder %v4026, 0
        %v4029 = vxor.u32 %v4024, 2147483648
        %v4030 = vsel %vm4028, %v4023, %v4029
        %vm4031 = vcmp.eq.s32.totalorder %v4026, 2
        %v4032 = vxor.u32 %v4023, 2147483648
        %v4033 = vsel %vm4031, %v4032, %v4024
        %v4034 = vsel %vm4027, %v4030, %v4033
        %v4035 = vsel %vm4025, nan, %v4034
        %v4036 = vand.u32 2147483647, %v1522
        %vm4037 = vcmp.le.f32.partialorder %v4036, 0.7853982
        %vm4038 = vcmp.lt.s32.totalorder %v1522, 0
        %v4039 = vand.u32 %v1522, 2139095040
        %v4040 = vshrl.u32 %v4039, 23
        %v4041 = vsub.s32 %v4040, 127
        %v4042 = vand.u32 2147483647, %v1522
        %v4043 = vand.u32 %v4042, 8388607
        %v4044 = vor.u32 %v4043, 8388608
        %v4045 = vsub.s32 0, %v4044
        %v4046 = vadd.s32 %v4041, 1
        %vm4047 = vcmp.gt.s32.totalorder %v4046, 0
        %v4048 = vsel %vm4047, %v4046, 0
        %v4049 = vshrl.u32 %v4048, 5
        %v4050 = vand.u32 %v4048, 31
        %v4051 = vsub.s32 32, %v4050
        %v4052 = vshrl.u32 683565275, %v4051
        %v4053 = vshll.u32 683565275, %v4050
        %v4054 = vshrl.u32 2475754826, %v4051
        %v4055 = vor.u32 %v4053, %v4054
        %v4056 = vshll.u32 2475754826, %v4050
        %v4057 = vshrl.u32 2131351028, %v4051
        %v4058 = vor.u32 %v4056, %v4057
        %v4059 = vshll.u32 2131351028, %v4050
        %v4060 = vshrl.u32 2102212464, %v4051
        %v4061 = vor.u32 %v4059, %v4060
        %v4062 = vshll.u32 2102212464, %v4050
        %v4063 = vshrl.u32 920167782, %v4051
        %v4064 = vor.u32 %v4062, %v4063
        %v4065 = vshll.u32 920167782, %v4050
        %v4066 = vshrl.u32 1326507024, %v4051
        %v4067 = vor.u32 %v4065, %v4066
        %vm4068 = vcmp.lt.s32.totalorder %v4049, 1
        %vm4069 = vcmp.lt.s32.totalorder %v4049, 2
        %vm4070 = vcmp.lt.s32.totalorder %v4049, 3
        %vm4071 = vcmp.lt.s32.totalorder %v4049, 4
        %v4072 = vsel %vm4068, %v4052, %v4055
        %v4073 = vsel %vm4071, %v4061, 2102212464
        %v4074 = vsel %vm4070, %v4058, %v4073
        %v4075 = vsel %vm4069, %v4072, %v4074
        %v4076 = vsel %vm4068, %v4055, %v4058
        %v4077 = vsel %vm4071, %v4064, 920167782
        %v4078 = vsel %vm4070, %v4061, %v4077
        %v4079 = vsel %vm4069, %v4076, %v4078
        %v4080 = vsel %vm4068, %v4058, %v4061
        %v4081 = vsel %vm4071, %v4067, 1326507024
        %v4082 = vsel %vm4070, %v4064, %v4081
        %v4083 = vsel %vm4069, %v4080, %v4082
        %v4084 = vshll.u32 %v4044, 8
        %v4085 = vmul.u32.u64.compose %v4084, %v4083
        %v4086 = vextract.low.u32 %v4085
        %v4087 = vextract.high.u32 %v4085
        %v4088 = vmul.u32.u64.compose %v4084, %v4079
        %v4089 = vextract.low.u32 %v4088
        %v4090 = vextract.high.u32 %v4088
        %v4091 = vmul.u32 %v4084, %v4075
        %v4092 = vadd.s32 %v4087, %v4089
        %vm4093 = vc.u32 %v4087, %v4089
        %v4094 = vadd.s32 %v4090, 1
        %v4095 = vsel %vm4093, %v4094, %v4090
        %v4096 = vadd.s32 %v4091, %v4095
        %v4097 = vadd.s32 %v4096, 536870912
        %v4098 = vshrl.u32 %v4097, 30
        %v4099 = vshll.u32 %v4098, 30
        %v4100 = vsub.s32 %v4096, %v4099
        %vm4101 = vcmp.lt.s32.totalorder %v4100, 0
        %v4102 = vsub.s32 0, %v4100
        %v4103 = vsel %vm4101, %v4102, %v4100
        %v4104 = vclz %v4103
        %v4105 = vsub.s32 %v4104, 2
        %vm4106 = vcmp.gt.s32.totalorder 0, %v4105
        %v4107 = vsel %vm4106, 0, %v4105
        %v4108 = vsub.s32 32, %v4107
        %v4109 = vshll.u32 %v4100, %v4107
        %v4110 = vshrl.u32 %v4092, %v4108
        %v4111 = vor.u32 %v4109, %v4110
        %v4112 = vsub.s32 4294967266, %v4107
        %v4113 = vadd.s32 %v4112, 127
        %v4114 = vshll.u32 %v4113, 23
        %v4115 = vor.u32 4788187, %v4114
        %v4116 = vand.u32 2147483647, %v4115
        %v4118 = vcvt.s32.f32 %v4111
        %v4119 = vmul.f32 %v4118, %v4116
        %v4120 = vxor.u32 %v4119, 2147483648
        %v4121 = vsel %vm4038, %v4120, %v4119
        %v4122 = vsub.s32 4, %v4098
        %v4123 = vsel %vm4038, %v4122, %v4098
        %v4124 = vsel %vm4037, %v1522, %v4121
        %v4125 = vsel %vm4037, 0, %v4123
        %v4126 = vcosq.f32.pop %v4124
        %v4127 = vsinq.f32.pop %v4124
        %vm4128 = vweird.f32 %v1522
        %v4129 = vand.u32 %v4125, 3
        %vm4130 = vcmp.lt.s32.totalorder %v4129, 2
        %vm4131 = vcmp.eq.s32.totalorder %v4129, 0
        %v4132 = vxor.u32 %v4127, 2147483648
        %v4133 = vsel %vm4131, %v4126, %v4132
        %vm4134 = vcmp.eq.s32.totalorder %v4129, 2
        %v4135 = vxor.u32 %v4126, 2147483648
        %v4136 = vsel %vm4134, %v4135, %v4127
        %v4137 = vsel %vm4130, %v4133, %v4136
        %v4138 = vsel %vm4128, nan, %v4137
        %v4139 = vand.u32 2147483647, %v1523
        %vm4140 = vcmp.le.f32.partialorder %v4139, 0.7853982
        %vm4141 = vcmp.lt.s32.totalorder %v1523, 0
        %v4142 = vand.u32 %v1523, 2139095040
        %v4143 = vshrl.u32 %v4142, 23
        %v4144 = vsub.s32 %v4143, 127
        %v4145 = vand.u32 2147483647, %v1523
        %v4146 = vand.u32 %v4145, 8388607
        %v4147 = vor.u32 %v4146, 8388608
        %v4148 = vsub.s32 0, %v4147
        %v4149 = vadd.s32 %v4144, 1
        %vm4150 = vcmp.gt.s32.totalorder %v4149, 0
        %v4151 = vsel %vm4150, %v4149, 0
        %v4152 = vshrl.u32 %v4151, 5
        %v4153 = vand.u32 %v4151, 31
        %v4154 = vsub.s32 32, %v4153
        %v4155 = vshrl.u32 683565275, %v4154
        %v4156 = vshll.u32 683565275, %v4153
        %v4157 = vshrl.u32 2475754826, %v4154
        %v4158 = vor.u32 %v4156, %v4157
        %v4159 = vshll.u32 2475754826, %v4153
        %v4160 = vshrl.u32 2131351028, %v4154
        %v4161 = vor.u32 %v4159, %v4160
        %v4162 = vshll.u32 2131351028, %v4153
        %v4163 = vshrl.u32 2102212464, %v4154
        %v4164 = vor.u32 %v4162, %v4163
        %v4165 = vshll.u32 2102212464, %v4153
        %v4166 = vshrl.u32 920167782, %v4154
        %v4167 = vor.u32 %v4165, %v4166
        %v4168 = vshll.u32 920167782, %v4153
        %v4169 = vshrl.u32 1326507024, %v4154
        %v4170 = vor.u32 %v4168, %v4169
        %vm4171 = vcmp.lt.s32.totalorder %v4152, 1
        %vm4172 = vcmp.lt.s32.totalorder %v4152, 2
        %vm4173 = vcmp.lt.s32.totalorder %v4152, 3
        %vm4174 = vcmp.lt.s32.totalorder %v4152, 4
        %v4175 = vsel %vm4171, %v4155, %v4158
        %v4176 = vsel %vm4174, %v4164, 2102212464
        %v4177 = vsel %vm4173, %v4161, %v4176
        %v4178 = vsel %vm4172, %v4175, %v4177
        %v4179 = vsel %vm4171, %v4158, %v4161
        %v4180 = vsel %vm4174, %v4167, 920167782
        %v4181 = vsel %vm4173, %v4164, %v4180
        %v4182 = vsel %vm4172, %v4179, %v4181
        %v4183 = vsel %vm4171, %v4161, %v4164
        %v4184 = vsel %vm4174, %v4170, 1326507024
        %v4185 = vsel %vm4173, %v4167, %v4184
        %v4186 = vsel %vm4172, %v4183, %v4185
        %v4187 = vshll.u32 %v4147, 8
        %v4188 = vmul.u32.u64.compose %v4187, %v4186
        %v4189 = vextract.low.u32 %v4188
        %v4190 = vextract.high.u32 %v4188
        %v4191 = vmul.u32.u64.compose %v4187, %v4182
        %v4192 = vextract.low.u32 %v4191
        %v4193 = vextract.high.u32 %v4191
        %v4194 = vmul.u32 %v4187, %v4178
        %v4195 = vadd.s32 %v4190, %v4192
        %vm4196 = vc.u32 %v4190, %v4192
        %v4197 = vadd.s32 %v4193, 1
        %v4198 = vsel %vm4196, %v4197, %v4193
        %v4199 = vadd.s32 %v4194, %v4198
        %v4200 = vadd.s32 %v4199, 536870912
        %v4201 = vshrl.u32 %v4200, 30
        %v4202 = vshll.u32 %v4201, 30
        %v4203 = vsub.s32 %v4199, %v4202
        %vm4204 = vcmp.lt.s32.totalorder %v4203, 0
        %v4205 = vsub.s32 0, %v4203
        %v4206 = vsel %vm4204, %v4205, %v4203
        %v4207 = vclz %v4206
        %v4208 = vsub.s32 %v4207, 2
        %vm4209 = vcmp.gt.s32.totalorder 0, %v4208
        %v4210 = vsel %vm4209, 0, %v4208
        %v4211 = vsub.s32 32, %v4210
        %v4212 = vshll.u32 %v4203, %v4210
        %v4213 = vshrl.u32 %v4195, %v4211
        %v4214 = vor.u32 %v4212, %v4213
        %v4215 = vsub.s32 4294967266, %v4210
        %v4216 = vadd.s32 %v4215, 127
        %v4217 = vshll.u32 %v4216, 23
        %v4218 = vor.u32 4788187, %v4217
        %v4219 = vand.u32 2147483647, %v4218
        %v4221 = vcvt.s32.f32 %v4214
        %v4222 = vmul.f32 %v4221, %v4219
        %v4223 = vxor.u32 %v4222, 2147483648
        %v4224 = vsel %vm4141, %v4223, %v4222
        %v4225 = vsub.s32 4, %v4201
        %v4226 = vsel %vm4141, %v4225, %v4201
        %v4227 = vsel %vm4140, %v1523, %v4224
        %v4228 = vsel %vm4140, 0, %v4226
        %v4229 = vcosq.f32.pop %v4227
        %v4230 = vsinq.f32.pop %v4227
        %vm4231 = vweird.f32 %v1523
        %v4232 = vand.u32 %v4228, 3
        %vm4233 = vcmp.lt.s32.totalorder %v4232, 2
        %vm4234 = vcmp.eq.s32.totalorder %v4232, 0
        %v4235 = vxor.u32 %v4230, 2147483648
        %v4236 = vsel %vm4234, %v4229, %v4235
        %vm4237 = vcmp.eq.s32.totalorder %v4232, 2
        %v4238 = vxor.u32 %v4229, 2147483648
        %v4239 = vsel %vm4237, %v4238, %v4230
        %v4240 = vsel %vm4233, %v4236, %v4239
        %v4241 = vsel %vm4231, nan, %v4240
        %v4242 = vand.u32 2147483647, %v1524
        %vm4243 = vcmp.le.f32.partialorder %v4242, 0.7853982
        %vm4244 = vcmp.lt.s32.totalorder %v1524, 0
        %v4245 = vand.u32 %v1524, 2139095040
        %v4246 = vshrl.u32 %v4245, 23
        %v4247 = vsub.s32 %v4246, 127
        %v4248 = vand.u32 2147483647, %v1524
        %v4249 = vand.u32 %v4248, 8388607
        %v4250 = vor.u32 %v4249, 8388608
        %v4251 = vsub.s32 0, %v4250
        %v4252 = vadd.s32 %v4247, 1
        %vm4253 = vcmp.gt.s32.totalorder %v4252, 0
        %v4254 = vsel %vm4253, %v4252, 0
        %v4255 = vshrl.u32 %v4254, 5
        %v4256 = vand.u32 %v4254, 31
        %v4257 = vsub.s32 32, %v4256
        %v4258 = vshrl.u32 683565275, %v4257
        %v4259 = vshll.u32 683565275, %v4256
        %v4260 = vshrl.u32 2475754826, %v4257
        %v4261 = vor.u32 %v4259, %v4260
        %v4262 = vshll.u32 2475754826, %v4256
        %v4263 = vshrl.u32 2131351028, %v4257
        %v4264 = vor.u32 %v4262, %v4263
        %v4265 = vshll.u32 2131351028, %v4256
        %v4266 = vshrl.u32 2102212464, %v4257
        %v4267 = vor.u32 %v4265, %v4266
        %v4268 = vshll.u32 2102212464, %v4256
        %v4269 = vshrl.u32 920167782, %v4257
        %v4270 = vor.u32 %v4268, %v4269
        %v4271 = vshll.u32 920167782, %v4256
        %v4272 = vshrl.u32 1326507024, %v4257
        %v4273 = vor.u32 %v4271, %v4272
        %vm4274 = vcmp.lt.s32.totalorder %v4255, 1
        %vm4275 = vcmp.lt.s32.totalorder %v4255, 2
        %vm4276 = vcmp.lt.s32.totalorder %v4255, 3
        %vm4277 = vcmp.lt.s32.totalorder %v4255, 4
        %v4278 = vsel %vm4274, %v4258, %v4261
        %v4279 = vsel %vm4277, %v4267, 2102212464
        %v4280 = vsel %vm4276, %v4264, %v4279
        %v4281 = vsel %vm4275, %v4278, %v4280
        %v4282 = vsel %vm4274, %v4261, %v4264
        %v4283 = vsel %vm4277, %v4270, 920167782
        %v4284 = vsel %vm4276, %v4267, %v4283
        %v4285 = vsel %vm4275, %v4282, %v4284
        %v4286 = vsel %vm4274, %v4264, %v4267
        %v4287 = vsel %vm4277, %v4273, 1326507024
        %v4288 = vsel %vm4276, %v4270, %v4287
        %v4289 = vsel %vm4275, %v4286, %v4288
        %v4290 = vshll.u32 %v4250, 8
        %v4291 = vmul.u32.u64.compose %v4290, %v4289
        %v4292 = vextract.low.u32 %v4291
        %v4293 = vextract.high.u32 %v4291
        %v4294 = vmul.u32.u64.compose %v4290, %v4285
        %v4295 = vextract.low.u32 %v4294
        %v4296 = vextract.high.u32 %v4294
        %v4297 = vmul.u32 %v4290, %v4281
        %v4298 = vadd.s32 %v4293, %v4295
        %vm4299 = vc.u32 %v4293, %v4295
        %v4300 = vadd.s32 %v4296, 1
        %v4301 = vsel %vm4299, %v4300, %v4296
        %v4302 = vadd.s32 %v4297, %v4301
        %v4303 = vadd.s32 %v4302, 536870912
        %v4304 = vshrl.u32 %v4303, 30
        %v4305 = vshll.u32 %v4304, 30
        %v4306 = vsub.s32 %v4302, %v4305
        %vm4307 = vcmp.lt.s32.totalorder %v4306, 0
        %v4308 = vsub.s32 0, %v4306
        %v4309 = vsel %vm4307, %v4308, %v4306
        %v4310 = vclz %v4309
        %v4311 = vsub.s32 %v4310, 2
        %vm4312 = vcmp.gt.s32.totalorder 0, %v4311
        %v4313 = vsel %vm4312, 0, %v4311
        %v4314 = vsub.s32 32, %v4313
        %v4315 = vshll.u32 %v4306, %v4313
        %v4316 = vshrl.u32 %v4298, %v4314
        %v4317 = vor.u32 %v4315, %v4316
        %v4318 = vsub.s32 4294967266, %v4313
        %v4319 = vadd.s32 %v4318, 127
        %v4320 = vshll.u32 %v4319, 23
        %v4321 = vor.u32 4788187, %v4320
        %v4322 = vand.u32 2147483647, %v4321
        %v4324 = vcvt.s32.f32 %v4317
        %v4325 = vmul.f32 %v4324, %v4322
        %v4326 = vxor.u32 %v4325, 2147483648
        %v4327 = vsel %vm4244, %v4326, %v4325
        %v4328 = vsub.s32 4, %v4304
        %v4329 = vsel %vm4244, %v4328, %v4304
        %v4330 = vsel %vm4243, %v1524, %v4327
        %v4331 = vsel %vm4243, 0, %v4329
        %v4332 = vcosq.f32.pop %v4330
        %v4333 = vsinq.f32.pop %v4330
        %vm4334 = vweird.f32 %v1524
        %v4335 = vand.u32 %v4331, 3
        %vm4336 = vcmp.lt.s32.totalorder %v4335, 2
        %vm4337 = vcmp.eq.s32.totalorder %v4335, 0
        %v4338 = vxor.u32 %v4333, 2147483648
        %v4339 = vsel %vm4337, %v4332, %v4338
        %vm4340 = vcmp.eq.s32.totalorder %v4335, 2
        %v4341 = vxor.u32 %v4332, 2147483648
        %v4342 = vsel %vm4340, %v4341, %v4333
        %v4343 = vsel %vm4336, %v4339, %v4342
        %v4344 = vsel %vm4334, nan, %v4343
        %v4345 = vand.u32 2147483647, %v1525
        %vm4346 = vcmp.le.f32.partialorder %v4345, 0.7853982
        %vm4347 = vcmp.lt.s32.totalorder %v1525, 0
        %v4348 = vand.u32 %v1525, 2139095040
        %v4349 = vshrl.u32 %v4348, 23
        %v4350 = vsub.s32 %v4349, 127
        %v4351 = vand.u32 2147483647, %v1525
        %v4352 = vand.u32 %v4351, 8388607
        %v4353 = vor.u32 %v4352, 8388608
        %v4354 = vsub.s32 0, %v4353
        %v4355 = vadd.s32 %v4350, 1
        %vm4356 = vcmp.gt.s32.totalorder %v4355, 0
        %v4357 = vsel %vm4356, %v4355, 0
        %v4358 = vshrl.u32 %v4357, 5
        %v4359 = vand.u32 %v4357, 31
        %v4360 = vsub.s32 32, %v4359
        %v4361 = vshrl.u32 683565275, %v4360
        %v4362 = vshll.u32 683565275, %v4359
        %v4363 = vshrl.u32 2475754826, %v4360
        %v4364 = vor.u32 %v4362, %v4363
        %v4365 = vshll.u32 2475754826, %v4359
        %v4366 = vshrl.u32 2131351028, %v4360
        %v4367 = vor.u32 %v4365, %v4366
        %v4368 = vshll.u32 2131351028, %v4359
        %v4369 = vshrl.u32 2102212464, %v4360
        %v4370 = vor.u32 %v4368, %v4369
        %v4371 = vshll.u32 2102212464, %v4359
        %v4372 = vshrl.u32 920167782, %v4360
        %v4373 = vor.u32 %v4371, %v4372
        %v4374 = vshll.u32 920167782, %v4359
        %v4375 = vshrl.u32 1326507024, %v4360
        %v4376 = vor.u32 %v4374, %v4375
        %vm4377 = vcmp.lt.s32.totalorder %v4358, 1
        %vm4378 = vcmp.lt.s32.totalorder %v4358, 2
        %vm4379 = vcmp.lt.s32.totalorder %v4358, 3
        %vm4380 = vcmp.lt.s32.totalorder %v4358, 4
        %v4381 = vsel %vm4377, %v4361, %v4364
        %v4382 = vsel %vm4380, %v4370, 2102212464
        %v4383 = vsel %vm4379, %v4367, %v4382
        %v4384 = vsel %vm4378, %v4381, %v4383
        %v4385 = vsel %vm4377, %v4364, %v4367
        %v4386 = vsel %vm4380, %v4373, 920167782
        %v4387 = vsel %vm4379, %v4370, %v4386
        %v4388 = vsel %vm4378, %v4385, %v4387
        %v4389 = vsel %vm4377, %v4367, %v4370
        %v4390 = vsel %vm4380, %v4376, 1326507024
        %v4391 = vsel %vm4379, %v4373, %v4390
        %v4392 = vsel %vm4378, %v4389, %v4391
        %v4393 = vshll.u32 %v4353, 8
        %v4394 = vmul.u32.u64.compose %v4393, %v4392
        %v4395 = vextract.low.u32 %v4394
        %v4396 = vextract.high.u32 %v4394
        %v4397 = vmul.u32.u64.compose %v4393, %v4388
        %v4398 = vextract.low.u32 %v4397
        %v4399 = vextract.high.u32 %v4397
        %v4400 = vmul.u32 %v4393, %v4384
        %v4401 = vadd.s32 %v4396, %v4398
        %vm4402 = vc.u32 %v4396, %v4398
        %v4403 = vadd.s32 %v4399, 1
        %v4404 = vsel %vm4402, %v4403, %v4399
        %v4405 = vadd.s32 %v4400, %v4404
        %v4406 = vadd.s32 %v4405, 536870912
        %v4407 = vshrl.u32 %v4406, 30
        %v4408 = vshll.u32 %v4407, 30
        %v4409 = vsub.s32 %v4405, %v4408
        %vm4410 = vcmp.lt.s32.totalorder %v4409, 0
        %v4411 = vsub.s32 0, %v4409
        %v4412 = vsel %vm4410, %v4411, %v4409
        %v4413 = vclz %v4412
        %v4414 = vsub.s32 %v4413, 2
        %vm4415 = vcmp.gt.s32.totalorder 0, %v4414
        %v4416 = vsel %vm4415, 0, %v4414
        %v4417 = vsub.s32 32, %v4416
        %v4418 = vshll.u32 %v4409, %v4416
        %v4419 = vshrl.u32 %v4401, %v4417
        %v4420 = vor.u32 %v4418, %v4419
        %v4421 = vsub.s32 4294967266, %v4416
        %v4422 = vadd.s32 %v4421, 127
        %v4423 = vshll.u32 %v4422, 23
        %v4424 = vor.u32 4788187, %v4423
        %v4425 = vand.u32 2147483647, %v4424
        %v4427 = vcvt.s32.f32 %v4420
        %v4428 = vmul.f32 %v4427, %v4425
        %v4429 = vxor.u32 %v4428, 2147483648
        %v4430 = vsel %vm4347, %v4429, %v4428
        %v4431 = vsub.s32 4, %v4407
        %v4432 = vsel %vm4347, %v4431, %v4407
        %v4433 = vsel %vm4346, %v1525, %v4430
        %v4434 = vsel %vm4346, 0, %v4432
        %v4435 = vcosq.f32.pop %v4433
        %v4436 = vsinq.f32.pop %v4433
        %vm4437 = vweird.f32 %v1525
        %v4438 = vand.u32 %v4434, 3
        %vm4439 = vcmp.lt.s32.totalorder %v4438, 2
        %vm4440 = vcmp.eq.s32.totalorder %v4438, 0
        %v4441 = vxor.u32 %v4436, 2147483648
        %v4442 = vsel %vm4440, %v4435, %v4441
        %vm4443 = vcmp.eq.s32.totalorder %v4438, 2
        %v4444 = vxor.u32 %v4435, 2147483648
        %v4445 = vsel %vm4443, %v4444, %v4436
        %v4446 = vsel %vm4439, %v4442, %v4445
        %v4447 = vsel %vm4437, nan, %v4446
        %v4448 = vand.u32 2147483647, %v1526
        %vm4449 = vcmp.le.f32.partialorder %v4448, 0.7853982
        %vm4450 = vcmp.lt.s32.totalorder %v1526, 0
        %v4451 = vand.u32 %v1526, 2139095040
        %v4452 = vshrl.u32 %v4451, 23
        %v4453 = vsub.s32 %v4452, 127
        %v4454 = vand.u32 2147483647, %v1526
        %v4455 = vand.u32 %v4454, 8388607
        %v4456 = vor.u32 %v4455, 8388608
        %v4457 = vsub.s32 0, %v4456
        %v4458 = vadd.s32 %v4453, 1
        %vm4459 = vcmp.gt.s32.totalorder %v4458, 0
        %v4460 = vsel %vm4459, %v4458, 0
        %v4461 = vshrl.u32 %v4460, 5
        %v4462 = vand.u32 %v4460, 31
        %v4463 = vsub.s32 32, %v4462
        %v4464 = vshrl.u32 683565275, %v4463
        %v4465 = vshll.u32 683565275, %v4462
        %v4466 = vshrl.u32 2475754826, %v4463
        %v4467 = vor.u32 %v4465, %v4466
        %v4468 = vshll.u32 2475754826, %v4462
        %v4469 = vshrl.u32 2131351028, %v4463
        %v4470 = vor.u32 %v4468, %v4469
        %v4471 = vshll.u32 2131351028, %v4462
        %v4472 = vshrl.u32 2102212464, %v4463
        %v4473 = vor.u32 %v4471, %v4472
        %v4474 = vshll.u32 2102212464, %v4462
        %v4475 = vshrl.u32 920167782, %v4463
        %v4476 = vor.u32 %v4474, %v4475
        %v4477 = vshll.u32 920167782, %v4462
        %v4478 = vshrl.u32 1326507024, %v4463
        %v4479 = vor.u32 %v4477, %v4478
        %vm4480 = vcmp.lt.s32.totalorder %v4461, 1
        %vm4481 = vcmp.lt.s32.totalorder %v4461, 2
        %vm4482 = vcmp.lt.s32.totalorder %v4461, 3
        %vm4483 = vcmp.lt.s32.totalorder %v4461, 4
        %v4484 = vsel %vm4480, %v4464, %v4467
        %v4485 = vsel %vm4483, %v4473, 2102212464
        %v4486 = vsel %vm4482, %v4470, %v4485
        %v4487 = vsel %vm4481, %v4484, %v4486
        %v4488 = vsel %vm4480, %v4467, %v4470
        %v4489 = vsel %vm4483, %v4476, 920167782
        %v4490 = vsel %vm4482, %v4473, %v4489
        %v4491 = vsel %vm4481, %v4488, %v4490
        %v4492 = vsel %vm4480, %v4470, %v4473
        %v4493 = vsel %vm4483, %v4479, 1326507024
        %v4494 = vsel %vm4482, %v4476, %v4493
        %v4495 = vsel %vm4481, %v4492, %v4494
        %v4496 = vshll.u32 %v4456, 8
        %v4497 = vmul.u32.u64.compose %v4496, %v4495
        %v4498 = vextract.low.u32 %v4497
        %v4499 = vextract.high.u32 %v4497
        %v4500 = vmul.u32.u64.compose %v4496, %v4491
        %v4501 = vextract.low.u32 %v4500
        %v4502 = vextract.high.u32 %v4500
        %v4503 = vmul.u32 %v4496, %v4487
        %v4504 = vadd.s32 %v4499, %v4501
        %vm4505 = vc.u32 %v4499, %v4501
        %v4506 = vadd.s32 %v4502, 1
        %v4507 = vsel %vm4505, %v4506, %v4502
        %v4508 = vadd.s32 %v4503, %v4507
        %v4509 = vadd.s32 %v4508, 536870912
        %v4510 = vshrl.u32 %v4509, 30
        %v4511 = vshll.u32 %v4510, 30
        %v4512 = vsub.s32 %v4508, %v4511
        %vm4513 = vcmp.lt.s32.totalorder %v4512, 0
        %v4514 = vsub.s32 0, %v4512
        %v4515 = vsel %vm4513, %v4514, %v4512
        %v4516 = vclz %v4515
        %v4517 = vsub.s32 %v4516, 2
        %vm4518 = vcmp.gt.s32.totalorder 0, %v4517
        %v4519 = vsel %vm4518, 0, %v4517
        %v4520 = vsub.s32 32, %v4519
        %v4521 = vshll.u32 %v4512, %v4519
        %v4522 = vshrl.u32 %v4504, %v4520
        %v4523 = vor.u32 %v4521, %v4522
        %v4524 = vsub.s32 4294967266, %v4519
        %v4525 = vadd.s32 %v4524, 127
        %v4526 = vshll.u32 %v4525, 23
        %v4527 = vor.u32 4788187, %v4526
        %v4528 = vand.u32 2147483647, %v4527
        %v4530 = vcvt.s32.f32 %v4523
        %v4531 = vmul.f32 %v4530, %v4528
        %v4532 = vxor.u32 %v4531, 2147483648
        %v4533 = vsel %vm4450, %v4532, %v4531
        %v4534 = vsub.s32 4, %v4510
        %v4535 = vsel %vm4450, %v4534, %v4510
        %v4536 = vsel %vm4449, %v1526, %v4533
        %v4537 = vsel %vm4449, 0, %v4535
        %v4538 = vcosq.f32.pop %v4536
        %v4539 = vsinq.f32.pop %v4536
        %vm4540 = vweird.f32 %v1526
        %v4541 = vand.u32 %v4537, 3
        %vm4542 = vcmp.lt.s32.totalorder %v4541, 2
        %vm4543 = vcmp.eq.s32.totalorder %v4541, 0
        %v4544 = vxor.u32 %v4539, 2147483648
        %v4545 = vsel %vm4543, %v4538, %v4544
        %vm4546 = vcmp.eq.s32.totalorder %v4541, 2
        %v4547 = vxor.u32 %v4538, 2147483648
        %v4548 = vsel %vm4546, %v4547, %v4539
        %v4549 = vsel %vm4542, %v4545, %v4548
        %v4550 = vsel %vm4540, nan, %v4549
        %v4551 = vand.u32 2147483647, %v1527
        %vm4552 = vcmp.le.f32.partialorder %v4551, 0.7853982
        %vm4553 = vcmp.lt.s32.totalorder %v1527, 0
        %v4554 = vand.u32 %v1527, 2139095040
        %v4555 = vshrl.u32 %v4554, 23
        %v4556 = vsub.s32 %v4555, 127
        %v4557 = vand.u32 2147483647, %v1527
        %v4558 = vand.u32 %v4557, 8388607
        %v4559 = vor.u32 %v4558, 8388608
        %v4560 = vsub.s32 0, %v4559
        %v4561 = vadd.s32 %v4556, 1
        %vm4562 = vcmp.gt.s32.totalorder %v4561, 0
        %v4563 = vsel %vm4562, %v4561, 0
        %v4564 = vshrl.u32 %v4563, 5
        %v4565 = vand.u32 %v4563, 31
        %v4566 = vsub.s32 32, %v4565
        %v4567 = vshrl.u32 683565275, %v4566
        %v4568 = vshll.u32 683565275, %v4565
        %v4569 = vshrl.u32 2475754826, %v4566
        %v4570 = vor.u32 %v4568, %v4569
        %v4571 = vshll.u32 2475754826, %v4565
        %v4572 = vshrl.u32 2131351028, %v4566
        %v4573 = vor.u32 %v4571, %v4572
        %v4574 = vshll.u32 2131351028, %v4565
        %v4575 = vshrl.u32 2102212464, %v4566
        %v4576 = vor.u32 %v4574, %v4575
        %v4577 = vshll.u32 2102212464, %v4565
        %v4578 = vshrl.u32 920167782, %v4566
        %v4579 = vor.u32 %v4577, %v4578
        %v4580 = vshll.u32 920167782, %v4565
        %v4581 = vshrl.u32 1326507024, %v4566
        %v4582 = vor.u32 %v4580, %v4581
        %vm4583 = vcmp.lt.s32.totalorder %v4564, 1
        %vm4584 = vcmp.lt.s32.totalorder %v4564, 2
        %vm4585 = vcmp.lt.s32.totalorder %v4564, 3
        %vm4586 = vcmp.lt.s32.totalorder %v4564, 4
        %v4587 = vsel %vm4583, %v4567, %v4570
        %v4588 = vsel %vm4586, %v4576, 2102212464
        %v4589 = vsel %vm4585, %v4573, %v4588
        %v4590 = vsel %vm4584, %v4587, %v4589
        %v4591 = vsel %vm4583, %v4570, %v4573
        %v4592 = vsel %vm4586, %v4579, 920167782
        %v4593 = vsel %vm4585, %v4576, %v4592
        %v4594 = vsel %vm4584, %v4591, %v4593
        %v4595 = vsel %vm4583, %v4573, %v4576
        %v4596 = vsel %vm4586, %v4582, 1326507024
        %v4597 = vsel %vm4585, %v4579, %v4596
        %v4598 = vsel %vm4584, %v4595, %v4597
        %v4599 = vshll.u32 %v4559, 8
        %v4600 = vmul.u32.u64.compose %v4599, %v4598
        %v4601 = vextract.low.u32 %v4600
        %v4602 = vextract.high.u32 %v4600
        %v4603 = vmul.u32.u64.compose %v4599, %v4594
        %v4604 = vextract.low.u32 %v4603
        %v4605 = vextract.high.u32 %v4603
        %v4606 = vmul.u32 %v4599, %v4590
        %v4607 = vadd.s32 %v4602, %v4604
        %vm4608 = vc.u32 %v4602, %v4604
        %v4609 = vadd.s32 %v4605, 1
        %v4610 = vsel %vm4608, %v4609, %v4605
        %v4611 = vadd.s32 %v4606, %v4610
        %v4612 = vadd.s32 %v4611, 536870912
        %v4613 = vshrl.u32 %v4612, 30
        %v4614 = vshll.u32 %v4613, 30
        %v4615 = vsub.s32 %v4611, %v4614
        %vm4616 = vcmp.lt.s32.totalorder %v4615, 0
        %v4617 = vsub.s32 0, %v4615
        %v4618 = vsel %vm4616, %v4617, %v4615
        %v4619 = vclz %v4618
        %v4620 = vsub.s32 %v4619, 2
        %vm4621 = vcmp.gt.s32.totalorder 0, %v4620
        %v4622 = vsel %vm4621, 0, %v4620
        %v4623 = vsub.s32 32, %v4622
        %v4624 = vshll.u32 %v4615, %v4622
        %v4625 = vshrl.u32 %v4607, %v4623
        %v4626 = vor.u32 %v4624, %v4625
        %v4627 = vsub.s32 4294967266, %v4622
        %v4628 = vadd.s32 %v4627, 127
        %v4629 = vshll.u32 %v4628, 23
        %v4630 = vor.u32 4788187, %v4629
        %v4631 = vand.u32 2147483647, %v4630
        %v4633 = vcvt.s32.f32 %v4626
        %v4634 = vmul.f32 %v4633, %v4631
        %v4635 = vxor.u32 %v4634, 2147483648
        %v4636 = vsel %vm4553, %v4635, %v4634
        %v4637 = vsub.s32 4, %v4613
        %v4638 = vsel %vm4553, %v4637, %v4613
        %v4639 = vsel %vm4552, %v1527, %v4636
        %v4640 = vsel %vm4552, 0, %v4638
        %v4641 = vcosq.f32.pop %v4639
        %v4642 = vsinq.f32.pop %v4639
        %vm4643 = vweird.f32 %v1527
        %v4644 = vand.u32 %v4640, 3
        %vm4645 = vcmp.lt.s32.totalorder %v4644, 2
        %vm4646 = vcmp.eq.s32.totalorder %v4644, 0
        %v4647 = vxor.u32 %v4642, 2147483648
        %v4648 = vsel %vm4646, %v4641, %v4647
        %vm4649 = vcmp.eq.s32.totalorder %v4644, 2
        %v4650 = vxor.u32 %v4641, 2147483648
        %v4651 = vsel %vm4649, %v4650, %v4642
        %v4652 = vsel %vm4645, %v4648, %v4651
        %v4653 = vsel %vm4643, nan, %v4652
        %v4654 = vand.u32 2147483647, %v1528
        %vm4655 = vcmp.le.f32.partialorder %v4654, 0.7853982
        %vm4656 = vcmp.lt.s32.totalorder %v1528, 0
        %v4657 = vand.u32 %v1528, 2139095040
        %v4658 = vshrl.u32 %v4657, 23
        %v4659 = vsub.s32 %v4658, 127
        %v4660 = vand.u32 2147483647, %v1528
        %v4661 = vand.u32 %v4660, 8388607
        %v4662 = vor.u32 %v4661, 8388608
        %v4663 = vsub.s32 0, %v4662
        %v4664 = vadd.s32 %v4659, 1
        %vm4665 = vcmp.gt.s32.totalorder %v4664, 0
        %v4666 = vsel %vm4665, %v4664, 0
        %v4667 = vshrl.u32 %v4666, 5
        %v4668 = vand.u32 %v4666, 31
        %v4669 = vsub.s32 32, %v4668
        %v4670 = vshrl.u32 683565275, %v4669
        %v4671 = vshll.u32 683565275, %v4668
        %v4672 = vshrl.u32 2475754826, %v4669
        %v4673 = vor.u32 %v4671, %v4672
        %v4674 = vshll.u32 2475754826, %v4668
        %v4675 = vshrl.u32 2131351028, %v4669
        %v4676 = vor.u32 %v4674, %v4675
        %v4677 = vshll.u32 2131351028, %v4668
        %v4678 = vshrl.u32 2102212464, %v4669
        %v4679 = vor.u32 %v4677, %v4678
        %v4680 = vshll.u32 2102212464, %v4668
        %v4681 = vshrl.u32 920167782, %v4669
        %v4682 = vor.u32 %v4680, %v4681
        %v4683 = vshll.u32 920167782, %v4668
        %v4684 = vshrl.u32 1326507024, %v4669
        %v4685 = vor.u32 %v4683, %v4684
        %vm4686 = vcmp.lt.s32.totalorder %v4667, 1
        %vm4687 = vcmp.lt.s32.totalorder %v4667, 2
        %vm4688 = vcmp.lt.s32.totalorder %v4667, 3
        %vm4689 = vcmp.lt.s32.totalorder %v4667, 4
        %v4690 = vsel %vm4686, %v4670, %v4673
        %v4691 = vsel %vm4689, %v4679, 2102212464
        %v4692 = vsel %vm4688, %v4676, %v4691
        %v4693 = vsel %vm4687, %v4690, %v4692
        %v4694 = vsel %vm4686, %v4673, %v4676
        %v4695 = vsel %vm4689, %v4682, 920167782
        %v4696 = vsel %vm4688, %v4679, %v4695
        %v4697 = vsel %vm4687, %v4694, %v4696
        %v4698 = vsel %vm4686, %v4676, %v4679
        %v4699 = vsel %vm4689, %v4685, 1326507024
        %v4700 = vsel %vm4688, %v4682, %v4699
        %v4701 = vsel %vm4687, %v4698, %v4700
        %v4702 = vshll.u32 %v4662, 8
        %v4703 = vmul.u32.u64.compose %v4702, %v4701
        %v4704 = vextract.low.u32 %v4703
        %v4705 = vextract.high.u32 %v4703
        %v4706 = vmul.u32.u64.compose %v4702, %v4697
        %v4707 = vextract.low.u32 %v4706
        %v4708 = vextract.high.u32 %v4706
        %v4709 = vmul.u32 %v4702, %v4693
        %v4710 = vadd.s32 %v4705, %v4707
        %vm4711 = vc.u32 %v4705, %v4707
        %v4712 = vadd.s32 %v4708, 1
        %v4713 = vsel %vm4711, %v4712, %v4708
        %v4714 = vadd.s32 %v4709, %v4713
        %v4715 = vadd.s32 %v4714, 536870912
        %v4716 = vshrl.u32 %v4715, 30
        %v4717 = vshll.u32 %v4716, 30
        %v4718 = vsub.s32 %v4714, %v4717
        %vm4719 = vcmp.lt.s32.totalorder %v4718, 0
        %v4720 = vsub.s32 0, %v4718
        %v4721 = vsel %vm4719, %v4720, %v4718
        %v4722 = vclz %v4721
        %v4723 = vsub.s32 %v4722, 2
        %vm4724 = vcmp.gt.s32.totalorder 0, %v4723
        %v4725 = vsel %vm4724, 0, %v4723
        %v4726 = vsub.s32 32, %v4725
        %v4727 = vshll.u32 %v4718, %v4725
        %v4728 = vshrl.u32 %v4710, %v4726
        %v4729 = vor.u32 %v4727, %v4728
        %v4730 = vsub.s32 4294967266, %v4725
        %v4731 = vadd.s32 %v4730, 127
        %v4732 = vshll.u32 %v4731, 23
        %v4733 = vor.u32 4788187, %v4732
        %v4734 = vand.u32 2147483647, %v4733
        %v4736 = vcvt.s32.f32 %v4729
        %v4737 = vmul.f32 %v4736, %v4734
        %v4738 = vxor.u32 %v4737, 2147483648
        %v4739 = vsel %vm4656, %v4738, %v4737
        %v4740 = vsub.s32 4, %v4716
        %v4741 = vsel %vm4656, %v4740, %v4716
        %v4742 = vsel %vm4655, %v1528, %v4739
        %v4743 = vsel %vm4655, 0, %v4741
        %v4744 = vcosq.f32.pop %v4742
        %v4745 = vsinq.f32.pop %v4742
        %vm4746 = vweird.f32 %v1528
        %v4747 = vand.u32 %v4743, 3
        %vm4748 = vcmp.lt.s32.totalorder %v4747, 2
        %vm4749 = vcmp.eq.s32.totalorder %v4747, 0
        %v4750 = vxor.u32 %v4745, 2147483648
        %v4751 = vsel %vm4749, %v4744, %v4750
        %vm4752 = vcmp.eq.s32.totalorder %v4747, 2
        %v4753 = vxor.u32 %v4744, 2147483648
        %v4754 = vsel %vm4752, %v4753, %v4745
        %v4755 = vsel %vm4748, %v4751, %v4754
        %v4756 = vsel %vm4746, nan, %v4755
        %v4757 = vand.u32 2147483647, %v1529
        %vm4758 = vcmp.le.f32.partialorder %v4757, 0.7853982
        %vm4759 = vcmp.lt.s32.totalorder %v1529, 0
        %v4760 = vand.u32 %v1529, 2139095040
        %v4761 = vshrl.u32 %v4760, 23
        %v4762 = vsub.s32 %v4761, 127
        %v4763 = vand.u32 2147483647, %v1529
        %v4764 = vand.u32 %v4763, 8388607
        %v4765 = vor.u32 %v4764, 8388608
        %v4766 = vsub.s32 0, %v4765
        %v4767 = vadd.s32 %v4762, 1
        %vm4768 = vcmp.gt.s32.totalorder %v4767, 0
        %v4769 = vsel %vm4768, %v4767, 0
        %v4770 = vshrl.u32 %v4769, 5
        %v4771 = vand.u32 %v4769, 31
        %v4772 = vsub.s32 32, %v4771
        %v4773 = vshrl.u32 683565275, %v4772
        %v4774 = vshll.u32 683565275, %v4771
        %v4775 = vshrl.u32 2475754826, %v4772
        %v4776 = vor.u32 %v4774, %v4775
        %v4777 = vshll.u32 2475754826, %v4771
        %v4778 = vshrl.u32 2131351028, %v4772
        %v4779 = vor.u32 %v4777, %v4778
        %v4780 = vshll.u32 2131351028, %v4771
        %v4781 = vshrl.u32 2102212464, %v4772
        %v4782 = vor.u32 %v4780, %v4781
        %v4783 = vshll.u32 2102212464, %v4771
        %v4784 = vshrl.u32 920167782, %v4772
        %v4785 = vor.u32 %v4783, %v4784
        %v4786 = vshll.u32 920167782, %v4771
        %v4787 = vshrl.u32 1326507024, %v4772
        %v4788 = vor.u32 %v4786, %v4787
        %vm4789 = vcmp.lt.s32.totalorder %v4770, 1
        %vm4790 = vcmp.lt.s32.totalorder %v4770, 2
        %vm4791 = vcmp.lt.s32.totalorder %v4770, 3
        %vm4792 = vcmp.lt.s32.totalorder %v4770, 4
        %v4793 = vsel %vm4789, %v4773, %v4776
        %v4794 = vsel %vm4792, %v4782, 2102212464
        %v4795 = vsel %vm4791, %v4779, %v4794
        %v4796 = vsel %vm4790, %v4793, %v4795
        %v4797 = vsel %vm4789, %v4776, %v4779
        %v4798 = vsel %vm4792, %v4785, 920167782
        %v4799 = vsel %vm4791, %v4782, %v4798
        %v4800 = vsel %vm4790, %v4797, %v4799
        %v4801 = vsel %vm4789, %v4779, %v4782
        %v4802 = vsel %vm4792, %v4788, 1326507024
        %v4803 = vsel %vm4791, %v4785, %v4802
        %v4804 = vsel %vm4790, %v4801, %v4803
        %v4805 = vshll.u32 %v4765, 8
        %v4806 = vmul.u32.u64.compose %v4805, %v4804
        %v4807 = vextract.low.u32 %v4806
        %v4808 = vextract.high.u32 %v4806
        %v4809 = vmul.u32.u64.compose %v4805, %v4800
        %v4810 = vextract.low.u32 %v4809
        %v4811 = vextract.high.u32 %v4809
        %v4812 = vmul.u32 %v4805, %v4796
        %v4813 = vadd.s32 %v4808, %v4810
        %vm4814 = vc.u32 %v4808, %v4810
        %v4815 = vadd.s32 %v4811, 1
        %v4816 = vsel %vm4814, %v4815, %v4811
        %v4817 = vadd.s32 %v4812, %v4816
        %v4818 = vadd.s32 %v4817, 536870912
        %v4819 = vshrl.u32 %v4818, 30
        %v4820 = vshll.u32 %v4819, 30
        %v4821 = vsub.s32 %v4817, %v4820
        %vm4822 = vcmp.lt.s32.totalorder %v4821, 0
        %v4823 = vsub.s32 0, %v4821
        %v4824 = vsel %vm4822, %v4823, %v4821
        %v4825 = vclz %v4824
        %v4826 = vsub.s32 %v4825, 2
        %vm4827 = vcmp.gt.s32.totalorder 0, %v4826
        %v4828 = vsel %vm4827, 0, %v4826
        %v4829 = vsub.s32 32, %v4828
        %v4830 = vshll.u32 %v4821, %v4828
        %v4831 = vshrl.u32 %v4813, %v4829
        %v4832 = vor.u32 %v4830, %v4831
        %v4833 = vsub.s32 4294967266, %v4828
        %v4834 = vadd.s32 %v4833, 127
        %v4835 = vshll.u32 %v4834, 23
        %v4836 = vor.u32 4788187, %v4835
        %v4837 = vand.u32 2147483647, %v4836
        %v4839 = vcvt.s32.f32 %v4832
        %v4840 = vmul.f32 %v4839, %v4837
        %v4841 = vxor.u32 %v4840, 2147483648
        %v4842 = vsel %vm4759, %v4841, %v4840
        %v4843 = vsub.s32 4, %v4819
        %v4844 = vsel %vm4759, %v4843, %v4819
        %v4845 = vsel %vm4758, %v1529, %v4842
        %v4846 = vsel %vm4758, 0, %v4844
        %v4847 = vcosq.f32.pop %v4845
        %v4848 = vsinq.f32.pop %v4845
        %vm4849 = vweird.f32 %v1529
        %v4850 = vand.u32 %v4846, 3
        %vm4851 = vcmp.lt.s32.totalorder %v4850, 2
        %vm4852 = vcmp.eq.s32.totalorder %v4850, 0
        %v4853 = vxor.u32 %v4848, 2147483648
        %v4854 = vsel %vm4852, %v4847, %v4853
        %vm4855 = vcmp.eq.s32.totalorder %v4850, 2
        %v4856 = vxor.u32 %v4847, 2147483648
        %v4857 = vsel %vm4855, %v4856, %v4848
        %v4858 = vsel %vm4851, %v4854, %v4857
        %v4859 = vsel %vm4849, nan, %v4858
        %v4860 = vand.u32 2147483647, %v1530
        %vm4861 = vcmp.le.f32.partialorder %v4860, 0.7853982
        %vm4862 = vcmp.lt.s32.totalorder %v1530, 0
        %v4863 = vand.u32 %v1530, 2139095040
        %v4864 = vshrl.u32 %v4863, 23
        %v4865 = vsub.s32 %v4864, 127
        %v4866 = vand.u32 2147483647, %v1530
        %v4867 = vand.u32 %v4866, 8388607
        %v4868 = vor.u32 %v4867, 8388608
        %v4869 = vsub.s32 0, %v4868
        %v4870 = vadd.s32 %v4865, 1
        %vm4871 = vcmp.gt.s32.totalorder %v4870, 0
        %v4872 = vsel %vm4871, %v4870, 0
        %v4873 = vshrl.u32 %v4872, 5
        %v4874 = vand.u32 %v4872, 31
        %v4875 = vsub.s32 32, %v4874
        %v4876 = vshrl.u32 683565275, %v4875
        %v4877 = vshll.u32 683565275, %v4874
        %v4878 = vshrl.u32 2475754826, %v4875
        %v4879 = vor.u32 %v4877, %v4878
        %v4880 = vshll.u32 2475754826, %v4874
        %v4881 = vshrl.u32 2131351028, %v4875
        %v4882 = vor.u32 %v4880, %v4881
        %v4883 = vshll.u32 2131351028, %v4874
        %v4884 = vshrl.u32 2102212464, %v4875
        %v4885 = vor.u32 %v4883, %v4884
        %v4886 = vshll.u32 2102212464, %v4874
        %v4887 = vshrl.u32 920167782, %v4875
        %v4888 = vor.u32 %v4886, %v4887
        %v4889 = vshll.u32 920167782, %v4874
        %v4890 = vshrl.u32 1326507024, %v4875
        %v4891 = vor.u32 %v4889, %v4890
        %vm4892 = vcmp.lt.s32.totalorder %v4873, 1
        %vm4893 = vcmp.lt.s32.totalorder %v4873, 2
        %vm4894 = vcmp.lt.s32.totalorder %v4873, 3
        %vm4895 = vcmp.lt.s32.totalorder %v4873, 4
        %v4896 = vsel %vm4892, %v4876, %v4879
        %v4897 = vsel %vm4895, %v4885, 2102212464
        %v4898 = vsel %vm4894, %v4882, %v4897
        %v4899 = vsel %vm4893, %v4896, %v4898
        %v4900 = vsel %vm4892, %v4879, %v4882
        %v4901 = vsel %vm4895, %v4888, 920167782
        %v4902 = vsel %vm4894, %v4885, %v4901
        %v4903 = vsel %vm4893, %v4900, %v4902
        %v4904 = vsel %vm4892, %v4882, %v4885
        %v4905 = vsel %vm4895, %v4891, 1326507024
        %v4906 = vsel %vm4894, %v4888, %v4905
        %v4907 = vsel %vm4893, %v4904, %v4906
        %v4908 = vshll.u32 %v4868, 8
        %v4909 = vmul.u32.u64.compose %v4908, %v4907
        %v4910 = vextract.low.u32 %v4909
        %v4911 = vextract.high.u32 %v4909
        %v4912 = vmul.u32.u64.compose %v4908, %v4903
        %v4913 = vextract.low.u32 %v4912
        %v4914 = vextract.high.u32 %v4912
        %v4915 = vmul.u32 %v4908, %v4899
        %v4916 = vadd.s32 %v4911, %v4913
        %vm4917 = vc.u32 %v4911, %v4913
        %v4918 = vadd.s32 %v4914, 1
        %v4919 = vsel %vm4917, %v4918, %v4914
        %v4920 = vadd.s32 %v4915, %v4919
        %v4921 = vadd.s32 %v4920, 536870912
        %v4922 = vshrl.u32 %v4921, 30
        %v4923 = vshll.u32 %v4922, 30
        %v4924 = vsub.s32 %v4920, %v4923
        %vm4925 = vcmp.lt.s32.totalorder %v4924, 0
        %v4926 = vsub.s32 0, %v4924
        %v4927 = vsel %vm4925, %v4926, %v4924
        %v4928 = vclz %v4927
        %v4929 = vsub.s32 %v4928, 2
        %vm4930 = vcmp.gt.s32.totalorder 0, %v4929
        %v4931 = vsel %vm4930, 0, %v4929
        %v4932 = vsub.s32 32, %v4931
        %v4933 = vshll.u32 %v4924, %v4931
        %v4934 = vshrl.u32 %v4916, %v4932
        %v4935 = vor.u32 %v4933, %v4934
        %v4936 = vsub.s32 4294967266, %v4931
        %v4937 = vadd.s32 %v4936, 127
        %v4938 = vshll.u32 %v4937, 23
        %v4939 = vor.u32 4788187, %v4938
        %v4940 = vand.u32 2147483647, %v4939
        %v4942 = vcvt.s32.f32 %v4935
        %v4943 = vmul.f32 %v4942, %v4940
        %v4944 = vxor.u32 %v4943, 2147483648
        %v4945 = vsel %vm4862, %v4944, %v4943
        %v4946 = vsub.s32 4, %v4922
        %v4947 = vsel %vm4862, %v4946, %v4922
        %v4948 = vsel %vm4861, %v1530, %v4945
        %v4949 = vsel %vm4861, 0, %v4947
        %v4950 = vcosq.f32.pop %v4948
        %v4951 = vsinq.f32.pop %v4948
        %vm4952 = vweird.f32 %v1530
        %v4953 = vand.u32 %v4949, 3
        %vm4954 = vcmp.lt.s32.totalorder %v4953, 2
        %vm4955 = vcmp.eq.s32.totalorder %v4953, 0
        %v4956 = vxor.u32 %v4951, 2147483648
        %v4957 = vsel %vm4955, %v4950, %v4956
        %vm4958 = vcmp.eq.s32.totalorder %v4953, 2
        %v4959 = vxor.u32 %v4950, 2147483648
        %v4960 = vsel %vm4958, %v4959, %v4951
        %v4961 = vsel %vm4954, %v4957, %v4960
        %v4962 = vsel %vm4952, nan, %v4961
        %v4963 = vand.u32 2147483647, %v1531
        %vm4964 = vcmp.le.f32.partialorder %v4963, 0.7853982
        %vm4965 = vcmp.lt.s32.totalorder %v1531, 0
        %v4966 = vand.u32 %v1531, 2139095040
        %v4967 = vshrl.u32 %v4966, 23
        %v4968 = vsub.s32 %v4967, 127
        %v4969 = vand.u32 2147483647, %v1531
        %v4970 = vand.u32 %v4969, 8388607
        %v4971 = vor.u32 %v4970, 8388608
        %v4972 = vsub.s32 0, %v4971
        %v4973 = vadd.s32 %v4968, 1
        %vm4974 = vcmp.gt.s32.totalorder %v4973, 0
        %v4975 = vsel %vm4974, %v4973, 0
        %v4976 = vshrl.u32 %v4975, 5
        %v4977 = vand.u32 %v4975, 31
        %v4978 = vsub.s32 32, %v4977
        %v4979 = vshrl.u32 683565275, %v4978
        %v4980 = vshll.u32 683565275, %v4977
        %v4981 = vshrl.u32 2475754826, %v4978
        %v4982 = vor.u32 %v4980, %v4981
        %v4983 = vshll.u32 2475754826, %v4977
        %v4984 = vshrl.u32 2131351028, %v4978
        %v4985 = vor.u32 %v4983, %v4984
        %v4986 = vshll.u32 2131351028, %v4977
        %v4987 = vshrl.u32 2102212464, %v4978
        %v4988 = vor.u32 %v4986, %v4987
        %v4989 = vshll.u32 2102212464, %v4977
        %v4990 = vshrl.u32 920167782, %v4978
        %v4991 = vor.u32 %v4989, %v4990
        %v4992 = vshll.u32 920167782, %v4977
        %v4993 = vshrl.u32 1326507024, %v4978
        %v4994 = vor.u32 %v4992, %v4993
        %vm4995 = vcmp.lt.s32.totalorder %v4976, 1
        %vm4996 = vcmp.lt.s32.totalorder %v4976, 2
        %vm4997 = vcmp.lt.s32.totalorder %v4976, 3
        %vm4998 = vcmp.lt.s32.totalorder %v4976, 4
        %v4999 = vsel %vm4995, %v4979, %v4982
        %v5000 = vsel %vm4998, %v4988, 2102212464
        %v5001 = vsel %vm4997, %v4985, %v5000
        %v5002 = vsel %vm4996, %v4999, %v5001
        %v5003 = vsel %vm4995, %v4982, %v4985
        %v5004 = vsel %vm4998, %v4991, 920167782
        %v5005 = vsel %vm4997, %v4988, %v5004
        %v5006 = vsel %vm4996, %v5003, %v5005
        %v5007 = vsel %vm4995, %v4985, %v4988
        %v5008 = vsel %vm4998, %v4994, 1326507024
        %v5009 = vsel %vm4997, %v4991, %v5008
        %v5010 = vsel %vm4996, %v5007, %v5009
        %v5011 = vshll.u32 %v4971, 8
        %v5012 = vmul.u32.u64.compose %v5011, %v5010
        %v5013 = vextract.low.u32 %v5012
        %v5014 = vextract.high.u32 %v5012
        %v5015 = vmul.u32.u64.compose %v5011, %v5006
        %v5016 = vextract.low.u32 %v5015
        %v5017 = vextract.high.u32 %v5015
        %v5018 = vmul.u32 %v5011, %v5002
        %v5019 = vadd.s32 %v5014, %v5016
        %vm5020 = vc.u32 %v5014, %v5016
        %v5021 = vadd.s32 %v5017, 1
        %v5022 = vsel %vm5020, %v5021, %v5017
        %v5023 = vadd.s32 %v5018, %v5022
        %v5024 = vadd.s32 %v5023, 536870912
        %v5025 = vshrl.u32 %v5024, 30
        %v5026 = vshll.u32 %v5025, 30
        %v5027 = vsub.s32 %v5023, %v5026
        %vm5028 = vcmp.lt.s32.totalorder %v5027, 0
        %v5029 = vsub.s32 0, %v5027
        %v5030 = vsel %vm5028, %v5029, %v5027
        %v5031 = vclz %v5030
        %v5032 = vsub.s32 %v5031, 2
        %vm5033 = vcmp.gt.s32.totalorder 0, %v5032
        %v5034 = vsel %vm5033, 0, %v5032
        %v5035 = vsub.s32 32, %v5034
        %v5036 = vshll.u32 %v5027, %v5034
        %v5037 = vshrl.u32 %v5019, %v5035
        %v5038 = vor.u32 %v5036, %v5037
        %v5039 = vsub.s32 4294967266, %v5034
        %v5040 = vadd.s32 %v5039, 127
        %v5041 = vshll.u32 %v5040, 23
        %v5042 = vor.u32 4788187, %v5041
        %v5043 = vand.u32 2147483647, %v5042
        %v5045 = vcvt.s32.f32 %v5038
        %v5046 = vmul.f32 %v5045, %v5043
        %v5047 = vxor.u32 %v5046, 2147483648
        %v5048 = vsel %vm4965, %v5047, %v5046
        %v5049 = vsub.s32 4, %v5025
        %v5050 = vsel %vm4965, %v5049, %v5025
        %v5051 = vsel %vm4964, %v1531, %v5048
        %v5052 = vsel %vm4964, 0, %v5050
        %v5053 = vcosq.f32.pop %v5051
        %v5054 = vsinq.f32.pop %v5051
        %vm5055 = vweird.f32 %v1531
        %v5056 = vand.u32 %v5052, 3
        %vm5057 = vcmp.lt.s32.totalorder %v5056, 2
        %vm5058 = vcmp.eq.s32.totalorder %v5056, 0
        %v5059 = vxor.u32 %v5054, 2147483648
        %v5060 = vsel %vm5058, %v5053, %v5059
        %vm5061 = vcmp.eq.s32.totalorder %v5056, 2
        %v5062 = vxor.u32 %v5053, 2147483648
        %v5063 = vsel %vm5061, %v5062, %v5054
        %v5064 = vsel %vm5057, %v5060, %v5063
        %v5065 = vsel %vm5055, nan, %v5064
        %v5066 = vand.u32 2147483647, %v1532
        %vm5067 = vcmp.le.f32.partialorder %v5066, 0.7853982
        %vm5068 = vcmp.lt.s32.totalorder %v1532, 0
        %v5069 = vand.u32 %v1532, 2139095040
        %v5070 = vshrl.u32 %v5069, 23
        %v5071 = vsub.s32 %v5070, 127
        %v5072 = vand.u32 2147483647, %v1532
        %v5073 = vand.u32 %v5072, 8388607
        %v5074 = vor.u32 %v5073, 8388608
        %v5075 = vsub.s32 0, %v5074
        %v5076 = vadd.s32 %v5071, 1
        %vm5077 = vcmp.gt.s32.totalorder %v5076, 0
        %v5078 = vsel %vm5077, %v5076, 0
        %v5079 = vshrl.u32 %v5078, 5
        %v5080 = vand.u32 %v5078, 31
        %v5081 = vsub.s32 32, %v5080
        %v5082 = vshrl.u32 683565275, %v5081
        %v5083 = vshll.u32 683565275, %v5080
        %v5084 = vshrl.u32 2475754826, %v5081
        %v5085 = vor.u32 %v5083, %v5084
        %v5086 = vshll.u32 2475754826, %v5080
        %v5087 = vshrl.u32 2131351028, %v5081
        %v5088 = vor.u32 %v5086, %v5087
        %v5089 = vshll.u32 2131351028, %v5080
        %v5090 = vshrl.u32 2102212464, %v5081
        %v5091 = vor.u32 %v5089, %v5090
        %v5092 = vshll.u32 2102212464, %v5080
        %v5093 = vshrl.u32 920167782, %v5081
        %v5094 = vor.u32 %v5092, %v5093
        %v5095 = vshll.u32 920167782, %v5080
        %v5096 = vshrl.u32 1326507024, %v5081
        %v5097 = vor.u32 %v5095, %v5096
        %vm5098 = vcmp.lt.s32.totalorder %v5079, 1
        %vm5099 = vcmp.lt.s32.totalorder %v5079, 2
        %vm5100 = vcmp.lt.s32.totalorder %v5079, 3
        %vm5101 = vcmp.lt.s32.totalorder %v5079, 4
        %v5102 = vsel %vm5098, %v5082, %v5085
        %v5103 = vsel %vm5101, %v5091, 2102212464
        %v5104 = vsel %vm5100, %v5088, %v5103
        %v5105 = vsel %vm5099, %v5102, %v5104
        %v5106 = vsel %vm5098, %v5085, %v5088
        %v5107 = vsel %vm5101, %v5094, 920167782
        %v5108 = vsel %vm5100, %v5091, %v5107
        %v5109 = vsel %vm5099, %v5106, %v5108
        %v5110 = vsel %vm5098, %v5088, %v5091
        %v5111 = vsel %vm5101, %v5097, 1326507024
        %v5112 = vsel %vm5100, %v5094, %v5111
        %v5113 = vsel %vm5099, %v5110, %v5112
        %v5114 = vshll.u32 %v5074, 8
        %v5115 = vmul.u32.u64.compose %v5114, %v5113
        %v5116 = vextract.low.u32 %v5115
        %v5117 = vextract.high.u32 %v5115
        %v5118 = vmul.u32.u64.compose %v5114, %v5109
        %v5119 = vextract.low.u32 %v5118
        %v5120 = vextract.high.u32 %v5118
        %v5121 = vmul.u32 %v5114, %v5105
        %v5122 = vadd.s32 %v5117, %v5119
        %vm5123 = vc.u32 %v5117, %v5119
        %v5124 = vadd.s32 %v5120, 1
        %v5125 = vsel %vm5123, %v5124, %v5120
        %v5126 = vadd.s32 %v5121, %v5125
        %v5127 = vadd.s32 %v5126, 536870912
        %v5128 = vshrl.u32 %v5127, 30
        %v5129 = vshll.u32 %v5128, 30
        %v5130 = vsub.s32 %v5126, %v5129
        %vm5131 = vcmp.lt.s32.totalorder %v5130, 0
        %v5132 = vsub.s32 0, %v5130
        %v5133 = vsel %vm5131, %v5132, %v5130
        %v5134 = vclz %v5133
        %v5135 = vsub.s32 %v5134, 2
        %vm5136 = vcmp.gt.s32.totalorder 0, %v5135
        %v5137 = vsel %vm5136, 0, %v5135
        %v5138 = vsub.s32 32, %v5137
        %v5139 = vshll.u32 %v5130, %v5137
        %v5140 = vshrl.u32 %v5122, %v5138
        %v5141 = vor.u32 %v5139, %v5140
        %v5142 = vsub.s32 4294967266, %v5137
        %v5143 = vadd.s32 %v5142, 127
        %v5144 = vshll.u32 %v5143, 23
        %v5145 = vor.u32 4788187, %v5144
        %v5146 = vand.u32 2147483647, %v5145
        %v5148 = vcvt.s32.f32 %v5141
        %v5149 = vmul.f32 %v5148, %v5146
        %v5150 = vxor.u32 %v5149, 2147483648
        %v5151 = vsel %vm5068, %v5150, %v5149
        %v5152 = vsub.s32 4, %v5128
        %v5153 = vsel %vm5068, %v5152, %v5128
        %v5154 = vsel %vm5067, %v1532, %v5151
        %v5155 = vsel %vm5067, 0, %v5153
        %v5156 = vcosq.f32.pop %v5154
        %v5157 = vsinq.f32.pop %v5154
        %vm5158 = vweird.f32 %v1532
        %v5159 = vand.u32 %v5155, 3
        %vm5160 = vcmp.lt.s32.totalorder %v5159, 2
        %vm5161 = vcmp.eq.s32.totalorder %v5159, 0
        %v5162 = vxor.u32 %v5157, 2147483648
        %v5163 = vsel %vm5161, %v5156, %v5162
        %vm5164 = vcmp.eq.s32.totalorder %v5159, 2
        %v5165 = vxor.u32 %v5156, 2147483648
        %v5166 = vsel %vm5164, %v5165, %v5157
        %v5167 = vsel %vm5160, %v5163, %v5166
        %v5168 = vsel %vm5158, nan, %v5167
        %v5169 = vand.u32 2147483647, %v1533
        %vm5170 = vcmp.le.f32.partialorder %v5169, 0.7853982
        %vm5171 = vcmp.lt.s32.totalorder %v1533, 0
        %v5172 = vand.u32 %v1533, 2139095040
        %v5173 = vshrl.u32 %v5172, 23
        %v5174 = vsub.s32 %v5173, 127
        %v5175 = vand.u32 2147483647, %v1533
        %v5176 = vand.u32 %v5175, 8388607
        %v5177 = vor.u32 %v5176, 8388608
        %v5178 = vsub.s32 0, %v5177
        %v5179 = vadd.s32 %v5174, 1
        %vm5180 = vcmp.gt.s32.totalorder %v5179, 0
        %v5181 = vsel %vm5180, %v5179, 0
        %v5182 = vshrl.u32 %v5181, 5
        %v5183 = vand.u32 %v5181, 31
        %v5184 = vsub.s32 32, %v5183
        %v5185 = vshrl.u32 683565275, %v5184
        %v5186 = vshll.u32 683565275, %v5183
        %v5187 = vshrl.u32 2475754826, %v5184
        %v5188 = vor.u32 %v5186, %v5187
        %v5189 = vshll.u32 2475754826, %v5183
        %v5190 = vshrl.u32 2131351028, %v5184
        %v5191 = vor.u32 %v5189, %v5190
        %v5192 = vshll.u32 2131351028, %v5183
        %v5193 = vshrl.u32 2102212464, %v5184
        %v5194 = vor.u32 %v5192, %v5193
        %v5195 = vshll.u32 2102212464, %v5183
        %v5196 = vshrl.u32 920167782, %v5184
        %v5197 = vor.u32 %v5195, %v5196
        %v5198 = vshll.u32 920167782, %v5183
        %v5199 = vshrl.u32 1326507024, %v5184
        %v5200 = vor.u32 %v5198, %v5199
        %vm5201 = vcmp.lt.s32.totalorder %v5182, 1
        %vm5202 = vcmp.lt.s32.totalorder %v5182, 2
        %vm5203 = vcmp.lt.s32.totalorder %v5182, 3
        %vm5204 = vcmp.lt.s32.totalorder %v5182, 4
        %v5205 = vsel %vm5201, %v5185, %v5188
        %v5206 = vsel %vm5204, %v5194, 2102212464
        %v5207 = vsel %vm5203, %v5191, %v5206
        %v5208 = vsel %vm5202, %v5205, %v5207
        %v5209 = vsel %vm5201, %v5188, %v5191
        %v5210 = vsel %vm5204, %v5197, 920167782
        %v5211 = vsel %vm5203, %v5194, %v5210
        %v5212 = vsel %vm5202, %v5209, %v5211
        %v5213 = vsel %vm5201, %v5191, %v5194
        %v5214 = vsel %vm5204, %v5200, 1326507024
        %v5215 = vsel %vm5203, %v5197, %v5214
        %v5216 = vsel %vm5202, %v5213, %v5215
        %v5217 = vshll.u32 %v5177, 8
        %v5218 = vmul.u32.u64.compose %v5217, %v5216
        %v5219 = vextract.low.u32 %v5218
        %v5220 = vextract.high.u32 %v5218
        %v5221 = vmul.u32.u64.compose %v5217, %v5212
        %v5222 = vextract.low.u32 %v5221
        %v5223 = vextract.high.u32 %v5221
        %v5224 = vmul.u32 %v5217, %v5208
        %v5225 = vadd.s32 %v5220, %v5222
        %vm5226 = vc.u32 %v5220, %v5222
        %v5227 = vadd.s32 %v5223, 1
        %v5228 = vsel %vm5226, %v5227, %v5223
        %v5229 = vadd.s32 %v5224, %v5228
        %v5230 = vadd.s32 %v5229, 536870912
        %v5231 = vshrl.u32 %v5230, 30
        %v5232 = vshll.u32 %v5231, 30
        %v5233 = vsub.s32 %v5229, %v5232
        %vm5234 = vcmp.lt.s32.totalorder %v5233, 0
        %v5235 = vsub.s32 0, %v5233
        %v5236 = vsel %vm5234, %v5235, %v5233
        %v5237 = vclz %v5236
        %v5238 = vsub.s32 %v5237, 2
        %vm5239 = vcmp.gt.s32.totalorder 0, %v5238
        %v5240 = vsel %vm5239, 0, %v5238
        %v5241 = vsub.s32 32, %v5240
        %v5242 = vshll.u32 %v5233, %v5240
        %v5243 = vshrl.u32 %v5225, %v5241
        %v5244 = vor.u32 %v5242, %v5243
        %v5245 = vsub.s32 4294967266, %v5240
        %v5246 = vadd.s32 %v5245, 127
        %v5247 = vshll.u32 %v5246, 23
        %v5248 = vor.u32 4788187, %v5247
        %v5249 = vand.u32 2147483647, %v5248
        %v5251 = vcvt.s32.f32 %v5244
        %v5252 = vmul.f32 %v5251, %v5249
        %v5253 = vxor.u32 %v5252, 2147483648
        %v5254 = vsel %vm5171, %v5253, %v5252
        %v5255 = vsub.s32 4, %v5231
        %v5256 = vsel %vm5171, %v5255, %v5231
        %v5257 = vsel %vm5170, %v1533, %v5254
        %v5258 = vsel %vm5170, 0, %v5256
        %v5259 = vcosq.f32.pop %v5257
        %v5260 = vsinq.f32.pop %v5257
        %vm5261 = vweird.f32 %v1533
        %v5262 = vand.u32 %v5258, 3
        %vm5263 = vcmp.lt.s32.totalorder %v5262, 2
        %vm5264 = vcmp.eq.s32.totalorder %v5262, 0
        %v5265 = vxor.u32 %v5260, 2147483648
        %v5266 = vsel %vm5264, %v5259, %v5265
        %vm5267 = vcmp.eq.s32.totalorder %v5262, 2
        %v5268 = vxor.u32 %v5259, 2147483648
        %v5269 = vsel %vm5267, %v5268, %v5260
        %v5270 = vsel %vm5263, %v5266, %v5269
        %v5271 = vsel %vm5261, nan, %v5270
        %v5272 = vand.u32 2147483647, %v1534
        %vm5273 = vcmp.le.f32.partialorder %v5272, 0.7853982
        %vm5274 = vcmp.lt.s32.totalorder %v1534, 0
        %v5275 = vand.u32 %v1534, 2139095040
        %v5276 = vshrl.u32 %v5275, 23
        %v5277 = vsub.s32 %v5276, 127
        %v5278 = vand.u32 2147483647, %v1534
        %v5279 = vand.u32 %v5278, 8388607
        %v5280 = vor.u32 %v5279, 8388608
        %v5281 = vsub.s32 0, %v5280
        %v5282 = vadd.s32 %v5277, 1
        %vm5283 = vcmp.gt.s32.totalorder %v5282, 0
        %v5284 = vsel %vm5283, %v5282, 0
        %v5285 = vshrl.u32 %v5284, 5
        %v5286 = vand.u32 %v5284, 31
        %v5287 = vsub.s32 32, %v5286
        %v5288 = vshrl.u32 683565275, %v5287
        %v5289 = vshll.u32 683565275, %v5286
        %v5290 = vshrl.u32 2475754826, %v5287
        %v5291 = vor.u32 %v5289, %v5290
        %v5292 = vshll.u32 2475754826, %v5286
        %v5293 = vshrl.u32 2131351028, %v5287
        %v5294 = vor.u32 %v5292, %v5293
        %v5295 = vshll.u32 2131351028, %v5286
        %v5296 = vshrl.u32 2102212464, %v5287
        %v5297 = vor.u32 %v5295, %v5296
        %v5298 = vshll.u32 2102212464, %v5286
        %v5299 = vshrl.u32 920167782, %v5287
        %v5300 = vor.u32 %v5298, %v5299
        %v5301 = vshll.u32 920167782, %v5286
        %v5302 = vshrl.u32 1326507024, %v5287
        %v5303 = vor.u32 %v5301, %v5302
        %vm5304 = vcmp.lt.s32.totalorder %v5285, 1
        %vm5305 = vcmp.lt.s32.totalorder %v5285, 2
        %vm5306 = vcmp.lt.s32.totalorder %v5285, 3
        %vm5307 = vcmp.lt.s32.totalorder %v5285, 4
        %v5308 = vsel %vm5304, %v5288, %v5291
        %v5309 = vsel %vm5307, %v5297, 2102212464
        %v5310 = vsel %vm5306, %v5294, %v5309
        %v5311 = vsel %vm5305, %v5308, %v5310
        %v5312 = vsel %vm5304, %v5291, %v5294
        %v5313 = vsel %vm5307, %v5300, 920167782
        %v5314 = vsel %vm5306, %v5297, %v5313
        %v5315 = vsel %vm5305, %v5312, %v5314
        %v5316 = vsel %vm5304, %v5294, %v5297
        %v5317 = vsel %vm5307, %v5303, 1326507024
        %v5318 = vsel %vm5306, %v5300, %v5317
        %v5319 = vsel %vm5305, %v5316, %v5318
        %v5320 = vshll.u32 %v5280, 8
        %v5321 = vmul.u32.u64.compose %v5320, %v5319
        %v5322 = vextract.low.u32 %v5321
        %v5323 = vextract.high.u32 %v5321
        %v5324 = vmul.u32.u64.compose %v5320, %v5315
        %v5325 = vextract.low.u32 %v5324
        %v5326 = vextract.high.u32 %v5324
        %v5327 = vmul.u32 %v5320, %v5311
        %v5328 = vadd.s32 %v5323, %v5325
        %vm5329 = vc.u32 %v5323, %v5325
        %v5330 = vadd.s32 %v5326, 1
        %v5331 = vsel %vm5329, %v5330, %v5326
        %v5332 = vadd.s32 %v5327, %v5331
        %v5333 = vadd.s32 %v5332, 536870912
        %v5334 = vshrl.u32 %v5333, 30
        %v5335 = vshll.u32 %v5334, 30
        %v5336 = vsub.s32 %v5332, %v5335
        %vm5337 = vcmp.lt.s32.totalorder %v5336, 0
        %v5338 = vsub.s32 0, %v5336
        %v5339 = vsel %vm5337, %v5338, %v5336
        %v5340 = vclz %v5339
        %v5341 = vsub.s32 %v5340, 2
        %vm5342 = vcmp.gt.s32.totalorder 0, %v5341
        %v5343 = vsel %vm5342, 0, %v5341
        %v5344 = vsub.s32 32, %v5343
        %v5345 = vshll.u32 %v5336, %v5343
        %v5346 = vshrl.u32 %v5328, %v5344
        %v5347 = vor.u32 %v5345, %v5346
        %v5348 = vsub.s32 4294967266, %v5343
        %v5349 = vadd.s32 %v5348, 127
        %v5350 = vshll.u32 %v5349, 23
        %v5351 = vor.u32 4788187, %v5350
        %v5352 = vand.u32 2147483647, %v5351
        %v5354 = vcvt.s32.f32 %v5347
        %v5355 = vmul.f32 %v5354, %v5352
        %v5356 = vxor.u32 %v5355, 2147483648
        %v5357 = vsel %vm5274, %v5356, %v5355
        %v5358 = vsub.s32 4, %v5334
        %v5359 = vsel %vm5274, %v5358, %v5334
        %v5360 = vsel %vm5273, %v1534, %v5357
        %v5361 = vsel %vm5273, 0, %v5359
        %v5362 = vcosq.f32.pop %v5360
        %v5363 = vsinq.f32.pop %v5360
        %vm5364 = vweird.f32 %v1534
        %v5365 = vand.u32 %v5361, 3
        %vm5366 = vcmp.lt.s32.totalorder %v5365, 2
        %vm5367 = vcmp.eq.s32.totalorder %v5365, 0
        %v5368 = vxor.u32 %v5363, 2147483648
        %v5369 = vsel %vm5367, %v5362, %v5368
        %vm5370 = vcmp.eq.s32.totalorder %v5365, 2
        %v5371 = vxor.u32 %v5362, 2147483648
        %v5372 = vsel %vm5370, %v5371, %v5363
        %v5373 = vsel %vm5366, %v5369, %v5372
        %v5374 = vsel %vm5364, nan, %v5373
        %v5375 = vmul.f32 %v2181, %v1759
        %v5376 = vmul.f32 %v2284, %v1760
        %v5377 = vmul.f32 %v2387, %v1761
        %v5378 = vmul.f32 %v2490, %v1762
        %v5379 = vmul.f32 %v2593, %v1763
        %v5380 = vmul.f32 %v2696, %v1764
        %v5381 = vmul.f32 %v2799, %v1765
        %v5382 = vmul.f32 %v2902, %v1766
        %v5383 = vmul.f32 %v3005, %v1767
        %v5384 = vmul.f32 %v3108, %v1768
        %v5385 = vmul.f32 %v3211, %v1769
        %v5386 = vmul.f32 %v3314, %v1770
        %v5387 = vmul.f32 %v3417, %v1771
        %v5388 = vmul.f32 %v3520, %v1772
        %v5389 = vmul.f32 %v3623, %v1773
        %v5390 = vmul.f32 %v3726, %v1774
        %v5391 = vmul.f32 %v3829, %v1775
        %v5392 = vmul.f32 %v3932, %v1776
        %v5393 = vmul.f32 %v4035, %v1777
        %v5394 = vmul.f32 %v4138, %v1778
        %v5395 = vmul.f32 %v4241, %v1779
        %v5396 = vmul.f32 %v4344, %v1780
        %v5397 = vmul.f32 %v4447, %v1781
        %v5398 = vmul.f32 %v4550, %v1782
        %v5399 = vmul.f32 %v4653, %v1783
        %v5400 = vmul.f32 %v4756, %v1784
        %v5401 = vmul.f32 %v4859, %v1785
        %v5402 = vmul.f32 %v4962, %v1786
        %v5403 = vmul.f32 %v5065, %v1787
        %v5404 = vmul.f32 %v5168, %v1788
        %v5405 = vmul.f32 %v5271, %v1789
        %v5406 = vmul.f32 %v5374, %v1790
        %v5407 = vand.u32 2147483647, %v1503
        %vm5408 = vcmp.le.f32.partialorder %v5407, 0.7853982
        %vm5409 = vcmp.lt.s32.totalorder %v1503, 0
        %v5410 = vand.u32 %v1503, 2139095040
        %v5411 = vshrl.u32 %v5410, 23
        %v5412 = vsub.s32 %v5411, 127
        %v5413 = vand.u32 2147483647, %v1503
        %v5414 = vand.u32 %v5413, 8388607
        %v5415 = vor.u32 %v5414, 8388608
        %v5416 = vsub.s32 0, %v5415
        %v5417 = vadd.s32 %v5412, 1
        %vm5418 = vcmp.gt.s32.totalorder %v5417, 0
        %v5419 = vsel %vm5418, %v5417, 0
        %v5420 = vshrl.u32 %v5419, 5
        %v5421 = vand.u32 %v5419, 31
        %v5422 = vsub.s32 32, %v5421
        %v5423 = vshrl.u32 683565275, %v5422
        %v5424 = vshll.u32 683565275, %v5421
        %v5425 = vshrl.u32 2475754826, %v5422
        %v5426 = vor.u32 %v5424, %v5425
        %v5427 = vshll.u32 2475754826, %v5421
        %v5428 = vshrl.u32 2131351028, %v5422
        %v5429 = vor.u32 %v5427, %v5428
        %v5430 = vshll.u32 2131351028, %v5421
        %v5431 = vshrl.u32 2102212464, %v5422
        %v5432 = vor.u32 %v5430, %v5431
        %v5433 = vshll.u32 2102212464, %v5421
        %v5434 = vshrl.u32 920167782, %v5422
        %v5435 = vor.u32 %v5433, %v5434
        %v5436 = vshll.u32 920167782, %v5421
        %v5437 = vshrl.u32 1326507024, %v5422
        %v5438 = vor.u32 %v5436, %v5437
        %vm5439 = vcmp.lt.s32.totalorder %v5420, 1
        %vm5440 = vcmp.lt.s32.totalorder %v5420, 2
        %vm5441 = vcmp.lt.s32.totalorder %v5420, 3
        %vm5442 = vcmp.lt.s32.totalorder %v5420, 4
        %v5443 = vsel %vm5439, %v5423, %v5426
        %v5444 = vsel %vm5442, %v5432, 2102212464
        %v5445 = vsel %vm5441, %v5429, %v5444
        %v5446 = vsel %vm5440, %v5443, %v5445
        %v5447 = vsel %vm5439, %v5426, %v5429
        %v5448 = vsel %vm5442, %v5435, 920167782
        %v5449 = vsel %vm5441, %v5432, %v5448
        %v5450 = vsel %vm5440, %v5447, %v5449
        %v5451 = vsel %vm5439, %v5429, %v5432
        %v5452 = vsel %vm5442, %v5438, 1326507024
        %v5453 = vsel %vm5441, %v5435, %v5452
        %v5454 = vsel %vm5440, %v5451, %v5453
        %v5455 = vshll.u32 %v5415, 8
        %v5456 = vmul.u32.u64.compose %v5455, %v5454
        %v5457 = vextract.low.u32 %v5456
        %v5458 = vextract.high.u32 %v5456
        %v5459 = vmul.u32.u64.compose %v5455, %v5450
        %v5460 = vextract.low.u32 %v5459
        %v5461 = vextract.high.u32 %v5459
        %v5462 = vmul.u32 %v5455, %v5446
        %v5463 = vadd.s32 %v5458, %v5460
        %vm5464 = vc.u32 %v5458, %v5460
        %v5465 = vadd.s32 %v5461, 1
        %v5466 = vsel %vm5464, %v5465, %v5461
        %v5467 = vadd.s32 %v5462, %v5466
        %v5468 = vadd.s32 %v5467, 536870912
        %v5469 = vshrl.u32 %v5468, 30
        %v5470 = vshll.u32 %v5469, 30
        %v5471 = vsub.s32 %v5467, %v5470
        %vm5472 = vcmp.lt.s32.totalorder %v5471, 0
        %v5473 = vsub.s32 0, %v5471
        %v5474 = vsel %vm5472, %v5473, %v5471
        %v5475 = vclz %v5474
        %v5476 = vsub.s32 %v5475, 2
        %vm5477 = vcmp.gt.s32.totalorder 0, %v5476
        %v5478 = vsel %vm5477, 0, %v5476
        %v5479 = vsub.s32 32, %v5478
        %v5480 = vshll.u32 %v5471, %v5478
        %v5481 = vshrl.u32 %v5463, %v5479
        %v5482 = vor.u32 %v5480, %v5481
        %v5483 = vsub.s32 4294967266, %v5478
        %v5484 = vadd.s32 %v5483, 127
        %v5485 = vshll.u32 %v5484, 23
        %v5486 = vor.u32 4788187, %v5485
        %v5487 = vand.u32 2147483647, %v5486
        %v5489 = vcvt.s32.f32 %v5482
        %v5490 = vmul.f32 %v5489, %v5487
        %v5491 = vxor.u32 %v5490, 2147483648
        %v5492 = vsel %vm5409, %v5491, %v5490
        %v5493 = vsub.s32 4, %v5469
        %v5494 = vsel %vm5409, %v5493, %v5469
        %v5495 = vsel %vm5408, %v1503, %v5492
        %v5496 = vsel %vm5408, 0, %v5494
        %v5497 = vcosq.f32.pop %v5495
        %v5498 = vsinq.f32.pop %v5495
        %vm5499 = vweird.f32 %v1503
        %v5500 = vadd.s32 %v5496, 3
        %v5501 = vand.u32 %v5500, 3
        %vm5502 = vcmp.lt.s32.totalorder %v5501, 2
        %vm5503 = vcmp.eq.s32.totalorder %v5501, 0
        %v5504 = vxor.u32 %v5498, 2147483648
        %v5505 = vsel %vm5503, %v5497, %v5504
        %vm5506 = vcmp.eq.s32.totalorder %v5501, 2
        %v5507 = vxor.u32 %v5497, 2147483648
        %v5508 = vsel %vm5506, %v5507, %v5498
        %v5509 = vsel %vm5502, %v5505, %v5508
        %v5510 = vsel %vm5499, nan, %v5509
        %v5511 = vand.u32 2147483647, %v1504
        %vm5512 = vcmp.le.f32.partialorder %v5511, 0.7853982
        %vm5513 = vcmp.lt.s32.totalorder %v1504, 0
        %v5514 = vand.u32 %v1504, 2139095040
        %v5515 = vshrl.u32 %v5514, 23
        %v5516 = vsub.s32 %v5515, 127
        %v5517 = vand.u32 2147483647, %v1504
        %v5518 = vand.u32 %v5517, 8388607
        %v5519 = vor.u32 %v5518, 8388608
        %v5520 = vsub.s32 0, %v5519
        %v5521 = vadd.s32 %v5516, 1
        %vm5522 = vcmp.gt.s32.totalorder %v5521, 0
        %v5523 = vsel %vm5522, %v5521, 0
        %v5524 = vshrl.u32 %v5523, 5
        %v5525 = vand.u32 %v5523, 31
        %v5526 = vsub.s32 32, %v5525
        %v5527 = vshrl.u32 683565275, %v5526
        %v5528 = vshll.u32 683565275, %v5525
        %v5529 = vshrl.u32 2475754826, %v5526
        %v5530 = vor.u32 %v5528, %v5529
        %v5531 = vshll.u32 2475754826, %v5525
        %v5532 = vshrl.u32 2131351028, %v5526
        %v5533 = vor.u32 %v5531, %v5532
        %v5534 = vshll.u32 2131351028, %v5525
        %v5535 = vshrl.u32 2102212464, %v5526
        %v5536 = vor.u32 %v5534, %v5535
        %v5537 = vshll.u32 2102212464, %v5525
        %v5538 = vshrl.u32 920167782, %v5526
        %v5539 = vor.u32 %v5537, %v5538
        %v5540 = vshll.u32 920167782, %v5525
        %v5541 = vshrl.u32 1326507024, %v5526
        %v5542 = vor.u32 %v5540, %v5541
        %vm5543 = vcmp.lt.s32.totalorder %v5524, 1
        %vm5544 = vcmp.lt.s32.totalorder %v5524, 2
        %vm5545 = vcmp.lt.s32.totalorder %v5524, 3
        %vm5546 = vcmp.lt.s32.totalorder %v5524, 4
        %v5547 = vsel %vm5543, %v5527, %v5530
        %v5548 = vsel %vm5546, %v5536, 2102212464
        %v5549 = vsel %vm5545, %v5533, %v5548
        %v5550 = vsel %vm5544, %v5547, %v5549
        %v5551 = vsel %vm5543, %v5530, %v5533
        %v5552 = vsel %vm5546, %v5539, 920167782
        %v5553 = vsel %vm5545, %v5536, %v5552
        %v5554 = vsel %vm5544, %v5551, %v5553
        %v5555 = vsel %vm5543, %v5533, %v5536
        %v5556 = vsel %vm5546, %v5542, 1326507024
        %v5557 = vsel %vm5545, %v5539, %v5556
        %v5558 = vsel %vm5544, %v5555, %v5557
        %v5559 = vshll.u32 %v5519, 8
        %v5560 = vmul.u32.u64.compose %v5559, %v5558
        %v5561 = vextract.low.u32 %v5560
        %v5562 = vextract.high.u32 %v5560
        %v5563 = vmul.u32.u64.compose %v5559, %v5554
        %v5564 = vextract.low.u32 %v5563
        %v5565 = vextract.high.u32 %v5563
        %v5566 = vmul.u32 %v5559, %v5550
        %v5567 = vadd.s32 %v5562, %v5564
        %vm5568 = vc.u32 %v5562, %v5564
        %v5569 = vadd.s32 %v5565, 1
        %v5570 = vsel %vm5568, %v5569, %v5565
        %v5571 = vadd.s32 %v5566, %v5570
        %v5572 = vadd.s32 %v5571, 536870912
        %v5573 = vshrl.u32 %v5572, 30
        %v5574 = vshll.u32 %v5573, 30
        %v5575 = vsub.s32 %v5571, %v5574
        %vm5576 = vcmp.lt.s32.totalorder %v5575, 0
        %v5577 = vsub.s32 0, %v5575
        %v5578 = vsel %vm5576, %v5577, %v5575
        %v5579 = vclz %v5578
        %v5580 = vsub.s32 %v5579, 2
        %vm5581 = vcmp.gt.s32.totalorder 0, %v5580
        %v5582 = vsel %vm5581, 0, %v5580
        %v5583 = vsub.s32 32, %v5582
        %v5584 = vshll.u32 %v5575, %v5582
        %v5585 = vshrl.u32 %v5567, %v5583
        %v5586 = vor.u32 %v5584, %v5585
        %v5587 = vsub.s32 4294967266, %v5582
        %v5588 = vadd.s32 %v5587, 127
        %v5589 = vshll.u32 %v5588, 23
        %v5590 = vor.u32 4788187, %v5589
        %v5591 = vand.u32 2147483647, %v5590
        %v5593 = vcvt.s32.f32 %v5586
        %v5594 = vmul.f32 %v5593, %v5591
        %v5595 = vxor.u32 %v5594, 2147483648
        %v5596 = vsel %vm5513, %v5595, %v5594
        %v5597 = vsub.s32 4, %v5573
        %v5598 = vsel %vm5513, %v5597, %v5573
        %v5599 = vsel %vm5512, %v1504, %v5596
        %v5600 = vsel %vm5512, 0, %v5598
        %v5601 = vcosq.f32.pop %v5599
        %v5602 = vsinq.f32.pop %v5599
        %vm5603 = vweird.f32 %v1504
        %v5604 = vadd.s32 %v5600, 3
        %v5605 = vand.u32 %v5604, 3
        %vm5606 = vcmp.lt.s32.totalorder %v5605, 2
        %vm5607 = vcmp.eq.s32.totalorder %v5605, 0
        %v5608 = vxor.u32 %v5602, 2147483648
        %v5609 = vsel %vm5607, %v5601, %v5608
        %vm5610 = vcmp.eq.s32.totalorder %v5605, 2
        %v5611 = vxor.u32 %v5601, 2147483648
        %v5612 = vsel %vm5610, %v5611, %v5602
        %v5613 = vsel %vm5606, %v5609, %v5612
        %v5614 = vsel %vm5603, nan, %v5613
        %v5615 = vand.u32 2147483647, %v1505
        %vm5616 = vcmp.le.f32.partialorder %v5615, 0.7853982
        %vm5617 = vcmp.lt.s32.totalorder %v1505, 0
        %v5618 = vand.u32 %v1505, 2139095040
        %v5619 = vshrl.u32 %v5618, 23
        %v5620 = vsub.s32 %v5619, 127
        %v5621 = vand.u32 2147483647, %v1505
        %v5622 = vand.u32 %v5621, 8388607
        %v5623 = vor.u32 %v5622, 8388608
        %v5624 = vsub.s32 0, %v5623
        %v5625 = vadd.s32 %v5620, 1
        %vm5626 = vcmp.gt.s32.totalorder %v5625, 0
        %v5627 = vsel %vm5626, %v5625, 0
        %v5628 = vshrl.u32 %v5627, 5
        %v5629 = vand.u32 %v5627, 31
        %v5630 = vsub.s32 32, %v5629
        %v5631 = vshrl.u32 683565275, %v5630
        %v5632 = vshll.u32 683565275, %v5629
        %v5633 = vshrl.u32 2475754826, %v5630
        %v5634 = vor.u32 %v5632, %v5633
        %v5635 = vshll.u32 2475754826, %v5629
        %v5636 = vshrl.u32 2131351028, %v5630
        %v5637 = vor.u32 %v5635, %v5636
        %v5638 = vshll.u32 2131351028, %v5629
        %v5639 = vshrl.u32 2102212464, %v5630
        %v5640 = vor.u32 %v5638, %v5639
        %v5641 = vshll.u32 2102212464, %v5629
        %v5642 = vshrl.u32 920167782, %v5630
        %v5643 = vor.u32 %v5641, %v5642
        %v5644 = vshll.u32 920167782, %v5629
        %v5645 = vshrl.u32 1326507024, %v5630
        %v5646 = vor.u32 %v5644, %v5645
        %vm5647 = vcmp.lt.s32.totalorder %v5628, 1
        %vm5648 = vcmp.lt.s32.totalorder %v5628, 2
        %vm5649 = vcmp.lt.s32.totalorder %v5628, 3
        %vm5650 = vcmp.lt.s32.totalorder %v5628, 4
        %v5651 = vsel %vm5647, %v5631, %v5634
        %v5652 = vsel %vm5650, %v5640, 2102212464
        %v5653 = vsel %vm5649, %v5637, %v5652
        %v5654 = vsel %vm5648, %v5651, %v5653
        %v5655 = vsel %vm5647, %v5634, %v5637
        %v5656 = vsel %vm5650, %v5643, 920167782
        %v5657 = vsel %vm5649, %v5640, %v5656
        %v5658 = vsel %vm5648, %v5655, %v5657
        %v5659 = vsel %vm5647, %v5637, %v5640
        %v5660 = vsel %vm5650, %v5646, 1326507024
        %v5661 = vsel %vm5649, %v5643, %v5660
        %v5662 = vsel %vm5648, %v5659, %v5661
        %v5663 = vshll.u32 %v5623, 8
        %v5664 = vmul.u32.u64.compose %v5663, %v5662
        %v5665 = vextract.low.u32 %v5664
        %v5666 = vextract.high.u32 %v5664
        %v5667 = vmul.u32.u64.compose %v5663, %v5658
        %v5668 = vextract.low.u32 %v5667
        %v5669 = vextract.high.u32 %v5667
        %v5670 = vmul.u32 %v5663, %v5654
        %v5671 = vadd.s32 %v5666, %v5668
        %vm5672 = vc.u32 %v5666, %v5668
        %v5673 = vadd.s32 %v5669, 1
        %v5674 = vsel %vm5672, %v5673, %v5669
        %v5675 = vadd.s32 %v5670, %v5674
        %v5676 = vadd.s32 %v5675, 536870912
        %v5677 = vshrl.u32 %v5676, 30
        %v5678 = vshll.u32 %v5677, 30
        %v5679 = vsub.s32 %v5675, %v5678
        %vm5680 = vcmp.lt.s32.totalorder %v5679, 0
        %v5681 = vsub.s32 0, %v5679
        %v5682 = vsel %vm5680, %v5681, %v5679
        %v5683 = vclz %v5682
        %v5684 = vsub.s32 %v5683, 2
        %vm5685 = vcmp.gt.s32.totalorder 0, %v5684
        %v5686 = vsel %vm5685, 0, %v5684
        %v5687 = vsub.s32 32, %v5686
        %v5688 = vshll.u32 %v5679, %v5686
        %v5689 = vshrl.u32 %v5671, %v5687
        %v5690 = vor.u32 %v5688, %v5689
        %v5691 = vsub.s32 4294967266, %v5686
        %v5692 = vadd.s32 %v5691, 127
        %v5693 = vshll.u32 %v5692, 23
        %v5694 = vor.u32 4788187, %v5693
        %v5695 = vand.u32 2147483647, %v5694
        %v5697 = vcvt.s32.f32 %v5690
        %v5698 = vmul.f32 %v5697, %v5695
        %v5699 = vxor.u32 %v5698, 2147483648
        %v5700 = vsel %vm5617, %v5699, %v5698
        %v5701 = vsub.s32 4, %v5677
        %v5702 = vsel %vm5617, %v5701, %v5677
        %v5703 = vsel %vm5616, %v1505, %v5700
        %v5704 = vsel %vm5616, 0, %v5702
        %v5705 = vcosq.f32.pop %v5703
        %v5706 = vsinq.f32.pop %v5703
        %vm5707 = vweird.f32 %v1505
        %v5708 = vadd.s32 %v5704, 3
        %v5709 = vand.u32 %v5708, 3
        %vm5710 = vcmp.lt.s32.totalorder %v5709, 2
        %vm5711 = vcmp.eq.s32.totalorder %v5709, 0
        %v5712 = vxor.u32 %v5706, 2147483648
        %v5713 = vsel %vm5711, %v5705, %v5712
        %vm5714 = vcmp.eq.s32.totalorder %v5709, 2
        %v5715 = vxor.u32 %v5705, 2147483648
        %v5716 = vsel %vm5714, %v5715, %v5706
        %v5717 = vsel %vm5710, %v5713, %v5716
        %v5718 = vsel %vm5707, nan, %v5717
        %v5719 = vand.u32 2147483647, %v1506
        %vm5720 = vcmp.le.f32.partialorder %v5719, 0.7853982
        %vm5721 = vcmp.lt.s32.totalorder %v1506, 0
        %v5722 = vand.u32 %v1506, 2139095040
        %v5723 = vshrl.u32 %v5722, 23
        %v5724 = vsub.s32 %v5723, 127
        %v5725 = vand.u32 2147483647, %v1506
        %v5726 = vand.u32 %v5725, 8388607
        %v5727 = vor.u32 %v5726, 8388608
        %v5728 = vsub.s32 0, %v5727
        %v5729 = vadd.s32 %v5724, 1
        %vm5730 = vcmp.gt.s32.totalorder %v5729, 0
        %v5731 = vsel %vm5730, %v5729, 0
        %v5732 = vshrl.u32 %v5731, 5
        %v5733 = vand.u32 %v5731, 31
        %v5734 = vsub.s32 32, %v5733
        %v5735 = vshrl.u32 683565275, %v5734
        %v5736 = vshll.u32 683565275, %v5733
        %v5737 = vshrl.u32 2475754826, %v5734
        %v5738 = vor.u32 %v5736, %v5737
        %v5739 = vshll.u32 2475754826, %v5733
        %v5740 = vshrl.u32 2131351028, %v5734
        %v5741 = vor.u32 %v5739, %v5740
        %v5742 = vshll.u32 2131351028, %v5733
        %v5743 = vshrl.u32 2102212464, %v5734
        %v5744 = vor.u32 %v5742, %v5743
        %v5745 = vshll.u32 2102212464, %v5733
        %v5746 = vshrl.u32 920167782, %v5734
        %v5747 = vor.u32 %v5745, %v5746
        %v5748 = vshll.u32 920167782, %v5733
        %v5749 = vshrl.u32 1326507024, %v5734
        %v5750 = vor.u32 %v5748, %v5749
        %vm5751 = vcmp.lt.s32.totalorder %v5732, 1
        %vm5752 = vcmp.lt.s32.totalorder %v5732, 2
        %vm5753 = vcmp.lt.s32.totalorder %v5732, 3
        %vm5754 = vcmp.lt.s32.totalorder %v5732, 4
        %v5755 = vsel %vm5751, %v5735, %v5738
        %v5756 = vsel %vm5754, %v5744, 2102212464
        %v5757 = vsel %vm5753, %v5741, %v5756
        %v5758 = vsel %vm5752, %v5755, %v5757
        %v5759 = vsel %vm5751, %v5738, %v5741
        %v5760 = vsel %vm5754, %v5747, 920167782
        %v5761 = vsel %vm5753, %v5744, %v5760
        %v5762 = vsel %vm5752, %v5759, %v5761
        %v5763 = vsel %vm5751, %v5741, %v5744
        %v5764 = vsel %vm5754, %v5750, 1326507024
        %v5765 = vsel %vm5753, %v5747, %v5764
        %v5766 = vsel %vm5752, %v5763, %v5765
        %v5767 = vshll.u32 %v5727, 8
        %v5768 = vmul.u32.u64.compose %v5767, %v5766
        %v5769 = vextract.low.u32 %v5768
        %v5770 = vextract.high.u32 %v5768
        %v5771 = vmul.u32.u64.compose %v5767, %v5762
        %v5772 = vextract.low.u32 %v5771
        %v5773 = vextract.high.u32 %v5771
        %v5774 = vmul.u32 %v5767, %v5758
        %v5775 = vadd.s32 %v5770, %v5772
        %vm5776 = vc.u32 %v5770, %v5772
        %v5777 = vadd.s32 %v5773, 1
        %v5778 = vsel %vm5776, %v5777, %v5773
        %v5779 = vadd.s32 %v5774, %v5778
        %v5780 = vadd.s32 %v5779, 536870912
        %v5781 = vshrl.u32 %v5780, 30
        %v5782 = vshll.u32 %v5781, 30
        %v5783 = vsub.s32 %v5779, %v5782
        %vm5784 = vcmp.lt.s32.totalorder %v5783, 0
        %v5785 = vsub.s32 0, %v5783
        %v5786 = vsel %vm5784, %v5785, %v5783
        %v5787 = vclz %v5786
        %v5788 = vsub.s32 %v5787, 2
        %vm5789 = vcmp.gt.s32.totalorder 0, %v5788
        %v5790 = vsel %vm5789, 0, %v5788
        %v5791 = vsub.s32 32, %v5790
        %v5792 = vshll.u32 %v5783, %v5790
        %v5793 = vshrl.u32 %v5775, %v5791
        %v5794 = vor.u32 %v5792, %v5793
        %v5795 = vsub.s32 4294967266, %v5790
        %v5796 = vadd.s32 %v5795, 127
        %v5797 = vshll.u32 %v5796, 23
        %v5798 = vor.u32 4788187, %v5797
        %v5799 = vand.u32 2147483647, %v5798
        %v5801 = vcvt.s32.f32 %v5794
        %v5802 = vmul.f32 %v5801, %v5799
        %v5803 = vxor.u32 %v5802, 2147483648
        %v5804 = vsel %vm5721, %v5803, %v5802
        %v5805 = vsub.s32 4, %v5781
        %v5806 = vsel %vm5721, %v5805, %v5781
        %v5807 = vsel %vm5720, %v1506, %v5804
        %v5808 = vsel %vm5720, 0, %v5806
        %v5809 = vcosq.f32.pop %v5807
        %v5810 = vsinq.f32.pop %v5807
        %vm5811 = vweird.f32 %v1506
        %v5812 = vadd.s32 %v5808, 3
        %v5813 = vand.u32 %v5812, 3
        %vm5814 = vcmp.lt.s32.totalorder %v5813, 2
        %vm5815 = vcmp.eq.s32.totalorder %v5813, 0
        %v5816 = vxor.u32 %v5810, 2147483648
        %v5817 = vsel %vm5815, %v5809, %v5816
        %vm5818 = vcmp.eq.s32.totalorder %v5813, 2
        %v5819 = vxor.u32 %v5809, 2147483648
        %v5820 = vsel %vm5818, %v5819, %v5810
        %v5821 = vsel %vm5814, %v5817, %v5820
        %v5822 = vsel %vm5811, nan, %v5821
        %v5823 = vand.u32 2147483647, %v1507
        %vm5824 = vcmp.le.f32.partialorder %v5823, 0.7853982
        %vm5825 = vcmp.lt.s32.totalorder %v1507, 0
        %v5826 = vand.u32 %v1507, 2139095040
        %v5827 = vshrl.u32 %v5826, 23
        %v5828 = vsub.s32 %v5827, 127
        %v5829 = vand.u32 2147483647, %v1507
        %v5830 = vand.u32 %v5829, 8388607
        %v5831 = vor.u32 %v5830, 8388608
        %v5832 = vsub.s32 0, %v5831
        %v5833 = vadd.s32 %v5828, 1
        %vm5834 = vcmp.gt.s32.totalorder %v5833, 0
        %v5835 = vsel %vm5834, %v5833, 0
        %v5836 = vshrl.u32 %v5835, 5
        %v5837 = vand.u32 %v5835, 31
        %v5838 = vsub.s32 32, %v5837
        %v5839 = vshrl.u32 683565275, %v5838
        %v5840 = vshll.u32 683565275, %v5837
        %v5841 = vshrl.u32 2475754826, %v5838
        %v5842 = vor.u32 %v5840, %v5841
        %v5843 = vshll.u32 2475754826, %v5837
        %v5844 = vshrl.u32 2131351028, %v5838
        %v5845 = vor.u32 %v5843, %v5844
        %v5846 = vshll.u32 2131351028, %v5837
        %v5847 = vshrl.u32 2102212464, %v5838
        %v5848 = vor.u32 %v5846, %v5847
        %v5849 = vshll.u32 2102212464, %v5837
        %v5850 = vshrl.u32 920167782, %v5838
        %v5851 = vor.u32 %v5849, %v5850
        %v5852 = vshll.u32 920167782, %v5837
        %v5853 = vshrl.u32 1326507024, %v5838
        %v5854 = vor.u32 %v5852, %v5853
        %vm5855 = vcmp.lt.s32.totalorder %v5836, 1
        %vm5856 = vcmp.lt.s32.totalorder %v5836, 2
        %vm5857 = vcmp.lt.s32.totalorder %v5836, 3
        %vm5858 = vcmp.lt.s32.totalorder %v5836, 4
        %v5859 = vsel %vm5855, %v5839, %v5842
        %v5860 = vsel %vm5858, %v5848, 2102212464
        %v5861 = vsel %vm5857, %v5845, %v5860
        %v5862 = vsel %vm5856, %v5859, %v5861
        %v5863 = vsel %vm5855, %v5842, %v5845
        %v5864 = vsel %vm5858, %v5851, 920167782
        %v5865 = vsel %vm5857, %v5848, %v5864
        %v5866 = vsel %vm5856, %v5863, %v5865
        %v5867 = vsel %vm5855, %v5845, %v5848
        %v5868 = vsel %vm5858, %v5854, 1326507024
        %v5869 = vsel %vm5857, %v5851, %v5868
        %v5870 = vsel %vm5856, %v5867, %v5869
        %v5871 = vshll.u32 %v5831, 8
        %v5872 = vmul.u32.u64.compose %v5871, %v5870
        %v5873 = vextract.low.u32 %v5872
        %v5874 = vextract.high.u32 %v5872
        %v5875 = vmul.u32.u64.compose %v5871, %v5866
        %v5876 = vextract.low.u32 %v5875
        %v5877 = vextract.high.u32 %v5875
        %v5878 = vmul.u32 %v5871, %v5862
        %v5879 = vadd.s32 %v5874, %v5876
        %vm5880 = vc.u32 %v5874, %v5876
        %v5881 = vadd.s32 %v5877, 1
        %v5882 = vsel %vm5880, %v5881, %v5877
        %v5883 = vadd.s32 %v5878, %v5882
        %v5884 = vadd.s32 %v5883, 536870912
        %v5885 = vshrl.u32 %v5884, 30
        %v5886 = vshll.u32 %v5885, 30
        %v5887 = vsub.s32 %v5883, %v5886
        %vm5888 = vcmp.lt.s32.totalorder %v5887, 0
        %v5889 = vsub.s32 0, %v5887
        %v5890 = vsel %vm5888, %v5889, %v5887
        %v5891 = vclz %v5890
        %v5892 = vsub.s32 %v5891, 2
        %vm5893 = vcmp.gt.s32.totalorder 0, %v5892
        %v5894 = vsel %vm5893, 0, %v5892
        %v5895 = vsub.s32 32, %v5894
        %v5896 = vshll.u32 %v5887, %v5894
        %v5897 = vshrl.u32 %v5879, %v5895
        %v5898 = vor.u32 %v5896, %v5897
        %v5899 = vsub.s32 4294967266, %v5894
        %v5900 = vadd.s32 %v5899, 127
        %v5901 = vshll.u32 %v5900, 23
        %v5902 = vor.u32 4788187, %v5901
        %v5903 = vand.u32 2147483647, %v5902
        %v5905 = vcvt.s32.f32 %v5898
        %v5906 = vmul.f32 %v5905, %v5903
        %v5907 = vxor.u32 %v5906, 2147483648
        %v5908 = vsel %vm5825, %v5907, %v5906
        %v5909 = vsub.s32 4, %v5885
        %v5910 = vsel %vm5825, %v5909, %v5885
        %v5911 = vsel %vm5824, %v1507, %v5908
        %v5912 = vsel %vm5824, 0, %v5910
        %v5913 = vcosq.f32.pop %v5911
        %v5914 = vsinq.f32.pop %v5911
        %vm5915 = vweird.f32 %v1507
        %v5916 = vadd.s32 %v5912, 3
        %v5917 = vand.u32 %v5916, 3
        %vm5918 = vcmp.lt.s32.totalorder %v5917, 2
        %vm5919 = vcmp.eq.s32.totalorder %v5917, 0
        %v5920 = vxor.u32 %v5914, 2147483648
        %v5921 = vsel %vm5919, %v5913, %v5920
        %vm5922 = vcmp.eq.s32.totalorder %v5917, 2
        %v5923 = vxor.u32 %v5913, 2147483648
        %v5924 = vsel %vm5922, %v5923, %v5914
        %v5925 = vsel %vm5918, %v5921, %v5924
        %v5926 = vsel %vm5915, nan, %v5925
        %v5927 = vand.u32 2147483647, %v1508
        %vm5928 = vcmp.le.f32.partialorder %v5927, 0.7853982
        %vm5929 = vcmp.lt.s32.totalorder %v1508, 0
        %v5930 = vand.u32 %v1508, 2139095040
        %v5931 = vshrl.u32 %v5930, 23
        %v5932 = vsub.s32 %v5931, 127
        %v5933 = vand.u32 2147483647, %v1508
        %v5934 = vand.u32 %v5933, 8388607
        %v5935 = vor.u32 %v5934, 8388608
        %v5936 = vsub.s32 0, %v5935
        %v5937 = vadd.s32 %v5932, 1
        %vm5938 = vcmp.gt.s32.totalorder %v5937, 0
        %v5939 = vsel %vm5938, %v5937, 0
        %v5940 = vshrl.u32 %v5939, 5
        %v5941 = vand.u32 %v5939, 31
        %v5942 = vsub.s32 32, %v5941
        %v5943 = vshrl.u32 683565275, %v5942
        %v5944 = vshll.u32 683565275, %v5941
        %v5945 = vshrl.u32 2475754826, %v5942
        %v5946 = vor.u32 %v5944, %v5945
        %v5947 = vshll.u32 2475754826, %v5941
        %v5948 = vshrl.u32 2131351028, %v5942
        %v5949 = vor.u32 %v5947, %v5948
        %v5950 = vshll.u32 2131351028, %v5941
        %v5951 = vshrl.u32 2102212464, %v5942
        %v5952 = vor.u32 %v5950, %v5951
        %v5953 = vshll.u32 2102212464, %v5941
        %v5954 = vshrl.u32 920167782, %v5942
        %v5955 = vor.u32 %v5953, %v5954
        %v5956 = vshll.u32 920167782, %v5941
        %v5957 = vshrl.u32 1326507024, %v5942
        %v5958 = vor.u32 %v5956, %v5957
        %vm5959 = vcmp.lt.s32.totalorder %v5940, 1
        %vm5960 = vcmp.lt.s32.totalorder %v5940, 2
        %vm5961 = vcmp.lt.s32.totalorder %v5940, 3
        %vm5962 = vcmp.lt.s32.totalorder %v5940, 4
        %v5963 = vsel %vm5959, %v5943, %v5946
        %v5964 = vsel %vm5962, %v5952, 2102212464
        %v5965 = vsel %vm5961, %v5949, %v5964
        %v5966 = vsel %vm5960, %v5963, %v5965
        %v5967 = vsel %vm5959, %v5946, %v5949
        %v5968 = vsel %vm5962, %v5955, 920167782
        %v5969 = vsel %vm5961, %v5952, %v5968
        %v5970 = vsel %vm5960, %v5967, %v5969
        %v5971 = vsel %vm5959, %v5949, %v5952
        %v5972 = vsel %vm5962, %v5958, 1326507024
        %v5973 = vsel %vm5961, %v5955, %v5972
        %v5974 = vsel %vm5960, %v5971, %v5973
        %v5975 = vshll.u32 %v5935, 8
        %v5976 = vmul.u32.u64.compose %v5975, %v5974
        %v5977 = vextract.low.u32 %v5976
        %v5978 = vextract.high.u32 %v5976
        %v5979 = vmul.u32.u64.compose %v5975, %v5970
        %v5980 = vextract.low.u32 %v5979
        %v5981 = vextract.high.u32 %v5979
        %v5982 = vmul.u32 %v5975, %v5966
        %v5983 = vadd.s32 %v5978, %v5980
        %vm5984 = vc.u32 %v5978, %v5980
        %v5985 = vadd.s32 %v5981, 1
        %v5986 = vsel %vm5984, %v5985, %v5981
        %v5987 = vadd.s32 %v5982, %v5986
        %v5988 = vadd.s32 %v5987, 536870912
        %v5989 = vshrl.u32 %v5988, 30
        %v5990 = vshll.u32 %v5989, 30
        %v5991 = vsub.s32 %v5987, %v5990
        %vm5992 = vcmp.lt.s32.totalorder %v5991, 0
        %v5993 = vsub.s32 0, %v5991
        %v5994 = vsel %vm5992, %v5993, %v5991
        %v5995 = vclz %v5994
        %v5996 = vsub.s32 %v5995, 2
        %vm5997 = vcmp.gt.s32.totalorder 0, %v5996
        %v5998 = vsel %vm5997, 0, %v5996
        %v5999 = vsub.s32 32, %v5998
        %v6000 = vshll.u32 %v5991, %v5998
        %v6001 = vshrl.u32 %v5983, %v5999
        %v6002 = vor.u32 %v6000, %v6001
        %v6003 = vsub.s32 4294967266, %v5998
        %v6004 = vadd.s32 %v6003, 127
        %v6005 = vshll.u32 %v6004, 23
        %v6006 = vor.u32 4788187, %v6005
        %v6007 = vand.u32 2147483647, %v6006
        %v6009 = vcvt.s32.f32 %v6002
        %v6010 = vmul.f32 %v6009, %v6007
        %v6011 = vxor.u32 %v6010, 2147483648
        %v6012 = vsel %vm5929, %v6011, %v6010
        %v6013 = vsub.s32 4, %v5989
        %v6014 = vsel %vm5929, %v6013, %v5989
        %v6015 = vsel %vm5928, %v1508, %v6012
        %v6016 = vsel %vm5928, 0, %v6014
        %v6017 = vcosq.f32.pop %v6015
        %v6018 = vsinq.f32.pop %v6015
        %vm6019 = vweird.f32 %v1508
        %v6020 = vadd.s32 %v6016, 3
        %v6021 = vand.u32 %v6020, 3
        %vm6022 = vcmp.lt.s32.totalorder %v6021, 2
        %vm6023 = vcmp.eq.s32.totalorder %v6021, 0
        %v6024 = vxor.u32 %v6018, 2147483648
        %v6025 = vsel %vm6023, %v6017, %v6024
        %vm6026 = vcmp.eq.s32.totalorder %v6021, 2
        %v6027 = vxor.u32 %v6017, 2147483648
        %v6028 = vsel %vm6026, %v6027, %v6018
        %v6029 = vsel %vm6022, %v6025, %v6028
        %v6030 = vsel %vm6019, nan, %v6029
        %v6031 = vand.u32 2147483647, %v1509
        %vm6032 = vcmp.le.f32.partialorder %v6031, 0.7853982
        %vm6033 = vcmp.lt.s32.totalorder %v1509, 0
        %v6034 = vand.u32 %v1509, 2139095040
        %v6035 = vshrl.u32 %v6034, 23
        %v6036 = vsub.s32 %v6035, 127
        %v6037 = vand.u32 2147483647, %v1509
        %v6038 = vand.u32 %v6037, 8388607
        %v6039 = vor.u32 %v6038, 8388608
        %v6040 = vsub.s32 0, %v6039
        %v6041 = vadd.s32 %v6036, 1
        %vm6042 = vcmp.gt.s32.totalorder %v6041, 0
        %v6043 = vsel %vm6042, %v6041, 0
        %v6044 = vshrl.u32 %v6043, 5
        %v6045 = vand.u32 %v6043, 31
        %v6046 = vsub.s32 32, %v6045
        %v6047 = vshrl.u32 683565275, %v6046
        %v6048 = vshll.u32 683565275, %v6045
        %v6049 = vshrl.u32 2475754826, %v6046
        %v6050 = vor.u32 %v6048, %v6049
        %v6051 = vshll.u32 2475754826, %v6045
        %v6052 = vshrl.u32 2131351028, %v6046
        %v6053 = vor.u32 %v6051, %v6052
        %v6054 = vshll.u32 2131351028, %v6045
        %v6055 = vshrl.u32 2102212464, %v6046
        %v6056 = vor.u32 %v6054, %v6055
        %v6057 = vshll.u32 2102212464, %v6045
        %v6058 = vshrl.u32 920167782, %v6046
        %v6059 = vor.u32 %v6057, %v6058
        %v6060 = vshll.u32 920167782, %v6045
        %v6061 = vshrl.u32 1326507024, %v6046
        %v6062 = vor.u32 %v6060, %v6061
        %vm6063 = vcmp.lt.s32.totalorder %v6044, 1
        %vm6064 = vcmp.lt.s32.totalorder %v6044, 2
        %vm6065 = vcmp.lt.s32.totalorder %v6044, 3
        %vm6066 = vcmp.lt.s32.totalorder %v6044, 4
        %v6067 = vsel %vm6063, %v6047, %v6050
        %v6068 = vsel %vm6066, %v6056, 2102212464
        %v6069 = vsel %vm6065, %v6053, %v6068
        %v6070 = vsel %vm6064, %v6067, %v6069
        %v6071 = vsel %vm6063, %v6050, %v6053
        %v6072 = vsel %vm6066, %v6059, 920167782
        %v6073 = vsel %vm6065, %v6056, %v6072
        %v6074 = vsel %vm6064, %v6071, %v6073
        %v6075 = vsel %vm6063, %v6053, %v6056
        %v6076 = vsel %vm6066, %v6062, 1326507024
        %v6077 = vsel %vm6065, %v6059, %v6076
        %v6078 = vsel %vm6064, %v6075, %v6077
        %v6079 = vshll.u32 %v6039, 8
        %v6080 = vmul.u32.u64.compose %v6079, %v6078
        %v6081 = vextract.low.u32 %v6080
        %v6082 = vextract.high.u32 %v6080
        %v6083 = vmul.u32.u64.compose %v6079, %v6074
        %v6084 = vextract.low.u32 %v6083
        %v6085 = vextract.high.u32 %v6083
        %v6086 = vmul.u32 %v6079, %v6070
        %v6087 = vadd.s32 %v6082, %v6084
        %vm6088 = vc.u32 %v6082, %v6084
        %v6089 = vadd.s32 %v6085, 1
        %v6090 = vsel %vm6088, %v6089, %v6085
        %v6091 = vadd.s32 %v6086, %v6090
        %v6092 = vadd.s32 %v6091, 536870912
        %v6093 = vshrl.u32 %v6092, 30
        %v6094 = vshll.u32 %v6093, 30
        %v6095 = vsub.s32 %v6091, %v6094
        %vm6096 = vcmp.lt.s32.totalorder %v6095, 0
        %v6097 = vsub.s32 0, %v6095
        %v6098 = vsel %vm6096, %v6097, %v6095
        %v6099 = vclz %v6098
        %v6100 = vsub.s32 %v6099, 2
        %vm6101 = vcmp.gt.s32.totalorder 0, %v6100
        %v6102 = vsel %vm6101, 0, %v6100
        %v6103 = vsub.s32 32, %v6102
        %v6104 = vshll.u32 %v6095, %v6102
        %v6105 = vshrl.u32 %v6087, %v6103
        %v6106 = vor.u32 %v6104, %v6105
        %v6107 = vsub.s32 4294967266, %v6102
        %v6108 = vadd.s32 %v6107, 127
        %v6109 = vshll.u32 %v6108, 23
        %v6110 = vor.u32 4788187, %v6109
        %v6111 = vand.u32 2147483647, %v6110
        %v6113 = vcvt.s32.f32 %v6106
        %v6114 = vmul.f32 %v6113, %v6111
        %v6115 = vxor.u32 %v6114, 2147483648
        %v6116 = vsel %vm6033, %v6115, %v6114
        %v6117 = vsub.s32 4, %v6093
        %v6118 = vsel %vm6033, %v6117, %v6093
        %v6119 = vsel %vm6032, %v1509, %v6116
        %v6120 = vsel %vm6032, 0, %v6118
        %v6121 = vcosq.f32.pop %v6119
        %v6122 = vsinq.f32.pop %v6119
        %vm6123 = vweird.f32 %v1509
        %v6124 = vadd.s32 %v6120, 3
        %v6125 = vand.u32 %v6124, 3
        %vm6126 = vcmp.lt.s32.totalorder %v6125, 2
        %vm6127 = vcmp.eq.s32.totalorder %v6125, 0
        %v6128 = vxor.u32 %v6122, 2147483648
        %v6129 = vsel %vm6127, %v6121, %v6128
        %vm6130 = vcmp.eq.s32.totalorder %v6125, 2
        %v6131 = vxor.u32 %v6121, 2147483648
        %v6132 = vsel %vm6130, %v6131, %v6122
        %v6133 = vsel %vm6126, %v6129, %v6132
        %v6134 = vsel %vm6123, nan, %v6133
        %v6135 = vand.u32 2147483647, %v1510
        %vm6136 = vcmp.le.f32.partialorder %v6135, 0.7853982
        %vm6137 = vcmp.lt.s32.totalorder %v1510, 0
        %v6138 = vand.u32 %v1510, 2139095040
        %v6139 = vshrl.u32 %v6138, 23
        %v6140 = vsub.s32 %v6139, 127
        %v6141 = vand.u32 2147483647, %v1510
        %v6142 = vand.u32 %v6141, 8388607
        %v6143 = vor.u32 %v6142, 8388608
        %v6144 = vsub.s32 0, %v6143
        %v6145 = vadd.s32 %v6140, 1
        %vm6146 = vcmp.gt.s32.totalorder %v6145, 0
        %v6147 = vsel %vm6146, %v6145, 0
        %v6148 = vshrl.u32 %v6147, 5
        %v6149 = vand.u32 %v6147, 31
        %v6150 = vsub.s32 32, %v6149
        %v6151 = vshrl.u32 683565275, %v6150
        %v6152 = vshll.u32 683565275, %v6149
        %v6153 = vshrl.u32 2475754826, %v6150
        %v6154 = vor.u32 %v6152, %v6153
        %v6155 = vshll.u32 2475754826, %v6149
        %v6156 = vshrl.u32 2131351028, %v6150
        %v6157 = vor.u32 %v6155, %v6156
        %v6158 = vshll.u32 2131351028, %v6149
        %v6159 = vshrl.u32 2102212464, %v6150
        %v6160 = vor.u32 %v6158, %v6159
        %v6161 = vshll.u32 2102212464, %v6149
        %v6162 = vshrl.u32 920167782, %v6150
        %v6163 = vor.u32 %v6161, %v6162
        %v6164 = vshll.u32 920167782, %v6149
        %v6165 = vshrl.u32 1326507024, %v6150
        %v6166 = vor.u32 %v6164, %v6165
        %vm6167 = vcmp.lt.s32.totalorder %v6148, 1
        %vm6168 = vcmp.lt.s32.totalorder %v6148, 2
        %vm6169 = vcmp.lt.s32.totalorder %v6148, 3
        %vm6170 = vcmp.lt.s32.totalorder %v6148, 4
        %v6171 = vsel %vm6167, %v6151, %v6154
        %v6172 = vsel %vm6170, %v6160, 2102212464
        %v6173 = vsel %vm6169, %v6157, %v6172
        %v6174 = vsel %vm6168, %v6171, %v6173
        %v6175 = vsel %vm6167, %v6154, %v6157
        %v6176 = vsel %vm6170, %v6163, 920167782
        %v6177 = vsel %vm6169, %v6160, %v6176
        %v6178 = vsel %vm6168, %v6175, %v6177
        %v6179 = vsel %vm6167, %v6157, %v6160
        %v6180 = vsel %vm6170, %v6166, 1326507024
        %v6181 = vsel %vm6169, %v6163, %v6180
        %v6182 = vsel %vm6168, %v6179, %v6181
        %v6183 = vshll.u32 %v6143, 8
        %v6184 = vmul.u32.u64.compose %v6183, %v6182
        %v6185 = vextract.low.u32 %v6184
        %v6186 = vextract.high.u32 %v6184
        %v6187 = vmul.u32.u64.compose %v6183, %v6178
        %v6188 = vextract.low.u32 %v6187
        %v6189 = vextract.high.u32 %v6187
        %v6190 = vmul.u32 %v6183, %v6174
        %v6191 = vadd.s32 %v6186, %v6188
        %vm6192 = vc.u32 %v6186, %v6188
        %v6193 = vadd.s32 %v6189, 1
        %v6194 = vsel %vm6192, %v6193, %v6189
        %v6195 = vadd.s32 %v6190, %v6194
        %v6196 = vadd.s32 %v6195, 536870912
        %v6197 = vshrl.u32 %v6196, 30
        %v6198 = vshll.u32 %v6197, 30
        %v6199 = vsub.s32 %v6195, %v6198
        %vm6200 = vcmp.lt.s32.totalorder %v6199, 0
        %v6201 = vsub.s32 0, %v6199
        %v6202 = vsel %vm6200, %v6201, %v6199
        %v6203 = vclz %v6202
        %v6204 = vsub.s32 %v6203, 2
        %vm6205 = vcmp.gt.s32.totalorder 0, %v6204
        %v6206 = vsel %vm6205, 0, %v6204
        %v6207 = vsub.s32 32, %v6206
        %v6208 = vshll.u32 %v6199, %v6206
        %v6209 = vshrl.u32 %v6191, %v6207
        %v6210 = vor.u32 %v6208, %v6209
        %v6211 = vsub.s32 4294967266, %v6206
        %v6212 = vadd.s32 %v6211, 127
        %v6213 = vshll.u32 %v6212, 23
        %v6214 = vor.u32 4788187, %v6213
        %v6215 = vand.u32 2147483647, %v6214
        %v6217 = vcvt.s32.f32 %v6210
        %v6218 = vmul.f32 %v6217, %v6215
        %v6219 = vxor.u32 %v6218, 2147483648
        %v6220 = vsel %vm6137, %v6219, %v6218
        %v6221 = vsub.s32 4, %v6197
        %v6222 = vsel %vm6137, %v6221, %v6197
        %v6223 = vsel %vm6136, %v1510, %v6220
        %v6224 = vsel %vm6136, 0, %v6222
        %v6225 = vcosq.f32.pop %v6223
        %v6226 = vsinq.f32.pop %v6223
        %vm6227 = vweird.f32 %v1510
        %v6228 = vadd.s32 %v6224, 3
        %v6229 = vand.u32 %v6228, 3
        %vm6230 = vcmp.lt.s32.totalorder %v6229, 2
        %vm6231 = vcmp.eq.s32.totalorder %v6229, 0
        %v6232 = vxor.u32 %v6226, 2147483648
        %v6233 = vsel %vm6231, %v6225, %v6232
        %vm6234 = vcmp.eq.s32.totalorder %v6229, 2
        %v6235 = vxor.u32 %v6225, 2147483648
        %v6236 = vsel %vm6234, %v6235, %v6226
        %v6237 = vsel %vm6230, %v6233, %v6236
        %v6238 = vsel %vm6227, nan, %v6237
        %v6239 = vand.u32 2147483647, %v1511
        %vm6240 = vcmp.le.f32.partialorder %v6239, 0.7853982
        %vm6241 = vcmp.lt.s32.totalorder %v1511, 0
        %v6242 = vand.u32 %v1511, 2139095040
        %v6243 = vshrl.u32 %v6242, 23
        %v6244 = vsub.s32 %v6243, 127
        %v6245 = vand.u32 2147483647, %v1511
        %v6246 = vand.u32 %v6245, 8388607
        %v6247 = vor.u32 %v6246, 8388608
        %v6248 = vsub.s32 0, %v6247
        %v6249 = vadd.s32 %v6244, 1
        %vm6250 = vcmp.gt.s32.totalorder %v6249, 0
        %v6251 = vsel %vm6250, %v6249, 0
        %v6252 = vshrl.u32 %v6251, 5
        %v6253 = vand.u32 %v6251, 31
        %v6254 = vsub.s32 32, %v6253
        %v6255 = vshrl.u32 683565275, %v6254
        %v6256 = vshll.u32 683565275, %v6253
        %v6257 = vshrl.u32 2475754826, %v6254
        %v6258 = vor.u32 %v6256, %v6257
        %v6259 = vshll.u32 2475754826, %v6253
        %v6260 = vshrl.u32 2131351028, %v6254
        %v6261 = vor.u32 %v6259, %v6260
        %v6262 = vshll.u32 2131351028, %v6253
        %v6263 = vshrl.u32 2102212464, %v6254
        %v6264 = vor.u32 %v6262, %v6263
        %v6265 = vshll.u32 2102212464, %v6253
        %v6266 = vshrl.u32 920167782, %v6254
        %v6267 = vor.u32 %v6265, %v6266
        %v6268 = vshll.u32 920167782, %v6253
        %v6269 = vshrl.u32 1326507024, %v6254
        %v6270 = vor.u32 %v6268, %v6269
        %vm6271 = vcmp.lt.s32.totalorder %v6252, 1
        %vm6272 = vcmp.lt.s32.totalorder %v6252, 2
        %vm6273 = vcmp.lt.s32.totalorder %v6252, 3
        %vm6274 = vcmp.lt.s32.totalorder %v6252, 4
        %v6275 = vsel %vm6271, %v6255, %v6258
        %v6276 = vsel %vm6274, %v6264, 2102212464
        %v6277 = vsel %vm6273, %v6261, %v6276
        %v6278 = vsel %vm6272, %v6275, %v6277
        %v6279 = vsel %vm6271, %v6258, %v6261
        %v6280 = vsel %vm6274, %v6267, 920167782
        %v6281 = vsel %vm6273, %v6264, %v6280
        %v6282 = vsel %vm6272, %v6279, %v6281
        %v6283 = vsel %vm6271, %v6261, %v6264
        %v6284 = vsel %vm6274, %v6270, 1326507024
        %v6285 = vsel %vm6273, %v6267, %v6284
        %v6286 = vsel %vm6272, %v6283, %v6285
        %v6287 = vshll.u32 %v6247, 8
        %v6288 = vmul.u32.u64.compose %v6287, %v6286
        %v6289 = vextract.low.u32 %v6288
        %v6290 = vextract.high.u32 %v6288
        %v6291 = vmul.u32.u64.compose %v6287, %v6282
        %v6292 = vextract.low.u32 %v6291
        %v6293 = vextract.high.u32 %v6291
        %v6294 = vmul.u32 %v6287, %v6278
        %v6295 = vadd.s32 %v6290, %v6292
        %vm6296 = vc.u32 %v6290, %v6292
        %v6297 = vadd.s32 %v6293, 1
        %v6298 = vsel %vm6296, %v6297, %v6293
        %v6299 = vadd.s32 %v6294, %v6298
        %v6300 = vadd.s32 %v6299, 536870912
        %v6301 = vshrl.u32 %v6300, 30
        %v6302 = vshll.u32 %v6301, 30
        %v6303 = vsub.s32 %v6299, %v6302
        %vm6304 = vcmp.lt.s32.totalorder %v6303, 0
        %v6305 = vsub.s32 0, %v6303
        %v6306 = vsel %vm6304, %v6305, %v6303
        %v6307 = vclz %v6306
        %v6308 = vsub.s32 %v6307, 2
        %vm6309 = vcmp.gt.s32.totalorder 0, %v6308
        %v6310 = vsel %vm6309, 0, %v6308
        %v6311 = vsub.s32 32, %v6310
        %v6312 = vshll.u32 %v6303, %v6310
        %v6313 = vshrl.u32 %v6295, %v6311
        %v6314 = vor.u32 %v6312, %v6313
        %v6315 = vsub.s32 4294967266, %v6310
        %v6316 = vadd.s32 %v6315, 127
        %v6317 = vshll.u32 %v6316, 23
        %v6318 = vor.u32 4788187, %v6317
        %v6319 = vand.u32 2147483647, %v6318
        %v6321 = vcvt.s32.f32 %v6314
        %v6322 = vmul.f32 %v6321, %v6319
        %v6323 = vxor.u32 %v6322, 2147483648
        %v6324 = vsel %vm6241, %v6323, %v6322
        %v6325 = vsub.s32 4, %v6301
        %v6326 = vsel %vm6241, %v6325, %v6301
        %v6327 = vsel %vm6240, %v1511, %v6324
        %v6328 = vsel %vm6240, 0, %v6326
        %v6329 = vcosq.f32.pop %v6327
        %v6330 = vsinq.f32.pop %v6327
        %vm6331 = vweird.f32 %v1511
        %v6332 = vadd.s32 %v6328, 3
        %v6333 = vand.u32 %v6332, 3
        %vm6334 = vcmp.lt.s32.totalorder %v6333, 2
        %vm6335 = vcmp.eq.s32.totalorder %v6333, 0
        %v6336 = vxor.u32 %v6330, 2147483648
        %v6337 = vsel %vm6335, %v6329, %v6336
        %vm6338 = vcmp.eq.s32.totalorder %v6333, 2
        %v6339 = vxor.u32 %v6329, 2147483648
        %v6340 = vsel %vm6338, %v6339, %v6330
        %v6341 = vsel %vm6334, %v6337, %v6340
        %v6342 = vsel %vm6331, nan, %v6341
        %v6343 = vand.u32 2147483647, %v1512
        %vm6344 = vcmp.le.f32.partialorder %v6343, 0.7853982
        %vm6345 = vcmp.lt.s32.totalorder %v1512, 0
        %v6346 = vand.u32 %v1512, 2139095040
        %v6347 = vshrl.u32 %v6346, 23
        %v6348 = vsub.s32 %v6347, 127
        %v6349 = vand.u32 2147483647, %v1512
        %v6350 = vand.u32 %v6349, 8388607
        %v6351 = vor.u32 %v6350, 8388608
        %v6352 = vsub.s32 0, %v6351
        %v6353 = vadd.s32 %v6348, 1
        %vm6354 = vcmp.gt.s32.totalorder %v6353, 0
        %v6355 = vsel %vm6354, %v6353, 0
        %v6356 = vshrl.u32 %v6355, 5
        %v6357 = vand.u32 %v6355, 31
        %v6358 = vsub.s32 32, %v6357
        %v6359 = vshrl.u32 683565275, %v6358
        %v6360 = vshll.u32 683565275, %v6357
        %v6361 = vshrl.u32 2475754826, %v6358
        %v6362 = vor.u32 %v6360, %v6361
        %v6363 = vshll.u32 2475754826, %v6357
        %v6364 = vshrl.u32 2131351028, %v6358
        %v6365 = vor.u32 %v6363, %v6364
        %v6366 = vshll.u32 2131351028, %v6357
        %v6367 = vshrl.u32 2102212464, %v6358
        %v6368 = vor.u32 %v6366, %v6367
        %v6369 = vshll.u32 2102212464, %v6357
        %v6370 = vshrl.u32 920167782, %v6358
        %v6371 = vor.u32 %v6369, %v6370
        %v6372 = vshll.u32 920167782, %v6357
        %v6373 = vshrl.u32 1326507024, %v6358
        %v6374 = vor.u32 %v6372, %v6373
        %vm6375 = vcmp.lt.s32.totalorder %v6356, 1
        %vm6376 = vcmp.lt.s32.totalorder %v6356, 2
        %vm6377 = vcmp.lt.s32.totalorder %v6356, 3
        %vm6378 = vcmp.lt.s32.totalorder %v6356, 4
        %v6379 = vsel %vm6375, %v6359, %v6362
        %v6380 = vsel %vm6378, %v6368, 2102212464
        %v6381 = vsel %vm6377, %v6365, %v6380
        %v6382 = vsel %vm6376, %v6379, %v6381
        %v6383 = vsel %vm6375, %v6362, %v6365
        %v6384 = vsel %vm6378, %v6371, 920167782
        %v6385 = vsel %vm6377, %v6368, %v6384
        %v6386 = vsel %vm6376, %v6383, %v6385
        %v6387 = vsel %vm6375, %v6365, %v6368
        %v6388 = vsel %vm6378, %v6374, 1326507024
        %v6389 = vsel %vm6377, %v6371, %v6388
        %v6390 = vsel %vm6376, %v6387, %v6389
        %v6391 = vshll.u32 %v6351, 8
        %v6392 = vmul.u32.u64.compose %v6391, %v6390
        %v6393 = vextract.low.u32 %v6392
        %v6394 = vextract.high.u32 %v6392
        %v6395 = vmul.u32.u64.compose %v6391, %v6386
        %v6396 = vextract.low.u32 %v6395
        %v6397 = vextract.high.u32 %v6395
        %v6398 = vmul.u32 %v6391, %v6382
        %v6399 = vadd.s32 %v6394, %v6396
        %vm6400 = vc.u32 %v6394, %v6396
        %v6401 = vadd.s32 %v6397, 1
        %v6402 = vsel %vm6400, %v6401, %v6397
        %v6403 = vadd.s32 %v6398, %v6402
        %v6404 = vadd.s32 %v6403, 536870912
        %v6405 = vshrl.u32 %v6404, 30
        %v6406 = vshll.u32 %v6405, 30
        %v6407 = vsub.s32 %v6403, %v6406
        %vm6408 = vcmp.lt.s32.totalorder %v6407, 0
        %v6409 = vsub.s32 0, %v6407
        %v6410 = vsel %vm6408, %v6409, %v6407
        %v6411 = vclz %v6410
        %v6412 = vsub.s32 %v6411, 2
        %vm6413 = vcmp.gt.s32.totalorder 0, %v6412
        %v6414 = vsel %vm6413, 0, %v6412
        %v6415 = vsub.s32 32, %v6414
        %v6416 = vshll.u32 %v6407, %v6414
        %v6417 = vshrl.u32 %v6399, %v6415
        %v6418 = vor.u32 %v6416, %v6417
        %v6419 = vsub.s32 4294967266, %v6414
        %v6420 = vadd.s32 %v6419, 127
        %v6421 = vshll.u32 %v6420, 23
        %v6422 = vor.u32 4788187, %v6421
        %v6423 = vand.u32 2147483647, %v6422
        %v6425 = vcvt.s32.f32 %v6418
        %v6426 = vmul.f32 %v6425, %v6423
        %v6427 = vxor.u32 %v6426, 2147483648
        %v6428 = vsel %vm6345, %v6427, %v6426
        %v6429 = vsub.s32 4, %v6405
        %v6430 = vsel %vm6345, %v6429, %v6405
        %v6431 = vsel %vm6344, %v1512, %v6428
        %v6432 = vsel %vm6344, 0, %v6430
        %v6433 = vcosq.f32.pop %v6431
        %v6434 = vsinq.f32.pop %v6431
        %vm6435 = vweird.f32 %v1512
        %v6436 = vadd.s32 %v6432, 3
        %v6437 = vand.u32 %v6436, 3
        %vm6438 = vcmp.lt.s32.totalorder %v6437, 2
        %vm6439 = vcmp.eq.s32.totalorder %v6437, 0
        %v6440 = vxor.u32 %v6434, 2147483648
        %v6441 = vsel %vm6439, %v6433, %v6440
        %vm6442 = vcmp.eq.s32.totalorder %v6437, 2
        %v6443 = vxor.u32 %v6433, 2147483648
        %v6444 = vsel %vm6442, %v6443, %v6434
        %v6445 = vsel %vm6438, %v6441, %v6444
        %v6446 = vsel %vm6435, nan, %v6445
        %v6447 = vand.u32 2147483647, %v1513
        %vm6448 = vcmp.le.f32.partialorder %v6447, 0.7853982
        %vm6449 = vcmp.lt.s32.totalorder %v1513, 0
        %v6450 = vand.u32 %v1513, 2139095040
        %v6451 = vshrl.u32 %v6450, 23
        %v6452 = vsub.s32 %v6451, 127
        %v6453 = vand.u32 2147483647, %v1513
        %v6454 = vand.u32 %v6453, 8388607
        %v6455 = vor.u32 %v6454, 8388608
        %v6456 = vsub.s32 0, %v6455
        %v6457 = vadd.s32 %v6452, 1
        %vm6458 = vcmp.gt.s32.totalorder %v6457, 0
        %v6459 = vsel %vm6458, %v6457, 0
        %v6460 = vshrl.u32 %v6459, 5
        %v6461 = vand.u32 %v6459, 31
        %v6462 = vsub.s32 32, %v6461
        %v6463 = vshrl.u32 683565275, %v6462
        %v6464 = vshll.u32 683565275, %v6461
        %v6465 = vshrl.u32 2475754826, %v6462
        %v6466 = vor.u32 %v6464, %v6465
        %v6467 = vshll.u32 2475754826, %v6461
        %v6468 = vshrl.u32 2131351028, %v6462
        %v6469 = vor.u32 %v6467, %v6468
        %v6470 = vshll.u32 2131351028, %v6461
        %v6471 = vshrl.u32 2102212464, %v6462
        %v6472 = vor.u32 %v6470, %v6471
        %v6473 = vshll.u32 2102212464, %v6461
        %v6474 = vshrl.u32 920167782, %v6462
        %v6475 = vor.u32 %v6473, %v6474
        %v6476 = vshll.u32 920167782, %v6461
        %v6477 = vshrl.u32 1326507024, %v6462
        %v6478 = vor.u32 %v6476, %v6477
        %vm6479 = vcmp.lt.s32.totalorder %v6460, 1
        %vm6480 = vcmp.lt.s32.totalorder %v6460, 2
        %vm6481 = vcmp.lt.s32.totalorder %v6460, 3
        %vm6482 = vcmp.lt.s32.totalorder %v6460, 4
        %v6483 = vsel %vm6479, %v6463, %v6466
        %v6484 = vsel %vm6482, %v6472, 2102212464
        %v6485 = vsel %vm6481, %v6469, %v6484
        %v6486 = vsel %vm6480, %v6483, %v6485
        %v6487 = vsel %vm6479, %v6466, %v6469
        %v6488 = vsel %vm6482, %v6475, 920167782
        %v6489 = vsel %vm6481, %v6472, %v6488
        %v6490 = vsel %vm6480, %v6487, %v6489
        %v6491 = vsel %vm6479, %v6469, %v6472
        %v6492 = vsel %vm6482, %v6478, 1326507024
        %v6493 = vsel %vm6481, %v6475, %v6492
        %v6494 = vsel %vm6480, %v6491, %v6493
        %v6495 = vshll.u32 %v6455, 8
        %v6496 = vmul.u32.u64.compose %v6495, %v6494
        %v6497 = vextract.low.u32 %v6496
        %v6498 = vextract.high.u32 %v6496
        %v6499 = vmul.u32.u64.compose %v6495, %v6490
        %v6500 = vextract.low.u32 %v6499
        %v6501 = vextract.high.u32 %v6499
        %v6502 = vmul.u32 %v6495, %v6486
        %v6503 = vadd.s32 %v6498, %v6500
        %vm6504 = vc.u32 %v6498, %v6500
        %v6505 = vadd.s32 %v6501, 1
        %v6506 = vsel %vm6504, %v6505, %v6501
        %v6507 = vadd.s32 %v6502, %v6506
        %v6508 = vadd.s32 %v6507, 536870912
        %v6509 = vshrl.u32 %v6508, 30
        %v6510 = vshll.u32 %v6509, 30
        %v6511 = vsub.s32 %v6507, %v6510
        %vm6512 = vcmp.lt.s32.totalorder %v6511, 0
        %v6513 = vsub.s32 0, %v6511
        %v6514 = vsel %vm6512, %v6513, %v6511
        %v6515 = vclz %v6514
        %v6516 = vsub.s32 %v6515, 2
        %vm6517 = vcmp.gt.s32.totalorder 0, %v6516
        %v6518 = vsel %vm6517, 0, %v6516
        %v6519 = vsub.s32 32, %v6518
        %v6520 = vshll.u32 %v6511, %v6518
        %v6521 = vshrl.u32 %v6503, %v6519
        %v6522 = vor.u32 %v6520, %v6521
        %v6523 = vsub.s32 4294967266, %v6518
        %v6524 = vadd.s32 %v6523, 127
        %v6525 = vshll.u32 %v6524, 23
        %v6526 = vor.u32 4788187, %v6525
        %v6527 = vand.u32 2147483647, %v6526
        %v6529 = vcvt.s32.f32 %v6522
        %v6530 = vmul.f32 %v6529, %v6527
        %v6531 = vxor.u32 %v6530, 2147483648
        %v6532 = vsel %vm6449, %v6531, %v6530
        %v6533 = vsub.s32 4, %v6509
        %v6534 = vsel %vm6449, %v6533, %v6509
        %v6535 = vsel %vm6448, %v1513, %v6532
        %v6536 = vsel %vm6448, 0, %v6534
        %v6537 = vcosq.f32.pop %v6535
        %v6538 = vsinq.f32.pop %v6535
        %vm6539 = vweird.f32 %v1513
        %v6540 = vadd.s32 %v6536, 3
        %v6541 = vand.u32 %v6540, 3
        %vm6542 = vcmp.lt.s32.totalorder %v6541, 2
        %vm6543 = vcmp.eq.s32.totalorder %v6541, 0
        %v6544 = vxor.u32 %v6538, 2147483648
        %v6545 = vsel %vm6543, %v6537, %v6544
        %vm6546 = vcmp.eq.s32.totalorder %v6541, 2
        %v6547 = vxor.u32 %v6537, 2147483648
        %v6548 = vsel %vm6546, %v6547, %v6538
        %v6549 = vsel %vm6542, %v6545, %v6548
        %v6550 = vsel %vm6539, nan, %v6549
        %v6551 = vand.u32 2147483647, %v1514
        %vm6552 = vcmp.le.f32.partialorder %v6551, 0.7853982
        %vm6553 = vcmp.lt.s32.totalorder %v1514, 0
        %v6554 = vand.u32 %v1514, 2139095040
        %v6555 = vshrl.u32 %v6554, 23
        %v6556 = vsub.s32 %v6555, 127
        %v6557 = vand.u32 2147483647, %v1514
        %v6558 = vand.u32 %v6557, 8388607
        %v6559 = vor.u32 %v6558, 8388608
        %v6560 = vsub.s32 0, %v6559
        %v6561 = vadd.s32 %v6556, 1
        %vm6562 = vcmp.gt.s32.totalorder %v6561, 0
        %v6563 = vsel %vm6562, %v6561, 0
        %v6564 = vshrl.u32 %v6563, 5
        %v6565 = vand.u32 %v6563, 31
        %v6566 = vsub.s32 32, %v6565
        %v6567 = vshrl.u32 683565275, %v6566
        %v6568 = vshll.u32 683565275, %v6565
        %v6569 = vshrl.u32 2475754826, %v6566
        %v6570 = vor.u32 %v6568, %v6569
        %v6571 = vshll.u32 2475754826, %v6565
        %v6572 = vshrl.u32 2131351028, %v6566
        %v6573 = vor.u32 %v6571, %v6572
        %v6574 = vshll.u32 2131351028, %v6565
        %v6575 = vshrl.u32 2102212464, %v6566
        %v6576 = vor.u32 %v6574, %v6575
        %v6577 = vshll.u32 2102212464, %v6565
        %v6578 = vshrl.u32 920167782, %v6566
        %v6579 = vor.u32 %v6577, %v6578
        %v6580 = vshll.u32 920167782, %v6565
        %v6581 = vshrl.u32 1326507024, %v6566
        %v6582 = vor.u32 %v6580, %v6581
        %vm6583 = vcmp.lt.s32.totalorder %v6564, 1
        %vm6584 = vcmp.lt.s32.totalorder %v6564, 2
        %vm6585 = vcmp.lt.s32.totalorder %v6564, 3
        %vm6586 = vcmp.lt.s32.totalorder %v6564, 4
        %v6587 = vsel %vm6583, %v6567, %v6570
        %v6588 = vsel %vm6586, %v6576, 2102212464
        %v6589 = vsel %vm6585, %v6573, %v6588
        %v6590 = vsel %vm6584, %v6587, %v6589
        %v6591 = vsel %vm6583, %v6570, %v6573
        %v6592 = vsel %vm6586, %v6579, 920167782
        %v6593 = vsel %vm6585, %v6576, %v6592
        %v6594 = vsel %vm6584, %v6591, %v6593
        %v6595 = vsel %vm6583, %v6573, %v6576
        %v6596 = vsel %vm6586, %v6582, 1326507024
        %v6597 = vsel %vm6585, %v6579, %v6596
        %v6598 = vsel %vm6584, %v6595, %v6597
        %v6599 = vshll.u32 %v6559, 8
        %v6600 = vmul.u32.u64.compose %v6599, %v6598
        %v6601 = vextract.low.u32 %v6600
        %v6602 = vextract.high.u32 %v6600
        %v6603 = vmul.u32.u64.compose %v6599, %v6594
        %v6604 = vextract.low.u32 %v6603
        %v6605 = vextract.high.u32 %v6603
        %v6606 = vmul.u32 %v6599, %v6590
        %v6607 = vadd.s32 %v6602, %v6604
        %vm6608 = vc.u32 %v6602, %v6604
        %v6609 = vadd.s32 %v6605, 1
        %v6610 = vsel %vm6608, %v6609, %v6605
        %v6611 = vadd.s32 %v6606, %v6610
        %v6612 = vadd.s32 %v6611, 536870912
        %v6613 = vshrl.u32 %v6612, 30
        %v6614 = vshll.u32 %v6613, 30
        %v6615 = vsub.s32 %v6611, %v6614
        %vm6616 = vcmp.lt.s32.totalorder %v6615, 0
        %v6617 = vsub.s32 0, %v6615
        %v6618 = vsel %vm6616, %v6617, %v6615
        %v6619 = vclz %v6618
        %v6620 = vsub.s32 %v6619, 2
        %vm6621 = vcmp.gt.s32.totalorder 0, %v6620
        %v6622 = vsel %vm6621, 0, %v6620
        %v6623 = vsub.s32 32, %v6622
        %v6624 = vshll.u32 %v6615, %v6622
        %v6625 = vshrl.u32 %v6607, %v6623
        %v6626 = vor.u32 %v6624, %v6625
        %v6627 = vsub.s32 4294967266, %v6622
        %v6628 = vadd.s32 %v6627, 127
        %v6629 = vshll.u32 %v6628, 23
        %v6630 = vor.u32 4788187, %v6629
        %v6631 = vand.u32 2147483647, %v6630
        %v6633 = vcvt.s32.f32 %v6626
        %v6634 = vmul.f32 %v6633, %v6631
        %v6635 = vxor.u32 %v6634, 2147483648
        %v6636 = vsel %vm6553, %v6635, %v6634
        %v6637 = vsub.s32 4, %v6613
        %v6638 = vsel %vm6553, %v6637, %v6613
        %v6639 = vsel %vm6552, %v1514, %v6636
        %v6640 = vsel %vm6552, 0, %v6638
        %v6641 = vcosq.f32.pop %v6639
        %v6642 = vsinq.f32.pop %v6639
        %vm6643 = vweird.f32 %v1514
        %v6644 = vadd.s32 %v6640, 3
        %v6645 = vand.u32 %v6644, 3
        %vm6646 = vcmp.lt.s32.totalorder %v6645, 2
        %vm6647 = vcmp.eq.s32.totalorder %v6645, 0
        %v6648 = vxor.u32 %v6642, 2147483648
        %v6649 = vsel %vm6647, %v6641, %v6648
        %vm6650 = vcmp.eq.s32.totalorder %v6645, 2
        %v6651 = vxor.u32 %v6641, 2147483648
        %v6652 = vsel %vm6650, %v6651, %v6642
        %v6653 = vsel %vm6646, %v6649, %v6652
        %v6654 = vsel %vm6643, nan, %v6653
        %v6655 = vand.u32 2147483647, %v1515
        %vm6656 = vcmp.le.f32.partialorder %v6655, 0.7853982
        %vm6657 = vcmp.lt.s32.totalorder %v1515, 0
        %v6658 = vand.u32 %v1515, 2139095040
        %v6659 = vshrl.u32 %v6658, 23
        %v6660 = vsub.s32 %v6659, 127
        %v6661 = vand.u32 2147483647, %v1515
        %v6662 = vand.u32 %v6661, 8388607
        %v6663 = vor.u32 %v6662, 8388608
        %v6664 = vsub.s32 0, %v6663
        %v6665 = vadd.s32 %v6660, 1
        %vm6666 = vcmp.gt.s32.totalorder %v6665, 0
        %v6667 = vsel %vm6666, %v6665, 0
        %v6668 = vshrl.u32 %v6667, 5
        %v6669 = vand.u32 %v6667, 31
        %v6670 = vsub.s32 32, %v6669
        %v6671 = vshrl.u32 683565275, %v6670
        %v6672 = vshll.u32 683565275, %v6669
        %v6673 = vshrl.u32 2475754826, %v6670
        %v6674 = vor.u32 %v6672, %v6673
        %v6675 = vshll.u32 2475754826, %v6669
        %v6676 = vshrl.u32 2131351028, %v6670
        %v6677 = vor.u32 %v6675, %v6676
        %v6678 = vshll.u32 2131351028, %v6669
        %v6679 = vshrl.u32 2102212464, %v6670
        %v6680 = vor.u32 %v6678, %v6679
        %v6681 = vshll.u32 2102212464, %v6669
        %v6682 = vshrl.u32 920167782, %v6670
        %v6683 = vor.u32 %v6681, %v6682
        %v6684 = vshll.u32 920167782, %v6669
        %v6685 = vshrl.u32 1326507024, %v6670
        %v6686 = vor.u32 %v6684, %v6685
        %vm6687 = vcmp.lt.s32.totalorder %v6668, 1
        %vm6688 = vcmp.lt.s32.totalorder %v6668, 2
        %vm6689 = vcmp.lt.s32.totalorder %v6668, 3
        %vm6690 = vcmp.lt.s32.totalorder %v6668, 4
        %v6691 = vsel %vm6687, %v6671, %v6674
        %v6692 = vsel %vm6690, %v6680, 2102212464
        %v6693 = vsel %vm6689, %v6677, %v6692
        %v6694 = vsel %vm6688, %v6691, %v6693
        %v6695 = vsel %vm6687, %v6674, %v6677
        %v6696 = vsel %vm6690, %v6683, 920167782
        %v6697 = vsel %vm6689, %v6680, %v6696
        %v6698 = vsel %vm6688, %v6695, %v6697
        %v6699 = vsel %vm6687, %v6677, %v6680
        %v6700 = vsel %vm6690, %v6686, 1326507024
        %v6701 = vsel %vm6689, %v6683, %v6700
        %v6702 = vsel %vm6688, %v6699, %v6701
        %v6703 = vshll.u32 %v6663, 8
        %v6704 = vmul.u32.u64.compose %v6703, %v6702
        %v6705 = vextract.low.u32 %v6704
        %v6706 = vextract.high.u32 %v6704
        %v6707 = vmul.u32.u64.compose %v6703, %v6698
        %v6708 = vextract.low.u32 %v6707
        %v6709 = vextract.high.u32 %v6707
        %v6710 = vmul.u32 %v6703, %v6694
        %v6711 = vadd.s32 %v6706, %v6708
        %vm6712 = vc.u32 %v6706, %v6708
        %v6713 = vadd.s32 %v6709, 1
        %v6714 = vsel %vm6712, %v6713, %v6709
        %v6715 = vadd.s32 %v6710, %v6714
        %v6716 = vadd.s32 %v6715, 536870912
        %v6717 = vshrl.u32 %v6716, 30
        %v6718 = vshll.u32 %v6717, 30
        %v6719 = vsub.s32 %v6715, %v6718
        %vm6720 = vcmp.lt.s32.totalorder %v6719, 0
        %v6721 = vsub.s32 0, %v6719
        %v6722 = vsel %vm6720, %v6721, %v6719
        %v6723 = vclz %v6722
        %v6724 = vsub.s32 %v6723, 2
        %vm6725 = vcmp.gt.s32.totalorder 0, %v6724
        %v6726 = vsel %vm6725, 0, %v6724
        %v6727 = vsub.s32 32, %v6726
        %v6728 = vshll.u32 %v6719, %v6726
        %v6729 = vshrl.u32 %v6711, %v6727
        %v6730 = vor.u32 %v6728, %v6729
        %v6731 = vsub.s32 4294967266, %v6726
        %v6732 = vadd.s32 %v6731, 127
        %v6733 = vshll.u32 %v6732, 23
        %v6734 = vor.u32 4788187, %v6733
        %v6735 = vand.u32 2147483647, %v6734
        %v6737 = vcvt.s32.f32 %v6730
        %v6738 = vmul.f32 %v6737, %v6735
        %v6739 = vxor.u32 %v6738, 2147483648
        %v6740 = vsel %vm6657, %v6739, %v6738
        %v6741 = vsub.s32 4, %v6717
        %v6742 = vsel %vm6657, %v6741, %v6717
        %v6743 = vsel %vm6656, %v1515, %v6740
        %v6744 = vsel %vm6656, 0, %v6742
        %v6745 = vcosq.f32.pop %v6743
        %v6746 = vsinq.f32.pop %v6743
        %vm6747 = vweird.f32 %v1515
        %v6748 = vadd.s32 %v6744, 3
        %v6749 = vand.u32 %v6748, 3
        %vm6750 = vcmp.lt.s32.totalorder %v6749, 2
        %vm6751 = vcmp.eq.s32.totalorder %v6749, 0
        %v6752 = vxor.u32 %v6746, 2147483648
        %v6753 = vsel %vm6751, %v6745, %v6752
        %vm6754 = vcmp.eq.s32.totalorder %v6749, 2
        %v6755 = vxor.u32 %v6745, 2147483648
        %v6756 = vsel %vm6754, %v6755, %v6746
        %v6757 = vsel %vm6750, %v6753, %v6756
        %v6758 = vsel %vm6747, nan, %v6757
        %v6759 = vand.u32 2147483647, %v1516
        %vm6760 = vcmp.le.f32.partialorder %v6759, 0.7853982
        %vm6761 = vcmp.lt.s32.totalorder %v1516, 0
        %v6762 = vand.u32 %v1516, 2139095040
        %v6763 = vshrl.u32 %v6762, 23
        %v6764 = vsub.s32 %v6763, 127
        %v6765 = vand.u32 2147483647, %v1516
        %v6766 = vand.u32 %v6765, 8388607
        %v6767 = vor.u32 %v6766, 8388608
        %v6768 = vsub.s32 0, %v6767
        %v6769 = vadd.s32 %v6764, 1
        %vm6770 = vcmp.gt.s32.totalorder %v6769, 0
        %v6771 = vsel %vm6770, %v6769, 0
        %v6772 = vshrl.u32 %v6771, 5
        %v6773 = vand.u32 %v6771, 31
        %v6774 = vsub.s32 32, %v6773
        %v6775 = vshrl.u32 683565275, %v6774
        %v6776 = vshll.u32 683565275, %v6773
        %v6777 = vshrl.u32 2475754826, %v6774
        %v6778 = vor.u32 %v6776, %v6777
        %v6779 = vshll.u32 2475754826, %v6773
        %v6780 = vshrl.u32 2131351028, %v6774
        %v6781 = vor.u32 %v6779, %v6780
        %v6782 = vshll.u32 2131351028, %v6773
        %v6783 = vshrl.u32 2102212464, %v6774
        %v6784 = vor.u32 %v6782, %v6783
        %v6785 = vshll.u32 2102212464, %v6773
        %v6786 = vshrl.u32 920167782, %v6774
        %v6787 = vor.u32 %v6785, %v6786
        %v6788 = vshll.u32 920167782, %v6773
        %v6789 = vshrl.u32 1326507024, %v6774
        %v6790 = vor.u32 %v6788, %v6789
        %vm6791 = vcmp.lt.s32.totalorder %v6772, 1
        %vm6792 = vcmp.lt.s32.totalorder %v6772, 2
        %vm6793 = vcmp.lt.s32.totalorder %v6772, 3
        %vm6794 = vcmp.lt.s32.totalorder %v6772, 4
        %v6795 = vsel %vm6791, %v6775, %v6778
        %v6796 = vsel %vm6794, %v6784, 2102212464
        %v6797 = vsel %vm6793, %v6781, %v6796
        %v6798 = vsel %vm6792, %v6795, %v6797
        %v6799 = vsel %vm6791, %v6778, %v6781
        %v6800 = vsel %vm6794, %v6787, 920167782
        %v6801 = vsel %vm6793, %v6784, %v6800
        %v6802 = vsel %vm6792, %v6799, %v6801
        %v6803 = vsel %vm6791, %v6781, %v6784
        %v6804 = vsel %vm6794, %v6790, 1326507024
        %v6805 = vsel %vm6793, %v6787, %v6804
        %v6806 = vsel %vm6792, %v6803, %v6805
        %v6807 = vshll.u32 %v6767, 8
        %v6808 = vmul.u32.u64.compose %v6807, %v6806
        %v6809 = vextract.low.u32 %v6808
        %v6810 = vextract.high.u32 %v6808
        %v6811 = vmul.u32.u64.compose %v6807, %v6802
        %v6812 = vextract.low.u32 %v6811
        %v6813 = vextract.high.u32 %v6811
        %v6814 = vmul.u32 %v6807, %v6798
        %v6815 = vadd.s32 %v6810, %v6812
        %vm6816 = vc.u32 %v6810, %v6812
        %v6817 = vadd.s32 %v6813, 1
        %v6818 = vsel %vm6816, %v6817, %v6813
        %v6819 = vadd.s32 %v6814, %v6818
        %v6820 = vadd.s32 %v6819, 536870912
        %v6821 = vshrl.u32 %v6820, 30
        %v6822 = vshll.u32 %v6821, 30
        %v6823 = vsub.s32 %v6819, %v6822
        %vm6824 = vcmp.lt.s32.totalorder %v6823, 0
        %v6825 = vsub.s32 0, %v6823
        %v6826 = vsel %vm6824, %v6825, %v6823
        %v6827 = vclz %v6826
        %v6828 = vsub.s32 %v6827, 2
        %vm6829 = vcmp.gt.s32.totalorder 0, %v6828
        %v6830 = vsel %vm6829, 0, %v6828
        %v6831 = vsub.s32 32, %v6830
        %v6832 = vshll.u32 %v6823, %v6830
        %v6833 = vshrl.u32 %v6815, %v6831
        %v6834 = vor.u32 %v6832, %v6833
        %v6835 = vsub.s32 4294967266, %v6830
        %v6836 = vadd.s32 %v6835, 127
        %v6837 = vshll.u32 %v6836, 23
        %v6838 = vor.u32 4788187, %v6837
        %v6839 = vand.u32 2147483647, %v6838
        %v6841 = vcvt.s32.f32 %v6834
        %v6842 = vmul.f32 %v6841, %v6839
        %v6843 = vxor.u32 %v6842, 2147483648
        %v6844 = vsel %vm6761, %v6843, %v6842
        %v6845 = vsub.s32 4, %v6821
        %v6846 = vsel %vm6761, %v6845, %v6821
        %v6847 = vsel %vm6760, %v1516, %v6844
        %v6848 = vsel %vm6760, 0, %v6846
        %v6849 = vcosq.f32.pop %v6847
        %v6850 = vsinq.f32.pop %v6847
        %vm6851 = vweird.f32 %v1516
        %v6852 = vadd.s32 %v6848, 3
        %v6853 = vand.u32 %v6852, 3
        %vm6854 = vcmp.lt.s32.totalorder %v6853, 2
        %vm6855 = vcmp.eq.s32.totalorder %v6853, 0
        %v6856 = vxor.u32 %v6850, 2147483648
        %v6857 = vsel %vm6855, %v6849, %v6856
        %vm6858 = vcmp.eq.s32.totalorder %v6853, 2
        %v6859 = vxor.u32 %v6849, 2147483648
        %v6860 = vsel %vm6858, %v6859, %v6850
        %v6861 = vsel %vm6854, %v6857, %v6860
        %v6862 = vsel %vm6851, nan, %v6861
        %v6863 = vand.u32 2147483647, %v1517
        %vm6864 = vcmp.le.f32.partialorder %v6863, 0.7853982
        %vm6865 = vcmp.lt.s32.totalorder %v1517, 0
        %v6866 = vand.u32 %v1517, 2139095040
        %v6867 = vshrl.u32 %v6866, 23
        %v6868 = vsub.s32 %v6867, 127
        %v6869 = vand.u32 2147483647, %v1517
        %v6870 = vand.u32 %v6869, 8388607
        %v6871 = vor.u32 %v6870, 8388608
        %v6872 = vsub.s32 0, %v6871
        %v6873 = vadd.s32 %v6868, 1
        %vm6874 = vcmp.gt.s32.totalorder %v6873, 0
        %v6875 = vsel %vm6874, %v6873, 0
        %v6876 = vshrl.u32 %v6875, 5
        %v6877 = vand.u32 %v6875, 31
        %v6878 = vsub.s32 32, %v6877
        %v6879 = vshrl.u32 683565275, %v6878
        %v6880 = vshll.u32 683565275, %v6877
        %v6881 = vshrl.u32 2475754826, %v6878
        %v6882 = vor.u32 %v6880, %v6881
        %v6883 = vshll.u32 2475754826, %v6877
        %v6884 = vshrl.u32 2131351028, %v6878
        %v6885 = vor.u32 %v6883, %v6884
        %v6886 = vshll.u32 2131351028, %v6877
        %v6887 = vshrl.u32 2102212464, %v6878
        %v6888 = vor.u32 %v6886, %v6887
        %v6889 = vshll.u32 2102212464, %v6877
        %v6890 = vshrl.u32 920167782, %v6878
        %v6891 = vor.u32 %v6889, %v6890
        %v6892 = vshll.u32 920167782, %v6877
        %v6893 = vshrl.u32 1326507024, %v6878
        %v6894 = vor.u32 %v6892, %v6893
        %vm6895 = vcmp.lt.s32.totalorder %v6876, 1
        %vm6896 = vcmp.lt.s32.totalorder %v6876, 2
        %vm6897 = vcmp.lt.s32.totalorder %v6876, 3
        %vm6898 = vcmp.lt.s32.totalorder %v6876, 4
        %v6899 = vsel %vm6895, %v6879, %v6882
        %v6900 = vsel %vm6898, %v6888, 2102212464
        %v6901 = vsel %vm6897, %v6885, %v6900
        %v6902 = vsel %vm6896, %v6899, %v6901
        %v6903 = vsel %vm6895, %v6882, %v6885
        %v6904 = vsel %vm6898, %v6891, 920167782
        %v6905 = vsel %vm6897, %v6888, %v6904
        %v6906 = vsel %vm6896, %v6903, %v6905
        %v6907 = vsel %vm6895, %v6885, %v6888
        %v6908 = vsel %vm6898, %v6894, 1326507024
        %v6909 = vsel %vm6897, %v6891, %v6908
        %v6910 = vsel %vm6896, %v6907, %v6909
        %v6911 = vshll.u32 %v6871, 8
        %v6912 = vmul.u32.u64.compose %v6911, %v6910
        %v6913 = vextract.low.u32 %v6912
        %v6914 = vextract.high.u32 %v6912
        %v6915 = vmul.u32.u64.compose %v6911, %v6906
        %v6916 = vextract.low.u32 %v6915
        %v6917 = vextract.high.u32 %v6915
        %v6918 = vmul.u32 %v6911, %v6902
        %v6919 = vadd.s32 %v6914, %v6916
        %vm6920 = vc.u32 %v6914, %v6916
        %v6921 = vadd.s32 %v6917, 1
        %v6922 = vsel %vm6920, %v6921, %v6917
        %v6923 = vadd.s32 %v6918, %v6922
        %v6924 = vadd.s32 %v6923, 536870912
        %v6925 = vshrl.u32 %v6924, 30
        %v6926 = vshll.u32 %v6925, 30
        %v6927 = vsub.s32 %v6923, %v6926
        %vm6928 = vcmp.lt.s32.totalorder %v6927, 0
        %v6929 = vsub.s32 0, %v6927
        %v6930 = vsel %vm6928, %v6929, %v6927
        %v6931 = vclz %v6930
        %v6932 = vsub.s32 %v6931, 2
        %vm6933 = vcmp.gt.s32.totalorder 0, %v6932
        %v6934 = vsel %vm6933, 0, %v6932
        %v6935 = vsub.s32 32, %v6934
        %v6936 = vshll.u32 %v6927, %v6934
        %v6937 = vshrl.u32 %v6919, %v6935
        %v6938 = vor.u32 %v6936, %v6937
        %v6939 = vsub.s32 4294967266, %v6934
        %v6940 = vadd.s32 %v6939, 127
        %v6941 = vshll.u32 %v6940, 23
        %v6942 = vor.u32 4788187, %v6941
        %v6943 = vand.u32 2147483647, %v6942
        %v6945 = vcvt.s32.f32 %v6938
        %v6946 = vmul.f32 %v6945, %v6943
        %v6947 = vxor.u32 %v6946, 2147483648
        %v6948 = vsel %vm6865, %v6947, %v6946
        %v6949 = vsub.s32 4, %v6925
        %v6950 = vsel %vm6865, %v6949, %v6925
        %v6951 = vsel %vm6864, %v1517, %v6948
        %v6952 = vsel %vm6864, 0, %v6950
        %v6953 = vcosq.f32.pop %v6951
        %v6954 = vsinq.f32.pop %v6951
        %vm6955 = vweird.f32 %v1517
        %v6956 = vadd.s32 %v6952, 3
        %v6957 = vand.u32 %v6956, 3
        %vm6958 = vcmp.lt.s32.totalorder %v6957, 2
        %vm6959 = vcmp.eq.s32.totalorder %v6957, 0
        %v6960 = vxor.u32 %v6954, 2147483648
        %v6961 = vsel %vm6959, %v6953, %v6960
        %vm6962 = vcmp.eq.s32.totalorder %v6957, 2
        %v6963 = vxor.u32 %v6953, 2147483648
        %v6964 = vsel %vm6962, %v6963, %v6954
        %v6965 = vsel %vm6958, %v6961, %v6964
        %v6966 = vsel %vm6955, nan, %v6965
        %v6967 = vand.u32 2147483647, %v1518
        %vm6968 = vcmp.le.f32.partialorder %v6967, 0.7853982
        %vm6969 = vcmp.lt.s32.totalorder %v1518, 0
        %v6970 = vand.u32 %v1518, 2139095040
        %v6971 = vshrl.u32 %v6970, 23
        %v6972 = vsub.s32 %v6971, 127
        %v6973 = vand.u32 2147483647, %v1518
        %v6974 = vand.u32 %v6973, 8388607
        %v6975 = vor.u32 %v6974, 8388608
        %v6976 = vsub.s32 0, %v6975
        %v6977 = vadd.s32 %v6972, 1
        %vm6978 = vcmp.gt.s32.totalorder %v6977, 0
        %v6979 = vsel %vm6978, %v6977, 0
        %v6980 = vshrl.u32 %v6979, 5
        %v6981 = vand.u32 %v6979, 31
        %v6982 = vsub.s32 32, %v6981
        %v6983 = vshrl.u32 683565275, %v6982
        %v6984 = vshll.u32 683565275, %v6981
        %v6985 = vshrl.u32 2475754826, %v6982
        %v6986 = vor.u32 %v6984, %v6985
        %v6987 = vshll.u32 2475754826, %v6981
        %v6988 = vshrl.u32 2131351028, %v6982
        %v6989 = vor.u32 %v6987, %v6988
        %v6990 = vshll.u32 2131351028, %v6981
        %v6991 = vshrl.u32 2102212464, %v6982
        %v6992 = vor.u32 %v6990, %v6991
        %v6993 = vshll.u32 2102212464, %v6981
        %v6994 = vshrl.u32 920167782, %v6982
        %v6995 = vor.u32 %v6993, %v6994
        %v6996 = vshll.u32 920167782, %v6981
        %v6997 = vshrl.u32 1326507024, %v6982
        %v6998 = vor.u32 %v6996, %v6997
        %vm6999 = vcmp.lt.s32.totalorder %v6980, 1
        %vm7000 = vcmp.lt.s32.totalorder %v6980, 2
        %vm7001 = vcmp.lt.s32.totalorder %v6980, 3
        %vm7002 = vcmp.lt.s32.totalorder %v6980, 4
        %v7003 = vsel %vm6999, %v6983, %v6986
        %v7004 = vsel %vm7002, %v6992, 2102212464
        %v7005 = vsel %vm7001, %v6989, %v7004
        %v7006 = vsel %vm7000, %v7003, %v7005
        %v7007 = vsel %vm6999, %v6986, %v6989
        %v7008 = vsel %vm7002, %v6995, 920167782
        %v7009 = vsel %vm7001, %v6992, %v7008
        %v7010 = vsel %vm7000, %v7007, %v7009
        %v7011 = vsel %vm6999, %v6989, %v6992
        %v7012 = vsel %vm7002, %v6998, 1326507024
        %v7013 = vsel %vm7001, %v6995, %v7012
        %v7014 = vsel %vm7000, %v7011, %v7013
        %v7015 = vshll.u32 %v6975, 8
        %v7016 = vmul.u32.u64.compose %v7015, %v7014
        %v7017 = vextract.low.u32 %v7016
        %v7018 = vextract.high.u32 %v7016
        %v7019 = vmul.u32.u64.compose %v7015, %v7010
        %v7020 = vextract.low.u32 %v7019
        %v7021 = vextract.high.u32 %v7019
        %v7022 = vmul.u32 %v7015, %v7006
        %v7023 = vadd.s32 %v7018, %v7020
        %vm7024 = vc.u32 %v7018, %v7020
        %v7025 = vadd.s32 %v7021, 1
        %v7026 = vsel %vm7024, %v7025, %v7021
        %v7027 = vadd.s32 %v7022, %v7026
        %v7028 = vadd.s32 %v7027, 536870912
        %v7029 = vshrl.u32 %v7028, 30
        %v7030 = vshll.u32 %v7029, 30
        %v7031 = vsub.s32 %v7027, %v7030
        %vm7032 = vcmp.lt.s32.totalorder %v7031, 0
        %v7033 = vsub.s32 0, %v7031
        %v7034 = vsel %vm7032, %v7033, %v7031
        %v7035 = vclz %v7034
        %v7036 = vsub.s32 %v7035, 2
        %vm7037 = vcmp.gt.s32.totalorder 0, %v7036
        %v7038 = vsel %vm7037, 0, %v7036
        %v7039 = vsub.s32 32, %v7038
        %v7040 = vshll.u32 %v7031, %v7038
        %v7041 = vshrl.u32 %v7023, %v7039
        %v7042 = vor.u32 %v7040, %v7041
        %v7043 = vsub.s32 4294967266, %v7038
        %v7044 = vadd.s32 %v7043, 127
        %v7045 = vshll.u32 %v7044, 23
        %v7046 = vor.u32 4788187, %v7045
        %v7047 = vand.u32 2147483647, %v7046
        %v7049 = vcvt.s32.f32 %v7042
        %v7050 = vmul.f32 %v7049, %v7047
        %v7051 = vxor.u32 %v7050, 2147483648
        %v7052 = vsel %vm6969, %v7051, %v7050
        %v7053 = vsub.s32 4, %v7029
        %v7054 = vsel %vm6969, %v7053, %v7029
        %v7055 = vsel %vm6968, %v1518, %v7052
        %v7056 = vsel %vm6968, 0, %v7054
        %v7057 = vcosq.f32.pop %v7055
        %v7058 = vsinq.f32.pop %v7055
        %vm7059 = vweird.f32 %v1518
        %v7060 = vadd.s32 %v7056, 3
        %v7061 = vand.u32 %v7060, 3
        %vm7062 = vcmp.lt.s32.totalorder %v7061, 2
        %vm7063 = vcmp.eq.s32.totalorder %v7061, 0
        %v7064 = vxor.u32 %v7058, 2147483648
        %v7065 = vsel %vm7063, %v7057, %v7064
        %vm7066 = vcmp.eq.s32.totalorder %v7061, 2
        %v7067 = vxor.u32 %v7057, 2147483648
        %v7068 = vsel %vm7066, %v7067, %v7058
        %v7069 = vsel %vm7062, %v7065, %v7068
        %v7070 = vsel %vm7059, nan, %v7069
        %v7071 = vand.u32 2147483647, %v1519
        %vm7072 = vcmp.le.f32.partialorder %v7071, 0.7853982
        %vm7073 = vcmp.lt.s32.totalorder %v1519, 0
        %v7074 = vand.u32 %v1519, 2139095040
        %v7075 = vshrl.u32 %v7074, 23
        %v7076 = vsub.s32 %v7075, 127
        %v7077 = vand.u32 2147483647, %v1519
        %v7078 = vand.u32 %v7077, 8388607
        %v7079 = vor.u32 %v7078, 8388608
        %v7080 = vsub.s32 0, %v7079
        %v7081 = vadd.s32 %v7076, 1
        %vm7082 = vcmp.gt.s32.totalorder %v7081, 0
        %v7083 = vsel %vm7082, %v7081, 0
        %v7084 = vshrl.u32 %v7083, 5
        %v7085 = vand.u32 %v7083, 31
        %v7086 = vsub.s32 32, %v7085
        %v7087 = vshrl.u32 683565275, %v7086
        %v7088 = vshll.u32 683565275, %v7085
        %v7089 = vshrl.u32 2475754826, %v7086
        %v7090 = vor.u32 %v7088, %v7089
        %v7091 = vshll.u32 2475754826, %v7085
        %v7092 = vshrl.u32 2131351028, %v7086
        %v7093 = vor.u32 %v7091, %v7092
        %v7094 = vshll.u32 2131351028, %v7085
        %v7095 = vshrl.u32 2102212464, %v7086
        %v7096 = vor.u32 %v7094, %v7095
        %v7097 = vshll.u32 2102212464, %v7085
        %v7098 = vshrl.u32 920167782, %v7086
        %v7099 = vor.u32 %v7097, %v7098
        %v7100 = vshll.u32 920167782, %v7085
        %v7101 = vshrl.u32 1326507024, %v7086
        %v7102 = vor.u32 %v7100, %v7101
        %vm7103 = vcmp.lt.s32.totalorder %v7084, 1
        %vm7104 = vcmp.lt.s32.totalorder %v7084, 2
        %vm7105 = vcmp.lt.s32.totalorder %v7084, 3
        %vm7106 = vcmp.lt.s32.totalorder %v7084, 4
        %v7107 = vsel %vm7103, %v7087, %v7090
        %v7108 = vsel %vm7106, %v7096, 2102212464
        %v7109 = vsel %vm7105, %v7093, %v7108
        %v7110 = vsel %vm7104, %v7107, %v7109
        %v7111 = vsel %vm7103, %v7090, %v7093
        %v7112 = vsel %vm7106, %v7099, 920167782
        %v7113 = vsel %vm7105, %v7096, %v7112
        %v7114 = vsel %vm7104, %v7111, %v7113
        %v7115 = vsel %vm7103, %v7093, %v7096
        %v7116 = vsel %vm7106, %v7102, 1326507024
        %v7117 = vsel %vm7105, %v7099, %v7116
        %v7118 = vsel %vm7104, %v7115, %v7117
        %v7119 = vshll.u32 %v7079, 8
        %v7120 = vmul.u32.u64.compose %v7119, %v7118
        %v7121 = vextract.low.u32 %v7120
        %v7122 = vextract.high.u32 %v7120
        %v7123 = vmul.u32.u64.compose %v7119, %v7114
        %v7124 = vextract.low.u32 %v7123
        %v7125 = vextract.high.u32 %v7123
        %v7126 = vmul.u32 %v7119, %v7110
        %v7127 = vadd.s32 %v7122, %v7124
        %vm7128 = vc.u32 %v7122, %v7124
        %v7129 = vadd.s32 %v7125, 1
        %v7130 = vsel %vm7128, %v7129, %v7125
        %v7131 = vadd.s32 %v7126, %v7130
        %v7132 = vadd.s32 %v7131, 536870912
        %v7133 = vshrl.u32 %v7132, 30
        %v7134 = vshll.u32 %v7133, 30
        %v7135 = vsub.s32 %v7131, %v7134
        %vm7136 = vcmp.lt.s32.totalorder %v7135, 0
        %v7137 = vsub.s32 0, %v7135
        %v7138 = vsel %vm7136, %v7137, %v7135
        %v7139 = vclz %v7138
        %v7140 = vsub.s32 %v7139, 2
        %vm7141 = vcmp.gt.s32.totalorder 0, %v7140
        %v7142 = vsel %vm7141, 0, %v7140
        %v7143 = vsub.s32 32, %v7142
        %v7144 = vshll.u32 %v7135, %v7142
        %v7145 = vshrl.u32 %v7127, %v7143
        %v7146 = vor.u32 %v7144, %v7145
        %v7147 = vsub.s32 4294967266, %v7142
        %v7148 = vadd.s32 %v7147, 127
        %v7149 = vshll.u32 %v7148, 23
        %v7150 = vor.u32 4788187, %v7149
        %v7151 = vand.u32 2147483647, %v7150
        %v7153 = vcvt.s32.f32 %v7146
        %v7154 = vmul.f32 %v7153, %v7151
        %v7155 = vxor.u32 %v7154, 2147483648
        %v7156 = vsel %vm7073, %v7155, %v7154
        %v7157 = vsub.s32 4, %v7133
        %v7158 = vsel %vm7073, %v7157, %v7133
        %v7159 = vsel %vm7072, %v1519, %v7156
        %v7160 = vsel %vm7072, 0, %v7158
        %v7161 = vcosq.f32.pop %v7159
        %v7162 = vsinq.f32.pop %v7159
        %vm7163 = vweird.f32 %v1519
        %v7164 = vadd.s32 %v7160, 3
        %v7165 = vand.u32 %v7164, 3
        %vm7166 = vcmp.lt.s32.totalorder %v7165, 2
        %vm7167 = vcmp.eq.s32.totalorder %v7165, 0
        %v7168 = vxor.u32 %v7162, 2147483648
        %v7169 = vsel %vm7167, %v7161, %v7168
        %vm7170 = vcmp.eq.s32.totalorder %v7165, 2
        %v7171 = vxor.u32 %v7161, 2147483648
        %v7172 = vsel %vm7170, %v7171, %v7162
        %v7173 = vsel %vm7166, %v7169, %v7172
        %v7174 = vsel %vm7163, nan, %v7173
        %v7175 = vand.u32 2147483647, %v1520
        %vm7176 = vcmp.le.f32.partialorder %v7175, 0.7853982
        %vm7177 = vcmp.lt.s32.totalorder %v1520, 0
        %v7178 = vand.u32 %v1520, 2139095040
        %v7179 = vshrl.u32 %v7178, 23
        %v7180 = vsub.s32 %v7179, 127
        %v7181 = vand.u32 2147483647, %v1520
        %v7182 = vand.u32 %v7181, 8388607
        %v7183 = vor.u32 %v7182, 8388608
        %v7184 = vsub.s32 0, %v7183
        %v7185 = vadd.s32 %v7180, 1
        %vm7186 = vcmp.gt.s32.totalorder %v7185, 0
        %v7187 = vsel %vm7186, %v7185, 0
        %v7188 = vshrl.u32 %v7187, 5
        %v7189 = vand.u32 %v7187, 31
        %v7190 = vsub.s32 32, %v7189
        %v7191 = vshrl.u32 683565275, %v7190
        %v7192 = vshll.u32 683565275, %v7189
        %v7193 = vshrl.u32 2475754826, %v7190
        %v7194 = vor.u32 %v7192, %v7193
        %v7195 = vshll.u32 2475754826, %v7189
        %v7196 = vshrl.u32 2131351028, %v7190
        %v7197 = vor.u32 %v7195, %v7196
        %v7198 = vshll.u32 2131351028, %v7189
        %v7199 = vshrl.u32 2102212464, %v7190
        %v7200 = vor.u32 %v7198, %v7199
        %v7201 = vshll.u32 2102212464, %v7189
        %v7202 = vshrl.u32 920167782, %v7190
        %v7203 = vor.u32 %v7201, %v7202
        %v7204 = vshll.u32 920167782, %v7189
        %v7205 = vshrl.u32 1326507024, %v7190
        %v7206 = vor.u32 %v7204, %v7205
        %vm7207 = vcmp.lt.s32.totalorder %v7188, 1
        %vm7208 = vcmp.lt.s32.totalorder %v7188, 2
        %vm7209 = vcmp.lt.s32.totalorder %v7188, 3
        %vm7210 = vcmp.lt.s32.totalorder %v7188, 4
        %v7211 = vsel %vm7207, %v7191, %v7194
        %v7212 = vsel %vm7210, %v7200, 2102212464
        %v7213 = vsel %vm7209, %v7197, %v7212
        %v7214 = vsel %vm7208, %v7211, %v7213
        %v7215 = vsel %vm7207, %v7194, %v7197
        %v7216 = vsel %vm7210, %v7203, 920167782
        %v7217 = vsel %vm7209, %v7200, %v7216
        %v7218 = vsel %vm7208, %v7215, %v7217
        %v7219 = vsel %vm7207, %v7197, %v7200
        %v7220 = vsel %vm7210, %v7206, 1326507024
        %v7221 = vsel %vm7209, %v7203, %v7220
        %v7222 = vsel %vm7208, %v7219, %v7221
        %v7223 = vshll.u32 %v7183, 8
        %v7224 = vmul.u32.u64.compose %v7223, %v7222
        %v7225 = vextract.low.u32 %v7224
        %v7226 = vextract.high.u32 %v7224
        %v7227 = vmul.u32.u64.compose %v7223, %v7218
        %v7228 = vextract.low.u32 %v7227
        %v7229 = vextract.high.u32 %v7227
        %v7230 = vmul.u32 %v7223, %v7214
        %v7231 = vadd.s32 %v7226, %v7228
        %vm7232 = vc.u32 %v7226, %v7228
        %v7233 = vadd.s32 %v7229, 1
        %v7234 = vsel %vm7232, %v7233, %v7229
        %v7235 = vadd.s32 %v7230, %v7234
        %v7236 = vadd.s32 %v7235, 536870912
        %v7237 = vshrl.u32 %v7236, 30
        %v7238 = vshll.u32 %v7237, 30
        %v7239 = vsub.s32 %v7235, %v7238
        %vm7240 = vcmp.lt.s32.totalorder %v7239, 0
        %v7241 = vsub.s32 0, %v7239
        %v7242 = vsel %vm7240, %v7241, %v7239
        %v7243 = vclz %v7242
        %v7244 = vsub.s32 %v7243, 2
        %vm7245 = vcmp.gt.s32.totalorder 0, %v7244
        %v7246 = vsel %vm7245, 0, %v7244
        %v7247 = vsub.s32 32, %v7246
        %v7248 = vshll.u32 %v7239, %v7246
        %v7249 = vshrl.u32 %v7231, %v7247
        %v7250 = vor.u32 %v7248, %v7249
        %v7251 = vsub.s32 4294967266, %v7246
        %v7252 = vadd.s32 %v7251, 127
        %v7253 = vshll.u32 %v7252, 23
        %v7254 = vor.u32 4788187, %v7253
        %v7255 = vand.u32 2147483647, %v7254
        %v7257 = vcvt.s32.f32 %v7250
        %v7258 = vmul.f32 %v7257, %v7255
        %v7259 = vxor.u32 %v7258, 2147483648
        %v7260 = vsel %vm7177, %v7259, %v7258
        %v7261 = vsub.s32 4, %v7237
        %v7262 = vsel %vm7177, %v7261, %v7237
        %v7263 = vsel %vm7176, %v1520, %v7260
        %v7264 = vsel %vm7176, 0, %v7262
        %v7265 = vcosq.f32.pop %v7263
        %v7266 = vsinq.f32.pop %v7263
        %vm7267 = vweird.f32 %v1520
        %v7268 = vadd.s32 %v7264, 3
        %v7269 = vand.u32 %v7268, 3
        %vm7270 = vcmp.lt.s32.totalorder %v7269, 2
        %vm7271 = vcmp.eq.s32.totalorder %v7269, 0
        %v7272 = vxor.u32 %v7266, 2147483648
        %v7273 = vsel %vm7271, %v7265, %v7272
        %vm7274 = vcmp.eq.s32.totalorder %v7269, 2
        %v7275 = vxor.u32 %v7265, 2147483648
        %v7276 = vsel %vm7274, %v7275, %v7266
        %v7277 = vsel %vm7270, %v7273, %v7276
        %v7278 = vsel %vm7267, nan, %v7277
        %v7279 = vand.u32 2147483647, %v1521
        %vm7280 = vcmp.le.f32.partialorder %v7279, 0.7853982
        %vm7281 = vcmp.lt.s32.totalorder %v1521, 0
        %v7282 = vand.u32 %v1521, 2139095040
        %v7283 = vshrl.u32 %v7282, 23
        %v7284 = vsub.s32 %v7283, 127
        %v7285 = vand.u32 2147483647, %v1521
        %v7286 = vand.u32 %v7285, 8388607
        %v7287 = vor.u32 %v7286, 8388608
        %v7288 = vsub.s32 0, %v7287
        %v7289 = vadd.s32 %v7284, 1
        %vm7290 = vcmp.gt.s32.totalorder %v7289, 0
        %v7291 = vsel %vm7290, %v7289, 0
        %v7292 = vshrl.u32 %v7291, 5
        %v7293 = vand.u32 %v7291, 31
        %v7294 = vsub.s32 32, %v7293
        %v7295 = vshrl.u32 683565275, %v7294
        %v7296 = vshll.u32 683565275, %v7293
        %v7297 = vshrl.u32 2475754826, %v7294
        %v7298 = vor.u32 %v7296, %v7297
        %v7299 = vshll.u32 2475754826, %v7293
        %v7300 = vshrl.u32 2131351028, %v7294
        %v7301 = vor.u32 %v7299, %v7300
        %v7302 = vshll.u32 2131351028, %v7293
        %v7303 = vshrl.u32 2102212464, %v7294
        %v7304 = vor.u32 %v7302, %v7303
        %v7305 = vshll.u32 2102212464, %v7293
        %v7306 = vshrl.u32 920167782, %v7294
        %v7307 = vor.u32 %v7305, %v7306
        %v7308 = vshll.u32 920167782, %v7293
        %v7309 = vshrl.u32 1326507024, %v7294
        %v7310 = vor.u32 %v7308, %v7309
        %vm7311 = vcmp.lt.s32.totalorder %v7292, 1
        %vm7312 = vcmp.lt.s32.totalorder %v7292, 2
        %vm7313 = vcmp.lt.s32.totalorder %v7292, 3
        %vm7314 = vcmp.lt.s32.totalorder %v7292, 4
        %v7315 = vsel %vm7311, %v7295, %v7298
        %v7316 = vsel %vm7314, %v7304, 2102212464
        %v7317 = vsel %vm7313, %v7301, %v7316
        %v7318 = vsel %vm7312, %v7315, %v7317
        %v7319 = vsel %vm7311, %v7298, %v7301
        %v7320 = vsel %vm7314, %v7307, 920167782
        %v7321 = vsel %vm7313, %v7304, %v7320
        %v7322 = vsel %vm7312, %v7319, %v7321
        %v7323 = vsel %vm7311, %v7301, %v7304
        %v7324 = vsel %vm7314, %v7310, 1326507024
        %v7325 = vsel %vm7313, %v7307, %v7324
        %v7326 = vsel %vm7312, %v7323, %v7325
        %v7327 = vshll.u32 %v7287, 8
        %v7328 = vmul.u32.u64.compose %v7327, %v7326
        %v7329 = vextract.low.u32 %v7328
        %v7330 = vextract.high.u32 %v7328
        %v7331 = vmul.u32.u64.compose %v7327, %v7322
        %v7332 = vextract.low.u32 %v7331
        %v7333 = vextract.high.u32 %v7331
        %v7334 = vmul.u32 %v7327, %v7318
        %v7335 = vadd.s32 %v7330, %v7332
        %vm7336 = vc.u32 %v7330, %v7332
        %v7337 = vadd.s32 %v7333, 1
        %v7338 = vsel %vm7336, %v7337, %v7333
        %v7339 = vadd.s32 %v7334, %v7338
        %v7340 = vadd.s32 %v7339, 536870912
        %v7341 = vshrl.u32 %v7340, 30
        %v7342 = vshll.u32 %v7341, 30
        %v7343 = vsub.s32 %v7339, %v7342
        %vm7344 = vcmp.lt.s32.totalorder %v7343, 0
        %v7345 = vsub.s32 0, %v7343
        %v7346 = vsel %vm7344, %v7345, %v7343
        %v7347 = vclz %v7346
        %v7348 = vsub.s32 %v7347, 2
        %vm7349 = vcmp.gt.s32.totalorder 0, %v7348
        %v7350 = vsel %vm7349, 0, %v7348
        %v7351 = vsub.s32 32, %v7350
        %v7352 = vshll.u32 %v7343, %v7350
        %v7353 = vshrl.u32 %v7335, %v7351
        %v7354 = vor.u32 %v7352, %v7353
        %v7355 = vsub.s32 4294967266, %v7350
        %v7356 = vadd.s32 %v7355, 127
        %v7357 = vshll.u32 %v7356, 23
        %v7358 = vor.u32 4788187, %v7357
        %v7359 = vand.u32 2147483647, %v7358
        %v7361 = vcvt.s32.f32 %v7354
        %v7362 = vmul.f32 %v7361, %v7359
        %v7363 = vxor.u32 %v7362, 2147483648
        %v7364 = vsel %vm7281, %v7363, %v7362
        %v7365 = vsub.s32 4, %v7341
        %v7366 = vsel %vm7281, %v7365, %v7341
        %v7367 = vsel %vm7280, %v1521, %v7364
        %v7368 = vsel %vm7280, 0, %v7366
        %v7369 = vcosq.f32.pop %v7367
        %v7370 = vsinq.f32.pop %v7367
        %vm7371 = vweird.f32 %v1521
        %v7372 = vadd.s32 %v7368, 3
        %v7373 = vand.u32 %v7372, 3
        %vm7374 = vcmp.lt.s32.totalorder %v7373, 2
        %vm7375 = vcmp.eq.s32.totalorder %v7373, 0
        %v7376 = vxor.u32 %v7370, 2147483648
        %v7377 = vsel %vm7375, %v7369, %v7376
        %vm7378 = vcmp.eq.s32.totalorder %v7373, 2
        %v7379 = vxor.u32 %v7369, 2147483648
        %v7380 = vsel %vm7378, %v7379, %v7370
        %v7381 = vsel %vm7374, %v7377, %v7380
        %v7382 = vsel %vm7371, nan, %v7381
        %v7383 = vand.u32 2147483647, %v1522
        %vm7384 = vcmp.le.f32.partialorder %v7383, 0.7853982
        %vm7385 = vcmp.lt.s32.totalorder %v1522, 0
        %v7386 = vand.u32 %v1522, 2139095040
        %v7387 = vshrl.u32 %v7386, 23
        %v7388 = vsub.s32 %v7387, 127
        %v7389 = vand.u32 2147483647, %v1522
        %v7390 = vand.u32 %v7389, 8388607
        %v7391 = vor.u32 %v7390, 8388608
        %v7392 = vsub.s32 0, %v7391
        %v7393 = vadd.s32 %v7388, 1
        %vm7394 = vcmp.gt.s32.totalorder %v7393, 0
        %v7395 = vsel %vm7394, %v7393, 0
        %v7396 = vshrl.u32 %v7395, 5
        %v7397 = vand.u32 %v7395, 31
        %v7398 = vsub.s32 32, %v7397
        %v7399 = vshrl.u32 683565275, %v7398
        %v7400 = vshll.u32 683565275, %v7397
        %v7401 = vshrl.u32 2475754826, %v7398
        %v7402 = vor.u32 %v7400, %v7401
        %v7403 = vshll.u32 2475754826, %v7397
        %v7404 = vshrl.u32 2131351028, %v7398
        %v7405 = vor.u32 %v7403, %v7404
        %v7406 = vshll.u32 2131351028, %v7397
        %v7407 = vshrl.u32 2102212464, %v7398
        %v7408 = vor.u32 %v7406, %v7407
        %v7409 = vshll.u32 2102212464, %v7397
        %v7410 = vshrl.u32 920167782, %v7398
        %v7411 = vor.u32 %v7409, %v7410
        %v7412 = vshll.u32 920167782, %v7397
        %v7413 = vshrl.u32 1326507024, %v7398
        %v7414 = vor.u32 %v7412, %v7413
        %vm7415 = vcmp.lt.s32.totalorder %v7396, 1
        %vm7416 = vcmp.lt.s32.totalorder %v7396, 2
        %vm7417 = vcmp.lt.s32.totalorder %v7396, 3
        %vm7418 = vcmp.lt.s32.totalorder %v7396, 4
        %v7419 = vsel %vm7415, %v7399, %v7402
        %v7420 = vsel %vm7418, %v7408, 2102212464
        %v7421 = vsel %vm7417, %v7405, %v7420
        %v7422 = vsel %vm7416, %v7419, %v7421
        %v7423 = vsel %vm7415, %v7402, %v7405
        %v7424 = vsel %vm7418, %v7411, 920167782
        %v7425 = vsel %vm7417, %v7408, %v7424
        %v7426 = vsel %vm7416, %v7423, %v7425
        %v7427 = vsel %vm7415, %v7405, %v7408
        %v7428 = vsel %vm7418, %v7414, 1326507024
        %v7429 = vsel %vm7417, %v7411, %v7428
        %v7430 = vsel %vm7416, %v7427, %v7429
        %v7431 = vshll.u32 %v7391, 8
        %v7432 = vmul.u32.u64.compose %v7431, %v7430
        %v7433 = vextract.low.u32 %v7432
        %v7434 = vextract.high.u32 %v7432
        %v7435 = vmul.u32.u64.compose %v7431, %v7426
        %v7436 = vextract.low.u32 %v7435
        %v7437 = vextract.high.u32 %v7435
        %v7438 = vmul.u32 %v7431, %v7422
        %v7439 = vadd.s32 %v7434, %v7436
        %vm7440 = vc.u32 %v7434, %v7436
        %v7441 = vadd.s32 %v7437, 1
        %v7442 = vsel %vm7440, %v7441, %v7437
        %v7443 = vadd.s32 %v7438, %v7442
        %v7444 = vadd.s32 %v7443, 536870912
        %v7445 = vshrl.u32 %v7444, 30
        %v7446 = vshll.u32 %v7445, 30
        %v7447 = vsub.s32 %v7443, %v7446
        %vm7448 = vcmp.lt.s32.totalorder %v7447, 0
        %v7449 = vsub.s32 0, %v7447
        %v7450 = vsel %vm7448, %v7449, %v7447
        %v7451 = vclz %v7450
        %v7452 = vsub.s32 %v7451, 2
        %vm7453 = vcmp.gt.s32.totalorder 0, %v7452
        %v7454 = vsel %vm7453, 0, %v7452
        %v7455 = vsub.s32 32, %v7454
        %v7456 = vshll.u32 %v7447, %v7454
        %v7457 = vshrl.u32 %v7439, %v7455
        %v7458 = vor.u32 %v7456, %v7457
        %v7459 = vsub.s32 4294967266, %v7454
        %v7460 = vadd.s32 %v7459, 127
        %v7461 = vshll.u32 %v7460, 23
        %v7462 = vor.u32 4788187, %v7461
        %v7463 = vand.u32 2147483647, %v7462
        %v7465 = vcvt.s32.f32 %v7458
        %v7466 = vmul.f32 %v7465, %v7463
        %v7467 = vxor.u32 %v7466, 2147483648
        %v7468 = vsel %vm7385, %v7467, %v7466
        %v7469 = vsub.s32 4, %v7445
        %v7470 = vsel %vm7385, %v7469, %v7445
        %v7471 = vsel %vm7384, %v1522, %v7468
        %v7472 = vsel %vm7384, 0, %v7470
        %v7473 = vcosq.f32.pop %v7471
        %v7474 = vsinq.f32.pop %v7471
        %vm7475 = vweird.f32 %v1522
        %v7476 = vadd.s32 %v7472, 3
        %v7477 = vand.u32 %v7476, 3
        %vm7478 = vcmp.lt.s32.totalorder %v7477, 2
        %vm7479 = vcmp.eq.s32.totalorder %v7477, 0
        %v7480 = vxor.u32 %v7474, 2147483648
        %v7481 = vsel %vm7479, %v7473, %v7480
        %vm7482 = vcmp.eq.s32.totalorder %v7477, 2
        %v7483 = vxor.u32 %v7473, 2147483648
        %v7484 = vsel %vm7482, %v7483, %v7474
        %v7485 = vsel %vm7478, %v7481, %v7484
        %v7486 = vsel %vm7475, nan, %v7485
        %v7487 = vand.u32 2147483647, %v1523
        %vm7488 = vcmp.le.f32.partialorder %v7487, 0.7853982
        %vm7489 = vcmp.lt.s32.totalorder %v1523, 0
        %v7490 = vand.u32 %v1523, 2139095040
        %v7491 = vshrl.u32 %v7490, 23
        %v7492 = vsub.s32 %v7491, 127
        %v7493 = vand.u32 2147483647, %v1523
        %v7494 = vand.u32 %v7493, 8388607
        %v7495 = vor.u32 %v7494, 8388608
        %v7496 = vsub.s32 0, %v7495
        %v7497 = vadd.s32 %v7492, 1
        %vm7498 = vcmp.gt.s32.totalorder %v7497, 0
        %v7499 = vsel %vm7498, %v7497, 0
        %v7500 = vshrl.u32 %v7499, 5
        %v7501 = vand.u32 %v7499, 31
        %v7502 = vsub.s32 32, %v7501
        %v7503 = vshrl.u32 683565275, %v7502
        %v7504 = vshll.u32 683565275, %v7501
        %v7505 = vshrl.u32 2475754826, %v7502
        %v7506 = vor.u32 %v7504, %v7505
        %v7507 = vshll.u32 2475754826, %v7501
        %v7508 = vshrl.u32 2131351028, %v7502
        %v7509 = vor.u32 %v7507, %v7508
        %v7510 = vshll.u32 2131351028, %v7501
        %v7511 = vshrl.u32 2102212464, %v7502
        %v7512 = vor.u32 %v7510, %v7511
        %v7513 = vshll.u32 2102212464, %v7501
        %v7514 = vshrl.u32 920167782, %v7502
        %v7515 = vor.u32 %v7513, %v7514
        %v7516 = vshll.u32 920167782, %v7501
        %v7517 = vshrl.u32 1326507024, %v7502
        %v7518 = vor.u32 %v7516, %v7517
        %vm7519 = vcmp.lt.s32.totalorder %v7500, 1
        %vm7520 = vcmp.lt.s32.totalorder %v7500, 2
        %vm7521 = vcmp.lt.s32.totalorder %v7500, 3
        %vm7522 = vcmp.lt.s32.totalorder %v7500, 4
        %v7523 = vsel %vm7519, %v7503, %v7506
        %v7524 = vsel %vm7522, %v7512, 2102212464
        %v7525 = vsel %vm7521, %v7509, %v7524
        %v7526 = vsel %vm7520, %v7523, %v7525
        %v7527 = vsel %vm7519, %v7506, %v7509
        %v7528 = vsel %vm7522, %v7515, 920167782
        %v7529 = vsel %vm7521, %v7512, %v7528
        %v7530 = vsel %vm7520, %v7527, %v7529
        %v7531 = vsel %vm7519, %v7509, %v7512
        %v7532 = vsel %vm7522, %v7518, 1326507024
        %v7533 = vsel %vm7521, %v7515, %v7532
        %v7534 = vsel %vm7520, %v7531, %v7533
        %v7535 = vshll.u32 %v7495, 8
        %v7536 = vmul.u32.u64.compose %v7535, %v7534
        %v7537 = vextract.low.u32 %v7536
        %v7538 = vextract.high.u32 %v7536
        %v7539 = vmul.u32.u64.compose %v7535, %v7530
        %v7540 = vextract.low.u32 %v7539
        %v7541 = vextract.high.u32 %v7539
        %v7542 = vmul.u32 %v7535, %v7526
        %v7543 = vadd.s32 %v7538, %v7540
        %vm7544 = vc.u32 %v7538, %v7540
        %v7545 = vadd.s32 %v7541, 1
        %v7546 = vsel %vm7544, %v7545, %v7541
        %v7547 = vadd.s32 %v7542, %v7546
        %v7548 = vadd.s32 %v7547, 536870912
        %v7549 = vshrl.u32 %v7548, 30
        %v7550 = vshll.u32 %v7549, 30
        %v7551 = vsub.s32 %v7547, %v7550
        %vm7552 = vcmp.lt.s32.totalorder %v7551, 0
        %v7553 = vsub.s32 0, %v7551
        %v7554 = vsel %vm7552, %v7553, %v7551
        %v7555 = vclz %v7554
        %v7556 = vsub.s32 %v7555, 2
        %vm7557 = vcmp.gt.s32.totalorder 0, %v7556
        %v7558 = vsel %vm7557, 0, %v7556
        %v7559 = vsub.s32 32, %v7558
        %v7560 = vshll.u32 %v7551, %v7558
        %v7561 = vshrl.u32 %v7543, %v7559
        %v7562 = vor.u32 %v7560, %v7561
        %v7563 = vsub.s32 4294967266, %v7558
        %v7564 = vadd.s32 %v7563, 127
        %v7565 = vshll.u32 %v7564, 23
        %v7566 = vor.u32 4788187, %v7565
        %v7567 = vand.u32 2147483647, %v7566
        %v7569 = vcvt.s32.f32 %v7562
        %v7570 = vmul.f32 %v7569, %v7567
        %v7571 = vxor.u32 %v7570, 2147483648
        %v7572 = vsel %vm7489, %v7571, %v7570
        %v7573 = vsub.s32 4, %v7549
        %v7574 = vsel %vm7489, %v7573, %v7549
        %v7575 = vsel %vm7488, %v1523, %v7572
        %v7576 = vsel %vm7488, 0, %v7574
        %v7577 = vcosq.f32.pop %v7575
        %v7578 = vsinq.f32.pop %v7575
        %vm7579 = vweird.f32 %v1523
        %v7580 = vadd.s32 %v7576, 3
        %v7581 = vand.u32 %v7580, 3
        %vm7582 = vcmp.lt.s32.totalorder %v7581, 2
        %vm7583 = vcmp.eq.s32.totalorder %v7581, 0
        %v7584 = vxor.u32 %v7578, 2147483648
        %v7585 = vsel %vm7583, %v7577, %v7584
        %vm7586 = vcmp.eq.s32.totalorder %v7581, 2
        %v7587 = vxor.u32 %v7577, 2147483648
        %v7588 = vsel %vm7586, %v7587, %v7578
        %v7589 = vsel %vm7582, %v7585, %v7588
        %v7590 = vsel %vm7579, nan, %v7589
        %v7591 = vand.u32 2147483647, %v1524
        %vm7592 = vcmp.le.f32.partialorder %v7591, 0.7853982
        %vm7593 = vcmp.lt.s32.totalorder %v1524, 0
        %v7594 = vand.u32 %v1524, 2139095040
        %v7595 = vshrl.u32 %v7594, 23
        %v7596 = vsub.s32 %v7595, 127
        %v7597 = vand.u32 2147483647, %v1524
        %v7598 = vand.u32 %v7597, 8388607
        %v7599 = vor.u32 %v7598, 8388608
        %v7600 = vsub.s32 0, %v7599
        %v7601 = vadd.s32 %v7596, 1
        %vm7602 = vcmp.gt.s32.totalorder %v7601, 0
        %v7603 = vsel %vm7602, %v7601, 0
        %v7604 = vshrl.u32 %v7603, 5
        %v7605 = vand.u32 %v7603, 31
        %v7606 = vsub.s32 32, %v7605
        %v7607 = vshrl.u32 683565275, %v7606
        %v7608 = vshll.u32 683565275, %v7605
        %v7609 = vshrl.u32 2475754826, %v7606
        %v7610 = vor.u32 %v7608, %v7609
        %v7611 = vshll.u32 2475754826, %v7605
        %v7612 = vshrl.u32 2131351028, %v7606
        %v7613 = vor.u32 %v7611, %v7612
        %v7614 = vshll.u32 2131351028, %v7605
        %v7615 = vshrl.u32 2102212464, %v7606
        %v7616 = vor.u32 %v7614, %v7615
        %v7617 = vshll.u32 2102212464, %v7605
        %v7618 = vshrl.u32 920167782, %v7606
        %v7619 = vor.u32 %v7617, %v7618
        %v7620 = vshll.u32 920167782, %v7605
        %v7621 = vshrl.u32 1326507024, %v7606
        %v7622 = vor.u32 %v7620, %v7621
        %vm7623 = vcmp.lt.s32.totalorder %v7604, 1
        %vm7624 = vcmp.lt.s32.totalorder %v7604, 2
        %vm7625 = vcmp.lt.s32.totalorder %v7604, 3
        %vm7626 = vcmp.lt.s32.totalorder %v7604, 4
        %v7627 = vsel %vm7623, %v7607, %v7610
        %v7628 = vsel %vm7626, %v7616, 2102212464
        %v7629 = vsel %vm7625, %v7613, %v7628
        %v7630 = vsel %vm7624, %v7627, %v7629
        %v7631 = vsel %vm7623, %v7610, %v7613
        %v7632 = vsel %vm7626, %v7619, 920167782
        %v7633 = vsel %vm7625, %v7616, %v7632
        %v7634 = vsel %vm7624, %v7631, %v7633
        %v7635 = vsel %vm7623, %v7613, %v7616
        %v7636 = vsel %vm7626, %v7622, 1326507024
        %v7637 = vsel %vm7625, %v7619, %v7636
        %v7638 = vsel %vm7624, %v7635, %v7637
        %v7639 = vshll.u32 %v7599, 8
        %v7640 = vmul.u32.u64.compose %v7639, %v7638
        %v7641 = vextract.low.u32 %v7640
        %v7642 = vextract.high.u32 %v7640
        %v7643 = vmul.u32.u64.compose %v7639, %v7634
        %v7644 = vextract.low.u32 %v7643
        %v7645 = vextract.high.u32 %v7643
        %v7646 = vmul.u32 %v7639, %v7630
        %v7647 = vadd.s32 %v7642, %v7644
        %vm7648 = vc.u32 %v7642, %v7644
        %v7649 = vadd.s32 %v7645, 1
        %v7650 = vsel %vm7648, %v7649, %v7645
        %v7651 = vadd.s32 %v7646, %v7650
        %v7652 = vadd.s32 %v7651, 536870912
        %v7653 = vshrl.u32 %v7652, 30
        %v7654 = vshll.u32 %v7653, 30
        %v7655 = vsub.s32 %v7651, %v7654
        %vm7656 = vcmp.lt.s32.totalorder %v7655, 0
        %v7657 = vsub.s32 0, %v7655
        %v7658 = vsel %vm7656, %v7657, %v7655
        %v7659 = vclz %v7658
        %v7660 = vsub.s32 %v7659, 2
        %vm7661 = vcmp.gt.s32.totalorder 0, %v7660
        %v7662 = vsel %vm7661, 0, %v7660
        %v7663 = vsub.s32 32, %v7662
        %v7664 = vshll.u32 %v7655, %v7662
        %v7665 = vshrl.u32 %v7647, %v7663
        %v7666 = vor.u32 %v7664, %v7665
        %v7667 = vsub.s32 4294967266, %v7662
        %v7668 = vadd.s32 %v7667, 127
        %v7669 = vshll.u32 %v7668, 23
        %v7670 = vor.u32 4788187, %v7669
        %v7671 = vand.u32 2147483647, %v7670
        %v7673 = vcvt.s32.f32 %v7666
        %v7674 = vmul.f32 %v7673, %v7671
        %v7675 = vxor.u32 %v7674, 2147483648
        %v7676 = vsel %vm7593, %v7675, %v7674
        %v7677 = vsub.s32 4, %v7653
        %v7678 = vsel %vm7593, %v7677, %v7653
        %v7679 = vsel %vm7592, %v1524, %v7676
        %v7680 = vsel %vm7592, 0, %v7678
        %v7681 = vcosq.f32.pop %v7679
        %v7682 = vsinq.f32.pop %v7679
        %vm7683 = vweird.f32 %v1524
        %v7684 = vadd.s32 %v7680, 3
        %v7685 = vand.u32 %v7684, 3
        %vm7686 = vcmp.lt.s32.totalorder %v7685, 2
        %vm7687 = vcmp.eq.s32.totalorder %v7685, 0
        %v7688 = vxor.u32 %v7682, 2147483648
        %v7689 = vsel %vm7687, %v7681, %v7688
        %vm7690 = vcmp.eq.s32.totalorder %v7685, 2
        %v7691 = vxor.u32 %v7681, 2147483648
        %v7692 = vsel %vm7690, %v7691, %v7682
        %v7693 = vsel %vm7686, %v7689, %v7692
        %v7694 = vsel %vm7683, nan, %v7693
        %v7695 = vand.u32 2147483647, %v1525
        %vm7696 = vcmp.le.f32.partialorder %v7695, 0.7853982
        %vm7697 = vcmp.lt.s32.totalorder %v1525, 0
        %v7698 = vand.u32 %v1525, 2139095040
        %v7699 = vshrl.u32 %v7698, 23
        %v7700 = vsub.s32 %v7699, 127
        %v7701 = vand.u32 2147483647, %v1525
        %v7702 = vand.u32 %v7701, 8388607
        %v7703 = vor.u32 %v7702, 8388608
        %v7704 = vsub.s32 0, %v7703
        %v7705 = vadd.s32 %v7700, 1
        %vm7706 = vcmp.gt.s32.totalorder %v7705, 0
        %v7707 = vsel %vm7706, %v7705, 0
        %v7708 = vshrl.u32 %v7707, 5
        %v7709 = vand.u32 %v7707, 31
        %v7710 = vsub.s32 32, %v7709
        %v7711 = vshrl.u32 683565275, %v7710
        %v7712 = vshll.u32 683565275, %v7709
        %v7713 = vshrl.u32 2475754826, %v7710
        %v7714 = vor.u32 %v7712, %v7713
        %v7715 = vshll.u32 2475754826, %v7709
        %v7716 = vshrl.u32 2131351028, %v7710
        %v7717 = vor.u32 %v7715, %v7716
        %v7718 = vshll.u32 2131351028, %v7709
        %v7719 = vshrl.u32 2102212464, %v7710
        %v7720 = vor.u32 %v7718, %v7719
        %v7721 = vshll.u32 2102212464, %v7709
        %v7722 = vshrl.u32 920167782, %v7710
        %v7723 = vor.u32 %v7721, %v7722
        %v7724 = vshll.u32 920167782, %v7709
        %v7725 = vshrl.u32 1326507024, %v7710
        %v7726 = vor.u32 %v7724, %v7725
        %vm7727 = vcmp.lt.s32.totalorder %v7708, 1
        %vm7728 = vcmp.lt.s32.totalorder %v7708, 2
        %vm7729 = vcmp.lt.s32.totalorder %v7708, 3
        %vm7730 = vcmp.lt.s32.totalorder %v7708, 4
        %v7731 = vsel %vm7727, %v7711, %v7714
        %v7732 = vsel %vm7730, %v7720, 2102212464
        %v7733 = vsel %vm7729, %v7717, %v7732
        %v7734 = vsel %vm7728, %v7731, %v7733
        %v7735 = vsel %vm7727, %v7714, %v7717
        %v7736 = vsel %vm7730, %v7723, 920167782
        %v7737 = vsel %vm7729, %v7720, %v7736
        %v7738 = vsel %vm7728, %v7735, %v7737
        %v7739 = vsel %vm7727, %v7717, %v7720
        %v7740 = vsel %vm7730, %v7726, 1326507024
        %v7741 = vsel %vm7729, %v7723, %v7740
        %v7742 = vsel %vm7728, %v7739, %v7741
        %v7743 = vshll.u32 %v7703, 8
        %v7744 = vmul.u32.u64.compose %v7743, %v7742
        %v7745 = vextract.low.u32 %v7744
        %v7746 = vextract.high.u32 %v7744
        %v7747 = vmul.u32.u64.compose %v7743, %v7738
        %v7748 = vextract.low.u32 %v7747
        %v7749 = vextract.high.u32 %v7747
        %v7750 = vmul.u32 %v7743, %v7734
        %v7751 = vadd.s32 %v7746, %v7748
        %vm7752 = vc.u32 %v7746, %v7748
        %v7753 = vadd.s32 %v7749, 1
        %v7754 = vsel %vm7752, %v7753, %v7749
        %v7755 = vadd.s32 %v7750, %v7754
        %v7756 = vadd.s32 %v7755, 536870912
        %v7757 = vshrl.u32 %v7756, 30
        %v7758 = vshll.u32 %v7757, 30
        %v7759 = vsub.s32 %v7755, %v7758
        %vm7760 = vcmp.lt.s32.totalorder %v7759, 0
        %v7761 = vsub.s32 0, %v7759
        %v7762 = vsel %vm7760, %v7761, %v7759
        %v7763 = vclz %v7762
        %v7764 = vsub.s32 %v7763, 2
        %vm7765 = vcmp.gt.s32.totalorder 0, %v7764
        %v7766 = vsel %vm7765, 0, %v7764
        %v7767 = vsub.s32 32, %v7766
        %v7768 = vshll.u32 %v7759, %v7766
        %v7769 = vshrl.u32 %v7751, %v7767
        %v7770 = vor.u32 %v7768, %v7769
        %v7771 = vsub.s32 4294967266, %v7766
        %v7772 = vadd.s32 %v7771, 127
        %v7773 = vshll.u32 %v7772, 23
        %v7774 = vor.u32 4788187, %v7773
        %v7775 = vand.u32 2147483647, %v7774
        %v7777 = vcvt.s32.f32 %v7770
        %v7778 = vmul.f32 %v7777, %v7775
        %v7779 = vxor.u32 %v7778, 2147483648
        %v7780 = vsel %vm7697, %v7779, %v7778
        %v7781 = vsub.s32 4, %v7757
        %v7782 = vsel %vm7697, %v7781, %v7757
        %v7783 = vsel %vm7696, %v1525, %v7780
        %v7784 = vsel %vm7696, 0, %v7782
        %v7785 = vcosq.f32.pop %v7783
        %v7786 = vsinq.f32.pop %v7783
        %vm7787 = vweird.f32 %v1525
        %v7788 = vadd.s32 %v7784, 3
        %v7789 = vand.u32 %v7788, 3
        %vm7790 = vcmp.lt.s32.totalorder %v7789, 2
        %vm7791 = vcmp.eq.s32.totalorder %v7789, 0
        %v7792 = vxor.u32 %v7786, 2147483648
        %v7793 = vsel %vm7791, %v7785, %v7792
        %vm7794 = vcmp.eq.s32.totalorder %v7789, 2
        %v7795 = vxor.u32 %v7785, 2147483648
        %v7796 = vsel %vm7794, %v7795, %v7786
        %v7797 = vsel %vm7790, %v7793, %v7796
        %v7798 = vsel %vm7787, nan, %v7797
        %v7799 = vand.u32 2147483647, %v1526
        %vm7800 = vcmp.le.f32.partialorder %v7799, 0.7853982
        %vm7801 = vcmp.lt.s32.totalorder %v1526, 0
        %v7802 = vand.u32 %v1526, 2139095040
        %v7803 = vshrl.u32 %v7802, 23
        %v7804 = vsub.s32 %v7803, 127
        %v7805 = vand.u32 2147483647, %v1526
        %v7806 = vand.u32 %v7805, 8388607
        %v7807 = vor.u32 %v7806, 8388608
        %v7808 = vsub.s32 0, %v7807
        %v7809 = vadd.s32 %v7804, 1
        %vm7810 = vcmp.gt.s32.totalorder %v7809, 0
        %v7811 = vsel %vm7810, %v7809, 0
        %v7812 = vshrl.u32 %v7811, 5
        %v7813 = vand.u32 %v7811, 31
        %v7814 = vsub.s32 32, %v7813
        %v7815 = vshrl.u32 683565275, %v7814
        %v7816 = vshll.u32 683565275, %v7813
        %v7817 = vshrl.u32 2475754826, %v7814
        %v7818 = vor.u32 %v7816, %v7817
        %v7819 = vshll.u32 2475754826, %v7813
        %v7820 = vshrl.u32 2131351028, %v7814
        %v7821 = vor.u32 %v7819, %v7820
        %v7822 = vshll.u32 2131351028, %v7813
        %v7823 = vshrl.u32 2102212464, %v7814
        %v7824 = vor.u32 %v7822, %v7823
        %v7825 = vshll.u32 2102212464, %v7813
        %v7826 = vshrl.u32 920167782, %v7814
        %v7827 = vor.u32 %v7825, %v7826
        %v7828 = vshll.u32 920167782, %v7813
        %v7829 = vshrl.u32 1326507024, %v7814
        %v7830 = vor.u32 %v7828, %v7829
        %vm7831 = vcmp.lt.s32.totalorder %v7812, 1
        %vm7832 = vcmp.lt.s32.totalorder %v7812, 2
        %vm7833 = vcmp.lt.s32.totalorder %v7812, 3
        %vm7834 = vcmp.lt.s32.totalorder %v7812, 4
        %v7835 = vsel %vm7831, %v7815, %v7818
        %v7836 = vsel %vm7834, %v7824, 2102212464
        %v7837 = vsel %vm7833, %v7821, %v7836
        %v7838 = vsel %vm7832, %v7835, %v7837
        %v7839 = vsel %vm7831, %v7818, %v7821
        %v7840 = vsel %vm7834, %v7827, 920167782
        %v7841 = vsel %vm7833, %v7824, %v7840
        %v7842 = vsel %vm7832, %v7839, %v7841
        %v7843 = vsel %vm7831, %v7821, %v7824
        %v7844 = vsel %vm7834, %v7830, 1326507024
        %v7845 = vsel %vm7833, %v7827, %v7844
        %v7846 = vsel %vm7832, %v7843, %v7845
        %v7847 = vshll.u32 %v7807, 8
        %v7848 = vmul.u32.u64.compose %v7847, %v7846
        %v7849 = vextract.low.u32 %v7848
        %v7850 = vextract.high.u32 %v7848
        %v7851 = vmul.u32.u64.compose %v7847, %v7842
        %v7852 = vextract.low.u32 %v7851
        %v7853 = vextract.high.u32 %v7851
        %v7854 = vmul.u32 %v7847, %v7838
        %v7855 = vadd.s32 %v7850, %v7852
        %vm7856 = vc.u32 %v7850, %v7852
        %v7857 = vadd.s32 %v7853, 1
        %v7858 = vsel %vm7856, %v7857, %v7853
        %v7859 = vadd.s32 %v7854, %v7858
        %v7860 = vadd.s32 %v7859, 536870912
        %v7861 = vshrl.u32 %v7860, 30
        %v7862 = vshll.u32 %v7861, 30
        %v7863 = vsub.s32 %v7859, %v7862
        %vm7864 = vcmp.lt.s32.totalorder %v7863, 0
        %v7865 = vsub.s32 0, %v7863
        %v7866 = vsel %vm7864, %v7865, %v7863
        %v7867 = vclz %v7866
        %v7868 = vsub.s32 %v7867, 2
        %vm7869 = vcmp.gt.s32.totalorder 0, %v7868
        %v7870 = vsel %vm7869, 0, %v7868
        %v7871 = vsub.s32 32, %v7870
        %v7872 = vshll.u32 %v7863, %v7870
        %v7873 = vshrl.u32 %v7855, %v7871
        %v7874 = vor.u32 %v7872, %v7873
        %v7875 = vsub.s32 4294967266, %v7870
        %v7876 = vadd.s32 %v7875, 127
        %v7877 = vshll.u32 %v7876, 23
        %v7878 = vor.u32 4788187, %v7877
        %v7879 = vand.u32 2147483647, %v7878
        %v7881 = vcvt.s32.f32 %v7874
        %v7882 = vmul.f32 %v7881, %v7879
        %v7883 = vxor.u32 %v7882, 2147483648
        %v7884 = vsel %vm7801, %v7883, %v7882
        %v7885 = vsub.s32 4, %v7861
        %v7886 = vsel %vm7801, %v7885, %v7861
        %v7887 = vsel %vm7800, %v1526, %v7884
        %v7888 = vsel %vm7800, 0, %v7886
        %v7889 = vcosq.f32.pop %v7887
        %v7890 = vsinq.f32.pop %v7887
        %vm7891 = vweird.f32 %v1526
        %v7892 = vadd.s32 %v7888, 3
        %v7893 = vand.u32 %v7892, 3
        %vm7894 = vcmp.lt.s32.totalorder %v7893, 2
        %vm7895 = vcmp.eq.s32.totalorder %v7893, 0
        %v7896 = vxor.u32 %v7890, 2147483648
        %v7897 = vsel %vm7895, %v7889, %v7896
        %vm7898 = vcmp.eq.s32.totalorder %v7893, 2
        %v7899 = vxor.u32 %v7889, 2147483648
        %v7900 = vsel %vm7898, %v7899, %v7890
        %v7901 = vsel %vm7894, %v7897, %v7900
        %v7902 = vsel %vm7891, nan, %v7901
        %v7903 = vand.u32 2147483647, %v1527
        %vm7904 = vcmp.le.f32.partialorder %v7903, 0.7853982
        %vm7905 = vcmp.lt.s32.totalorder %v1527, 0
        %v7906 = vand.u32 %v1527, 2139095040
        %v7907 = vshrl.u32 %v7906, 23
        %v7908 = vsub.s32 %v7907, 127
        %v7909 = vand.u32 2147483647, %v1527
        %v7910 = vand.u32 %v7909, 8388607
        %v7911 = vor.u32 %v7910, 8388608
        %v7912 = vsub.s32 0, %v7911
        %v7913 = vadd.s32 %v7908, 1
        %vm7914 = vcmp.gt.s32.totalorder %v7913, 0
        %v7915 = vsel %vm7914, %v7913, 0
        %v7916 = vshrl.u32 %v7915, 5
        %v7917 = vand.u32 %v7915, 31
        %v7918 = vsub.s32 32, %v7917
        %v7919 = vshrl.u32 683565275, %v7918
        %v7920 = vshll.u32 683565275, %v7917
        %v7921 = vshrl.u32 2475754826, %v7918
        %v7922 = vor.u32 %v7920, %v7921
        %v7923 = vshll.u32 2475754826, %v7917
        %v7924 = vshrl.u32 2131351028, %v7918
        %v7925 = vor.u32 %v7923, %v7924
        %v7926 = vshll.u32 2131351028, %v7917
        %v7927 = vshrl.u32 2102212464, %v7918
        %v7928 = vor.u32 %v7926, %v7927
        %v7929 = vshll.u32 2102212464, %v7917
        %v7930 = vshrl.u32 920167782, %v7918
        %v7931 = vor.u32 %v7929, %v7930
        %v7932 = vshll.u32 920167782, %v7917
        %v7933 = vshrl.u32 1326507024, %v7918
        %v7934 = vor.u32 %v7932, %v7933
        %vm7935 = vcmp.lt.s32.totalorder %v7916, 1
        %vm7936 = vcmp.lt.s32.totalorder %v7916, 2
        %vm7937 = vcmp.lt.s32.totalorder %v7916, 3
        %vm7938 = vcmp.lt.s32.totalorder %v7916, 4
        %v7939 = vsel %vm7935, %v7919, %v7922
        %v7940 = vsel %vm7938, %v7928, 2102212464
        %v7941 = vsel %vm7937, %v7925, %v7940
        %v7942 = vsel %vm7936, %v7939, %v7941
        %v7943 = vsel %vm7935, %v7922, %v7925
        %v7944 = vsel %vm7938, %v7931, 920167782
        %v7945 = vsel %vm7937, %v7928, %v7944
        %v7946 = vsel %vm7936, %v7943, %v7945
        %v7947 = vsel %vm7935, %v7925, %v7928
        %v7948 = vsel %vm7938, %v7934, 1326507024
        %v7949 = vsel %vm7937, %v7931, %v7948
        %v7950 = vsel %vm7936, %v7947, %v7949
        %v7951 = vshll.u32 %v7911, 8
        %v7952 = vmul.u32.u64.compose %v7951, %v7950
        %v7953 = vextract.low.u32 %v7952
        %v7954 = vextract.high.u32 %v7952
        %v7955 = vmul.u32.u64.compose %v7951, %v7946
        %v7956 = vextract.low.u32 %v7955
        %v7957 = vextract.high.u32 %v7955
        %v7958 = vmul.u32 %v7951, %v7942
        %v7959 = vadd.s32 %v7954, %v7956
        %vm7960 = vc.u32 %v7954, %v7956
        %v7961 = vadd.s32 %v7957, 1
        %v7962 = vsel %vm7960, %v7961, %v7957
        %v7963 = vadd.s32 %v7958, %v7962
        %v7964 = vadd.s32 %v7963, 536870912
        %v7965 = vshrl.u32 %v7964, 30
        %v7966 = vshll.u32 %v7965, 30
        %v7967 = vsub.s32 %v7963, %v7966
        %vm7968 = vcmp.lt.s32.totalorder %v7967, 0
        %v7969 = vsub.s32 0, %v7967
        %v7970 = vsel %vm7968, %v7969, %v7967
        %v7971 = vclz %v7970
        %v7972 = vsub.s32 %v7971, 2
        %vm7973 = vcmp.gt.s32.totalorder 0, %v7972
        %v7974 = vsel %vm7973, 0, %v7972
        %v7975 = vsub.s32 32, %v7974
        %v7976 = vshll.u32 %v7967, %v7974
        %v7977 = vshrl.u32 %v7959, %v7975
        %v7978 = vor.u32 %v7976, %v7977
        %v7979 = vsub.s32 4294967266, %v7974
        %v7980 = vadd.s32 %v7979, 127
        %v7981 = vshll.u32 %v7980, 23
        %v7982 = vor.u32 4788187, %v7981
        %v7983 = vand.u32 2147483647, %v7982
        %v7985 = vcvt.s32.f32 %v7978
        %v7986 = vmul.f32 %v7985, %v7983
        %v7987 = vxor.u32 %v7986, 2147483648
        %v7988 = vsel %vm7905, %v7987, %v7986
        %v7989 = vsub.s32 4, %v7965
        %v7990 = vsel %vm7905, %v7989, %v7965
        %v7991 = vsel %vm7904, %v1527, %v7988
        %v7992 = vsel %vm7904, 0, %v7990
        %v7993 = vcosq.f32.pop %v7991
        %v7994 = vsinq.f32.pop %v7991
        %vm7995 = vweird.f32 %v1527
        %v7996 = vadd.s32 %v7992, 3
        %v7997 = vand.u32 %v7996, 3
        %vm7998 = vcmp.lt.s32.totalorder %v7997, 2
        %vm7999 = vcmp.eq.s32.totalorder %v7997, 0
        %v8000 = vxor.u32 %v7994, 2147483648
        %v8001 = vsel %vm7999, %v7993, %v8000
        %vm8002 = vcmp.eq.s32.totalorder %v7997, 2
        %v8003 = vxor.u32 %v7993, 2147483648
        %v8004 = vsel %vm8002, %v8003, %v7994
        %v8005 = vsel %vm7998, %v8001, %v8004
        %v8006 = vsel %vm7995, nan, %v8005
        %v8007 = vand.u32 2147483647, %v1528
        %vm8008 = vcmp.le.f32.partialorder %v8007, 0.7853982
        %vm8009 = vcmp.lt.s32.totalorder %v1528, 0
        %v8010 = vand.u32 %v1528, 2139095040
        %v8011 = vshrl.u32 %v8010, 23
        %v8012 = vsub.s32 %v8011, 127
        %v8013 = vand.u32 2147483647, %v1528
        %v8014 = vand.u32 %v8013, 8388607
        %v8015 = vor.u32 %v8014, 8388608
        %v8016 = vsub.s32 0, %v8015
        %v8017 = vadd.s32 %v8012, 1
        %vm8018 = vcmp.gt.s32.totalorder %v8017, 0
        %v8019 = vsel %vm8018, %v8017, 0
        %v8020 = vshrl.u32 %v8019, 5
        %v8021 = vand.u32 %v8019, 31
        %v8022 = vsub.s32 32, %v8021
        %v8023 = vshrl.u32 683565275, %v8022
        %v8024 = vshll.u32 683565275, %v8021
        %v8025 = vshrl.u32 2475754826, %v8022
        %v8026 = vor.u32 %v8024, %v8025
        %v8027 = vshll.u32 2475754826, %v8021
        %v8028 = vshrl.u32 2131351028, %v8022
        %v8029 = vor.u32 %v8027, %v8028
        %v8030 = vshll.u32 2131351028, %v8021
        %v8031 = vshrl.u32 2102212464, %v8022
        %v8032 = vor.u32 %v8030, %v8031
        %v8033 = vshll.u32 2102212464, %v8021
        %v8034 = vshrl.u32 920167782, %v8022
        %v8035 = vor.u32 %v8033, %v8034
        %v8036 = vshll.u32 920167782, %v8021
        %v8037 = vshrl.u32 1326507024, %v8022
        %v8038 = vor.u32 %v8036, %v8037
        %vm8039 = vcmp.lt.s32.totalorder %v8020, 1
        %vm8040 = vcmp.lt.s32.totalorder %v8020, 2
        %vm8041 = vcmp.lt.s32.totalorder %v8020, 3
        %vm8042 = vcmp.lt.s32.totalorder %v8020, 4
        %v8043 = vsel %vm8039, %v8023, %v8026
        %v8044 = vsel %vm8042, %v8032, 2102212464
        %v8045 = vsel %vm8041, %v8029, %v8044
        %v8046 = vsel %vm8040, %v8043, %v8045
        %v8047 = vsel %vm8039, %v8026, %v8029
        %v8048 = vsel %vm8042, %v8035, 920167782
        %v8049 = vsel %vm8041, %v8032, %v8048
        %v8050 = vsel %vm8040, %v8047, %v8049
        %v8051 = vsel %vm8039, %v8029, %v8032
        %v8052 = vsel %vm8042, %v8038, 1326507024
        %v8053 = vsel %vm8041, %v8035, %v8052
        %v8054 = vsel %vm8040, %v8051, %v8053
        %v8055 = vshll.u32 %v8015, 8
        %v8056 = vmul.u32.u64.compose %v8055, %v8054
        %v8057 = vextract.low.u32 %v8056
        %v8058 = vextract.high.u32 %v8056
        %v8059 = vmul.u32.u64.compose %v8055, %v8050
        %v8060 = vextract.low.u32 %v8059
        %v8061 = vextract.high.u32 %v8059
        %v8062 = vmul.u32 %v8055, %v8046
        %v8063 = vadd.s32 %v8058, %v8060
        %vm8064 = vc.u32 %v8058, %v8060
        %v8065 = vadd.s32 %v8061, 1
        %v8066 = vsel %vm8064, %v8065, %v8061
        %v8067 = vadd.s32 %v8062, %v8066
        %v8068 = vadd.s32 %v8067, 536870912
        %v8069 = vshrl.u32 %v8068, 30
        %v8070 = vshll.u32 %v8069, 30
        %v8071 = vsub.s32 %v8067, %v8070
        %vm8072 = vcmp.lt.s32.totalorder %v8071, 0
        %v8073 = vsub.s32 0, %v8071
        %v8074 = vsel %vm8072, %v8073, %v8071
        %v8075 = vclz %v8074
        %v8076 = vsub.s32 %v8075, 2
        %vm8077 = vcmp.gt.s32.totalorder 0, %v8076
        %v8078 = vsel %vm8077, 0, %v8076
        %v8079 = vsub.s32 32, %v8078
        %v8080 = vshll.u32 %v8071, %v8078
        %v8081 = vshrl.u32 %v8063, %v8079
        %v8082 = vor.u32 %v8080, %v8081
        %v8083 = vsub.s32 4294967266, %v8078
        %v8084 = vadd.s32 %v8083, 127
        %v8085 = vshll.u32 %v8084, 23
        %v8086 = vor.u32 4788187, %v8085
        %v8087 = vand.u32 2147483647, %v8086
        %v8089 = vcvt.s32.f32 %v8082
        %v8090 = vmul.f32 %v8089, %v8087
        %v8091 = vxor.u32 %v8090, 2147483648
        %v8092 = vsel %vm8009, %v8091, %v8090
        %v8093 = vsub.s32 4, %v8069
        %v8094 = vsel %vm8009, %v8093, %v8069
        %v8095 = vsel %vm8008, %v1528, %v8092
        %v8096 = vsel %vm8008, 0, %v8094
        %v8097 = vcosq.f32.pop %v8095
        %v8098 = vsinq.f32.pop %v8095
        %vm8099 = vweird.f32 %v1528
        %v8100 = vadd.s32 %v8096, 3
        %v8101 = vand.u32 %v8100, 3
        %vm8102 = vcmp.lt.s32.totalorder %v8101, 2
        %vm8103 = vcmp.eq.s32.totalorder %v8101, 0
        %v8104 = vxor.u32 %v8098, 2147483648
        %v8105 = vsel %vm8103, %v8097, %v8104
        %vm8106 = vcmp.eq.s32.totalorder %v8101, 2
        %v8107 = vxor.u32 %v8097, 2147483648
        %v8108 = vsel %vm8106, %v8107, %v8098
        %v8109 = vsel %vm8102, %v8105, %v8108
        %v8110 = vsel %vm8099, nan, %v8109
        %v8111 = vand.u32 2147483647, %v1529
        %vm8112 = vcmp.le.f32.partialorder %v8111, 0.7853982
        %vm8113 = vcmp.lt.s32.totalorder %v1529, 0
        %v8114 = vand.u32 %v1529, 2139095040
        %v8115 = vshrl.u32 %v8114, 23
        %v8116 = vsub.s32 %v8115, 127
        %v8117 = vand.u32 2147483647, %v1529
        %v8118 = vand.u32 %v8117, 8388607
        %v8119 = vor.u32 %v8118, 8388608
        %v8120 = vsub.s32 0, %v8119
        %v8121 = vadd.s32 %v8116, 1
        %vm8122 = vcmp.gt.s32.totalorder %v8121, 0
        %v8123 = vsel %vm8122, %v8121, 0
        %v8124 = vshrl.u32 %v8123, 5
        %v8125 = vand.u32 %v8123, 31
        %v8126 = vsub.s32 32, %v8125
        %v8127 = vshrl.u32 683565275, %v8126
        %v8128 = vshll.u32 683565275, %v8125
        %v8129 = vshrl.u32 2475754826, %v8126
        %v8130 = vor.u32 %v8128, %v8129
        %v8131 = vshll.u32 2475754826, %v8125
        %v8132 = vshrl.u32 2131351028, %v8126
        %v8133 = vor.u32 %v8131, %v8132
        %v8134 = vshll.u32 2131351028, %v8125
        %v8135 = vshrl.u32 2102212464, %v8126
        %v8136 = vor.u32 %v8134, %v8135
        %v8137 = vshll.u32 2102212464, %v8125
        %v8138 = vshrl.u32 920167782, %v8126
        %v8139 = vor.u32 %v8137, %v8138
        %v8140 = vshll.u32 920167782, %v8125
        %v8141 = vshrl.u32 1326507024, %v8126
        %v8142 = vor.u32 %v8140, %v8141
        %vm8143 = vcmp.lt.s32.totalorder %v8124, 1
        %vm8144 = vcmp.lt.s32.totalorder %v8124, 2
        %vm8145 = vcmp.lt.s32.totalorder %v8124, 3
        %vm8146 = vcmp.lt.s32.totalorder %v8124, 4
        %v8147 = vsel %vm8143, %v8127, %v8130
        %v8148 = vsel %vm8146, %v8136, 2102212464
        %v8149 = vsel %vm8145, %v8133, %v8148
        %v8150 = vsel %vm8144, %v8147, %v8149
        %v8151 = vsel %vm8143, %v8130, %v8133
        %v8152 = vsel %vm8146, %v8139, 920167782
        %v8153 = vsel %vm8145, %v8136, %v8152
        %v8154 = vsel %vm8144, %v8151, %v8153
        %v8155 = vsel %vm8143, %v8133, %v8136
        %v8156 = vsel %vm8146, %v8142, 1326507024
        %v8157 = vsel %vm8145, %v8139, %v8156
        %v8158 = vsel %vm8144, %v8155, %v8157
        %v8159 = vshll.u32 %v8119, 8
        %v8160 = vmul.u32.u64.compose %v8159, %v8158
        %v8161 = vextract.low.u32 %v8160
        %v8162 = vextract.high.u32 %v8160
        %v8163 = vmul.u32.u64.compose %v8159, %v8154
        %v8164 = vextract.low.u32 %v8163
        %v8165 = vextract.high.u32 %v8163
        %v8166 = vmul.u32 %v8159, %v8150
        %v8167 = vadd.s32 %v8162, %v8164
        %vm8168 = vc.u32 %v8162, %v8164
        %v8169 = vadd.s32 %v8165, 1
        %v8170 = vsel %vm8168, %v8169, %v8165
        %v8171 = vadd.s32 %v8166, %v8170
        %v8172 = vadd.s32 %v8171, 536870912
        %v8173 = vshrl.u32 %v8172, 30
        %v8174 = vshll.u32 %v8173, 30
        %v8175 = vsub.s32 %v8171, %v8174
        %vm8176 = vcmp.lt.s32.totalorder %v8175, 0
        %v8177 = vsub.s32 0, %v8175
        %v8178 = vsel %vm8176, %v8177, %v8175
        %v8179 = vclz %v8178
        %v8180 = vsub.s32 %v8179, 2
        %vm8181 = vcmp.gt.s32.totalorder 0, %v8180
        %v8182 = vsel %vm8181, 0, %v8180
        %v8183 = vsub.s32 32, %v8182
        %v8184 = vshll.u32 %v8175, %v8182
        %v8185 = vshrl.u32 %v8167, %v8183
        %v8186 = vor.u32 %v8184, %v8185
        %v8187 = vsub.s32 4294967266, %v8182
        %v8188 = vadd.s32 %v8187, 127
        %v8189 = vshll.u32 %v8188, 23
        %v8190 = vor.u32 4788187, %v8189
        %v8191 = vand.u32 2147483647, %v8190
        %v8193 = vcvt.s32.f32 %v8186
        %v8194 = vmul.f32 %v8193, %v8191
        %v8195 = vxor.u32 %v8194, 2147483648
        %v8196 = vsel %vm8113, %v8195, %v8194
        %v8197 = vsub.s32 4, %v8173
        %v8198 = vsel %vm8113, %v8197, %v8173
        %v8199 = vsel %vm8112, %v1529, %v8196
        %v8200 = vsel %vm8112, 0, %v8198
        %v8201 = vcosq.f32.pop %v8199
        %v8202 = vsinq.f32.pop %v8199
        %vm8203 = vweird.f32 %v1529
        %v8204 = vadd.s32 %v8200, 3
        %v8205 = vand.u32 %v8204, 3
        %vm8206 = vcmp.lt.s32.totalorder %v8205, 2
        %vm8207 = vcmp.eq.s32.totalorder %v8205, 0
        %v8208 = vxor.u32 %v8202, 2147483648
        %v8209 = vsel %vm8207, %v8201, %v8208
        %vm8210 = vcmp.eq.s32.totalorder %v8205, 2
        %v8211 = vxor.u32 %v8201, 2147483648
        %v8212 = vsel %vm8210, %v8211, %v8202
        %v8213 = vsel %vm8206, %v8209, %v8212
        %v8214 = vsel %vm8203, nan, %v8213
        %v8215 = vand.u32 2147483647, %v1530
        %vm8216 = vcmp.le.f32.partialorder %v8215, 0.7853982
        %vm8217 = vcmp.lt.s32.totalorder %v1530, 0
        %v8218 = vand.u32 %v1530, 2139095040
        %v8219 = vshrl.u32 %v8218, 23
        %v8220 = vsub.s32 %v8219, 127
        %v8221 = vand.u32 2147483647, %v1530
        %v8222 = vand.u32 %v8221, 8388607
        %v8223 = vor.u32 %v8222, 8388608
        %v8224 = vsub.s32 0, %v8223
        %v8225 = vadd.s32 %v8220, 1
        %vm8226 = vcmp.gt.s32.totalorder %v8225, 0
        %v8227 = vsel %vm8226, %v8225, 0
        %v8228 = vshrl.u32 %v8227, 5
        %v8229 = vand.u32 %v8227, 31
        %v8230 = vsub.s32 32, %v8229
        %v8231 = vshrl.u32 683565275, %v8230
        %v8232 = vshll.u32 683565275, %v8229
        %v8233 = vshrl.u32 2475754826, %v8230
        %v8234 = vor.u32 %v8232, %v8233
        %v8235 = vshll.u32 2475754826, %v8229
        %v8236 = vshrl.u32 2131351028, %v8230
        %v8237 = vor.u32 %v8235, %v8236
        %v8238 = vshll.u32 2131351028, %v8229
        %v8239 = vshrl.u32 2102212464, %v8230
        %v8240 = vor.u32 %v8238, %v8239
        %v8241 = vshll.u32 2102212464, %v8229
        %v8242 = vshrl.u32 920167782, %v8230
        %v8243 = vor.u32 %v8241, %v8242
        %v8244 = vshll.u32 920167782, %v8229
        %v8245 = vshrl.u32 1326507024, %v8230
        %v8246 = vor.u32 %v8244, %v8245
        %vm8247 = vcmp.lt.s32.totalorder %v8228, 1
        %vm8248 = vcmp.lt.s32.totalorder %v8228, 2
        %vm8249 = vcmp.lt.s32.totalorder %v8228, 3
        %vm8250 = vcmp.lt.s32.totalorder %v8228, 4
        %v8251 = vsel %vm8247, %v8231, %v8234
        %v8252 = vsel %vm8250, %v8240, 2102212464
        %v8253 = vsel %vm8249, %v8237, %v8252
        %v8254 = vsel %vm8248, %v8251, %v8253
        %v8255 = vsel %vm8247, %v8234, %v8237
        %v8256 = vsel %vm8250, %v8243, 920167782
        %v8257 = vsel %vm8249, %v8240, %v8256
        %v8258 = vsel %vm8248, %v8255, %v8257
        %v8259 = vsel %vm8247, %v8237, %v8240
        %v8260 = vsel %vm8250, %v8246, 1326507024
        %v8261 = vsel %vm8249, %v8243, %v8260
        %v8262 = vsel %vm8248, %v8259, %v8261
        %v8263 = vshll.u32 %v8223, 8
        %v8264 = vmul.u32.u64.compose %v8263, %v8262
        %v8265 = vextract.low.u32 %v8264
        %v8266 = vextract.high.u32 %v8264
        %v8267 = vmul.u32.u64.compose %v8263, %v8258
        %v8268 = vextract.low.u32 %v8267
        %v8269 = vextract.high.u32 %v8267
        %v8270 = vmul.u32 %v8263, %v8254
        %v8271 = vadd.s32 %v8266, %v8268
        %vm8272 = vc.u32 %v8266, %v8268
        %v8273 = vadd.s32 %v8269, 1
        %v8274 = vsel %vm8272, %v8273, %v8269
        %v8275 = vadd.s32 %v8270, %v8274
        %v8276 = vadd.s32 %v8275, 536870912
        %v8277 = vshrl.u32 %v8276, 30
        %v8278 = vshll.u32 %v8277, 30
        %v8279 = vsub.s32 %v8275, %v8278
        %vm8280 = vcmp.lt.s32.totalorder %v8279, 0
        %v8281 = vsub.s32 0, %v8279
        %v8282 = vsel %vm8280, %v8281, %v8279
        %v8283 = vclz %v8282
        %v8284 = vsub.s32 %v8283, 2
        %vm8285 = vcmp.gt.s32.totalorder 0, %v8284
        %v8286 = vsel %vm8285, 0, %v8284
        %v8287 = vsub.s32 32, %v8286
        %v8288 = vshll.u32 %v8279, %v8286
        %v8289 = vshrl.u32 %v8271, %v8287
        %v8290 = vor.u32 %v8288, %v8289
        %v8291 = vsub.s32 4294967266, %v8286
        %v8292 = vadd.s32 %v8291, 127
        %v8293 = vshll.u32 %v8292, 23
        %v8294 = vor.u32 4788187, %v8293
        %v8295 = vand.u32 2147483647, %v8294
        %v8297 = vcvt.s32.f32 %v8290
        %v8298 = vmul.f32 %v8297, %v8295
        %v8299 = vxor.u32 %v8298, 2147483648
        %v8300 = vsel %vm8217, %v8299, %v8298
        %v8301 = vsub.s32 4, %v8277
        %v8302 = vsel %vm8217, %v8301, %v8277
        %v8303 = vsel %vm8216, %v1530, %v8300
        %v8304 = vsel %vm8216, 0, %v8302
        %v8305 = vcosq.f32.pop %v8303
        %v8306 = vsinq.f32.pop %v8303
        %vm8307 = vweird.f32 %v1530
        %v8308 = vadd.s32 %v8304, 3
        %v8309 = vand.u32 %v8308, 3
        %vm8310 = vcmp.lt.s32.totalorder %v8309, 2
        %vm8311 = vcmp.eq.s32.totalorder %v8309, 0
        %v8312 = vxor.u32 %v8306, 2147483648
        %v8313 = vsel %vm8311, %v8305, %v8312
        %vm8314 = vcmp.eq.s32.totalorder %v8309, 2
        %v8315 = vxor.u32 %v8305, 2147483648
        %v8316 = vsel %vm8314, %v8315, %v8306
        %v8317 = vsel %vm8310, %v8313, %v8316
        %v8318 = vsel %vm8307, nan, %v8317
        %v8319 = vand.u32 2147483647, %v1531
        %vm8320 = vcmp.le.f32.partialorder %v8319, 0.7853982
        %vm8321 = vcmp.lt.s32.totalorder %v1531, 0
        %v8322 = vand.u32 %v1531, 2139095040
        %v8323 = vshrl.u32 %v8322, 23
        %v8324 = vsub.s32 %v8323, 127
        %v8325 = vand.u32 2147483647, %v1531
        %v8326 = vand.u32 %v8325, 8388607
        %v8327 = vor.u32 %v8326, 8388608
        %v8328 = vsub.s32 0, %v8327
        %v8329 = vadd.s32 %v8324, 1
        %vm8330 = vcmp.gt.s32.totalorder %v8329, 0
        %v8331 = vsel %vm8330, %v8329, 0
        %v8332 = vshrl.u32 %v8331, 5
        %v8333 = vand.u32 %v8331, 31
        %v8334 = vsub.s32 32, %v8333
        %v8335 = vshrl.u32 683565275, %v8334
        %v8336 = vshll.u32 683565275, %v8333
        %v8337 = vshrl.u32 2475754826, %v8334
        %v8338 = vor.u32 %v8336, %v8337
        %v8339 = vshll.u32 2475754826, %v8333
        %v8340 = vshrl.u32 2131351028, %v8334
        %v8341 = vor.u32 %v8339, %v8340
        %v8342 = vshll.u32 2131351028, %v8333
        %v8343 = vshrl.u32 2102212464, %v8334
        %v8344 = vor.u32 %v8342, %v8343
        %v8345 = vshll.u32 2102212464, %v8333
        %v8346 = vshrl.u32 920167782, %v8334
        %v8347 = vor.u32 %v8345, %v8346
        %v8348 = vshll.u32 920167782, %v8333
        %v8349 = vshrl.u32 1326507024, %v8334
        %v8350 = vor.u32 %v8348, %v8349
        %vm8351 = vcmp.lt.s32.totalorder %v8332, 1
        %vm8352 = vcmp.lt.s32.totalorder %v8332, 2
        %vm8353 = vcmp.lt.s32.totalorder %v8332, 3
        %vm8354 = vcmp.lt.s32.totalorder %v8332, 4
        %v8355 = vsel %vm8351, %v8335, %v8338
        %v8356 = vsel %vm8354, %v8344, 2102212464
        %v8357 = vsel %vm8353, %v8341, %v8356
        %v8358 = vsel %vm8352, %v8355, %v8357
        %v8359 = vsel %vm8351, %v8338, %v8341
        %v8360 = vsel %vm8354, %v8347, 920167782
        %v8361 = vsel %vm8353, %v8344, %v8360
        %v8362 = vsel %vm8352, %v8359, %v8361
        %v8363 = vsel %vm8351, %v8341, %v8344
        %v8364 = vsel %vm8354, %v8350, 1326507024
        %v8365 = vsel %vm8353, %v8347, %v8364
        %v8366 = vsel %vm8352, %v8363, %v8365
        %v8367 = vshll.u32 %v8327, 8
        %v8368 = vmul.u32.u64.compose %v8367, %v8366
        %v8369 = vextract.low.u32 %v8368
        %v8370 = vextract.high.u32 %v8368
        %v8371 = vmul.u32.u64.compose %v8367, %v8362
        %v8372 = vextract.low.u32 %v8371
        %v8373 = vextract.high.u32 %v8371
        %v8374 = vmul.u32 %v8367, %v8358
        %v8375 = vadd.s32 %v8370, %v8372
        %vm8376 = vc.u32 %v8370, %v8372
        %v8377 = vadd.s32 %v8373, 1
        %v8378 = vsel %vm8376, %v8377, %v8373
        %v8379 = vadd.s32 %v8374, %v8378
        %v8380 = vadd.s32 %v8379, 536870912
        %v8381 = vshrl.u32 %v8380, 30
        %v8382 = vshll.u32 %v8381, 30
        %v8383 = vsub.s32 %v8379, %v8382
        %vm8384 = vcmp.lt.s32.totalorder %v8383, 0
        %v8385 = vsub.s32 0, %v8383
        %v8386 = vsel %vm8384, %v8385, %v8383
        %v8387 = vclz %v8386
        %v8388 = vsub.s32 %v8387, 2
        %vm8389 = vcmp.gt.s32.totalorder 0, %v8388
        %v8390 = vsel %vm8389, 0, %v8388
        %v8391 = vsub.s32 32, %v8390
        %v8392 = vshll.u32 %v8383, %v8390
        %v8393 = vshrl.u32 %v8375, %v8391
        %v8394 = vor.u32 %v8392, %v8393
        %v8395 = vsub.s32 4294967266, %v8390
        %v8396 = vadd.s32 %v8395, 127
        %v8397 = vshll.u32 %v8396, 23
        %v8398 = vor.u32 4788187, %v8397
        %v8399 = vand.u32 2147483647, %v8398
        %v8401 = vcvt.s32.f32 %v8394
        %v8402 = vmul.f32 %v8401, %v8399
        %v8403 = vxor.u32 %v8402, 2147483648
        %v8404 = vsel %vm8321, %v8403, %v8402
        %v8405 = vsub.s32 4, %v8381
        %v8406 = vsel %vm8321, %v8405, %v8381
        %v8407 = vsel %vm8320, %v1531, %v8404
        %v8408 = vsel %vm8320, 0, %v8406
        %v8409 = vcosq.f32.pop %v8407
        %v8410 = vsinq.f32.pop %v8407
        %vm8411 = vweird.f32 %v1531
        %v8412 = vadd.s32 %v8408, 3
        %v8413 = vand.u32 %v8412, 3
        %vm8414 = vcmp.lt.s32.totalorder %v8413, 2
        %vm8415 = vcmp.eq.s32.totalorder %v8413, 0
        %v8416 = vxor.u32 %v8410, 2147483648
        %v8417 = vsel %vm8415, %v8409, %v8416
        %vm8418 = vcmp.eq.s32.totalorder %v8413, 2
        %v8419 = vxor.u32 %v8409, 2147483648
        %v8420 = vsel %vm8418, %v8419, %v8410
        %v8421 = vsel %vm8414, %v8417, %v8420
        %v8422 = vsel %vm8411, nan, %v8421
        %v8423 = vand.u32 2147483647, %v1532
        %vm8424 = vcmp.le.f32.partialorder %v8423, 0.7853982
        %vm8425 = vcmp.lt.s32.totalorder %v1532, 0
        %v8426 = vand.u32 %v1532, 2139095040
        %v8427 = vshrl.u32 %v8426, 23
        %v8428 = vsub.s32 %v8427, 127
        %v8429 = vand.u32 2147483647, %v1532
        %v8430 = vand.u32 %v8429, 8388607
        %v8431 = vor.u32 %v8430, 8388608
        %v8432 = vsub.s32 0, %v8431
        %v8433 = vadd.s32 %v8428, 1
        %vm8434 = vcmp.gt.s32.totalorder %v8433, 0
        %v8435 = vsel %vm8434, %v8433, 0
        %v8436 = vshrl.u32 %v8435, 5
        %v8437 = vand.u32 %v8435, 31
        %v8438 = vsub.s32 32, %v8437
        %v8439 = vshrl.u32 683565275, %v8438
        %v8440 = vshll.u32 683565275, %v8437
        %v8441 = vshrl.u32 2475754826, %v8438
        %v8442 = vor.u32 %v8440, %v8441
        %v8443 = vshll.u32 2475754826, %v8437
        %v8444 = vshrl.u32 2131351028, %v8438
        %v8445 = vor.u32 %v8443, %v8444
        %v8446 = vshll.u32 2131351028, %v8437
        %v8447 = vshrl.u32 2102212464, %v8438
        %v8448 = vor.u32 %v8446, %v8447
        %v8449 = vshll.u32 2102212464, %v8437
        %v8450 = vshrl.u32 920167782, %v8438
        %v8451 = vor.u32 %v8449, %v8450
        %v8452 = vshll.u32 920167782, %v8437
        %v8453 = vshrl.u32 1326507024, %v8438
        %v8454 = vor.u32 %v8452, %v8453
        %vm8455 = vcmp.lt.s32.totalorder %v8436, 1
        %vm8456 = vcmp.lt.s32.totalorder %v8436, 2
        %vm8457 = vcmp.lt.s32.totalorder %v8436, 3
        %vm8458 = vcmp.lt.s32.totalorder %v8436, 4
        %v8459 = vsel %vm8455, %v8439, %v8442
        %v8460 = vsel %vm8458, %v8448, 2102212464
        %v8461 = vsel %vm8457, %v8445, %v8460
        %v8462 = vsel %vm8456, %v8459, %v8461
        %v8463 = vsel %vm8455, %v8442, %v8445
        %v8464 = vsel %vm8458, %v8451, 920167782
        %v8465 = vsel %vm8457, %v8448, %v8464
        %v8466 = vsel %vm8456, %v8463, %v8465
        %v8467 = vsel %vm8455, %v8445, %v8448
        %v8468 = vsel %vm8458, %v8454, 1326507024
        %v8469 = vsel %vm8457, %v8451, %v8468
        %v8470 = vsel %vm8456, %v8467, %v8469
        %v8471 = vshll.u32 %v8431, 8
        %v8472 = vmul.u32.u64.compose %v8471, %v8470
        %v8473 = vextract.low.u32 %v8472
        %v8474 = vextract.high.u32 %v8472
        %v8475 = vmul.u32.u64.compose %v8471, %v8466
        %v8476 = vextract.low.u32 %v8475
        %v8477 = vextract.high.u32 %v8475
        %v8478 = vmul.u32 %v8471, %v8462
        %v8479 = vadd.s32 %v8474, %v8476
        %vm8480 = vc.u32 %v8474, %v8476
        %v8481 = vadd.s32 %v8477, 1
        %v8482 = vsel %vm8480, %v8481, %v8477
        %v8483 = vadd.s32 %v8478, %v8482
        %v8484 = vadd.s32 %v8483, 536870912
        %v8485 = vshrl.u32 %v8484, 30
        %v8486 = vshll.u32 %v8485, 30
        %v8487 = vsub.s32 %v8483, %v8486
        %vm8488 = vcmp.lt.s32.totalorder %v8487, 0
        %v8489 = vsub.s32 0, %v8487
        %v8490 = vsel %vm8488, %v8489, %v8487
        %v8491 = vclz %v8490
        %v8492 = vsub.s32 %v8491, 2
        %vm8493 = vcmp.gt.s32.totalorder 0, %v8492
        %v8494 = vsel %vm8493, 0, %v8492
        %v8495 = vsub.s32 32, %v8494
        %v8496 = vshll.u32 %v8487, %v8494
        %v8497 = vshrl.u32 %v8479, %v8495
        %v8498 = vor.u32 %v8496, %v8497
        %v8499 = vsub.s32 4294967266, %v8494
        %v8500 = vadd.s32 %v8499, 127
        %v8501 = vshll.u32 %v8500, 23
        %v8502 = vor.u32 4788187, %v8501
        %v8503 = vand.u32 2147483647, %v8502
        %v8505 = vcvt.s32.f32 %v8498
        %v8506 = vmul.f32 %v8505, %v8503
        %v8507 = vxor.u32 %v8506, 2147483648
        %v8508 = vsel %vm8425, %v8507, %v8506
        %v8509 = vsub.s32 4, %v8485
        %v8510 = vsel %vm8425, %v8509, %v8485
        %v8511 = vsel %vm8424, %v1532, %v8508
        %v8512 = vsel %vm8424, 0, %v8510
        %v8513 = vcosq.f32.pop %v8511
        %v8514 = vsinq.f32.pop %v8511
        %vm8515 = vweird.f32 %v1532
        %v8516 = vadd.s32 %v8512, 3
        %v8517 = vand.u32 %v8516, 3
        %vm8518 = vcmp.lt.s32.totalorder %v8517, 2
        %vm8519 = vcmp.eq.s32.totalorder %v8517, 0
        %v8520 = vxor.u32 %v8514, 2147483648
        %v8521 = vsel %vm8519, %v8513, %v8520
        %vm8522 = vcmp.eq.s32.totalorder %v8517, 2
        %v8523 = vxor.u32 %v8513, 2147483648
        %v8524 = vsel %vm8522, %v8523, %v8514
        %v8525 = vsel %vm8518, %v8521, %v8524
        %v8526 = vsel %vm8515, nan, %v8525
        %v8527 = vand.u32 2147483647, %v1533
        %vm8528 = vcmp.le.f32.partialorder %v8527, 0.7853982
        %vm8529 = vcmp.lt.s32.totalorder %v1533, 0
        %v8530 = vand.u32 %v1533, 2139095040
        %v8531 = vshrl.u32 %v8530, 23
        %v8532 = vsub.s32 %v8531, 127
        %v8533 = vand.u32 2147483647, %v1533
        %v8534 = vand.u32 %v8533, 8388607
        %v8535 = vor.u32 %v8534, 8388608
        %v8536 = vsub.s32 0, %v8535
        %v8537 = vadd.s32 %v8532, 1
        %vm8538 = vcmp.gt.s32.totalorder %v8537, 0
        %v8539 = vsel %vm8538, %v8537, 0
        %v8540 = vshrl.u32 %v8539, 5
        %v8541 = vand.u32 %v8539, 31
        %v8542 = vsub.s32 32, %v8541
        %v8543 = vshrl.u32 683565275, %v8542
        %v8544 = vshll.u32 683565275, %v8541
        %v8545 = vshrl.u32 2475754826, %v8542
        %v8546 = vor.u32 %v8544, %v8545
        %v8547 = vshll.u32 2475754826, %v8541
        %v8548 = vshrl.u32 2131351028, %v8542
        %v8549 = vor.u32 %v8547, %v8548
        %v8550 = vshll.u32 2131351028, %v8541
        %v8551 = vshrl.u32 2102212464, %v8542
        %v8552 = vor.u32 %v8550, %v8551
        %v8553 = vshll.u32 2102212464, %v8541
        %v8554 = vshrl.u32 920167782, %v8542
        %v8555 = vor.u32 %v8553, %v8554
        %v8556 = vshll.u32 920167782, %v8541
        %v8557 = vshrl.u32 1326507024, %v8542
        %v8558 = vor.u32 %v8556, %v8557
        %vm8559 = vcmp.lt.s32.totalorder %v8540, 1
        %vm8560 = vcmp.lt.s32.totalorder %v8540, 2
        %vm8561 = vcmp.lt.s32.totalorder %v8540, 3
        %vm8562 = vcmp.lt.s32.totalorder %v8540, 4
        %v8563 = vsel %vm8559, %v8543, %v8546
        %v8564 = vsel %vm8562, %v8552, 2102212464
        %v8565 = vsel %vm8561, %v8549, %v8564
        %v8566 = vsel %vm8560, %v8563, %v8565
        %v8567 = vsel %vm8559, %v8546, %v8549
        %v8568 = vsel %vm8562, %v8555, 920167782
        %v8569 = vsel %vm8561, %v8552, %v8568
        %v8570 = vsel %vm8560, %v8567, %v8569
        %v8571 = vsel %vm8559, %v8549, %v8552
        %v8572 = vsel %vm8562, %v8558, 1326507024
        %v8573 = vsel %vm8561, %v8555, %v8572
        %v8574 = vsel %vm8560, %v8571, %v8573
        %v8575 = vshll.u32 %v8535, 8
        %v8576 = vmul.u32.u64.compose %v8575, %v8574
        %v8577 = vextract.low.u32 %v8576
        %v8578 = vextract.high.u32 %v8576
        %v8579 = vmul.u32.u64.compose %v8575, %v8570
        %v8580 = vextract.low.u32 %v8579
        %v8581 = vextract.high.u32 %v8579
        %v8582 = vmul.u32 %v8575, %v8566
        %v8583 = vadd.s32 %v8578, %v8580
        %vm8584 = vc.u32 %v8578, %v8580
        %v8585 = vadd.s32 %v8581, 1
        %v8586 = vsel %vm8584, %v8585, %v8581
        %v8587 = vadd.s32 %v8582, %v8586
        %v8588 = vadd.s32 %v8587, 536870912
        %v8589 = vshrl.u32 %v8588, 30
        %v8590 = vshll.u32 %v8589, 30
        %v8591 = vsub.s32 %v8587, %v8590
        %vm8592 = vcmp.lt.s32.totalorder %v8591, 0
        %v8593 = vsub.s32 0, %v8591
        %v8594 = vsel %vm8592, %v8593, %v8591
        %v8595 = vclz %v8594
        %v8596 = vsub.s32 %v8595, 2
        %vm8597 = vcmp.gt.s32.totalorder 0, %v8596
        %v8598 = vsel %vm8597, 0, %v8596
        %v8599 = vsub.s32 32, %v8598
        %v8600 = vshll.u32 %v8591, %v8598
        %v8601 = vshrl.u32 %v8583, %v8599
        %v8602 = vor.u32 %v8600, %v8601
        %v8603 = vsub.s32 4294967266, %v8598
        %v8604 = vadd.s32 %v8603, 127
        %v8605 = vshll.u32 %v8604, 23
        %v8606 = vor.u32 4788187, %v8605
        %v8607 = vand.u32 2147483647, %v8606
        %v8609 = vcvt.s32.f32 %v8602
        %v8610 = vmul.f32 %v8609, %v8607
        %v8611 = vxor.u32 %v8610, 2147483648
        %v8612 = vsel %vm8529, %v8611, %v8610
        %v8613 = vsub.s32 4, %v8589
        %v8614 = vsel %vm8529, %v8613, %v8589
        %v8615 = vsel %vm8528, %v1533, %v8612
        %v8616 = vsel %vm8528, 0, %v8614
        %v8617 = vcosq.f32.pop %v8615
        %v8618 = vsinq.f32.pop %v8615
        %vm8619 = vweird.f32 %v1533
        %v8620 = vadd.s32 %v8616, 3
        %v8621 = vand.u32 %v8620, 3
        %vm8622 = vcmp.lt.s32.totalorder %v8621, 2
        %vm8623 = vcmp.eq.s32.totalorder %v8621, 0
        %v8624 = vxor.u32 %v8618, 2147483648
        %v8625 = vsel %vm8623, %v8617, %v8624
        %vm8626 = vcmp.eq.s32.totalorder %v8621, 2
        %v8627 = vxor.u32 %v8617, 2147483648
        %v8628 = vsel %vm8626, %v8627, %v8618
        %v8629 = vsel %vm8622, %v8625, %v8628
        %v8630 = vsel %vm8619, nan, %v8629
        %v8631 = vand.u32 2147483647, %v1534
        %vm8632 = vcmp.le.f32.partialorder %v8631, 0.7853982
        %vm8633 = vcmp.lt.s32.totalorder %v1534, 0
        %v8634 = vand.u32 %v1534, 2139095040
        %v8635 = vshrl.u32 %v8634, 23
        %v8636 = vsub.s32 %v8635, 127
        %v8637 = vand.u32 2147483647, %v1534
        %v8638 = vand.u32 %v8637, 8388607
        %v8639 = vor.u32 %v8638, 8388608
        %v8640 = vsub.s32 0, %v8639
        %v8641 = vadd.s32 %v8636, 1
        %vm8642 = vcmp.gt.s32.totalorder %v8641, 0
        %v8643 = vsel %vm8642, %v8641, 0
        %v8644 = vshrl.u32 %v8643, 5
        %v8645 = vand.u32 %v8643, 31
        %v8646 = vsub.s32 32, %v8645
        %v8647 = vshrl.u32 683565275, %v8646
        %v8648 = vshll.u32 683565275, %v8645
        %v8649 = vshrl.u32 2475754826, %v8646
        %v8650 = vor.u32 %v8648, %v8649
        %v8651 = vshll.u32 2475754826, %v8645
        %v8652 = vshrl.u32 2131351028, %v8646
        %v8653 = vor.u32 %v8651, %v8652
        %v8654 = vshll.u32 2131351028, %v8645
        %v8655 = vshrl.u32 2102212464, %v8646
        %v8656 = vor.u32 %v8654, %v8655
        %v8657 = vshll.u32 2102212464, %v8645
        %v8658 = vshrl.u32 920167782, %v8646
        %v8659 = vor.u32 %v8657, %v8658
        %v8660 = vshll.u32 920167782, %v8645
        %v8661 = vshrl.u32 1326507024, %v8646
        %v8662 = vor.u32 %v8660, %v8661
        %vm8663 = vcmp.lt.s32.totalorder %v8644, 1
        %vm8664 = vcmp.lt.s32.totalorder %v8644, 2
        %vm8665 = vcmp.lt.s32.totalorder %v8644, 3
        %vm8666 = vcmp.lt.s32.totalorder %v8644, 4
        %v8667 = vsel %vm8663, %v8647, %v8650
        %v8668 = vsel %vm8666, %v8656, 2102212464
        %v8669 = vsel %vm8665, %v8653, %v8668
        %v8670 = vsel %vm8664, %v8667, %v8669
        %v8671 = vsel %vm8663, %v8650, %v8653
        %v8672 = vsel %vm8666, %v8659, 920167782
        %v8673 = vsel %vm8665, %v8656, %v8672
        %v8674 = vsel %vm8664, %v8671, %v8673
        %v8675 = vsel %vm8663, %v8653, %v8656
        %v8676 = vsel %vm8666, %v8662, 1326507024
        %v8677 = vsel %vm8665, %v8659, %v8676
        %v8678 = vsel %vm8664, %v8675, %v8677
        %v8679 = vshll.u32 %v8639, 8
        %v8680 = vmul.u32.u64.compose %v8679, %v8678
        %v8681 = vextract.low.u32 %v8680
        %v8682 = vextract.high.u32 %v8680
        %v8683 = vmul.u32.u64.compose %v8679, %v8674
        %v8684 = vextract.low.u32 %v8683
        %v8685 = vextract.high.u32 %v8683
        %v8686 = vmul.u32 %v8679, %v8670
        %v8687 = vadd.s32 %v8682, %v8684
        %vm8688 = vc.u32 %v8682, %v8684
        %v8689 = vadd.s32 %v8685, 1
        %v8690 = vsel %vm8688, %v8689, %v8685
        %v8691 = vadd.s32 %v8686, %v8690
        %v8692 = vadd.s32 %v8691, 536870912
        %v8693 = vshrl.u32 %v8692, 30
        %v8694 = vshll.u32 %v8693, 30
        %v8695 = vsub.s32 %v8691, %v8694
        %vm8696 = vcmp.lt.s32.totalorder %v8695, 0
        %v8697 = vsub.s32 0, %v8695
        %v8698 = vsel %vm8696, %v8697, %v8695
        %v8699 = vclz %v8698
        %v8700 = vsub.s32 %v8699, 2
        %vm8701 = vcmp.gt.s32.totalorder 0, %v8700
        %v8702 = vsel %vm8701, 0, %v8700
        %v8703 = vsub.s32 32, %v8702
        %v8704 = vshll.u32 %v8695, %v8702
        %v8705 = vshrl.u32 %v8687, %v8703
        %v8706 = vor.u32 %v8704, %v8705
        %v8707 = vsub.s32 4294967266, %v8702
        %v8708 = vadd.s32 %v8707, 127
        %v8709 = vshll.u32 %v8708, 23
        %v8710 = vor.u32 4788187, %v8709
        %v8711 = vand.u32 2147483647, %v8710
        %v8713 = vcvt.s32.f32 %v8706
        %v8714 = vmul.f32 %v8713, %v8711
        %v8715 = vxor.u32 %v8714, 2147483648
        %v8716 = vsel %vm8633, %v8715, %v8714
        %v8717 = vsub.s32 4, %v8693
        %v8718 = vsel %vm8633, %v8717, %v8693
        %v8719 = vsel %vm8632, %v1534, %v8716
        %v8720 = vsel %vm8632, 0, %v8718
        %v8721 = vcosq.f32.pop %v8719
        %v8722 = vsinq.f32.pop %v8719
        %vm8723 = vweird.f32 %v1534
        %v8724 = vadd.s32 %v8720, 3
        %v8725 = vand.u32 %v8724, 3
        %vm8726 = vcmp.lt.s32.totalorder %v8725, 2
        %vm8727 = vcmp.eq.s32.totalorder %v8725, 0
        %v8728 = vxor.u32 %v8722, 2147483648
        %v8729 = vsel %vm8727, %v8721, %v8728
        %vm8730 = vcmp.eq.s32.totalorder %v8725, 2
        %v8731 = vxor.u32 %v8721, 2147483648
        %v8732 = vsel %vm8730, %v8731, %v8722
        %v8733 = vsel %vm8726, %v8729, %v8732
        %v8734 = vsel %vm8723, nan, %v8733
        %v8735 = vmul.f32 %v1439, %v5510
        %v8736 = vmul.f32 %v1440, %v5614
        %v8737 = vmul.f32 %v1441, %v5718
        %v8738 = vmul.f32 %v1442, %v5822
        %v8739 = vmul.f32 %v1443, %v5926
        %v8740 = vmul.f32 %v1444, %v6030
        %v8741 = vmul.f32 %v1445, %v6134
        %v8742 = vmul.f32 %v1446, %v6238
        %v8743 = vmul.f32 %v1447, %v6342
        %v8744 = vmul.f32 %v1448, %v6446
        %v8745 = vmul.f32 %v1449, %v6550
        %v8746 = vmul.f32 %v1450, %v6654
        %v8747 = vmul.f32 %v1451, %v6758
        %v8748 = vmul.f32 %v1452, %v6862
        %v8749 = vmul.f32 %v1453, %v6966
        %v8750 = vmul.f32 %v1454, %v7070
        %v8751 = vmul.f32 %v1455, %v7174
        %v8752 = vmul.f32 %v1456, %v7278
        %v8753 = vmul.f32 %v1457, %v7382
        %v8754 = vmul.f32 %v1458, %v7486
        %v8755 = vmul.f32 %v1459, %v7590
        %v8756 = vmul.f32 %v1460, %v7694
        %v8757 = vmul.f32 %v1461, %v7798
        %v8758 = vmul.f32 %v1462, %v7902
        %v8759 = vmul.f32 %v1463, %v8006
        %v8760 = vmul.f32 %v1464, %v8110
        %v8761 = vmul.f32 %v1465, %v8214
        %v8762 = vmul.f32 %v1466, %v8318
        %v8763 = vmul.f32 %v1467, %v8422
        %v8764 = vmul.f32 %v1468, %v8526
        %v8765 = vmul.f32 %v1469, %v8630
        %v8766 = vmul.f32 %v1470, %v8734
        %v8767 = vmul.f32 %v8735, %v2015
        %v8768 = vmul.f32 %v8736, %v2016
        %v8769 = vmul.f32 %v8737, %v2017
        %v8770 = vmul.f32 %v8738, %v2018
        %v8771 = vmul.f32 %v8739, %v2019
        %v8772 = vmul.f32 %v8740, %v2020
        %v8773 = vmul.f32 %v8741, %v2021
        %v8774 = vmul.f32 %v8742, %v2022
        %v8775 = vmul.f32 %v8743, %v2023
        %v8776 = vmul.f32 %v8744, %v2024
        %v8777 = vmul.f32 %v8745, %v2025
        %v8778 = vmul.f32 %v8746, %v2026
        %v8779 = vmul.f32 %v8747, %v2027
        %v8780 = vmul.f32 %v8748, %v2028
        %v8781 = vmul.f32 %v8749, %v2029
        %v8782 = vmul.f32 %v8750, %v2030
        %v8783 = vmul.f32 %v8751, %v2031
        %v8784 = vmul.f32 %v8752, %v2032
        %v8785 = vmul.f32 %v8753, %v2033
        %v8786 = vmul.f32 %v8754, %v2034
        %v8787 = vmul.f32 %v8755, %v2035
        %v8788 = vmul.f32 %v8756, %v2036
        %v8789 = vmul.f32 %v8757, %v2037
        %v8790 = vmul.f32 %v8758, %v2038
        %v8791 = vmul.f32 %v8759, %v2039
        %v8792 = vmul.f32 %v8760, %v2040
        %v8793 = vmul.f32 %v8761, %v2041
        %v8794 = vmul.f32 %v8762, %v2042
        %v8795 = vmul.f32 %v8763, %v2043
        %v8796 = vmul.f32 %v8764, %v2044
        %v8797 = vmul.f32 %v8765, %v2045
        %v8798 = vmul.f32 %v8766, %v2046
        %v8799 = vsub.f32 %v5375, %v8767
        %v8800 = vsub.f32 %v5376, %v8768
        %v8801 = vsub.f32 %v5377, %v8769
        %v8802 = vsub.f32 %v5378, %v8770
        %v8803 = vsub.f32 %v5379, %v8771
        %v8804 = vsub.f32 %v5380, %v8772
        %v8805 = vsub.f32 %v5381, %v8773
        %v8806 = vsub.f32 %v5382, %v8774
        %v8807 = vsub.f32 %v5383, %v8775
        %v8808 = vsub.f32 %v5384, %v8776
        %v8809 = vsub.f32 %v5385, %v8777
        %v8810 = vsub.f32 %v5386, %v8778
        %v8811 = vsub.f32 %v5387, %v8779
        %v8812 = vsub.f32 %v5388, %v8780
        %v8813 = vsub.f32 %v5389, %v8781
        %v8814 = vsub.f32 %v5390, %v8782
        %v8815 = vsub.f32 %v5391, %v8783
        %v8816 = vsub.f32 %v5392, %v8784
        %v8817 = vsub.f32 %v5393, %v8785
        %v8818 = vsub.f32 %v5394, %v8786
        %v8819 = vsub.f32 %v5395, %v8787
        %v8820 = vsub.f32 %v5396, %v8788
        %v8821 = vsub.f32 %v5397, %v8789
        %v8822 = vsub.f32 %v5398, %v8790
        %v8823 = vsub.f32 %v5399, %v8791
        %v8824 = vsub.f32 %v5400, %v8792
        %v8825 = vsub.f32 %v5401, %v8793
        %v8826 = vsub.f32 %v5402, %v8794
        %v8827 = vsub.f32 %v5403, %v8795
        %v8828 = vsub.f32 %v5404, %v8796
        %v8829 = vsub.f32 %v5405, %v8797
        %v8830 = vsub.f32 %v5406, %v8798
        %v8831 = vmul.f32 %v2047, %v8799
        %v8832 = vmul.f32 %v2048, %v8800
        %v8833 = vmul.f32 %v2049, %v8801
        %v8834 = vmul.f32 %v2050, %v8802
        %v8835 = vmul.f32 %v2051, %v8803
        %v8836 = vmul.f32 %v2052, %v8804
        %v8837 = vmul.f32 %v2053, %v8805
        %v8838 = vmul.f32 %v2054, %v8806
        %v8839 = vmul.f32 %v2055, %v8807
        %v8840 = vmul.f32 %v2056, %v8808
        %v8841 = vmul.f32 %v2057, %v8809
        %v8842 = vmul.f32 %v2058, %v8810
        %v8843 = vmul.f32 %v2059, %v8811
        %v8844 = vmul.f32 %v2060, %v8812
        %v8845 = vmul.f32 %v2061, %v8813
        %v8846 = vmul.f32 %v2062, %v8814
        %v8847 = vmul.f32 %v2063, %v8815
        %v8848 = vmul.f32 %v2064, %v8816
        %v8849 = vmul.f32 %v2065, %v8817
        %v8850 = vmul.f32 %v2066, %v8818
        %v8851 = vmul.f32 %v2067, %v8819
        %v8852 = vmul.f32 %v2068, %v8820
        %v8853 = vmul.f32 %v2069, %v8821
        %v8854 = vmul.f32 %v2070, %v8822
        %v8855 = vmul.f32 %v2071, %v8823
        %v8856 = vmul.f32 %v2072, %v8824
        %v8857 = vmul.f32 %v2073, %v8825
        %v8858 = vmul.f32 %v2074, %v8826
        %v8859 = vmul.f32 %v2075, %v8827
        %v8860 = vmul.f32 %v2076, %v8828
        %v8861 = vmul.f32 %v2077, %v8829
        %v8862 = vmul.f32 %v2078, %v8830
        %vm8863 = vcmp.lt.f32.partialorder %v453, 8.0
        %vm8864 = vcmp.lt.f32.partialorder %v460, 8.0
        %vm8865 = vcmp.lt.f32.partialorder %v467, 8.0
        %vm8866 = vcmp.lt.f32.partialorder %v474, 8.0
        %vm8867 = vcmp.lt.f32.partialorder %v481, 8.0
        %vm8868 = vcmp.lt.f32.partialorder %v488, 8.0
        %vm8869 = vcmp.lt.f32.partialorder %v495, 8.0
        %vm8870 = vcmp.lt.f32.partialorder %v502, 8.0
        %vm8871 = vcmp.lt.f32.partialorder %v509, 8.0
        %vm8872 = vcmp.lt.f32.partialorder %v516, 8.0
        %vm8873 = vcmp.lt.f32.partialorder %v523, 8.0
        %vm8874 = vcmp.lt.f32.partialorder %v530, 8.0
        %vm8875 = vcmp.lt.f32.partialorder %v537, 8.0
        %vm8876 = vcmp.lt.f32.partialorder %v544, 8.0
        %vm8877 = vcmp.lt.f32.partialorder %v551, 8.0
        %vm8878 = vcmp.lt.f32.partialorder %v558, 8.0
        %vm8879 = vcmp.lt.f32.partialorder %v565, 8.0
        %vm8880 = vcmp.lt.f32.partialorder %v572, 8.0
        %vm8881 = vcmp.lt.f32.partialorder %v579, 8.0
        %vm8882 = vcmp.lt.f32.partialorder %v586, 8.0
        %vm8883 = vcmp.lt.f32.partialorder %v593, 8.0
        %vm8884 = vcmp.lt.f32.partialorder %v600, 8.0
        %vm8885 = vcmp.lt.f32.partialorder %v607, 8.0
        %vm8886 = vcmp.lt.f32.partialorder %v614, 8.0
        %vm8887 = vcmp.lt.f32.partialorder %v621, 8.0
        %vm8888 = vcmp.lt.f32.partialorder %v628, 8.0
        %vm8889 = vcmp.lt.f32.partialorder %v635, 8.0
        %vm8890 = vcmp.lt.f32.partialorder %v642, 8.0
        %vm8891 = vcmp.lt.f32.partialorder %v649, 8.0
        %vm8892 = vcmp.lt.f32.partialorder %v656, 8.0
        %vm8893 = vcmp.lt.f32.partialorder %v663, 8.0
        %vm8894 = vcmp.lt.f32.partialorder %v670, 8.0
        %v8895 = vsel %vm8863, %v1311, %v8831
        %v8896 = vsel %vm8864, %v1312, %v8832
        %v8897 = vsel %vm8865, %v1313, %v8833
        %v8898 = vsel %vm8866, %v1314, %v8834
        %v8899 = vsel %vm8867, %v1315, %v8835
        %v8900 = vsel %vm8868, %v1316, %v8836
        %v8901 = vsel %vm8869, %v1317, %v8837
        %v8902 = vsel %vm8870, %v1318, %v8838
        %v8903 = vsel %vm8871, %v1319, %v8839
        %v8904 = vsel %vm8872, %v1320, %v8840
        %v8905 = vsel %vm8873, %v1321, %v8841
        %v8906 = vsel %vm8874, %v1322, %v8842
        %v8907 = vsel %vm8875, %v1323, %v8843
        %v8908 = vsel %vm8876, %v1324, %v8844
        %v8909 = vsel %vm8877, %v1325, %v8845
        %v8910 = vsel %vm8878, %v1326, %v8846
        %v8911 = vsel %vm8879, %v1327, %v8847
        %v8912 = vsel %vm8880, %v1328, %v8848
        %v8913 = vsel %vm8881, %v1329, %v8849
        %v8914 = vsel %vm8882, %v1330, %v8850
        %v8915 = vsel %vm8883, %v1331, %v8851
        %v8916 = vsel %vm8884, %v1332, %v8852
        %v8917 = vsel %vm8885, %v1333, %v8853
        %v8918 = vsel %vm8886, %v1334, %v8854
        %v8919 = vsel %vm8887, %v1335, %v8855
        %v8920 = vsel %vm8888, %v1336, %v8856
        %v8921 = vsel %vm8889, %v1337, %v8857
        %v8922 = vsel %vm8890, %v1338, %v8858
        %v8923 = vsel %vm8891, %v1339, %v8859
        %v8924 = vsel %vm8892, %v1340, %v8860
        %v8925 = vsel %vm8893, %v1341, %v8861
        %v8926 = vsel %vm8894, %v1342, %v8862
        %8927 = vst [vmem:[%s151] sm:$0xff] %v8895
        %8928 = vst [vmem:[%s151 + $0x8] sm:$0xff] %v8896
        %8929 = vst [vmem:[%s151 + $0x10] sm:$0xff] %v8897
        %8930 = vst [vmem:[%s151 + $0x18] sm:$0xff] %v8898
        %8931 = vst [vmem:[%s151 + $0x20] sm:$0xff] %v8899
        %8932 = vst [vmem:[%s151 + $0x28] sm:$0xff] %v8900
        %8933 = vst [vmem:[%s151 + $0x30] sm:$0xff] %v8901
        %8934 = vst [vmem:[%s151 + $0x38] sm:$0xff] %v8902
        %8935 = vst [vmem:[%s151 + $0x40] sm:$0xff] %v8903
        %8936 = vst [vmem:[%s151 + $0x48] sm:$0xff] %v8904
        %8937 = vst [vmem:[%s151 + $0x50] sm:$0xff] %v8905
        %8938 = vst [vmem:[%s151 + $0x58] sm:$0xff] %v8906
        %8939 = vst [vmem:[%s151 + $0x60] sm:$0xff] %v8907
        %8940 = vst [vmem:[%s151 + $0x68] sm:$0xff] %v8908
        %8941 = vst [vmem:[%s151 + $0x70] sm:$0xff] %v8909
        %8942 = vst [vmem:[%s151 + $0x78] sm:$0xff] %v8910
        %8943 = vst [vmem:[%s151 + $0x80] sm:$0xff] %v8911
        %8944 = vst [vmem:[%s151 + $0x88] sm:$0xff] %v8912
        %8945 = vst [vmem:[%s151 + $0x90] sm:$0xff] %v8913
        %8946 = vst [vmem:[%s151 + $0x98] sm:$0xff] %v8914
        %8947 = vst [vmem:[%s151 + $0xa0] sm:$0xff] %v8915
        %8948 = vst [vmem:[%s151 + $0xa8] sm:$0xff] %v8916
        %8949 = vst [vmem:[%s151 + $0xb0] sm:$0xff] %v8917
        %8950 = vst [vmem:[%s151 + $0xb8] sm:$0xff] %v8918
        %8951 = vst [vmem:[%s151 + $0xc0] sm:$0xff] %v8919
        %8952 = vst [vmem:[%s151 + $0xc8] sm:$0xff] %v8920
        %8953 = vst [vmem:[%s151 + $0xd0] sm:$0xff] %v8921
        %8954 = vst [vmem:[%s151 + $0xd8] sm:$0xff] %v8922
        %8955 = vst [vmem:[%s151 + $0xe0] sm:$0xff] %v8923
        %8956 = vst [vmem:[%s151 + $0xe8] sm:$0xff] %v8924
        %8957 = vst [vmem:[%s151 + $0xf0] sm:$0xff] %v8925
        %8958 = vst [vmem:[%s151 + $0xf8] sm:$0xff] %v8926
        %s8959 = sand.u32 %s85, 1
        %s8960 = scalar_lea.sflag [#allocation3], %s8959
        %s8961 = sand.u32 %s85, 1
        %s8962 = smul.addr %s8961, 256
        %s8963 = scalar_lea.vmem [#allocation2], %s8962
        // Predicated region
        $region29: #{tpu_custom_call.1} parent=27 // pred_check
          %p8964 = pneg %p95
        $region30: #{tpu_custom_call.1} parent=27 // pred_check_branch
          %8966 = sbr.rel (%p8964) target = $region32
        $region31: #{tpu_custom_call.1} parent=27 // pred_region
          %s8967 = smul.u32 8, %s20
          %s8968 = smul.u32 4, %s21
          %s8970 = ssub.s32 4096, 4096
          %8971 = vsyncadd %s8960, %s8970
          %s8972 = smul.addr %s8967, 12
          %s8973 = sadd.s32 %s8968, %s8972
          %s8974 = smul.addr %s8973, 128
          %s8975 = scalar_lea.hbm %s2, %s8974
          %s8976 = sshll.u32 %s8963, 4
          %s8977 = int_to_ptr.vmem [resolvable:$true] %s8976
          %8982 = dma.vmem_to_hbm [thread:$0]  %s8977, 4096, %s8975, %s8960, 512, 1536, 32
        $region32: #{tpu_custom_call.1} parent=27 // pred_fallthru
          _
      $region28: #{tpu_custom_call.1} parent=5 // pred_fallthru
        _
      %p8983 = scmp.le.s32.totalorder 2, %s11
      // Predicated region
      $region33: #{tpu_custom_call.1} parent=5 // pred_check
        %p8984 = pneg %p8983
      $region34: #{tpu_custom_call.1} parent=5 // pred_check_branch
        %8986 = sbr.rel (%p8984) target = $region36
      $region35: #{tpu_custom_call.1} parent=5 // pred_region
        %s8987 = ssub.s32 %s11, 2
        // Predicated region
        $region37: #{tpu_custom_call.1} parent=35 // pred_check
          %p8988 = pneg %p101
        $region38: #{tpu_custom_call.1} parent=35 // pred_check_branch
          %8990 = sbr.rel (%p8988) target = $region40
        $region39: #{tpu_custom_call.1} parent=35 // pred_region
          %s8991 = sand.u32 %s86, 1
          %s8992 = scalar_lea.sflag [#allocation3], %s8991
          %s8993 = sand.u32 %s86, 1
          %s8994 = smul.addr %s8993, 256
          %s8995 = scalar_lea.vmem [#allocation2], %s8994
          %8996 = dma.done %s8992, 4096
        $region40: #{tpu_custom_call.1} parent=35 // pred_fallthru
          _
      $region36: #{tpu_custom_call.1} parent=5 // pred_fallthru
        _
    $region6: #{tpu_custom_call.1} parent=1 // loop_footer
      %s15 = sadd.s32 1, %s11
    $region7: #{tpu_custom_call.1} parent=1 // loop_footer_branch
      %10 = sbr.rel target = $region3
    $region8: #{tpu_custom_call.1} parent=1 // loop_exit
      _
    %8997 = vsyncpa [#allocation3], 1
    %s8998 = scalar_lea.sflag [#allocation3], 1
    %8999 = vsyncpa %s8998, 1

</llo_original>
